<compile_context>
chip_gen: v6e
topology: v6e:2x2x1
jax: 0.10.0
libtpu: 0.0.40
codegen_flags: <defaults>
</compile_context>

<pallas_src>
import functools

import jax
import jax.numpy as jnp
from jax import lax
from jax.experimental import pallas as pl
from jax.experimental.pallas import tpu as pltpu


# ---------------- Pallas kernels ----------------

def _conv_relu_pool_kernel(p_ref, w_ref, b_ref, o_ref):
    """Fused im2col-conv + bias + ReLU + 2x2 maxpool.

    p_ref: (4, M, K)   im2col patches, one slab per 2x2 pooling-window quadrant; rows of every
                       quadrant share the same (pooled-output) row order.
    w_ref: (K, Cout)   b_ref: (1, Cout)   o_ref: (M, Cout) pooled output.
    """
    w = w_ref[...]
    b = b_ref[...]
    y0 = jnp.maximum(jnp.dot(p_ref[0], w, preferred_element_type=jnp.float32) + b, 0.0)
    y1 = jnp.maximum(jnp.dot(p_ref[1], w, preferred_element_type=jnp.float32) + b, 0.0)
    y2 = jnp.maximum(jnp.dot(p_ref[2], w, preferred_element_type=jnp.float32) + b, 0.0)
    y3 = jnp.maximum(jnp.dot(p_ref[3], w, preferred_element_type=jnp.float32) + b, 0.0)
    o_ref[...] = jnp.maximum(jnp.maximum(y0, y1), jnp.maximum(y2, y3))


def _conv_relu_pool_fc_kernel(p_ref, w_ref, b_ref, wf_ref, bf_ref, o_ref, pooled_ref, *, batch):
    """Fused conv2 + bias + ReLU + 2x2 maxpool + final Linear(3136 -> 10).

    p_ref:  (4, 49*batch, 288) patch quadrants; quadrant rows ordered (spatial p, batch b).
    w_ref:  (288, 64)   b_ref: (1, 64)
    wf_ref: (49, 64, 10) FC weight, one (64, 10) block per pooled spatial position p = h*7 + w
            (this encodes torch's (C, H, W)-order .view flatten).
    bf_ref: (1, 10)     o_ref: (batch, 10)
    pooled_ref: VMEM scratch (49*batch, 64) holding the pooled layer-2 activation.
    """
    w = w_ref[...]
    b = b_ref[...]
    y0 = jnp.maximum(jnp.dot(p_ref[0], w, preferred_element_type=jnp.float32) + b, 0.0)
    y1 = jnp.maximum(jnp.dot(p_ref[1], w, preferred_element_type=jnp.float32) + b, 0.0)
    y2 = jnp.maximum(jnp.dot(p_ref[2], w, preferred_element_type=jnp.float32) + b, 0.0)
    y3 = jnp.maximum(jnp.dot(p_ref[3], w, preferred_element_type=jnp.float32) + b, 0.0)
    pooled_ref[...] = jnp.maximum(jnp.maximum(y0, y1), jnp.maximum(y2, y3))

    # FC: out[b, n] = sum_p pooled[p*batch + b, :] @ wf[p]  (+ bias).
    acc = jnp.zeros((batch, 10), jnp.float32)
    for p in range(49):
        blk = pooled_ref[pl.ds(p * batch, batch), :]                 # (batch, 64)
        acc = acc + jnp.dot(blk, wf_ref[p], preferred_element_type=jnp.float32)
    o_ref[...] = acc + bf_ref[...]


# ---------------- XLA glue: im2col with pooling-quadrant row ordering ----------------

def _quadrant_patches_conv1(x_b28):
    """(B, 28, 28) -> (4, B*14*14, 9); quadrant rows ordered b*196 + ho*14 + wo."""
    B = x_b28.shape[0]
    xp = jnp.pad(x_b28, ((0, 0), (1, 1), (1, 1)))
    cols = [xp[:, dy:dy + 28, dx:dx + 28] for dy in range(3) for dx in range(3)]
    p = jnp.stack(cols, axis=-1)                     # (B, 28, 28, 9), k = dy*3 + dx
    p = p.reshape(B, 14, 2, 14, 2, 9)                # (b, ho, py, wo, px, k)
    p = p.transpose(2, 4, 0, 1, 3, 5)                # (py, px, b, ho, wo, k)
    return p.reshape(4, B * 14 * 14, 9)


def _quadrant_patches_conv2(y1_rows, B):
    """(B*14*14, 32) pooled layer-1 rows -> (4, 49*B, 288); quadrant rows ordered p*B + b."""
    y = y1_rows.reshape(B, 14, 14, 32)
    yp = jnp.pad(y, ((0, 0), (1, 1), (1, 1), (0, 0)))
    cols = [yp[:, dy:dy + 14, dx:dx + 14, :] for dy in range(3) for dx in range(3)]
    p = jnp.concatenate(cols, axis=-1)               # (B, 14, 14, 288), k = (dy*3+dx)*32 + ci
    p = p.reshape(B, 7, 2, 7, 2, 288)                # (b, ho, py, wo, px, k)
    p = p.transpose(2, 4, 1, 3, 0, 5)                # (py, px, ho, wo, b, k)
    return p.reshape(4, 49 * B, 288)


# ---------------- parameter prep (one time, outside the jitted forward) ----------------

def prepare_params(params):
    """Re-layout torch-style parameters into kernel-friendly matrices (done once)."""
    w1, b1, w2, b2, wf, bf = params
    w1m = jnp.transpose(w1, (2, 3, 1, 0)).reshape(9 * 1, 32).astype(jnp.float32)
    w2m = jnp.transpose(w2, (2, 3, 1, 0)).reshape(9 * 32, 64).astype(jnp.float32)
    # fc weight columns are torch-flattened (c, h, w); regroup into one (64, 10) block per
    # pooled spatial position p = h*7 + w, matching the in-kernel pooled row layout.
    wf3 = jnp.transpose(wf.reshape(10, 64, 7, 7), (2, 3, 1, 0)).reshape(49, 64, 10).astype(jnp.float32)
    return (w1m, b1.reshape(1, 32).astype(jnp.float32),
            w2m, b2.reshape(1, 64).astype(jnp.float32),
            wf3, bf.reshape(1, 10).astype(jnp.float32))


# ---------------- forward pass ----------------

@jax.jit
def cnn_forward(x_nchw, prepared):
    w1m, b1r, w2m, b2r, wf3, bfr = prepared
    B = x_nchw.shape[0]

    # ---- layer 1: Conv2d(1, 32, 3, pad=1) + ReLU + MaxPool2d(2), fully fused ----
    p1 = _quadrant_patches_conv1(x_nchw.reshape(B, 28, 28))
    y1 = pl.pallas_call(
        _conv_relu_pool_kernel,
        out_shape=jax.ShapeDtypeStruct((B * 196, 32), jnp.float32),
        grid_spec=pltpu.PrefetchScalarGridSpec(
            num_scalar_prefetch=0,
            grid=(1,),
            in_specs=[pl.BlockSpec((4, B * 196, 9), lambda i: (0, 0, 0)),
                      pl.BlockSpec((9, 32), lambda i: (0, 0)),
                      pl.BlockSpec((1, 32), lambda i: (0, 0))],
            out_specs=pl.BlockSpec((B * 196, 32), lambda i: (0, 0)),
        ),
        compiler_params=pltpu.CompilerParams(dimension_semantics=("arbitrary",)),
    )(p1, w1m, b1r)

    # ---- layer 2 + fc: Conv2d(32, 64, 3, pad=1) + ReLU + MaxPool2d(2) + Linear(3136, 10) ----
    p2 = _quadrant_patches_conv2(y1, B)
    out = pl.pallas_call(
        functools.partial(_conv_relu_pool_fc_kernel, batch=B),
        out_shape=jax.ShapeDtypeStruct((B, 10), jnp.float32),
        grid_spec=pltpu.PrefetchScalarGridSpec(
            num_scalar_prefetch=0,
            grid=(1,),
            in_specs=[pl.BlockSpec((4, 49 * B, 288), lambda i: (0, 0, 0)),
                      pl.BlockSpec((288, 64), lambda i: (0, 0)),
                      pl.BlockSpec((1, 64), lambda i: (0, 0)),
                      pl.BlockSpec((49, 64, 10), lambda i: (0, 0, 0)),
                      pl.BlockSpec((1, 10), lambda i: (0, 0))],
            out_specs=pl.BlockSpec((B, 10), lambda i: (0, 0)),
            scratch_shapes=[pltpu.VMEM((49 * B, 64), jnp.float32)],
        ),
        compiler_params=pltpu.CompilerParams(dimension_semantics=("arbitrary",)),
    )(p2, w2m, b2r, wf3, bfr)
    return out


# ---------------- pure-JAX reference (sanity check) ----------------

def cnn_reference(x_nchw, params):
    w1, b1, w2, b2, wf, bf = params

    def block(x, w, b):
        y = lax.conv_general_dilated(x, w, window_strides=(1, 1), padding="SAME",
                                     dimension_numbers=("NCHW", "OIHW", "NCHW"))
        y = jnp.maximum(y + b[None, :, None, None], 0.0)
        return lax.reduce_window(y, -jnp.inf, lax.max,
                                 (1, 1, 2, 2), (1, 1, 2, 2), "VALID")

    y = block(x_nchw, w1, b1)
    y = block(y, w2, b2)
    flat = y.reshape(y.shape[0], -1)
    return flat @ wf.T + bf


if __name__ == "__main__":
    key = jax.random.PRNGKey(0)
    ks = jax.random.split(key, 7)

    # deterministic synthetic parameters (shapes from CNN.__init__); not a checkpoint load
    x  = jax.random.normal(ks[0], (2, 1, 28, 28), jnp.float32)       # MNIST-shaped input, batch=2
    w1 = jax.random.normal(ks[1], (32, 1, 3, 3), jnp.float32) * 0.10
    b1 = jax.random.normal(ks[2], (32,), jnp.float32) * 0.01
    w2 = jax.random.normal(ks[3], (64, 32, 3, 3), jnp.float32) * 0.05
    b2 = jax.random.normal(ks[4], (64,), jnp.float32) * 0.01
    limit = (6.0 / (7 * 7 * 64 + 10)) ** 0.5                          # xavier_uniform bound for fc
    wf = jax.random.uniform(ks[5], (10, 7 * 7 * 64), jnp.float32, -limit, limit)
    bf = jax.random.normal(ks[6], (10,), jnp.float32) * 0.01
    params = (w1, b1, w2, b2, wf, bf)

    prepared = jax.block_until_ready(prepare_params(params))         # one-time weight re-layout

    out = jax.block_until_ready(cnn_forward(x, prepared))
    ref = jax.block_until_ready(cnn_reference(x, params))

    assert out.shape == (2, 10), out.shape
    if not jnp.allclose(out, ref, atol=2e-3, rtol=2e-3):
        raise AssertionError("Pallas CNN output mismatch vs JAX reference")
    print("KERNEL_OK")
</pallas_src>

<mosaic_0001>
module attributes {stable_mosaic.version = 11 : i64} {
  func.func @_conv_relu_pool_kernel(%arg0: i32, %arg1: memref<4x392x9xf32, #tpu.memory_space<vmem>>, %arg2: memref<9x32xf32, #tpu.memory_space<vmem>>, %arg3: memref<1x32xf32, #tpu.memory_space<vmem>>, %arg4: memref<392x32xf32, #tpu.memory_space<vmem>>) attributes {dimension_semantics = [#tpu.dimension_semantics<arbitrary>], iteration_bounds = array<i64: 1>, scalar_prefetch = 0 : i64, scratch_operands = 0 : i64, tpu.core_type = #tpu.core_type<tc>, window_params = [{pipeline_mode = #tpu.pipeline_mode<synchronous>, transform_indices = @transform_0, window_bounds = array<i64: 4, 392, 9>}, {pipeline_mode = #tpu.pipeline_mode<synchronous>, transform_indices = @transform_1, window_bounds = array<i64: 9, 32>}, {pipeline_mode = #tpu.pipeline_mode<synchronous>, transform_indices = @transform_2, window_bounds = array<i64: 1, 32>}, {pipeline_mode = #tpu.pipeline_mode<synchronous>, transform_indices = @transform_3, window_bounds = array<i64: 392, 32>}]} {
    %c0 = arith.constant 0 : index
    %c0_0 = arith.constant 0 : index
    %0 = vector.load %arg2[%c0, %c0_0] : memref<9x32xf32, #tpu.memory_space<vmem>>, vector<9x32xf32>
    %c0_1 = arith.constant 0 : index
    %c0_2 = arith.constant 0 : index
    %1 = vector.load %arg3[%c0_1, %c0_2] : memref<1x32xf32, #tpu.memory_space<vmem>>, vector<1x32xf32>
    %c0_3 = arith.constant 0 : index
    %c0_4 = arith.constant 0 : index
    %c0_5 = arith.constant 0 : index
    %2 = vector.load %arg1[%c0_3, %c0_4, %c0_5] : memref<4x392x9xf32, #tpu.memory_space<vmem>>, vector<1x392x9xf32>
    %3 = vector.shape_cast %2 : vector<1x392x9xf32> to vector<392x9xf32>
    %cst = arith.constant dense<0.000000e+00> : vector<392x32xf32>
    %4 = tpu.matmul %3, %0, %cst {dimension_numbers = #tpu.dot_dimension_numbers<[1], [0], [0], [1], [0, 0, 1, 1], [], []>} : vector<392x9xf32>, vector<9x32xf32>, vector<392x32xf32> -> vector<392x32xf32>
    %5 = vector.broadcast %1 : vector<1x32xf32> to vector<392x32xf32>
    %6 = arith.addf %4, %5 : vector<392x32xf32>
    %cst_6 = arith.constant 0.000000e+00 : f32
    %7 = vector.broadcast %cst_6 : f32 to vector<392x32xf32>
    %8 = arith.maximumf %6, %7 : vector<392x32xf32>
    %c1 = arith.constant 1 : index
    %c0_7 = arith.constant 0 : index
    %c0_8 = arith.constant 0 : index
    %9 = vector.load %arg1[%c1, %c0_7, %c0_8] : memref<4x392x9xf32, #tpu.memory_space<vmem>>, vector<1x392x9xf32>
    %10 = vector.shape_cast %9 : vector<1x392x9xf32> to vector<392x9xf32>
    %cst_9 = arith.constant dense<0.000000e+00> : vector<392x32xf32>
    %11 = tpu.matmul %10, %0, %cst_9 {dimension_numbers = #tpu.dot_dimension_numbers<[1], [0], [0], [1], [0, 0, 1, 1], [], []>} : vector<392x9xf32>, vector<9x32xf32>, vector<392x32xf32> -> vector<392x32xf32>
    %12 = vector.broadcast %1 : vector<1x32xf32> to vector<392x32xf32>
    %13 = arith.addf %11, %12 : vector<392x32xf32>
    %cst_10 = arith.constant 0.000000e+00 : f32
    %14 = vector.broadcast %cst_10 : f32 to vector<392x32xf32>
    %15 = arith.maximumf %13, %14 : vector<392x32xf32>
    %c2 = arith.constant 2 : index
    %c0_11 = arith.constant 0 : index
    %c0_12 = arith.constant 0 : index
    %16 = vector.load %arg1[%c2, %c0_11, %c0_12] : memref<4x392x9xf32, #tpu.memory_space<vmem>>, vector<1x392x9xf32>
    %17 = vector.shape_cast %16 : vector<1x392x9xf32> to vector<392x9xf32>
    %cst_13 = arith.constant dense<0.000000e+00> : vector<392x32xf32>
    %18 = tpu.matmul %17, %0, %cst_13 {dimension_numbers = #tpu.dot_dimension_numbers<[1], [0], [0], [1], [0, 0, 1, 1], [], []>} : vector<392x9xf32>, vector<9x32xf32>, vector<392x32xf32> -> vector<392x32xf32>
    %19 = vector.broadcast %1 : vector<1x32xf32> to vector<392x32xf32>
    %20 = arith.addf %18, %19 : vector<392x32xf32>
    %cst_14 = arith.constant 0.000000e+00 : f32
    %21 = vector.broadcast %cst_14 : f32 to vector<392x32xf32>
    %22 = arith.maximumf %20, %21 : vector<392x32xf32>
    %c3 = arith.constant 3 : index
    %c0_15 = arith.constant 0 : index
    %c0_16 = arith.constant 0 : index
    %23 = vector.load %arg1[%c3, %c0_15, %c0_16] : memref<4x392x9xf32, #tpu.memory_space<vmem>>, vector<1x392x9xf32>
    %24 = vector.shape_cast %23 : vector<1x392x9xf32> to vector<392x9xf32>
    %cst_17 = arith.constant dense<0.000000e+00> : vector<392x32xf32>
    %25 = tpu.matmul %24, %0, %cst_17 {dimension_numbers = #tpu.dot_dimension_numbers<[1], [0], [0], [1], [0, 0, 1, 1], [], []>} : vector<392x9xf32>, vector<9x32xf32>, vector<392x32xf32> -> vector<392x32xf32>
    %26 = vector.broadcast %1 : vector<1x32xf32> to vector<392x32xf32>
    %27 = arith.addf %25, %26 : vector<392x32xf32>
    %cst_18 = arith.constant 0.000000e+00 : f32
    %28 = vector.broadcast %cst_18 : f32 to vector<392x32xf32>
    %29 = arith.maximumf %27, %28 : vector<392x32xf32>
    %30 = arith.maximumf %8, %15 : vector<392x32xf32>
    %31 = arith.maximumf %22, %29 : vector<392x32xf32>
    %32 = arith.maximumf %30, %31 : vector<392x32xf32>
    %c0_19 = arith.constant 0 : index
    %c0_20 = arith.constant 0 : index
    %33 = vector.load %arg4[%c0_19, %c0_20] : memref<392x32xf32, #tpu.memory_space<vmem>>, vector<392x32xf32>
    tpu.vector_store %arg4[%c0_19, %c0_20], %32 {strides = array<i32>} : memref<392x32xf32, #tpu.memory_space<vmem>>, vector<392x32xf32>,
    return
  }
  func.func @transform_0(%arg0: i32) -> (i32, i32, i32) {
    %c0_i32 = arith.constant 0 : i32
    %c0_i32_0 = arith.constant 0 : i32
    %c0_i32_1 = arith.constant 0 : i32
    %c0_i32_2 = arith.constant 0 : i32
    return %c0_i32, %c0_i32_0, %c0_i32_1 : i32, i32, i32
  }
  func.func @transform_1(%arg0: i32) -> (i32, i32) {
    %c0_i32 = arith.constant 0 : i32
    %c0_i32_0 = arith.constant 0 : i32
    %c0_i32_1 = arith.constant 0 : i32
    return %c0_i32, %c0_i32_0 : i32, i32
  }
  func.func @transform_2(%arg0: i32) -> (i32, i32) {
    %c0_i32 = arith.constant 0 : i32
    %c0_i32_0 = arith.constant 0 : i32
    %c0_i32_1 = arith.constant 0 : i32
    return %c0_i32, %c0_i32_0 : i32, i32
  }
  func.func @transform_3(%arg0: i32) -> (i32, i32) {
    %c0_i32 = arith.constant 0 : i32
    %c0_i32_0 = arith.constant 0 : i32
    %c0_i32_1 = arith.constant 0 : i32
    return %c0_i32, %c0_i32_0 : i32, i32
  }
}

module attributes {stable_mosaic.version = 11 : i64} {
  func.func @_conv_relu_pool_fc_kernel(%arg0: i32, %arg1: memref<4x98x288xf32, #tpu.memory_space<vmem>>, %arg2: memref<288x64xf32, #tpu.memory_space<vmem>>, %arg3: memref<1x64xf32, #tpu.memory_space<vmem>>, %arg4: memref<49x64x10xf32, #tpu.memory_space<vmem>>, %arg5: memref<1x10xf32, #tpu.memory_space<vmem>>, %arg6: memref<2x10xf32, #tpu.memory_space<vmem>>, %arg7: memref<98x64xf32, #tpu.memory_space<vmem>>) attributes {dimension_semantics = [#tpu.dimension_semantics<arbitrary>], iteration_bounds = array<i64: 1>, scalar_prefetch = 0 : i64, scratch_operands = 1 : i64, tpu.core_type = #tpu.core_type<tc>, window_params = [{pipeline_mode = #tpu.pipeline_mode<synchronous>, transform_indices = @transform_0, window_bounds = array<i64: 4, 98, 288>}, {pipeline_mode = #tpu.pipeline_mode<synchronous>, transform_indices = @transform_1, window_bounds = array<i64: 288, 64>}, {pipeline_mode = #tpu.pipeline_mode<synchronous>, transform_indices = @transform_2, window_bounds = array<i64: 1, 64>}, {pipeline_mode = #tpu.pipeline_mode<synchronous>, transform_indices = @transform_3, window_bounds = array<i64: 49, 64, 10>}, {pipeline_mode = #tpu.pipeline_mode<synchronous>, transform_indices = @transform_4, window_bounds = array<i64: 1, 10>}, {pipeline_mode = #tpu.pipeline_mode<synchronous>, transform_indices = @transform_5, window_bounds = array<i64: 2, 10>}]} {
    %c0 = arith.constant 0 : index
    %c0_0 = arith.constant 0 : index
    %0 = vector.load %arg2[%c0, %c0_0] : memref<288x64xf32, #tpu.memory_space<vmem>>, vector<288x64xf32>
    %c0_1 = arith.constant 0 : index
    %c0_2 = arith.constant 0 : index
    %1 = vector.load %arg3[%c0_1, %c0_2] : memref<1x64xf32, #tpu.memory_space<vmem>>, vector<1x64xf32>
    %c0_3 = arith.constant 0 : index
    %c0_4 = arith.constant 0 : index
    %c0_5 = arith.constant 0 : index
    %2 = vector.load %arg1[%c0_3, %c0_4, %c0_5] : memref<4x98x288xf32, #tpu.memory_space<vmem>>, vector<1x98x288xf32>
    %3 = vector.shape_cast %2 : vector<1x98x288xf32> to vector<98x288xf32>
    %cst = arith.constant dense<0.000000e+00> : vector<98x64xf32>
    %4 = tpu.matmul %3, %0, %cst {dimension_numbers = #tpu.dot_dimension_numbers<[1], [0], [0], [1], [0, 0, 1, 1], [], []>} : vector<98x288xf32>, vector<288x64xf32>, vector<98x64xf32> -> vector<98x64xf32>
    %5 = vector.broadcast %1 : vector<1x64xf32> to vector<98x64xf32>
    %6 = arith.addf %4, %5 : vector<98x64xf32>
    %cst_6 = arith.constant 0.000000e+00 : f32
    %7 = vector.broadcast %cst_6 : f32 to vector<98x64xf32>
    %8 = arith.maximumf %6, %7 : vector<98x64xf32>
    %c1 = arith.constant 1 : index
    %c0_7 = arith.constant 0 : index
    %c0_8 = arith.constant 0 : index
    %9 = vector.load %arg1[%c1, %c0_7, %c0_8] : memref<4x98x288xf32, #tpu.memory_space<vmem>>, vector<1x98x288xf32>
    %10 = vector.shape_cast %9 : vector<1x98x288xf32> to vector<98x288xf32>
    %cst_9 = arith.constant dense<0.000000e+00> : vector<98x64xf32>
    %11 = tpu.matmul %10, %0, %cst_9 {dimension_numbers = #tpu.dot_dimension_numbers<[1], [0], [0], [1], [0, 0, 1, 1], [], []>} : vector<98x288xf32>, vector<288x64xf32>, vector<98x64xf32> -> vector<98x64xf32>
    %12 = vector.broadcast %1 : vector<1x64xf32> to vector<98x64xf32>
    %13 = arith.addf %11, %12 : vector<98x64xf32>
    %cst_10 = arith.constant 0.000000e+00 : f32
    %14 = vector.broadcast %cst_10 : f32 to vector<98x64xf32>
    %15 = arith.maximumf %13, %14 : vector<98x64xf32>
    %c2 = arith.constant 2 : index
    %c0_11 = arith.constant 0 : index
    %c0_12 = arith.constant 0 : index
    %16 = vector.load %arg1[%c2, %c0_11, %c0_12] : memref<4x98x288xf32, #tpu.memory_space<vmem>>, vector<1x98x288xf32>
    %17 = vector.shape_cast %16 : vector<1x98x288xf32> to vector<98x288xf32>
    %cst_13 = arith.constant dense<0.000000e+00> : vector<98x64xf32>
    %18 = tpu.matmul %17, %0, %cst_13 {dimension_numbers = #tpu.dot_dimension_numbers<[1], [0], [0], [1], [0, 0, 1, 1], [], []>} : vector<98x288xf32>, vector<288x64xf32>, vector<98x64xf32> -> vector<98x64xf32>
    %19 = vector.broadcast %1 : vector<1x64xf32> to vector<98x64xf32>
    %20 = arith.addf %18, %19 : vector<98x64xf32>
    %cst_14 = arith.constant 0.000000e+00 : f32
    %21 = vector.broadcast %cst_14 : f32 to vector<98x64xf32>
    %22 = arith.maximumf %20, %21 : vector<98x64xf32>
    %c3 = arith.constant 3 : index
    %c0_15 = arith.constant 0 : index
    %c0_16 = arith.constant 0 : index
    %23 = vector.load %arg1[%c3, %c0_15, %c0_16] : memref<4x98x288xf32, #tpu.memory_space<vmem>>, vector<1x98x288xf32>
    %24 = vector.shape_cast %23 : vector<1x98x288xf32> to vector<98x288xf32>
    %cst_17 = arith.constant dense<0.000000e+00> : vector<98x64xf32>
    %25 = tpu.matmul %24, %0, %cst_17 {dimension_numbers = #tpu.dot_dimension_numbers<[1], [0], [0], [1], [0, 0, 1, 1], [], []>} : vector<98x288xf32>, vector<288x64xf32>, vector<98x64xf32> -> vector<98x64xf32>
    %26 = vector.broadcast %1 : vector<1x64xf32> to vector<98x64xf32>
    %27 = arith.addf %25, %26 : vector<98x64xf32>
    %cst_18 = arith.constant 0.000000e+00 : f32
    %28 = vector.broadcast %cst_18 : f32 to vector<98x64xf32>
    %29 = arith.maximumf %27, %28 : vector<98x64xf32>
    %30 = arith.maximumf %8, %15 : vector<98x64xf32>
    %31 = arith.maximumf %22, %29 : vector<98x64xf32>
    %32 = arith.maximumf %30, %31 : vector<98x64xf32>
    %c0_19 = arith.constant 0 : index
    %c0_20 = arith.constant 0 : index
    %33 = vector.load %arg7[%c0_19, %c0_20] : memref<98x64xf32, #tpu.memory_space<vmem>>, vector<98x64xf32>
    tpu.vector_store %arg7[%c0_19, %c0_20], %32 {strides = array<i32>} : memref<98x64xf32, #tpu.memory_space<vmem>>, vector<98x64xf32>,
    %cst_21 = arith.constant 0.000000e+00 : f32
    %34 = vector.broadcast %cst_21 : f32 to vector<2x10xf32>
    %c0_22 = arith.constant 0 : index
    %c0_23 = arith.constant 0 : index
    %35 = vector.load %arg7[%c0_22, %c0_23] : memref<98x64xf32, #tpu.memory_space<vmem>>, vector<2x64xf32>
    %c0_24 = arith.constant 0 : index
    %c0_25 = arith.constant 0 : index
    %c0_26 = arith.constant 0 : index
    %36 = vector.load %arg4[%c0_24, %c0_25, %c0_26] : memref<49x64x10xf32, #tpu.memory_space<vmem>>, vector<1x64x10xf32>
    %37 = vector.shape_cast %36 : vector<1x64x10xf32> to vector<64x10xf32>
    %cst_27 = arith.constant dense<0.000000e+00> : vector<2x10xf32>
    %38 = tpu.matmul %35, %37, %cst_27 {dimension_numbers = #tpu.dot_dimension_numbers<[1], [0], [0], [1], [0, 0, 1, 1], [], []>} : vector<2x64xf32>, vector<64x10xf32>, vector<2x10xf32> -> vector<2x10xf32>
    %39 = arith.addf %34, %38 : vector<2x10xf32>
    %c2_28 = arith.constant 2 : index
    %c0_29 = arith.constant 0 : index
    %40 = vector.load %arg7[%c2_28, %c0_29] : memref<98x64xf32, #tpu.memory_space<vmem>>, vector<2x64xf32>
    %c1_30 = arith.constant 1 : index
    %c0_31 = arith.constant 0 : index
    %c0_32 = arith.constant 0 : index
    %41 = vector.load %arg4[%c1_30, %c0_31, %c0_32] : memref<49x64x10xf32, #tpu.memory_space<vmem>>, vector<1x64x10xf32>
    %42 = vector.shape_cast %41 : vector<1x64x10xf32> to vector<64x10xf32>
    %cst_33 = arith.constant dense<0.000000e+00> : vector<2x10xf32>
    %43 = tpu.matmul %40, %42, %cst_33 {dimension_numbers = #tpu.dot_dimension_numbers<[1], [0], [0], [1], [0, 0, 1, 1], [], []>} : vector<2x64xf32>, vector<64x10xf32>, vector<2x10xf32> -> vector<2x10xf32>
    %44 = arith.addf %39, %43 : vector<2x10xf32>
    %c4 = arith.constant 4 : index
    %c0_34 = arith.constant 0 : index
    %45 = vector.load %arg7[%c4, %c0_34] : memref<98x64xf32, #tpu.memory_space<vmem>>, vector<2x64xf32>
    %c2_35 = arith.constant 2 : index
    %c0_36 = arith.constant 0 : index
    %c0_37 = arith.constant 0 : index
    %46 = vector.load %arg4[%c2_35, %c0_36, %c0_37] : memref<49x64x10xf32, #tpu.memory_space<vmem>>, vector<1x64x10xf32>
    %47 = vector.shape_cast %46 : vector<1x64x10xf32> to vector<64x10xf32>
    %cst_38 = arith.constant dense<0.000000e+00> : vector<2x10xf32>
    %48 = tpu.matmul %45, %47, %cst_38 {dimension_numbers = #tpu.dot_dimension_numbers<[1], [0], [0], [1], [0, 0, 1, 1], [], []>} : vector<2x64xf32>, vector<64x10xf32>, vector<2x10xf32> -> vector<2x10xf32>
    %49 = arith.addf %44, %48 : vector<2x10xf32>
    %c6 = arith.constant 6 : index
    %c0_39 = arith.constant 0 : index
    %50 = vector.load %arg7[%c6, %c0_39] : memref<98x64xf32, #tpu.memory_space<vmem>>, vector<2x64xf32>
    %c3_40 = arith.constant 3 : index
    %c0_41 = arith.constant 0 : index
    %c0_42 = arith.constant 0 : index
    %51 = vector.load %arg4[%c3_40, %c0_41, %c0_42] : memref<49x64x10xf32, #tpu.memory_space<vmem>>, vector<1x64x10xf32>
    %52 = vector.shape_cast %51 : vector<1x64x10xf32> to vector<64x10xf32>
    %cst_43 = arith.constant dense<0.000000e+00> : vector<2x10xf32>
    %53 = tpu.matmul %50, %52, %cst_43 {dimension_numbers = #tpu.dot_dimension_numbers<[1], [0], [0], [1], [0, 0, 1, 1], [], []>} : vector<2x64xf32>, vector<64x10xf32>, vector<2x10xf32> -> vector<2x10xf32>
    %54 = arith.addf %49, %53 : vector<2x10xf32>
    %c8 = arith.constant 8 : index
    %c0_44 = arith.constant 0 : index
    %55 = vector.load %arg7[%c8, %c0_44] : memref<98x64xf32, #tpu.memory_space<vmem>>, vector<2x64xf32>
    %c4_45 = arith.constant 4 : index
    %c0_46 = arith.constant 0 : index
    %c0_47 = arith.constant 0 : index
    %56 = vector.load %arg4[%c4_45, %c0_46, %c0_47] : memref<49x64x10xf32, #tpu.memory_space<vmem>>, vector<1x64x10xf32>
    %57 = vector.shape_cast %56 : vector<1x64x10xf32> to vector<64x10xf32>
    %cst_48 = arith.constant dense<0.000000e+00> : vector<2x10xf32>
    %58 = tpu.matmul %55, %57, %cst_48 {dimension_numbers = #tpu.dot_dimension_numbers<[1], [0], [0], [1], [0, 0, 1, 1], [], []>} : vector<2x64xf32>, vector<64x10xf32>, vector<2x10xf32> -> vector<2x10xf32>
    %59 = arith.addf %54, %58 : vector<2x10xf32>
    %c10 = arith.constant 10 : index
    %c0_49 = arith.constant 0 : index
    %60 = vector.load %arg7[%c10, %c0_49] : memref<98x64xf32, #tpu.memory_space<vmem>>, vector<2x64xf32>
    %c5 = arith.constant 5 : index
    %c0_50 = arith.constant 0 : index
    %c0_51 = arith.constant 0 : index
    %61 = vector.load %arg4[%c5, %c0_50, %c0_51] : memref<49x64x10xf32, #tpu.memory_space<vmem>>, vector<1x64x10xf32>
    %62 = vector.shape_cast %61 : vector<1x64x10xf32> to vector<64x10xf32>
    %cst_52 = arith.constant dense<0.000000e+00> : vector<2x10xf32>
    %63 = tpu.matmul %60, %62, %cst_52 {dimension_numbers = #tpu.dot_dimension_numbers<[1], [0], [0], [1], [0, 0, 1, 1], [], []>} : vector<2x64xf32>, vector<64x10xf32>, vector<2x10xf32> -> vector<2x10xf32>
    %64 = arith.addf %59, %63 : vector<2x10xf32>
    %c12 = arith.constant 12 : index
    %c0_53 = arith.constant 0 : index
    %65 = vector.load %arg7[%c12, %c0_53] : memref<98x64xf32, #tpu.memory_space<vmem>>, vector<2x64xf32>
    %c6_54 = arith.constant 6 : index
    %c0_55 = arith.constant 0 : index
    %c0_56 = arith.constant 0 : index
    %66 = vector.load %arg4[%c6_54, %c0_55, %c0_56] : memref<49x64x10xf32, #tpu.memory_space<vmem>>, vector<1x64x10xf32>
    %67 = vector.shape_cast %66 : vector<1x64x10xf32> to vector<64x10xf32>
    %cst_57 = arith.constant dense<0.000000e+00> : vector<2x10xf32>
    %68 = tpu.matmul %65, %67, %cst_57 {dimension_numbers = #tpu.dot_dimension_numbers<[1], [0], [0], [1], [0, 0, 1, 1], [], []>} : vector<2x64xf32>, vector<64x10xf32>, vector<2x10xf32> -> vector<2x10xf32>
    %69 = arith.addf %64, %68 : vector<2x10xf32>
    %c14 = arith.constant 14 : index
    %c0_58 = arith.constant 0 : index
    %70 = vector.load %arg7[%c14, %c0_58] : memref<98x64xf32, #tpu.memory_space<vmem>>, vector<2x64xf32>
    %c7 = arith.constant 7 : index
    %c0_59 = arith.constant 0 : index
    %c0_60 = arith.constant 0 : index
    %71 = vector.load %arg4[%c7, %c0_59, %c0_60] : memref<49x64x10xf32, #tpu.memory_space<vmem>>, vector<1x64x10xf32>
    %72 = vector.shape_cast %71 : vector<1x64x10xf32> to vector<64x10xf32>
    %cst_61 = arith.constant dense<0.000000e+00> : vector<2x10xf32>
    %73 = tpu.matmul %70, %72, %cst_61 {dimension_numbers = #tpu.dot_dimension_numbers<[1], [0], [0], [1], [0, 0, 1, 1], [], []>} : vector<2x64xf32>, vector<64x10xf32>, vector<2x10xf32> -> vector<2x10xf32>
    %74 = arith.addf %69, %73 : vector<2x10xf32>
    %c16 = arith.constant 16 : index
    %c0_62 = arith.constant 0 : index
    %75 = vector.load %arg7[%c16, %c0_62] : memref<98x64xf32, #tpu.memory_space<vmem>>, vector<2x64xf32>
    %c8_63 = arith.constant 8 : index
    %c0_64 = arith.constant 0 : index
    %c0_65 = arith.constant 0 : index
    %76 = vector.load %arg4[%c8_63, %c0_64, %c0_65] : memref<49x64x10xf32, #tpu.memory_space<vmem>>, vector<1x64x10xf32>
    %77 = vector.shape_cast %76 : vector<1x64x10xf32> to vector<64x10xf32>
    %cst_66 = arith.constant dense<0.000000e+00> : vector<2x10xf32>
    %78 = tpu.matmul %75, %77, %cst_66 {dimension_numbers = #tpu.dot_dimension_numbers<[1], [0], [0], [1], [0, 0, 1, 1], [], []>} : vector<2x64xf32>, vector<64x10xf32>, vector<2x10xf32> -> vector<2x10xf32>
    %79 = arith.addf %74, %78 : vector<2x10xf32>
    %c18 = arith.constant 18 : index
    %c0_67 = arith.constant 0 : index
    %80 = vector.load %arg7[%c18, %c0_67] : memref<98x64xf32, #tpu.memory_space<vmem>>, vector<2x64xf32>
    %c9 = arith.constant 9 : index
    %c0_68 = arith.constant 0 : index
    %c0_69 = arith.constant 0 : index
    %81 = vector.load %arg4[%c9, %c0_68, %c0_69] : memref<49x64x10xf32, #tpu.memory_space<vmem>>, vector<1x64x10xf32>
    %82 = vector.shape_cast %81 : vector<1x64x10xf32> to vector<64x10xf32>
    %cst_70 = arith.constant dense<0.000000e+00> : vector<2x10xf32>
    %83 = tpu.matmul %80, %82, %cst_70 {dimension_numbers = #tpu.dot_dimension_numbers<[1], [0], [0], [1], [0, 0, 1, 1], [], []>} : vector<2x64xf32>, vector<64x10xf32>, vector<2x10xf32> -> vector<2x10xf32>
    %84 = arith.addf %79, %83 : vector<2x10xf32>
    %c20 = arith.constant 20 : index
    %c0_71 = arith.constant 0 : index
    %85 = vector.load %arg7[%c20, %c0_71] : memref<98x64xf32, #tpu.memory_space<vmem>>, vector<2x64xf32>
    %c10_72 = arith.constant 10 : index
    %c0_73 = arith.constant 0 : index
    %c0_74 = arith.constant 0 : index
    %86 = vector.load %arg4[%c10_72, %c0_73, %c0_74] : memref<49x64x10xf32, #tpu.memory_space<vmem>>, vector<1x64x10xf32>
    %87 = vector.shape_cast %86 : vector<1x64x10xf32> to vector<64x10xf32>
    %cst_75 = arith.constant dense<0.000000e+00> : vector<2x10xf32>
    %88 = tpu.matmul %85, %87, %cst_75 {dimension_numbers = #tpu.dot_dimension_numbers<[1], [0], [0], [1], [0, 0, 1, 1], [], []>} : vector<2x64xf32>, vector<64x10xf32>, vector<2x10xf32> -> vector<2x10xf32>
    %89 = arith.addf %84, %88 : vector<2x10xf32>
    %c22 = arith.constant 22 : index
    %c0_76 = arith.constant 0 : index
    %90 = vector.load %arg7[%c22, %c0_76] : memref<98x64xf32, #tpu.memory_space<vmem>>, vector<2x64xf32>
    %c11 = arith.constant 11 : index
    %c0_77 = arith.constant 0 : index
    %c0_78 = arith.constant 0 : index
    %91 = vector.load %arg4[%c11, %c0_77, %c0_78] : memref<49x64x10xf32, #tpu.memory_space<vmem>>, vector<1x64x10xf32>
    %92 = vector.shape_cast %91 : vector<1x64x10xf32> to vector<64x10xf32>
    %cst_79 = arith.constant dense<0.000000e+00> : vector<2x10xf32>
    %93 = tpu.matmul %90, %92, %cst_79 {dimension_numbers = #tpu.dot_dimension_numbers<[1], [0], [0], [1], [0, 0, 1, 1], [], []>} : vector<2x64xf32>, vector<64x10xf32>, vector<2x10xf32> -> vector<2x10xf32>
    %94 = arith.addf %89, %93 : vector<2x10xf32>
    %c24 = arith.constant 24 : index
    %c0_80 = arith.constant 0 : index
    %95 = vector.load %arg7[%c24, %c0_80] : memref<98x64xf32, #tpu.memory_space<vmem>>, vector<2x64xf32>
    %c12_81 = arith.constant 12 : index
    %c0_82 = arith.constant 0 : index
    %c0_83 = arith.constant 0 : index
    %96 = vector.load %arg4[%c12_81, %c0_82, %c0_83] : memref<49x64x10xf32, #tpu.memory_space<vmem>>, vector<1x64x10xf32>
    %97 = vector.shape_cast %96 : vector<1x64x10xf32> to vector<64x10xf32>
    %cst_84 = arith.constant dense<0.000000e+00> : vector<2x10xf32>
    %98 = tpu.matmul %95, %97, %cst_84 {dimension_numbers = #tpu.dot_dimension_numbers<[1], [0], [0], [1], [0, 0, 1, 1], [], []>} : vector<2x64xf32>, vector<64x10xf32>, vector<2x10xf32> -> vector<2x10xf32>
    %99 = arith.addf %94, %98 : vector<2x10xf32>
    %c26 = arith.constant 26 : index
    %c0_85 = arith.constant 0 : index
    %100 = vector.load %arg7[%c26, %c0_85] : memref<98x64xf32, #tpu.memory_space<vmem>>, vector<2x64xf32>
    %c13 = arith.constant 13 : index
    %c0_86 = arith.constant 0 : index
    %c0_87 = arith.constant 0 : index
    %101 = vector.load %arg4[%c13, %c0_86, %c0_87] : memref<49x64x10xf32, #tpu.memory_space<vmem>>, vector<1x64x10xf32>
    %102 = vector.shape_cast %101 : vector<1x64x10xf32> to vector<64x10xf32>
    %cst_88 = arith.constant dense<0.000000e+00> : vector<2x10xf32>
    %103 = tpu.matmul %100, %102, %cst_88 {dimension_numbers = #tpu.dot_dimension_numbers<[1], [0], [0], [1], [0, 0, 1, 1], [], []>} : vector<2x64xf32>, vector<64x10xf32>, vector<2x10xf32> -> vector<2x10xf32>
    %104 = arith.addf %99, %103 : vector<2x10xf32>
    %c28 = arith.constant 28 : index
    %c0_89 = arith.constant 0 : index
    %105 = vector.load %arg7[%c28, %c0_89] : memref<98x64xf32, #tpu.memory_space<vmem>>, vector<2x64xf32>
    %c14_90 = arith.constant 14 : index
    %c0_91 = arith.constant 0 : index
    %c0_92 = arith.constant 0 : index
    %106 = vector.load %arg4[%c14_90, %c0_91, %c0_92] : memref<49x64x10xf32, #tpu.memory_space<vmem>>, vector<1x64x10xf32>
    %107 = vector.shape_cast %106 : vector<1x64x10xf32> to vector<64x10xf32>
    %cst_93 = arith.constant dense<0.000000e+00> : vector<2x10xf32>
    %108 = tpu.matmul %105, %107, %cst_93 {dimension_numbers = #tpu.dot_dimension_numbers<[1], [0], [0], [1], [0, 0, 1, 1], [], []>} : vector<2x64xf32>, vector<64x10xf32>, vector<2x10xf32> -> vector<2x10xf32>
    %109 = arith.addf %104, %108 : vector<2x10xf32>
    %c30 = arith.constant 30 : index
    %c0_94 = arith.constant 0 : index
    %110 = vector.load %arg7[%c30, %c0_94] : memref<98x64xf32, #tpu.memory_space<vmem>>, vector<2x64xf32>
    %c15 = arith.constant 15 : index
    %c0_95 = arith.constant 0 : index
    %c0_96 = arith.constant 0 : index
    %111 = vector.load %arg4[%c15, %c0_95, %c0_96] : memref<49x64x10xf32, #tpu.memory_space<vmem>>, vector<1x64x10xf32>
    %112 = vector.shape_cast %111 : vector<1x64x10xf32> to vector<64x10xf32>
    %cst_97 = arith.constant dense<0.000000e+00> : vector<2x10xf32>
    %113 = tpu.matmul %110, %112, %cst_97 {dimension_numbers = #tpu.dot_dimension_numbers<[1], [0], [0], [1], [0, 0, 1, 1], [], []>} : vector<2x64xf32>, vector<64x10xf32>, vector<2x10xf32> -> vector<2x10xf32>
    %114 = arith.addf %109, %113 : vector<2x10xf32>
    %c32 = arith.constant 32 : index
    %c0_98 = arith.constant 0 : index
    %115 = vector.load %arg7[%c32, %c0_98] : memref<98x64xf32, #tpu.memory_space<vmem>>, vector<2x64xf32>
    %c16_99 = arith.constant 16 : index
    %c0_100 = arith.constant 0 : index
    %c0_101 = arith.constant 0 : index
    %116 = vector.load %arg4[%c16_99, %c0_100, %c0_101] : memref<49x64x10xf32, #tpu.memory_space<vmem>>, vector<1x64x10xf32>
    %117 = vector.shape_cast %116 : vector<1x64x10xf32> to vector<64x10xf32>
    %cst_102 = arith.constant dense<0.000000e+00> : vector<2x10xf32>
    %118 = tpu.matmul %115, %117, %cst_102 {dimension_numbers = #tpu.dot_dimension_numbers<[1], [0], [0], [1], [0, 0, 1, 1], [], []>} : vector<2x64xf32>, vector<64x10xf32>, vector<2x10xf32> -> vector<2x10xf32>
    %119 = arith.addf %114, %118 : vector<2x10xf32>
    %c34 = arith.constant 34 : index
    %c0_103 = arith.constant 0 : index
    %120 = vector.load %arg7[%c34, %c0_103] : memref<98x64xf32, #tpu.memory_space<vmem>>, vector<2x64xf32>
    %c17 = arith.constant 17 : index
    %c0_104 = arith.constant 0 : index
    %c0_105 = arith.constant 0 : index
    %121 = vector.load %arg4[%c17, %c0_104, %c0_105] : memref<49x64x10xf32, #tpu.memory_space<vmem>>, vector<1x64x10xf32>
    %122 = vector.shape_cast %121 : vector<1x64x10xf32> to vector<64x10xf32>
    %cst_106 = arith.constant dense<0.000000e+00> : vector<2x10xf32>
    %123 = tpu.matmul %120, %122, %cst_106 {dimension_numbers = #tpu.dot_dimension_numbers<[1], [0], [0], [1], [0, 0, 1, 1], [], []>} : vector<2x64xf32>, vector<64x10xf32>, vector<2x10xf32> -> vector<2x10xf32>
    %124 = arith.addf %119, %123 : vector<2x10xf32>
    %c36 = arith.constant 36 : index
    %c0_107 = arith.constant 0 : index
    %125 = vector.load %arg7[%c36, %c0_107] : memref<98x64xf32, #tpu.memory_space<vmem>>, vector<2x64xf32>
    %c18_108 = arith.constant 18 : index
    %c0_109 = arith.constant 0 : index
    %c0_110 = arith.constant 0 : index
    %126 = vector.load %arg4[%c18_108, %c0_109, %c0_110] : memref<49x64x10xf32, #tpu.memory_space<vmem>>, vector<1x64x10xf32>
    %127 = vector.shape_cast %126 : vector<1x64x10xf32> to vector<64x10xf32>
    %cst_111 = arith.constant dense<0.000000e+00> : vector<2x10xf32>
    %128 = tpu.matmul %125, %127, %cst_111 {dimension_numbers = #tpu.dot_dimension_numbers<[1], [0], [0], [1], [0, 0, 1, 1], [], []>} : vector<2x64xf32>, vector<64x10xf32>, vector<2x10xf32> -> vector<2x10xf32>
    %129 = arith.addf %124, %128 : vector<2x10xf32>
    %c38 = arith.constant 38 : index
    %c0_112 = arith.constant 0 : index
    %130 = vector.load %arg7[%c38, %c0_112] : memref<98x64xf32, #tpu.memory_space<vmem>>, vector<2x64xf32>
    %c19 = arith.constant 19 : index
    %c0_113 = arith.constant 0 : index
    %c0_114 = arith.constant 0 : index
    %131 = vector.load %arg4[%c19, %c0_113, %c0_114] : memref<49x64x10xf32, #tpu.memory_space<vmem>>, vector<1x64x10xf32>
    %132 = vector.shape_cast %131 : vector<1x64x10xf32> to vector<64x10xf32>
    %cst_115 = arith.constant dense<0.000000e+00> : vector<2x10xf32>
    %133 = tpu.matmul %130, %132, %cst_115 {dimension_numbers = #tpu.dot_dimension_numbers<[1], [0], [0], [1], [0, 0, 1, 1], [], []>} : vector<2x64xf32>, vector<64x10xf32>, vector<2x10xf32> -> vector<2x10xf32>
    %134 = arith.addf %129, %133 : vector<2x10xf32>
    %c40 = arith.constant 40 : index
    %c0_116 = arith.constant 0 : index
    %135 = vector.load %arg7[%c40, %c0_116] : memref<98x64xf32, #tpu.memory_space<vmem>>, vector<2x64xf32>
    %c20_117 = arith.constant 20 : index
    %c0_118 = arith.constant 0 : index
    %c0_119 = arith.constant 0 : index
    %136 = vector.load %arg4[%c20_117, %c0_118, %c0_119] : memref<49x64x10xf32, #tpu.memory_space<vmem>>, vector<1x64x10xf32>
    %137 = vector.shape_cast %136 : vector<1x64x10xf32> to vector<64x10xf32>
    %cst_120 = arith.constant dense<0.000000e+00> : vector<2x10xf32>
    %138 = tpu.matmul %135, %137, %cst_120 {dimension_numbers = #tpu.dot_dimension_numbers<[1], [0], [0], [1], [0, 0, 1, 1], [], []>} : vector<2x64xf32>, vector<64x10xf32>, vector<2x10xf32> -> vector<2x10xf32>
    %139 = arith.addf %134, %138 : vector<2x10xf32>
    %c42 = arith.constant 42 : index
    %c0_121 = arith.constant 0 : index
    %140 = vector.load %arg7[%c42, %c0_121] : memref<98x64xf32, #tpu.memory_space<vmem>>, vector<2x64xf32>
    %c21 = arith.constant 21 : index
    %c0_122 = arith.constant 0 : index
    %c0_123 = arith.constant 0 : index
    %141 = vector.load %arg4[%c21, %c0_122, %c0_123] : memref<49x64x10xf32, #tpu.memory_space<vmem>>, vector<1x64x10xf32>
    %142 = vector.shape_cast %141 : vector<1x64x10xf32> to vector<64x10xf32>
    %cst_124 = arith.constant dense<0.000000e+00> : vector<2x10xf32>
    %143 = tpu.matmul %140, %142, %cst_124 {dimension_numbers = #tpu.dot_dimension_numbers<[1], [0], [0], [1], [0, 0, 1, 1], [], []>} : vector<2x64xf32>, vector<64x10xf32>, vector<2x10xf32> -> vector<2x10xf32>
    %144 = arith.addf %139, %143 : vector<2x10xf32>
    %c44 = arith.constant 44 : index
    %c0_125 = arith.constant 0 : index
    %145 = vector.load %arg7[%c44, %c0_125] : memref<98x64xf32, #tpu.memory_space<vmem>>, vector<2x64xf32>
    %c22_126 = arith.constant 22 : index
    %c0_127 = arith.constant 0 : index
    %c0_128 = arith.constant 0 : index
    %146 = vector.load %arg4[%c22_126, %c0_127, %c0_128] : memref<49x64x10xf32, #tpu.memory_space<vmem>>, vector<1x64x10xf32>
    %147 = vector.shape_cast %146 : vector<1x64x10xf32> to vector<64x10xf32>
    %cst_129 = arith.constant dense<0.000000e+00> : vector<2x10xf32>
    %148 = tpu.matmul %145, %147, %cst_129 {dimension_numbers = #tpu.dot_dimension_numbers<[1], [0], [0], [1], [0, 0, 1, 1], [], []>} : vector<2x64xf32>, vector<64x10xf32>, vector<2x10xf32> -> vector<2x10xf32>
    %149 = arith.addf %144, %148 : vector<2x10xf32>
    %c46 = arith.constant 46 : index
    %c0_130 = arith.constant 0 : index
    %150 = vector.load %arg7[%c46, %c0_130] : memref<98x64xf32, #tpu.memory_space<vmem>>, vector<2x64xf32>
    %c23 = arith.constant 23 : index
    %c0_131 = arith.constant 0 : index
    %c0_132 = arith.constant 0 : index
    %151 = vector.load %arg4[%c23, %c0_131, %c0_132] : memref<49x64x10xf32, #tpu.memory_space<vmem>>, vector<1x64x10xf32>
    %152 = vector.shape_cast %151 : vector<1x64x10xf32> to vector<64x10xf32>
    %cst_133 = arith.constant dense<0.000000e+00> : vector<2x10xf32>
    %153 = tpu.matmul %150, %152, %cst_133 {dimension_numbers = #tpu.dot_dimension_numbers<[1], [0], [0], [1], [0, 0, 1, 1], [], []>} : vector<2x64xf32>, vector<64x10xf32>, vector<2x10xf32> -> vector<2x10xf32>
    %154 = arith.addf %149, %153 : vector<2x10xf32>
    %c48 = arith.constant 48 : index
    %c0_134 = arith.constant 0 : index
    %155 = vector.load %arg7[%c48, %c0_134] : memref<98x64xf32, #tpu.memory_space<vmem>>, vector<2x64xf32>
    %c24_135 = arith.constant 24 : index
    %c0_136 = arith.constant 0 : index
    %c0_137 = arith.constant 0 : index
    %156 = vector.load %arg4[%c24_135, %c0_136, %c0_137] : memref<49x64x10xf32, #tpu.memory_space<vmem>>, vector<1x64x10xf32>
    %157 = vector.shape_cast %156 : vector<1x64x10xf32> to vector<64x10xf32>
    %cst_138 = arith.constant dense<0.000000e+00> : vector<2x10xf32>
    %158 = tpu.matmul %155, %157, %cst_138 {dimension_numbers = #tpu.dot_dimension_numbers<[1], [0], [0], [1], [0, 0, 1, 1], [], []>} : vector<2x64xf32>, vector<64x10xf32>, vector<2x10xf32> -> vector<2x10xf32>
    %159 = arith.addf %154, %158 : vector<2x10xf32>
    %c50 = arith.constant 50 : index
    %c0_139 = arith.constant 0 : index
    %160 = vector.load %arg7[%c50, %c0_139] : memref<98x64xf32, #tpu.memory_space<vmem>>, vector<2x64xf32>
    %c25 = arith.constant 25 : index
    %c0_140 = arith.constant 0 : index
    %c0_141 = arith.constant 0 : index
    %161 = vector.load %arg4[%c25, %c0_140, %c0_141] : memref<49x64x10xf32, #tpu.memory_space<vmem>>, vector<1x64x10xf32>
    %162 = vector.shape_cast %161 : vector<1x64x10xf32> to vector<64x10xf32>
    %cst_142 = arith.constant dense<0.000000e+00> : vector<2x10xf32>
    %163 = tpu.matmul %160, %162, %cst_142 {dimension_numbers = #tpu.dot_dimension_numbers<[1], [0], [0], [1], [0, 0, 1, 1], [], []>} : vector<2x64xf32>, vector<64x10xf32>, vector<2x10xf32> -> vector<2x10xf32>
    %164 = arith.addf %159, %163 : vector<2x10xf32>
    %c52 = arith.constant 52 : index
    %c0_143 = arith.constant 0 : index
    %165 = vector.load %arg7[%c52, %c0_143] : memref<98x64xf32, #tpu.memory_space<vmem>>, vector<2x64xf32>
    %c26_144 = arith.constant 26 : index
    %c0_145 = arith.constant 0 : index
    %c0_146 = arith.constant 0 : index
    %166 = vector.load %arg4[%c26_144, %c0_145, %c0_146] : memref<49x64x10xf32, #tpu.memory_space<vmem>>, vector<1x64x10xf32>
    %167 = vector.shape_cast %166 : vector<1x64x10xf32> to vector<64x10xf32>
    %cst_147 = arith.constant dense<0.000000e+00> : vector<2x10xf32>
    %168 = tpu.matmul %165, %167, %cst_147 {dimension_numbers = #tpu.dot_dimension_numbers<[1], [0], [0], [1], [0, 0, 1, 1], [], []>} : vector<2x64xf32>, vector<64x10xf32>, vector<2x10xf32> -> vector<2x10xf32>
    %169 = arith.addf %164, %168 : vector<2x10xf32>
    %c54 = arith.constant 54 : index
    %c0_148 = arith.constant 0 : index
    %170 = vector.load %arg7[%c54, %c0_148] : memref<98x64xf32, #tpu.memory_space<vmem>>, vector<2x64xf32>
    %c27 = arith.constant 27 : index
    %c0_149 = arith.constant 0 : index
    %c0_150 = arith.constant 0 : index
    %171 = vector.load %arg4[%c27, %c0_149, %c0_150] : memref<49x64x10xf32, #tpu.memory_space<vmem>>, vector<1x64x10xf32>
    %172 = vector.shape_cast %171 : vector<1x64x10xf32> to vector<64x10xf32>
    %cst_151 = arith.constant dense<0.000000e+00> : vector<2x10xf32>
    %173 = tpu.matmul %170, %172, %cst_151 {dimension_numbers = #tpu.dot_dimension_numbers<[1], [0], [0], [1], [0, 0, 1, 1], [], []>} : vector<2x64xf32>, vector<64x10xf32>, vector<2x10xf32> -> vector<2x10xf32>
    %174 = arith.addf %169, %173 : vector<2x10xf32>
    %c56 = arith.constant 56 : index
    %c0_152 = arith.constant 0 : index
    %175 = vector.load %arg7[%c56, %c0_152] : memref<98x64xf32, #tpu.memory_space<vmem>>, vector<2x64xf32>
    %c28_153 = arith.constant 28 : index
    %c0_154 = arith.constant 0 : index
    %c0_155 = arith.constant 0 : index
    %176 = vector.load %arg4[%c28_153, %c0_154, %c0_155] : memref<49x64x10xf32, #tpu.memory_space<vmem>>, vector<1x64x10xf32>
    %177 = vector.shape_cast %176 : vector<1x64x10xf32> to vector<64x10xf32>
    %cst_156 = arith.constant dense<0.000000e+00> : vector<2x10xf32>
    %178 = tpu.matmul %175, %177, %cst_156 {dimension_numbers = #tpu.dot_dimension_numbers<[1], [0], [0], [1], [0, 0, 1, 1], [], []>} : vector<2x64xf32>, vector<64x10xf32>, vector<2x10xf32> -> vector<2x10xf32>
    %179 = arith.addf %174, %178 : vector<2x10xf32>
    %c58 = arith.constant 58 : index
    %c0_157 = arith.constant 0 : index
    %180 = vector.load %arg7[%c58, %c0_157] : memref<98x64xf32, #tpu.memory_space<vmem>>, vector<2x64xf32>
    %c29 = arith.constant 29 : index
    %c0_158 = arith.constant 0 : index
    %c0_159 = arith.constant 0 : index
    %181 = vector.load %arg4[%c29, %c0_158, %c0_159] : memref<49x64x10xf32, #tpu.memory_space<vmem>>, vector<1x64x10xf32>
    %182 = vector.shape_cast %181 : vector<1x64x10xf32> to vector<64x10xf32>
    %cst_160 = arith.constant dense<0.000000e+00> : vector<2x10xf32>
    %183 = tpu.matmul %180, %182, %cst_160 {dimension_numbers = #tpu.dot_dimension_numbers<[1], [0], [0], [1], [0, 0, 1, 1], [], []>} : vector<2x64xf32>, vector<64x10xf32>, vector<2x10xf32> -> vector<2x10xf32>
    %184 = arith.addf %179, %183 : vector<2x10xf32>
    %c60 = arith.constant 60 : index
    %c0_161 = arith.constant 0 : index
    %185 = vector.load %arg7[%c60, %c0_161] : memref<98x64xf32, #tpu.memory_space<vmem>>, vector<2x64xf32>
    %c30_162 = arith.constant 30 : index
    %c0_163 = arith.constant 0 : index
    %c0_164 = arith.constant 0 : index
    %186 = vector.load %arg4[%c30_162, %c0_163, %c0_164] : memref<49x64x10xf32, #tpu.memory_space<vmem>>, vector<1x64x10xf32>
    %187 = vector.shape_cast %186 : vector<1x64x10xf32> to vector<64x10xf32>
    %cst_165 = arith.constant dense<0.000000e+00> : vector<2x10xf32>
    %188 = tpu.matmul %185, %187, %cst_165 {dimension_numbers = #tpu.dot_dimension_numbers<[1], [0], [0], [1], [0, 0, 1, 1], [], []>} : vector<2x64xf32>, vector<64x10xf32>, vector<2x10xf32> -> vector<2x10xf32>
    %189 = arith.addf %184, %188 : vector<2x10xf32>
    %c62 = arith.constant 62 : index
    %c0_166 = arith.constant 0 : index
    %190 = vector.load %arg7[%c62, %c0_166] : memref<98x64xf32, #tpu.memory_space<vmem>>, vector<2x64xf32>
    %c31 = arith.constant 31 : index
    %c0_167 = arith.constant 0 : index
    %c0_168 = arith.constant 0 : index
    %191 = vector.load %arg4[%c31, %c0_167, %c0_168] : memref<49x64x10xf32, #tpu.memory_space<vmem>>, vector<1x64x10xf32>
    %192 = vector.shape_cast %191 : vector<1x64x10xf32> to vector<64x10xf32>
    %cst_169 = arith.constant dense<0.000000e+00> : vector<2x10xf32>
    %193 = tpu.matmul %190, %192, %cst_169 {dimension_numbers = #tpu.dot_dimension_numbers<[1], [0], [0], [1], [0, 0, 1, 1], [], []>} : vector<2x64xf32>, vector<64x10xf32>, vector<2x10xf32> -> vector<2x10xf32>
    %194 = arith.addf %189, %193 : vector<2x10xf32>
    %c64 = arith.constant 64 : index
    %c0_170 = arith.constant 0 : index
    %195 = vector.load %arg7[%c64, %c0_170] : memref<98x64xf32, #tpu.memory_space<vmem>>, vector<2x64xf32>
    %c32_171 = arith.constant 32 : index
    %c0_172 = arith.constant 0 : index
    %c0_173 = arith.constant 0 : index
    %196 = vector.load %arg4[%c32_171, %c0_172, %c0_173] : memref<49x64x10xf32, #tpu.memory_space<vmem>>, vector<1x64x10xf32>
    %197 = vector.shape_cast %196 : vector<1x64x10xf32> to vector<64x10xf32>
    %cst_174 = arith.constant dense<0.000000e+00> : vector<2x10xf32>
    %198 = tpu.matmul %195, %197, %cst_174 {dimension_numbers = #tpu.dot_dimension_numbers<[1], [0], [0], [1], [0, 0, 1, 1], [], []>} : vector<2x64xf32>, vector<64x10xf32>, vector<2x10xf32> -> vector<2x10xf32>
    %199 = arith.addf %194, %198 : vector<2x10xf32>
    %c66 = arith.constant 66 : index
    %c0_175 = arith.constant 0 : index
    %200 = vector.load %arg7[%c66, %c0_175] : memref<98x64xf32, #tpu.memory_space<vmem>>, vector<2x64xf32>
    %c33 = arith.constant 33 : index
    %c0_176 = arith.constant 0 : index
    %c0_177 = arith.constant 0 : index
    %201 = vector.load %arg4[%c33, %c0_176, %c0_177] : memref<49x64x10xf32, #tpu.memory_space<vmem>>, vector<1x64x10xf32>
    %202 = vector.shape_cast %201 : vector<1x64x10xf32> to vector<64x10xf32>
    %cst_178 = arith.constant dense<0.000000e+00> : vector<2x10xf32>
    %203 = tpu.matmul %200, %202, %cst_178 {dimension_numbers = #tpu.dot_dimension_numbers<[1], [0], [0], [1], [0, 0, 1, 1], [], []>} : vector<2x64xf32>, vector<64x10xf32>, vector<2x10xf32> -> vector<2x10xf32>
    %204 = arith.addf %199, %203 : vector<2x10xf32>
    %c68 = arith.constant 68 : index
    %c0_179 = arith.constant 0 : index
    %205 = vector.load %arg7[%c68, %c0_179] : memref<98x64xf32, #tpu.memory_space<vmem>>, vector<2x64xf32>
    %c34_180 = arith.constant 34 : index
    %c0_181 = arith.constant 0 : index
    %c0_182 = arith.constant 0 : index
    %206 = vector.load %arg4[%c34_180, %c0_181, %c0_182] : memref<49x64x10xf32, #tpu.memory_space<vmem>>, vector<1x64x10xf32>
    %207 = vector.shape_cast %206 : vector<1x64x10xf32> to vector<64x10xf32>
    %cst_183 = arith.constant dense<0.000000e+00> : vector<2x10xf32>
    %208 = tpu.matmul %205, %207, %cst_183 {dimension_numbers = #tpu.dot_dimension_numbers<[1], [0], [0], [1], [0, 0, 1, 1], [], []>} : vector<2x64xf32>, vector<64x10xf32>, vector<2x10xf32> -> vector<2x10xf32>
    %209 = arith.addf %204, %208 : vector<2x10xf32>
    %c70 = arith.constant 70 : index
    %c0_184 = arith.constant 0 : index
    %210 = vector.load %arg7[%c70, %c0_184] : memref<98x64xf32, #tpu.memory_space<vmem>>, vector<2x64xf32>
    %c35 = arith.constant 35 : index
    %c0_185 = arith.constant 0 : index
    %c0_186 = arith.constant 0 : index
    %211 = vector.load %arg4[%c35, %c0_185, %c0_186] : memref<49x64x10xf32, #tpu.memory_space<vmem>>, vector<1x64x10xf32>
    %212 = vector.shape_cast %211 : vector<1x64x10xf32> to vector<64x10xf32>
    %cst_187 = arith.constant dense<0.000000e+00> : vector<2x10xf32>
    %213 = tpu.matmul %210, %212, %cst_187 {dimension_numbers = #tpu.dot_dimension_numbers<[1], [0], [0], [1], [0, 0, 1, 1], [], []>} : vector<2x64xf32>, vector<64x10xf32>, vector<2x10xf32> -> vector<2x10xf32>
    %214 = arith.addf %209, %213 : vector<2x10xf32>
    %c72 = arith.constant 72 : index
    %c0_188 = arith.constant 0 : index
    %215 = vector.load %arg7[%c72, %c0_188] : memref<98x64xf32, #tpu.memory_space<vmem>>, vector<2x64xf32>
    %c36_189 = arith.constant 36 : index
    %c0_190 = arith.constant 0 : index
    %c0_191 = arith.constant 0 : index
    %216 = vector.load %arg4[%c36_189, %c0_190, %c0_191] : memref<49x64x10xf32, #tpu.memory_space<vmem>>, vector<1x64x10xf32>
    %217 = vector.shape_cast %216 : vector<1x64x10xf32> to vector<64x10xf32>
    %cst_192 = arith.constant dense<0.000000e+00> : vector<2x10xf32>
    %218 = tpu.matmul %215, %217, %cst_192 {dimension_numbers = #tpu.dot_dimension_numbers<[1], [0], [0], [1], [0, 0, 1, 1], [], []>} : vector<2x64xf32>, vector<64x10xf32>, vector<2x10xf32> -> vector<2x10xf32>
    %219 = arith.addf %214, %218 : vector<2x10xf32>
    %c74 = arith.constant 74 : index
    %c0_193 = arith.constant 0 : index
    %220 = vector.load %arg7[%c74, %c0_193] : memref<98x64xf32, #tpu.memory_space<vmem>>, vector<2x64xf32>
    %c37 = arith.constant 37 : index
    %c0_194 = arith.constant 0 : index
    %c0_195 = arith.constant 0 : index
    %221 = vector.load %arg4[%c37, %c0_194, %c0_195] : memref<49x64x10xf32, #tpu.memory_space<vmem>>, vector<1x64x10xf32>
    %222 = vector.shape_cast %221 : vector<1x64x10xf32> to vector<64x10xf32>
    %cst_196 = arith.constant dense<0.000000e+00> : vector<2x10xf32>
    %223 = tpu.matmul %220, %222, %cst_196 {dimension_numbers = #tpu.dot_dimension_numbers<[1], [0], [0], [1], [0, 0, 1, 1], [], []>} : vector<2x64xf32>, vector<64x10xf32>, vector<2x10xf32> -> vector<2x10xf32>
    %224 = arith.addf %219, %223 : vector<2x10xf32>
    %c76 = arith.constant 76 : index
    %c0_197 = arith.constant 0 : index
    %225 = vector.load %arg7[%c76, %c0_197] : memref<98x64xf32, #tpu.memory_space<vmem>>, vector<2x64xf32>
    %c38_198 = arith.constant 38 : index
    %c0_199 = arith.constant 0 : index
    %c0_200 = arith.constant 0 : index
    %226 = vector.load %arg4[%c38_198, %c0_199, %c0_200] : memref<49x64x10xf32, #tpu.memory_space<vmem>>, vector<1x64x10xf32>
    %227 = vector.shape_cast %226 : vector<1x64x10xf32> to vector<64x10xf32>
    %cst_201 = arith.constant dense<0.000000e+00> : vector<2x10xf32>
    %228 = tpu.matmul %225, %227, %cst_201 {dimension_numbers = #tpu.dot_dimension_numbers<[1], [0], [0], [1], [0, 0, 1, 1], [], []>} : vector<2x64xf32>, vector<64x10xf32>, vector<2x10xf32> -> vector<2x10xf32>
    %229 = arith.addf %224, %228 : vector<2x10xf32>
    %c78 = arith.constant 78 : index
    %c0_202 = arith.constant 0 : index
    %230 = vector.load %arg7[%c78, %c0_202] : memref<98x64xf32, #tpu.memory_space<vmem>>, vector<2x64xf32>
    %c39 = arith.constant 39 : index
    %c0_203 = arith.constant 0 : index
    %c0_204 = arith.constant 0 : index
    %231 = vector.load %arg4[%c39, %c0_203, %c0_204] : memref<49x64x10xf32, #tpu.memory_space<vmem>>, vector<1x64x10xf32>
    %232 = vector.shape_cast %231 : vector<1x64x10xf32> to vector<64x10xf32>
    %cst_205 = arith.constant dense<0.000000e+00> : vector<2x10xf32>
    %233 = tpu.matmul %230, %232, %cst_205 {dimension_numbers = #tpu.dot_dimension_numbers<[1], [0], [0], [1], [0, 0, 1, 1], [], []>} : vector<2x64xf32>, vector<64x10xf32>, vector<2x10xf32> -> vector<2x10xf32>
    %234 = arith.addf %229, %233 : vector<2x10xf32>
    %c80 = arith.constant 80 : index
    %c0_206 = arith.constant 0 : index
    %235 = vector.load %arg7[%c80, %c0_206] : memref<98x64xf32, #tpu.memory_space<vmem>>, vector<2x64xf32>
    %c40_207 = arith.constant 40 : index
    %c0_208 = arith.constant 0 : index
    %c0_209 = arith.constant 0 : index
    %236 = vector.load %arg4[%c40_207, %c0_208, %c0_209] : memref<49x64x10xf32, #tpu.memory_space<vmem>>, vector<1x64x10xf32>
    %237 = vector.shape_cast %236 : vector<1x64x10xf32> to vector<64x10xf32>
    %cst_210 = arith.constant dense<0.000000e+00> : vector<2x10xf32>
    %238 = tpu.matmul %235, %237, %cst_210 {dimension_numbers = #tpu.dot_dimension_numbers<[1], [0], [0], [1], [0, 0, 1, 1], [], []>} : vector<2x64xf32>, vector<64x10xf32>, vector<2x10xf32> -> vector<2x10xf32>
    %239 = arith.addf %234, %238 : vector<2x10xf32>
    %c82 = arith.constant 82 : index
    %c0_211 = arith.constant 0 : index
    %240 = vector.load %arg7[%c82, %c0_211] : memref<98x64xf32, #tpu.memory_space<vmem>>, vector<2x64xf32>
    %c41 = arith.constant 41 : index
    %c0_212 = arith.constant 0 : index
    %c0_213 = arith.constant 0 : index
    %241 = vector.load %arg4[%c41, %c0_212, %c0_213] : memref<49x64x10xf32, #tpu.memory_space<vmem>>, vector<1x64x10xf32>
    %242 = vector.shape_cast %241 : vector<1x64x10xf32> to vector<64x10xf32>
    %cst_214 = arith.constant dense<0.000000e+00> : vector<2x10xf32>
    %243 = tpu.matmul %240, %242, %cst_214 {dimension_numbers = #tpu.dot_dimension_numbers<[1], [0], [0], [1], [0, 0, 1, 1], [], []>} : vector<2x64xf32>, vector<64x10xf32>, vector<2x10xf32> -> vector<2x10xf32>
    %244 = arith.addf %239, %243 : vector<2x10xf32>
    %c84 = arith.constant 84 : index
    %c0_215 = arith.constant 0 : index
    %245 = vector.load %arg7[%c84, %c0_215] : memref<98x64xf32, #tpu.memory_space<vmem>>, vector<2x64xf32>
    %c42_216 = arith.constant 42 : index
    %c0_217 = arith.constant 0 : index
    %c0_218 = arith.constant 0 : index
    %246 = vector.load %arg4[%c42_216, %c0_217, %c0_218] : memref<49x64x10xf32, #tpu.memory_space<vmem>>, vector<1x64x10xf32>
    %247 = vector.shape_cast %246 : vector<1x64x10xf32> to vector<64x10xf32>
    %cst_219 = arith.constant dense<0.000000e+00> : vector<2x10xf32>
    %248 = tpu.matmul %245, %247, %cst_219 {dimension_numbers = #tpu.dot_dimension_numbers<[1], [0], [0], [1], [0, 0, 1, 1], [], []>} : vector<2x64xf32>, vector<64x10xf32>, vector<2x10xf32> -> vector<2x10xf32>
    %249 = arith.addf %244, %248 : vector<2x10xf32>
    %c86 = arith.constant 86 : index
    %c0_220 = arith.constant 0 : index
    %250 = vector.load %arg7[%c86, %c0_220] : memref<98x64xf32, #tpu.memory_space<vmem>>, vector<2x64xf32>
    %c43 = arith.constant 43 : index
    %c0_221 = arith.constant 0 : index
    %c0_222 = arith.constant 0 : index
    %251 = vector.load %arg4[%c43, %c0_221, %c0_222] : memref<49x64x10xf32, #tpu.memory_space<vmem>>, vector<1x64x10xf32>
    %252 = vector.shape_cast %251 : vector<1x64x10xf32> to vector<64x10xf32>
    %cst_223 = arith.constant dense<0.000000e+00> : vector<2x10xf32>
    %253 = tpu.matmul %250, %252, %cst_223 {dimension_numbers = #tpu.dot_dimension_numbers<[1], [0], [0], [1], [0, 0, 1, 1], [], []>} : vector<2x64xf32>, vector<64x10xf32>, vector<2x10xf32> -> vector<2x10xf32>
    %254 = arith.addf %249, %253 : vector<2x10xf32>
    %c88 = arith.constant 88 : index
    %c0_224 = arith.constant 0 : index
    %255 = vector.load %arg7[%c88, %c0_224] : memref<98x64xf32, #tpu.memory_space<vmem>>, vector<2x64xf32>
    %c44_225 = arith.constant 44 : index
    %c0_226 = arith.constant 0 : index
    %c0_227 = arith.constant 0 : index
    %256 = vector.load %arg4[%c44_225, %c0_226, %c0_227] : memref<49x64x10xf32, #tpu.memory_space<vmem>>, vector<1x64x10xf32>
    %257 = vector.shape_cast %256 : vector<1x64x10xf32> to vector<64x10xf32>
    %cst_228 = arith.constant dense<0.000000e+00> : vector<2x10xf32>
    %258 = tpu.matmul %255, %257, %cst_228 {dimension_numbers = #tpu.dot_dimension_numbers<[1], [0], [0], [1], [0, 0, 1, 1], [], []>} : vector<2x64xf32>, vector<64x10xf32>, vector<2x10xf32> -> vector<2x10xf32>
    %259 = arith.addf %254, %258 : vector<2x10xf32>
    %c90 = arith.constant 90 : index
    %c0_229 = arith.constant 0 : index
    %260 = vector.load %arg7[%c90, %c0_229] : memref<98x64xf32, #tpu.memory_space<vmem>>, vector<2x64xf32>
    %c45 = arith.constant 45 : index
    %c0_230 = arith.constant 0 : index
    %c0_231 = arith.constant 0 : index
    %261 = vector.load %arg4[%c45, %c0_230, %c0_231] : memref<49x64x10xf32, #tpu.memory_space<vmem>>, vector<1x64x10xf32>
    %262 = vector.shape_cast %261 : vector<1x64x10xf32> to vector<64x10xf32>
    %cst_232 = arith.constant dense<0.000000e+00> : vector<2x10xf32>
    %263 = tpu.matmul %260, %262, %cst_232 {dimension_numbers = #tpu.dot_dimension_numbers<[1], [0], [0], [1], [0, 0, 1, 1], [], []>} : vector<2x64xf32>, vector<64x10xf32>, vector<2x10xf32> -> vector<2x10xf32>
    %264 = arith.addf %259, %263 : vector<2x10xf32>
    %c92 = arith.constant 92 : index
    %c0_233 = arith.constant 0 : index
    %265 = vector.load %arg7[%c92, %c0_233] : memref<98x64xf32, #tpu.memory_space<vmem>>, vector<2x64xf32>
    %c46_234 = arith.constant 46 : index
    %c0_235 = arith.constant 0 : index
    %c0_236 = arith.constant 0 : index
    %266 = vector.load %arg4[%c46_234, %c0_235, %c0_236] : memref<49x64x10xf32, #tpu.memory_space<vmem>>, vector<1x64x10xf32>
    %267 = vector.shape_cast %266 : vector<1x64x10xf32> to vector<64x10xf32>
    %cst_237 = arith.constant dense<0.000000e+00> : vector<2x10xf32>
    %268 = tpu.matmul %265, %267, %cst_237 {dimension_numbers = #tpu.dot_dimension_numbers<[1], [0], [0], [1], [0, 0, 1, 1], [], []>} : vector<2x64xf32>, vector<64x10xf32>, vector<2x10xf32> -> vector<2x10xf32>
    %269 = arith.addf %264, %268 : vector<2x10xf32>
    %c94 = arith.constant 94 : index
    %c0_238 = arith.constant 0 : index
    %270 = vector.load %arg7[%c94, %c0_238] : memref<98x64xf32, #tpu.memory_space<vmem>>, vector<2x64xf32>
    %c47 = arith.constant 47 : index
    %c0_239 = arith.constant 0 : index
    %c0_240 = arith.constant 0 : index
    %271 = vector.load %arg4[%c47, %c0_239, %c0_240] : memref<49x64x10xf32, #tpu.memory_space<vmem>>, vector<1x64x10xf32>
    %272 = vector.shape_cast %271 : vector<1x64x10xf32> to vector<64x10xf32>
    %cst_241 = arith.constant dense<0.000000e+00> : vector<2x10xf32>
    %273 = tpu.matmul %270, %272, %cst_241 {dimension_numbers = #tpu.dot_dimension_numbers<[1], [0], [0], [1], [0, 0, 1, 1], [], []>} : vector<2x64xf32>, vector<64x10xf32>, vector<2x10xf32> -> vector<2x10xf32>
    %274 = arith.addf %269, %273 : vector<2x10xf32>
    %c96 = arith.constant 96 : index
    %c0_242 = arith.constant 0 : index
    %275 = vector.load %arg7[%c96, %c0_242] : memref<98x64xf32, #tpu.memory_space<vmem>>, vector<2x64xf32>
    %c48_243 = arith.constant 48 : index
    %c0_244 = arith.constant 0 : index
    %c0_245 = arith.constant 0 : index
    %276 = vector.load %arg4[%c48_243, %c0_244, %c0_245] : memref<49x64x10xf32, #tpu.memory_space<vmem>>, vector<1x64x10xf32>
    %277 = vector.shape_cast %276 : vector<1x64x10xf32> to vector<64x10xf32>
    %cst_246 = arith.constant dense<0.000000e+00> : vector<2x10xf32>
    %278 = tpu.matmul %275, %277, %cst_246 {dimension_numbers = #tpu.dot_dimension_numbers<[1], [0], [0], [1], [0, 0, 1, 1], [], []>} : vector<2x64xf32>, vector<64x10xf32>, vector<2x10xf32> -> vector<2x10xf32>
    %279 = arith.addf %274, %278 : vector<2x10xf32>
    %c0_247 = arith.constant 0 : index
    %c0_248 = arith.constant 0 : index
    %280 = vector.load %arg5[%c0_247, %c0_248] : memref<1x10xf32, #tpu.memory_space<vmem>>, vector<1x10xf32>
    %281 = vector.broadcast %280 : vector<1x10xf32> to vector<2x10xf32>
    %282 = arith.addf %279, %281 : vector<2x10xf32>
    %c0_249 = arith.constant 0 : index
    %c0_250 = arith.constant 0 : index
    %283 = vector.load %arg6[%c0_249, %c0_250] : memref<2x10xf32, #tpu.memory_space<vmem>>, vector<2x10xf32>
    tpu.vector_store %arg6[%c0_249, %c0_250], %282 {strides = array<i32>} : memref<2x10xf32, #tpu.memory_space<vmem>>, vector<2x10xf32>,
    return
  }
  func.func @transform_0(%arg0: i32) -> (i32, i32, i32) {
    %c0_i32 = arith.constant 0 : i32
    %c0_i32_0 = arith.constant 0 : i32
    %c0_i32_1 = arith.constant 0 : i32
    %c0_i32_2 = arith.constant 0 : i32
    return %c0_i32, %c0_i32_0, %c0_i32_1 : i32, i32, i32
  }
  func.func @transform_1(%arg0: i32) -> (i32, i32) {
    %c0_i32 = arith.constant 0 : i32
    %c0_i32_0 = arith.constant 0 : i32
    %c0_i32_1 = arith.constant 0 : i32
    return %c0_i32, %c0_i32_0 : i32, i32
  }
  func.func @transform_2(%arg0: i32) -> (i32, i32) {
    %c0_i32 = arith.constant 0 : i32
    %c0_i32_0 = arith.constant 0 : i32
    %c0_i32_1 = arith.constant 0 : i32
    return %c0_i32, %c0_i32_0 : i32, i32
  }
  func.func @transform_3(%arg0: i32) -> (i32, i32, i32) {
    %c0_i32 = arith.constant 0 : i32
    %c0_i32_0 = arith.constant 0 : i32
    %c0_i32_1 = arith.constant 0 : i32
    %c0_i32_2 = arith.constant 0 : i32
    return %c0_i32, %c0_i32_0, %c0_i32_1 : i32, i32, i32
  }
  func.func @transform_4(%arg0: i32) -> (i32, i32) {
    %c0_i32 = arith.constant 0 : i32
    %c0_i32_0 = arith.constant 0 : i32
    %c0_i32_1 = arith.constant 0 : i32
    return %c0_i32, %c0_i32_0 : i32, i32
  }
  func.func @transform_5(%arg0: i32) -> (i32, i32) {
    %c0_i32 = arith.constant 0 : i32
    %c0_i32_0 = arith.constant 0 : i32
    %c0_i32_1 = arith.constant 0 : i32
    return %c0_i32, %c0_i32_0 : i32, i32
  }
}

</mosaic_0001>

<llo_original>
// kernel: cnn_forward.2
$region0: #{cnn_forward.2}
  #allocation0 [shape = 'u32[]', space=smem, size = 0x4, offset = 0x4, fixed_abs, tag = 'smem constant byte address 0x4 - core index']
  #allocation1 [shape = 'u32[144,128]{1,0:T(1,128)}', space=vmem, size = 0x12000, scoped, tag = 'internal scratch']
  %s0 = inlined_call_operand.vmem [shape: f32[4,392,9], index: 0, kind: input, shape index: {}]
  %s1 = inlined_call_operand.vmem [shape: f32[9,32], index: 1, kind: input, shape index: {}]
  %s2 = inlined_call_operand.vmem [shape: f32[1,32], index: 2, kind: input, shape index: {}]
  %s3 = inlined_call_operand.vmem [shape: f32[392,32], index: 3, kind: output, shape index: {}]
  %s4 = sld [smem:[#allocation0]]
  $region22: #{cnn_forward.2} parent=0
    _
  %s6 = ssub.s32 1, %s4
  %s7 = scalar_select 0, %s6, %s4
  // Predicated region
  $region2: #{cnn_forward.2} parent=0 // pred_check
    _
  $region3: #{cnn_forward.2} parent=0 // pred_check_branch
    %9 = sbr.rel (0) target = $region5
  $region4: #{cnn_forward.2} parent=0 // pred_region
    _
  $region5: #{cnn_forward.2} parent=0 // pred_fallthru
    _
  // Predicated region
  $region6: #{cnn_forward.2} parent=0 // pred_check
    _
  $region7: #{cnn_forward.2} parent=0 // pred_check_branch
    %11 = sbr.rel (0) target = $region9
  $region8: #{cnn_forward.2} parent=0 // pred_region
    _
  $region9: #{cnn_forward.2} parent=0 // pred_fallthru
    _
  // Predicated region
  $region10: #{cnn_forward.2} parent=0 // pred_check
    _
  $region11: #{cnn_forward.2} parent=0 // pred_check_branch
    %13 = sbr.rel (0) target = $region13
  $region12: #{cnn_forward.2} parent=0 // pred_region
    _
  $region13: #{cnn_forward.2} parent=0 // pred_fallthru
    _
  %v14 = vld [vmem:[%s1] sm:$0xff]
  %v15 = vld [vmem:[%s1 + $0x8] sm:$0x1]
  %v16 = vld [vmem:[%s2] sm:$0x1]
  %v17 = vld [vmem:[%s0] sm:$0xff]
  %v18 = vld [vmem:[%s0 + $0x8] sm:$0xff]
  %v19 = vld [vmem:[%s0 + $0x10] sm:$0xff]
  %v20 = vld [vmem:[%s0 + $0x18] sm:$0xff]
  %v21 = vld [vmem:[%s0 + $0x20] sm:$0xff]
  %v22 = vld [vmem:[%s0 + $0x28] sm:$0xff]
  %v23 = vld [vmem:[%s0 + $0x30] sm:$0xff]
  %v24 = vld [vmem:[%s0 + $0x38] sm:$0xff]
  %v25 = vld [vmem:[%s0 + $0x40] sm:$0xff]
  %v26 = vld [vmem:[%s0 + $0x48] sm:$0xff]
  %v27 = vld [vmem:[%s0 + $0x50] sm:$0xff]
  %v28 = vld [vmem:[%s0 + $0x58] sm:$0xff]
  %v29 = vld [vmem:[%s0 + $0x60] sm:$0xff]
  %v30 = vld [vmem:[%s0 + $0x68] sm:$0xff]
  %v31 = vld [vmem:[%s0 + $0x70] sm:$0xff]
  %v32 = vld [vmem:[%s0 + $0x78] sm:$0xff]
  %v33 = vld [vmem:[%s0 + $0x80] sm:$0xff]
  %v34 = vld [vmem:[%s0 + $0x88] sm:$0xff]
  %v35 = vld [vmem:[%s0 + $0x90] sm:$0xff]
  %v36 = vld [vmem:[%s0 + $0x98] sm:$0xff]
  %v37 = vld [vmem:[%s0 + $0xa0] sm:$0xff]
  %v38 = vld [vmem:[%s0 + $0xa8] sm:$0xff]
  %v39 = vld [vmem:[%s0 + $0xb0] sm:$0xff]
  %v40 = vld [vmem:[%s0 + $0xb8] sm:$0xff]
  %v41 = vld [vmem:[%s0 + $0xc0] sm:$0xff]
  %v42 = vld [vmem:[%s0 + $0xc8] sm:$0xff]
  %v43 = vld [vmem:[%s0 + $0xd0] sm:$0xff]
  %v44 = vld [vmem:[%s0 + $0xd8] sm:$0xff]
  %v45 = vld [vmem:[%s0 + $0xe0] sm:$0xff]
  %v46 = vld [vmem:[%s0 + $0xe8] sm:$0xff]
  %v47 = vld [vmem:[%s0 + $0xf0] sm:$0xff]
  %v48 = vld [vmem:[%s0 + $0xf8] sm:$0xff]
  %v49 = vld [vmem:[%s0 + $0x100] sm:$0xff]
  %v50 = vld [vmem:[%s0 + $0x108] sm:$0xff]
  %v51 = vld [vmem:[%s0 + $0x110] sm:$0xff]
  %v52 = vld [vmem:[%s0 + $0x118] sm:$0xff]
  %v53 = vld [vmem:[%s0 + $0x120] sm:$0xff]
  %v54 = vld [vmem:[%s0 + $0x128] sm:$0xff]
  %v55 = vld [vmem:[%s0 + $0x130] sm:$0xff]
  %v56 = vld [vmem:[%s0 + $0x138] sm:$0xff]
  %v57 = vld [vmem:[%s0 + $0x140] sm:$0xff]
  %v58 = vld [vmem:[%s0 + $0x148] sm:$0xff]
  %v59 = vld [vmem:[%s0 + $0x150] sm:$0xff]
  %v60 = vld [vmem:[%s0 + $0x158] sm:$0xff]
  %v61 = vld [vmem:[%s0 + $0x160] sm:$0xff]
  %v62 = vld [vmem:[%s0 + $0x168] sm:$0xff]
  %v63 = vld [vmem:[%s0 + $0x170] sm:$0xff]
  %v64 = vld [vmem:[%s0 + $0x178] sm:$0xff]
  %v65 = vld [vmem:[%s0 + $0x180] sm:$0xff]
  %v67 = vlaneseq
  %v68 = vshrl.u32 %v67, 7
  %v69 = vsub.s32 0, %v68
  %v70 = vrot.slane %v16, %v69
  %vm72 = vcmask 72704
  %v74 = vsel %vm72, %v17, 0
  %v77 = vsel %vm72, %v18, 0
  %v80 = vsel %vm72, %v19, 0
  %v83 = vsel %vm72, %v20, 0
  %v86 = vsel %vm72, %v21, 0
  %v89 = vsel %vm72, %v22, 0
  %v92 = vsel %vm72, %v23, 0
  %v95 = vsel %vm72, %v24, 0
  %v98 = vsel %vm72, %v25, 0
  %v101 = vsel %vm72, %v26, 0
  %v104 = vsel %vm72, %v27, 0
  %v107 = vsel %vm72, %v28, 0
  %v110 = vsel %vm72, %v29, 0
  %v113 = vsel %vm72, %v30, 0
  %v116 = vsel %vm72, %v31, 0
  %v119 = vsel %vm72, %v32, 0
  %v122 = vsel %vm72, %v33, 0
  %v125 = vsel %vm72, %v34, 0
  %v128 = vsel %vm72, %v35, 0
  %v131 = vsel %vm72, %v36, 0
  %v134 = vsel %vm72, %v37, 0
  %v137 = vsel %vm72, %v38, 0
  %v140 = vsel %vm72, %v39, 0
  %v143 = vsel %vm72, %v40, 0
  %v146 = vsel %vm72, %v41, 0
  %v149 = vsel %vm72, %v42, 0
  %v152 = vsel %vm72, %v43, 0
  %v155 = vsel %vm72, %v44, 0
  %v158 = vsel %vm72, %v45, 0
  %v161 = vsel %vm72, %v46, 0
  %v164 = vsel %vm72, %v47, 0
  %v167 = vsel %vm72, %v48, 0
  %v170 = vsel %vm72, %v49, 0
  %v173 = vsel %vm72, %v50, 0
  %v176 = vsel %vm72, %v51, 0
  %v179 = vsel %vm72, %v52, 0
  %v182 = vsel %vm72, %v53, 0
  %v185 = vsel %vm72, %v54, 0
  %v188 = vsel %vm72, %v55, 0
  %v191 = vsel %vm72, %v56, 0
  %v194 = vsel %vm72, %v57, 0
  %v197 = vsel %vm72, %v58, 0
  %v200 = vsel %vm72, %v59, 0
  %v203 = vsel %vm72, %v60, 0
  %v206 = vsel %vm72, %v61, 0
  %v209 = vsel %vm72, %v62, 0
  %v212 = vsel %vm72, %v63, 0
  %v215 = vsel %vm72, %v64, 0
  %v218 = vsel %vm72, %v65, 0
  %vm220 = vcmask 1040384
  %v222 = vsel %vm220, %v15, 0
  %224 = vmatprep.subr.mxu0 0.0
  %225 = vmatpush1.msra.mxu0 0.0
  %226 = vmatprep.subr.mxu0 0.0
  %227 = vmatpush1.msra.mxu0 0.0
  %228 = vmatprep.subr.mxu0 0.0
  %229 = vmatpush1.msra.mxu0 0.0
  %230 = vmatprep.subr.mxu0 0.0
  %231 = vmatpush1.msra.mxu0 0.0
  %232 = vmatprep.subr.mxu0 0.0
  %233 = vmatpush1.msra.mxu0 0.0
  %234 = vmatprep.subr.mxu0 0.0
  %235 = vmatpush1.msra.mxu0 0.0
  %236 = vmatprep.subr.mxu0 0.0
  %237 = vmatpush1.msra.mxu0 0.0
  %238 = vmatprep.subr.mxu0 0.0
  %239 = vmatpush1.msra.mxu0 0.0
  %240 = vmatprep.subr.mxu0 0.0
  %241 = vmatpush1.msra.mxu0 0.0
  %242 = vmatprep.subr.mxu0 0.0
  %243 = vmatpush1.msra.mxu0 0.0
  %244 = vmatprep.subr.mxu0 0.0
  %245 = vmatpush1.msra.mxu0 0.0
  %246 = vmatprep.subr.mxu0 0.0
  %247 = vmatpush1.msra.mxu0 0.0
  %248 = vmatprep.subr.mxu0 0.0
  %249 = vmatpush1.msra.mxu0 0.0
  %250 = vmatprep.subr.mxu0 0.0
  %251 = vmatpush1.msra.mxu0 0.0
  %252 = vmatprep.subr.mxu0 0.0
  %253 = vmatpush1.msra.mxu0 %v222
  %254 = vmatprep.subr.mxu0 0.0
  %255 = vmatpush1.msra.mxu0 %v14
  %256 = vmatprep.subr.mxu0 0.0
  %257 = vmatpush2.msra.mxu0 0.0
  %258 = vmatprep.subr.mxu0 0.0
  %259 = vmatpush2.msra.mxu0 0.0
  %260 = vmatprep.subr.mxu0 0.0
  %261 = vmatpush2.msra.mxu0 0.0
  %262 = vmatprep.subr.mxu0 0.0
  %263 = vmatpush2.msra.mxu0 0.0
  %264 = vmatprep.subr.mxu0 0.0
  %265 = vmatpush2.msra.mxu0 0.0
  %266 = vmatprep.subr.mxu0 0.0
  %267 = vmatpush2.msra.mxu0 0.0
  %268 = vmatprep.subr.mxu0 0.0
  %269 = vmatpush2.msra.mxu0 0.0
  %270 = vmatprep.subr.mxu0 0.0
  %271 = vmatpush2.msra.mxu0 0.0
  %272 = vmatprep.subr.mxu0 0.0
  %273 = vmatpush2.msra.mxu0 0.0
  %274 = vmatprep.subr.mxu0 0.0
  %275 = vmatpush2.msra.mxu0 0.0
  %276 = vmatprep.subr.mxu0 0.0
  %277 = vmatpush2.msra.mxu0 0.0
  %278 = vmatprep.subr.mxu0 0.0
  %279 = vmatpush2.msra.mxu0 0.0
  %280 = vmatprep.subr.mxu0 0.0
  %281 = vmatpush2.msra.mxu0 0.0
  %282 = vmatprep.subr.mxu0 0.0
  %283 = vmatpush2.msra.mxu0 0.0
  %284 = vmatprep.subr.mxu0 0.0
  %285 = vmatpush2.msra.mxu0 0.0
  %286 = vmatprep.subr.mxu0 0.0
  %287 = vmatpush2.msra.mxu0 0.0
  %288 = vmatprep.mubr.f32.mxu0 0.0
  %289 = vmatmul.mubr.f32.gmra.mxu0 %v74
  %v290 = vpop.f32.mrf.mxu0
  %v291 = vadd.f32 %v70, %v290
  %v292 = vpop.f32.mrf.mxu0
  %293 = vmatprep.mubr.f32.mxu0 0.0
  %294 = vmatmul.mubr.f32.gmra.mxu0 %v77
  %v295 = vpop.f32.mrf.mxu0
  %v296 = vadd.f32 %v70, %v295
  %v297 = vpop.f32.mrf.mxu0
  %298 = vmatprep.mubr.f32.mxu0 0.0
  %299 = vmatmul.mubr.f32.gmra.mxu0 %v80
  %v300 = vpop.f32.mrf.mxu0
  %v301 = vadd.f32 %v70, %v300
  %v302 = vpop.f32.mrf.mxu0
  %303 = vmatprep.mubr.f32.mxu0 0.0
  %304 = vmatmul.mubr.f32.gmra.mxu0 %v83
  %v305 = vpop.f32.mrf.mxu0
  %v306 = vadd.f32 %v70, %v305
  %v307 = vpop.f32.mrf.mxu0
  %308 = vmatprep.mubr.f32.mxu0 0.0
  %309 = vmatmul.mubr.f32.gmra.mxu0 %v86
  %v310 = vpop.f32.mrf.mxu0
  %v311 = vadd.f32 %v70, %v310
  %v312 = vpop.f32.mrf.mxu0
  %313 = vmatprep.mubr.f32.mxu0 0.0
  %314 = vmatmul.mubr.f32.gmra.mxu0 %v89
  %v315 = vpop.f32.mrf.mxu0
  %v316 = vadd.f32 %v70, %v315
  %v317 = vpop.f32.mrf.mxu0
  %318 = vmatprep.mubr.f32.mxu0 0.0
  %319 = vmatmul.mubr.f32.gmra.mxu0 %v92
  %v320 = vpop.f32.mrf.mxu0
  %v321 = vadd.f32 %v70, %v320
  %v322 = vpop.f32.mrf.mxu0
  %323 = vmatprep.mubr.f32.mxu0 0.0
  %324 = vmatmul.mubr.f32.gmra.mxu0 %v95
  %v325 = vpop.f32.mrf.mxu0
  %v326 = vadd.f32 %v70, %v325
  %v327 = vpop.f32.mrf.mxu0
  %328 = vmatprep.mubr.f32.mxu0 0.0
  %329 = vmatmul.mubr.f32.gmra.mxu0 %v98
  %v330 = vpop.f32.mrf.mxu0
  %v331 = vadd.f32 %v70, %v330
  %v332 = vpop.f32.mrf.mxu0
  %333 = vmatprep.mubr.f32.mxu0 0.0
  %334 = vmatmul.mubr.f32.gmra.mxu0 %v101
  %v335 = vpop.f32.mrf.mxu0
  %v336 = vadd.f32 %v70, %v335
  %v337 = vpop.f32.mrf.mxu0
  %338 = vmatprep.mubr.f32.mxu0 0.0
  %339 = vmatmul.mubr.f32.gmra.mxu0 %v104
  %v340 = vpop.f32.mrf.mxu0
  %v341 = vadd.f32 %v70, %v340
  %v342 = vpop.f32.mrf.mxu0
  %343 = vmatprep.mubr.f32.mxu0 0.0
  %344 = vmatmul.mubr.f32.gmra.mxu0 %v107
  %v345 = vpop.f32.mrf.mxu0
  %v346 = vadd.f32 %v70, %v345
  %v347 = vpop.f32.mrf.mxu0
  %348 = vmatprep.mubr.f32.mxu0 0.0
  %349 = vmatmul.mubr.f32.gmra.mxu0 %v110
  %v350 = vpop.f32.mrf.mxu0
  %v351 = vadd.f32 %v70, %v350
  %v352 = vpop.f32.mrf.mxu0
  %353 = vmatprep.mubr.f32.mxu0 0.0
  %354 = vmatmul.mubr.f32.gmra.mxu0 %v113
  %v355 = vpop.f32.mrf.mxu0
  %v356 = vadd.f32 %v70, %v355
  %v357 = vpop.f32.mrf.mxu0
  %358 = vmatprep.mubr.f32.mxu0 0.0
  %359 = vmatmul.mubr.f32.gmra.mxu0 %v116
  %v360 = vpop.f32.mrf.mxu0
  %v361 = vadd.f32 %v70, %v360
  %v362 = vpop.f32.mrf.mxu0
  %363 = vmatprep.mubr.f32.mxu0 0.0
  %364 = vmatmul.mubr.f32.gmra.mxu0 %v119
  %v365 = vpop.f32.mrf.mxu0
  %v366 = vadd.f32 %v70, %v365
  %v367 = vpop.f32.mrf.mxu0
  %368 = vmatprep.mubr.f32.mxu0 0.0
  %369 = vmatmul.mubr.f32.gmra.mxu0 %v122
  %v370 = vpop.f32.mrf.mxu0
  %v371 = vadd.f32 %v70, %v370
  %v372 = vpop.f32.mrf.mxu0
  %373 = vmatprep.mubr.f32.mxu0 0.0
  %374 = vmatmul.mubr.f32.gmra.mxu0 %v125
  %v375 = vpop.f32.mrf.mxu0
  %v376 = vadd.f32 %v70, %v375
  %v377 = vpop.f32.mrf.mxu0
  %378 = vmatprep.mubr.f32.mxu0 0.0
  %379 = vmatmul.mubr.f32.gmra.mxu0 %v128
  %v380 = vpop.f32.mrf.mxu0
  %v381 = vadd.f32 %v70, %v380
  %v382 = vpop.f32.mrf.mxu0
  %383 = vmatprep.mubr.f32.mxu0 0.0
  %384 = vmatmul.mubr.f32.gmra.mxu0 %v131
  %v385 = vpop.f32.mrf.mxu0
  %v386 = vadd.f32 %v70, %v385
  %v387 = vpop.f32.mrf.mxu0
  %388 = vmatprep.mubr.f32.mxu0 0.0
  %389 = vmatmul.mubr.f32.gmra.mxu0 %v134
  %v390 = vpop.f32.mrf.mxu0
  %v391 = vadd.f32 %v70, %v390
  %v392 = vpop.f32.mrf.mxu0
  %393 = vmatprep.mubr.f32.mxu0 0.0
  %394 = vmatmul.mubr.f32.gmra.mxu0 %v137
  %v395 = vpop.f32.mrf.mxu0
  %v396 = vadd.f32 %v70, %v395
  %v397 = vpop.f32.mrf.mxu0
  %398 = vmatprep.mubr.f32.mxu0 0.0
  %399 = vmatmul.mubr.f32.gmra.mxu0 %v140
  %v400 = vpop.f32.mrf.mxu0
  %v401 = vadd.f32 %v70, %v400
  %v402 = vpop.f32.mrf.mxu0
  %403 = vmatprep.mubr.f32.mxu0 0.0
  %404 = vmatmul.mubr.f32.gmra.mxu0 %v143
  %v405 = vpop.f32.mrf.mxu0
  %v406 = vadd.f32 %v70, %v405
  %v407 = vpop.f32.mrf.mxu0
  %408 = vmatprep.mubr.f32.mxu0 0.0
  %409 = vmatmul.mubr.f32.gmra.mxu0 %v146
  %v410 = vpop.f32.mrf.mxu0
  %v411 = vadd.f32 %v70, %v410
  %v412 = vpop.f32.mrf.mxu0
  %413 = vmatprep.mubr.f32.mxu0 0.0
  %414 = vmatmul.mubr.f32.gmra.mxu0 %v149
  %v415 = vpop.f32.mrf.mxu0
  %v416 = vadd.f32 %v70, %v415
  %v417 = vpop.f32.mrf.mxu0
  %418 = vmatprep.mubr.f32.mxu0 0.0
  %419 = vmatmul.mubr.f32.gmra.mxu0 %v152
  %v420 = vpop.f32.mrf.mxu0
  %v421 = vadd.f32 %v70, %v420
  %v422 = vpop.f32.mrf.mxu0
  %423 = vmatprep.mubr.f32.mxu0 0.0
  %424 = vmatmul.mubr.f32.gmra.mxu0 %v155
  %v425 = vpop.f32.mrf.mxu0
  %v426 = vadd.f32 %v70, %v425
  %v427 = vpop.f32.mrf.mxu0
  %428 = vmatprep.mubr.f32.mxu0 0.0
  %429 = vmatmul.mubr.f32.gmra.mxu0 %v158
  %v430 = vpop.f32.mrf.mxu0
  %v431 = vadd.f32 %v70, %v430
  %v432 = vpop.f32.mrf.mxu0
  %433 = vmatprep.mubr.f32.mxu0 0.0
  %434 = vmatmul.mubr.f32.gmra.mxu0 %v161
  %v435 = vpop.f32.mrf.mxu0
  %v436 = vadd.f32 %v70, %v435
  %v437 = vpop.f32.mrf.mxu0
  %438 = vmatprep.mubr.f32.mxu0 0.0
  %439 = vmatmul.mubr.f32.gmra.mxu0 %v164
  %v440 = vpop.f32.mrf.mxu0
  %v441 = vadd.f32 %v70, %v440
  %v442 = vpop.f32.mrf.mxu0
  %443 = vmatprep.mubr.f32.mxu0 0.0
  %444 = vmatmul.mubr.f32.gmra.mxu0 %v167
  %v445 = vpop.f32.mrf.mxu0
  %v446 = vadd.f32 %v70, %v445
  %v447 = vpop.f32.mrf.mxu0
  %448 = vmatprep.mubr.f32.mxu0 0.0
  %449 = vmatmul.mubr.f32.gmra.mxu0 %v170
  %v450 = vpop.f32.mrf.mxu0
  %v451 = vadd.f32 %v70, %v450
  %v452 = vpop.f32.mrf.mxu0
  %453 = vmatprep.mubr.f32.mxu0 0.0
  %454 = vmatmul.mubr.f32.gmra.mxu0 %v173
  %v455 = vpop.f32.mrf.mxu0
  %v456 = vadd.f32 %v70, %v455
  %v457 = vpop.f32.mrf.mxu0
  %458 = vmatprep.mubr.f32.mxu0 0.0
  %459 = vmatmul.mubr.f32.gmra.mxu0 %v176
  %v460 = vpop.f32.mrf.mxu0
  %v461 = vadd.f32 %v70, %v460
  %v462 = vpop.f32.mrf.mxu0
  %463 = vmatprep.mubr.f32.mxu0 0.0
  %464 = vmatmul.mubr.f32.gmra.mxu0 %v179
  %v465 = vpop.f32.mrf.mxu0
  %v466 = vadd.f32 %v70, %v465
  %v467 = vpop.f32.mrf.mxu0
  %468 = vmatprep.mubr.f32.mxu0 0.0
  %469 = vmatmul.mubr.f32.gmra.mxu0 %v182
  %v470 = vpop.f32.mrf.mxu0
  %v471 = vadd.f32 %v70, %v470
  %v472 = vpop.f32.mrf.mxu0
  %473 = vmatprep.mubr.f32.mxu0 0.0
  %474 = vmatmul.mubr.f32.gmra.mxu0 %v185
  %v475 = vpop.f32.mrf.mxu0
  %v476 = vadd.f32 %v70, %v475
  %v477 = vpop.f32.mrf.mxu0
  %478 = vmatprep.mubr.f32.mxu0 0.0
  %479 = vmatmul.mubr.f32.gmra.mxu0 %v188
  %v480 = vpop.f32.mrf.mxu0
  %v481 = vadd.f32 %v70, %v480
  %v482 = vpop.f32.mrf.mxu0
  %483 = vmatprep.mubr.f32.mxu0 0.0
  %484 = vmatmul.mubr.f32.gmra.mxu0 %v191
  %v485 = vpop.f32.mrf.mxu0
  %v486 = vadd.f32 %v70, %v485
  %v487 = vpop.f32.mrf.mxu0
  %488 = vmatprep.mubr.f32.mxu0 0.0
  %489 = vmatmul.mubr.f32.gmra.mxu0 %v194
  %v490 = vpop.f32.mrf.mxu0
  %v491 = vadd.f32 %v70, %v490
  %v492 = vpop.f32.mrf.mxu0
  %493 = vmatprep.mubr.f32.mxu0 0.0
  %494 = vmatmul.mubr.f32.gmra.mxu0 %v197
  %v495 = vpop.f32.mrf.mxu0
  %v496 = vadd.f32 %v70, %v495
  %v497 = vpop.f32.mrf.mxu0
  %498 = vmatprep.mubr.f32.mxu0 0.0
  %499 = vmatmul.mubr.f32.gmra.mxu0 %v200
  %v500 = vpop.f32.mrf.mxu0
  %v501 = vadd.f32 %v70, %v500
  %v502 = vpop.f32.mrf.mxu0
  %503 = vmatprep.mubr.f32.mxu0 0.0
  %504 = vmatmul.mubr.f32.gmra.mxu0 %v203
  %v505 = vpop.f32.mrf.mxu0
  %v506 = vadd.f32 %v70, %v505
  %v507 = vpop.f32.mrf.mxu0
  %508 = vmatprep.mubr.f32.mxu0 0.0
  %509 = vmatmul.mubr.f32.gmra.mxu0 %v206
  %v510 = vpop.f32.mrf.mxu0
  %v511 = vadd.f32 %v70, %v510
  %v512 = vpop.f32.mrf.mxu0
  %513 = vmatprep.mubr.f32.mxu0 0.0
  %514 = vmatmul.mubr.f32.gmra.mxu0 %v209
  %v515 = vpop.f32.mrf.mxu0
  %v516 = vadd.f32 %v70, %v515
  %v517 = vpop.f32.mrf.mxu0
  %518 = vmatprep.mubr.f32.mxu0 0.0
  %519 = vmatmul.mubr.f32.gmra.mxu0 %v212
  %v520 = vpop.f32.mrf.mxu0
  %v521 = vadd.f32 %v70, %v520
  %v522 = vpop.f32.mrf.mxu0
  %523 = vmatprep.mubr.f32.mxu0 0.0
  %524 = vmatmul.mubr.f32.gmra.mxu0 %v215
  %v525 = vpop.f32.mrf.mxu0
  %v526 = vadd.f32 %v70, %v525
  %v527 = vpop.f32.mrf.mxu0
  %528 = vmatprep.mubr.f32.mxu0 0.0
  %529 = vmatmul.mubr.f32.gmra.mxu0 %v218
  %v530 = vpop.f32.mrf.mxu0
  %v531 = vadd.f32 %v70, %v530
  %v532 = vpop.f32.mrf.mxu0
  %533 = vdwg.mxu0
  %v534 = vmax.f32 %v291, 0.0
  %v535 = vmax.f32 %v296, 0.0
  %v536 = vmax.f32 %v301, 0.0
  %v537 = vmax.f32 %v306, 0.0
  %v538 = vmax.f32 %v311, 0.0
  %v539 = vmax.f32 %v316, 0.0
  %v540 = vmax.f32 %v321, 0.0
  %v541 = vmax.f32 %v326, 0.0
  %v542 = vmax.f32 %v331, 0.0
  %v543 = vmax.f32 %v336, 0.0
  %v544 = vmax.f32 %v341, 0.0
  %v545 = vmax.f32 %v346, 0.0
  %v546 = vmax.f32 %v351, 0.0
  %v547 = vmax.f32 %v356, 0.0
  %v548 = vmax.f32 %v361, 0.0
  %v549 = vmax.f32 %v366, 0.0
  %v550 = vmax.f32 %v371, 0.0
  %v551 = vmax.f32 %v376, 0.0
  %v552 = vmax.f32 %v381, 0.0
  %v553 = vmax.f32 %v386, 0.0
  %v554 = vmax.f32 %v391, 0.0
  %v555 = vmax.f32 %v396, 0.0
  %v556 = vmax.f32 %v401, 0.0
  %v557 = vmax.f32 %v406, 0.0
  %v558 = vmax.f32 %v411, 0.0
  %v559 = vmax.f32 %v416, 0.0
  %v560 = vmax.f32 %v421, 0.0
  %v561 = vmax.f32 %v426, 0.0
  %v562 = vmax.f32 %v431, 0.0
  %v563 = vmax.f32 %v436, 0.0
  %v564 = vmax.f32 %v441, 0.0
  %v565 = vmax.f32 %v446, 0.0
  %v566 = vmax.f32 %v451, 0.0
  %v567 = vmax.f32 %v456, 0.0
  %v568 = vmax.f32 %v461, 0.0
  %v569 = vmax.f32 %v466, 0.0
  %v570 = vmax.f32 %v471, 0.0
  %v571 = vmax.f32 %v476, 0.0
  %v572 = vmax.f32 %v481, 0.0
  %v573 = vmax.f32 %v486, 0.0
  %v574 = vmax.f32 %v491, 0.0
  %v575 = vmax.f32 %v496, 0.0
  %v576 = vmax.f32 %v501, 0.0
  %v577 = vmax.f32 %v506, 0.0
  %v578 = vmax.f32 %v511, 0.0
  %v579 = vmax.f32 %v516, 0.0
  %v580 = vmax.f32 %v521, 0.0
  %v581 = vmax.f32 %v526, 0.0
  %v582 = vmax.f32 %v531, 0.0
  %s583 = scalar_lea.vmem %s0, 392
  %v584 = vld [vmem:[%s583] sm:$0xff]
  %v585 = vld [vmem:[%s583 + $0x8] sm:$0xff]
  %v586 = vld [vmem:[%s583 + $0x10] sm:$0xff]
  %v587 = vld [vmem:[%s583 + $0x18] sm:$0xff]
  %v588 = vld [vmem:[%s583 + $0x20] sm:$0xff]
  %v589 = vld [vmem:[%s583 + $0x28] sm:$0xff]
  %v590 = vld [vmem:[%s583 + $0x30] sm:$0xff]
  %v591 = vld [vmem:[%s583 + $0x38] sm:$0xff]
  %v592 = vld [vmem:[%s583 + $0x40] sm:$0xff]
  %v593 = vld [vmem:[%s583 + $0x48] sm:$0xff]
  %v594 = vld [vmem:[%s583 + $0x50] sm:$0xff]
  %v595 = vld [vmem:[%s583 + $0x58] sm:$0xff]
  %v596 = vld [vmem:[%s583 + $0x60] sm:$0xff]
  %v597 = vld [vmem:[%s583 + $0x68] sm:$0xff]
  %v598 = vld [vmem:[%s583 + $0x70] sm:$0xff]
  %v599 = vld [vmem:[%s583 + $0x78] sm:$0xff]
  %v600 = vld [vmem:[%s583 + $0x80] sm:$0xff]
  %v601 = vld [vmem:[%s583 + $0x88] sm:$0xff]
  %v602 = vld [vmem:[%s583 + $0x90] sm:$0xff]
  %v603 = vld [vmem:[%s583 + $0x98] sm:$0xff]
  %v604 = vld [vmem:[%s583 + $0xa0] sm:$0xff]
  %v605 = vld [vmem:[%s583 + $0xa8] sm:$0xff]
  %v606 = vld [vmem:[%s583 + $0xb0] sm:$0xff]
  %v607 = vld [vmem:[%s583 + $0xb8] sm:$0xff]
  %v608 = vld [vmem:[%s583 + $0xc0] sm:$0xff]
  %v609 = vld [vmem:[%s583 + $0xc8] sm:$0xff]
  %v610 = vld [vmem:[%s583 + $0xd0] sm:$0xff]
  %v611 = vld [vmem:[%s583 + $0xd8] sm:$0xff]
  %v612 = vld [vmem:[%s583 + $0xe0] sm:$0xff]
  %v613 = vld [vmem:[%s583 + $0xe8] sm:$0xff]
  %v614 = vld [vmem:[%s583 + $0xf0] sm:$0xff]
  %v615 = vld [vmem:[%s583 + $0xf8] sm:$0xff]
  %v616 = vld [vmem:[%s583 + $0x100] sm:$0xff]
  %v617 = vld [vmem:[%s583 + $0x108] sm:$0xff]
  %v618 = vld [vmem:[%s583 + $0x110] sm:$0xff]
  %v619 = vld [vmem:[%s583 + $0x118] sm:$0xff]
  %v620 = vld [vmem:[%s583 + $0x120] sm:$0xff]
  %v621 = vld [vmem:[%s583 + $0x128] sm:$0xff]
  %v622 = vld [vmem:[%s583 + $0x130] sm:$0xff]
  %v623 = vld [vmem:[%s583 + $0x138] sm:$0xff]
  %v624 = vld [vmem:[%s583 + $0x140] sm:$0xff]
  %v625 = vld [vmem:[%s583 + $0x148] sm:$0xff]
  %v626 = vld [vmem:[%s583 + $0x150] sm:$0xff]
  %v627 = vld [vmem:[%s583 + $0x158] sm:$0xff]
  %v628 = vld [vmem:[%s583 + $0x160] sm:$0xff]
  %v629 = vld [vmem:[%s583 + $0x168] sm:$0xff]
  %v630 = vld [vmem:[%s583 + $0x170] sm:$0xff]
  %v631 = vld [vmem:[%s583 + $0x178] sm:$0xff]
  %v632 = vld [vmem:[%s583 + $0x180] sm:$0xff]
  %v634 = vsel %vm72, %v584, 0
  %v637 = vsel %vm72, %v585, 0
  %v640 = vsel %vm72, %v586, 0
  %v643 = vsel %vm72, %v587, 0
  %v646 = vsel %vm72, %v588, 0
  %v649 = vsel %vm72, %v589, 0
  %v652 = vsel %vm72, %v590, 0
  %v655 = vsel %vm72, %v591, 0
  %v658 = vsel %vm72, %v592, 0
  %v661 = vsel %vm72, %v593, 0
  %v664 = vsel %vm72, %v594, 0
  %v667 = vsel %vm72, %v595, 0
  %v670 = vsel %vm72, %v596, 0
  %v673 = vsel %vm72, %v597, 0
  %v676 = vsel %vm72, %v598, 0
  %v679 = vsel %vm72, %v599, 0
  %v682 = vsel %vm72, %v600, 0
  %v685 = vsel %vm72, %v601, 0
  %v688 = vsel %vm72, %v602, 0
  %v691 = vsel %vm72, %v603, 0
  %v694 = vsel %vm72, %v604, 0
  %v697 = vsel %vm72, %v605, 0
  %v700 = vsel %vm72, %v606, 0
  %v703 = vsel %vm72, %v607, 0
  %v706 = vsel %vm72, %v608, 0
  %v709 = vsel %vm72, %v609, 0
  %v712 = vsel %vm72, %v610, 0
  %v715 = vsel %vm72, %v611, 0
  %v718 = vsel %vm72, %v612, 0
  %v721 = vsel %vm72, %v613, 0
  %v724 = vsel %vm72, %v614, 0
  %v727 = vsel %vm72, %v615, 0
  %v730 = vsel %vm72, %v616, 0
  %v733 = vsel %vm72, %v617, 0
  %v736 = vsel %vm72, %v618, 0
  %v739 = vsel %vm72, %v619, 0
  %v742 = vsel %vm72, %v620, 0
  %v745 = vsel %vm72, %v621, 0
  %v748 = vsel %vm72, %v622, 0
  %v751 = vsel %vm72, %v623, 0
  %v754 = vsel %vm72, %v624, 0
  %v757 = vsel %vm72, %v625, 0
  %v760 = vsel %vm72, %v626, 0
  %v763 = vsel %vm72, %v627, 0
  %v766 = vsel %vm72, %v628, 0
  %v769 = vsel %vm72, %v629, 0
  %v772 = vsel %vm72, %v630, 0
  %v775 = vsel %vm72, %v631, 0
  %v778 = vsel %vm72, %v632, 0
  %780 = vmatprep.subr.mxu0 0.0
  %781 = vmatpush1.msra.mxu0 0.0
  %782 = vmatprep.subr.mxu0 0.0
  %783 = vmatpush1.msra.mxu0 0.0
  %784 = vmatprep.subr.mxu0 0.0
  %785 = vmatpush1.msra.mxu0 0.0
  %786 = vmatprep.subr.mxu0 0.0
  %787 = vmatpush1.msra.mxu0 0.0
  %788 = vmatprep.subr.mxu0 0.0
  %789 = vmatpush1.msra.mxu0 0.0
  %790 = vmatprep.subr.mxu0 0.0
  %791 = vmatpush1.msra.mxu0 0.0
  %792 = vmatprep.subr.mxu0 0.0
  %793 = vmatpush1.msra.mxu0 0.0
  %794 = vmatprep.subr.mxu0 0.0
  %795 = vmatpush1.msra.mxu0 0.0
  %796 = vmatprep.subr.mxu0 0.0
  %797 = vmatpush1.msra.mxu0 0.0
  %798 = vmatprep.subr.mxu0 0.0
  %799 = vmatpush1.msra.mxu0 0.0
  %800 = vmatprep.subr.mxu0 0.0
  %801 = vmatpush1.msra.mxu0 0.0
  %802 = vmatprep.subr.mxu0 0.0
  %803 = vmatpush1.msra.mxu0 0.0
  %804 = vmatprep.subr.mxu0 0.0
  %805 = vmatpush1.msra.mxu0 0.0
  %806 = vmatprep.subr.mxu0 0.0
  %807 = vmatpush1.msra.mxu0 0.0
  %808 = vmatprep.subr.mxu0 0.0
  %809 = vmatpush1.msra.mxu0 %v222
  %810 = vmatprep.subr.mxu0 0.0
  %811 = vmatpush1.msra.mxu0 %v14
  %812 = vmatprep.subr.mxu0 0.0
  %813 = vmatpush2.msra.mxu0 0.0
  %814 = vmatprep.subr.mxu0 0.0
  %815 = vmatpush2.msra.mxu0 0.0
  %816 = vmatprep.subr.mxu0 0.0
  %817 = vmatpush2.msra.mxu0 0.0
  %818 = vmatprep.subr.mxu0 0.0
  %819 = vmatpush2.msra.mxu0 0.0
  %820 = vmatprep.subr.mxu0 0.0
  %821 = vmatpush2.msra.mxu0 0.0
  %822 = vmatprep.subr.mxu0 0.0
  %823 = vmatpush2.msra.mxu0 0.0
  %824 = vmatprep.subr.mxu0 0.0
  %825 = vmatpush2.msra.mxu0 0.0
  %826 = vmatprep.subr.mxu0 0.0
  %827 = vmatpush2.msra.mxu0 0.0
  %828 = vmatprep.subr.mxu0 0.0
  %829 = vmatpush2.msra.mxu0 0.0
  %830 = vmatprep.subr.mxu0 0.0
  %831 = vmatpush2.msra.mxu0 0.0
  %832 = vmatprep.subr.mxu0 0.0
  %833 = vmatpush2.msra.mxu0 0.0
  %834 = vmatprep.subr.mxu0 0.0
  %835 = vmatpush2.msra.mxu0 0.0
  %836 = vmatprep.subr.mxu0 0.0
  %837 = vmatpush2.msra.mxu0 0.0
  %838 = vmatprep.subr.mxu0 0.0
  %839 = vmatpush2.msra.mxu0 0.0
  %840 = vmatprep.subr.mxu0 0.0
  %841 = vmatpush2.msra.mxu0 0.0
  %842 = vmatprep.subr.mxu0 0.0
  %843 = vmatpush2.msra.mxu0 0.0
  %844 = vmatprep.mubr.f32.mxu0 0.0
  %845 = vmatmul.mubr.f32.gmra.mxu0 %v634
  %v846 = vpop.f32.mrf.mxu0
  %v847 = vadd.f32 %v70, %v846
  %v848 = vpop.f32.mrf.mxu0
  %849 = vmatprep.mubr.f32.mxu0 0.0
  %850 = vmatmul.mubr.f32.gmra.mxu0 %v637
  %v851 = vpop.f32.mrf.mxu0
  %v852 = vadd.f32 %v70, %v851
  %v853 = vpop.f32.mrf.mxu0
  %854 = vmatprep.mubr.f32.mxu0 0.0
  %855 = vmatmul.mubr.f32.gmra.mxu0 %v640
  %v856 = vpop.f32.mrf.mxu0
  %v857 = vadd.f32 %v70, %v856
  %v858 = vpop.f32.mrf.mxu0
  %859 = vmatprep.mubr.f32.mxu0 0.0
  %860 = vmatmul.mubr.f32.gmra.mxu0 %v643
  %v861 = vpop.f32.mrf.mxu0
  %v862 = vadd.f32 %v70, %v861
  %v863 = vpop.f32.mrf.mxu0
  %864 = vmatprep.mubr.f32.mxu0 0.0
  %865 = vmatmul.mubr.f32.gmra.mxu0 %v646
  %v866 = vpop.f32.mrf.mxu0
  %v867 = vadd.f32 %v70, %v866
  %v868 = vpop.f32.mrf.mxu0
  %869 = vmatprep.mubr.f32.mxu0 0.0
  %870 = vmatmul.mubr.f32.gmra.mxu0 %v649
  %v871 = vpop.f32.mrf.mxu0
  %v872 = vadd.f32 %v70, %v871
  %v873 = vpop.f32.mrf.mxu0
  %874 = vmatprep.mubr.f32.mxu0 0.0
  %875 = vmatmul.mubr.f32.gmra.mxu0 %v652
  %v876 = vpop.f32.mrf.mxu0
  %v877 = vadd.f32 %v70, %v876
  %v878 = vpop.f32.mrf.mxu0
  %879 = vmatprep.mubr.f32.mxu0 0.0
  %880 = vmatmul.mubr.f32.gmra.mxu0 %v655
  %v881 = vpop.f32.mrf.mxu0
  %v882 = vadd.f32 %v70, %v881
  %v883 = vpop.f32.mrf.mxu0
  %884 = vmatprep.mubr.f32.mxu0 0.0
  %885 = vmatmul.mubr.f32.gmra.mxu0 %v658
  %v886 = vpop.f32.mrf.mxu0
  %v887 = vadd.f32 %v70, %v886
  %v888 = vpop.f32.mrf.mxu0
  %889 = vmatprep.mubr.f32.mxu0 0.0
  %890 = vmatmul.mubr.f32.gmra.mxu0 %v661
  %v891 = vpop.f32.mrf.mxu0
  %v892 = vadd.f32 %v70, %v891
  %v893 = vpop.f32.mrf.mxu0
  %894 = vmatprep.mubr.f32.mxu0 0.0
  %895 = vmatmul.mubr.f32.gmra.mxu0 %v664
  %v896 = vpop.f32.mrf.mxu0
  %v897 = vadd.f32 %v70, %v896
  %v898 = vpop.f32.mrf.mxu0
  %899 = vmatprep.mubr.f32.mxu0 0.0
  %900 = vmatmul.mubr.f32.gmra.mxu0 %v667
  %v901 = vpop.f32.mrf.mxu0
  %v902 = vadd.f32 %v70, %v901
  %v903 = vpop.f32.mrf.mxu0
  %904 = vmatprep.mubr.f32.mxu0 0.0
  %905 = vmatmul.mubr.f32.gmra.mxu0 %v670
  %v906 = vpop.f32.mrf.mxu0
  %v907 = vadd.f32 %v70, %v906
  %v908 = vpop.f32.mrf.mxu0
  %909 = vmatprep.mubr.f32.mxu0 0.0
  %910 = vmatmul.mubr.f32.gmra.mxu0 %v673
  %v911 = vpop.f32.mrf.mxu0
  %v912 = vadd.f32 %v70, %v911
  %v913 = vpop.f32.mrf.mxu0
  %914 = vmatprep.mubr.f32.mxu0 0.0
  %915 = vmatmul.mubr.f32.gmra.mxu0 %v676
  %v916 = vpop.f32.mrf.mxu0
  %v917 = vadd.f32 %v70, %v916
  %v918 = vpop.f32.mrf.mxu0
  %919 = vmatprep.mubr.f32.mxu0 0.0
  %920 = vmatmul.mubr.f32.gmra.mxu0 %v679
  %v921 = vpop.f32.mrf.mxu0
  %v922 = vadd.f32 %v70, %v921
  %v923 = vpop.f32.mrf.mxu0
  %924 = vmatprep.mubr.f32.mxu0 0.0
  %925 = vmatmul.mubr.f32.gmra.mxu0 %v682
  %v926 = vpop.f32.mrf.mxu0
  %v927 = vadd.f32 %v70, %v926
  %v928 = vpop.f32.mrf.mxu0
  %929 = vmatprep.mubr.f32.mxu0 0.0
  %930 = vmatmul.mubr.f32.gmra.mxu0 %v685
  %v931 = vpop.f32.mrf.mxu0
  %v932 = vadd.f32 %v70, %v931
  %v933 = vpop.f32.mrf.mxu0
  %934 = vmatprep.mubr.f32.mxu0 0.0
  %935 = vmatmul.mubr.f32.gmra.mxu0 %v688
  %v936 = vpop.f32.mrf.mxu0
  %v937 = vadd.f32 %v70, %v936
  %v938 = vpop.f32.mrf.mxu0
  %939 = vmatprep.mubr.f32.mxu0 0.0
  %940 = vmatmul.mubr.f32.gmra.mxu0 %v691
  %v941 = vpop.f32.mrf.mxu0
  %v942 = vadd.f32 %v70, %v941
  %v943 = vpop.f32.mrf.mxu0
  %944 = vmatprep.mubr.f32.mxu0 0.0
  %945 = vmatmul.mubr.f32.gmra.mxu0 %v694
  %v946 = vpop.f32.mrf.mxu0
  %v947 = vadd.f32 %v70, %v946
  %v948 = vpop.f32.mrf.mxu0
  %949 = vmatprep.mubr.f32.mxu0 0.0
  %950 = vmatmul.mubr.f32.gmra.mxu0 %v697
  %v951 = vpop.f32.mrf.mxu0
  %v952 = vadd.f32 %v70, %v951
  %v953 = vpop.f32.mrf.mxu0
  %954 = vmatprep.mubr.f32.mxu0 0.0
  %955 = vmatmul.mubr.f32.gmra.mxu0 %v700
  %v956 = vpop.f32.mrf.mxu0
  %v957 = vadd.f32 %v70, %v956
  %v958 = vpop.f32.mrf.mxu0
  %959 = vmatprep.mubr.f32.mxu0 0.0
  %960 = vmatmul.mubr.f32.gmra.mxu0 %v703
  %v961 = vpop.f32.mrf.mxu0
  %v962 = vadd.f32 %v70, %v961
  %v963 = vpop.f32.mrf.mxu0
  %964 = vmatprep.mubr.f32.mxu0 0.0
  %965 = vmatmul.mubr.f32.gmra.mxu0 %v706
  %v966 = vpop.f32.mrf.mxu0
  %v967 = vadd.f32 %v70, %v966
  %v968 = vpop.f32.mrf.mxu0
  %969 = vmatprep.mubr.f32.mxu0 0.0
  %970 = vmatmul.mubr.f32.gmra.mxu0 %v709
  %v971 = vpop.f32.mrf.mxu0
  %v972 = vadd.f32 %v70, %v971
  %v973 = vpop.f32.mrf.mxu0
  %974 = vmatprep.mubr.f32.mxu0 0.0
  %975 = vmatmul.mubr.f32.gmra.mxu0 %v712
  %v976 = vpop.f32.mrf.mxu0
  %v977 = vadd.f32 %v70, %v976
  %v978 = vpop.f32.mrf.mxu0
  %979 = vmatprep.mubr.f32.mxu0 0.0
  %980 = vmatmul.mubr.f32.gmra.mxu0 %v715
  %v981 = vpop.f32.mrf.mxu0
  %v982 = vadd.f32 %v70, %v981
  %v983 = vpop.f32.mrf.mxu0
  %984 = vmatprep.mubr.f32.mxu0 0.0
  %985 = vmatmul.mubr.f32.gmra.mxu0 %v718
  %v986 = vpop.f32.mrf.mxu0
  %v987 = vadd.f32 %v70, %v986
  %v988 = vpop.f32.mrf.mxu0
  %989 = vmatprep.mubr.f32.mxu0 0.0
  %990 = vmatmul.mubr.f32.gmra.mxu0 %v721
  %v991 = vpop.f32.mrf.mxu0
  %v992 = vadd.f32 %v70, %v991
  %v993 = vpop.f32.mrf.mxu0
  %994 = vmatprep.mubr.f32.mxu0 0.0
  %995 = vmatmul.mubr.f32.gmra.mxu0 %v724
  %v996 = vpop.f32.mrf.mxu0
  %v997 = vadd.f32 %v70, %v996
  %v998 = vpop.f32.mrf.mxu0
  %999 = vmatprep.mubr.f32.mxu0 0.0
  %1000 = vmatmul.mubr.f32.gmra.mxu0 %v727
  %v1001 = vpop.f32.mrf.mxu0
  %v1002 = vadd.f32 %v70, %v1001
  %v1003 = vpop.f32.mrf.mxu0
  %1004 = vmatprep.mubr.f32.mxu0 0.0
  %1005 = vmatmul.mubr.f32.gmra.mxu0 %v730
  %v1006 = vpop.f32.mrf.mxu0
  %v1007 = vadd.f32 %v70, %v1006
  %v1008 = vpop.f32.mrf.mxu0
  %1009 = vmatprep.mubr.f32.mxu0 0.0
  %1010 = vmatmul.mubr.f32.gmra.mxu0 %v733
  %v1011 = vpop.f32.mrf.mxu0
  %v1012 = vadd.f32 %v70, %v1011
  %v1013 = vpop.f32.mrf.mxu0
  %1014 = vmatprep.mubr.f32.mxu0 0.0
  %1015 = vmatmul.mubr.f32.gmra.mxu0 %v736
  %v1016 = vpop.f32.mrf.mxu0
  %v1017 = vadd.f32 %v70, %v1016
  %v1018 = vpop.f32.mrf.mxu0
  %1019 = vmatprep.mubr.f32.mxu0 0.0
  %1020 = vmatmul.mubr.f32.gmra.mxu0 %v739
  %v1021 = vpop.f32.mrf.mxu0
  %v1022 = vadd.f32 %v70, %v1021
  %v1023 = vpop.f32.mrf.mxu0
  %1024 = vmatprep.mubr.f32.mxu0 0.0
  %1025 = vmatmul.mubr.f32.gmra.mxu0 %v742
  %v1026 = vpop.f32.mrf.mxu0
  %v1027 = vadd.f32 %v70, %v1026
  %v1028 = vpop.f32.mrf.mxu0
  %1029 = vmatprep.mubr.f32.mxu0 0.0
  %1030 = vmatmul.mubr.f32.gmra.mxu0 %v745
  %v1031 = vpop.f32.mrf.mxu0
  %v1032 = vadd.f32 %v70, %v1031
  %v1033 = vpop.f32.mrf.mxu0
  %1034 = vmatprep.mubr.f32.mxu0 0.0
  %1035 = vmatmul.mubr.f32.gmra.mxu0 %v748
  %v1036 = vpop.f32.mrf.mxu0
  %v1037 = vadd.f32 %v70, %v1036
  %v1038 = vpop.f32.mrf.mxu0
  %1039 = vmatprep.mubr.f32.mxu0 0.0
  %1040 = vmatmul.mubr.f32.gmra.mxu0 %v751
  %v1041 = vpop.f32.mrf.mxu0
  %v1042 = vadd.f32 %v70, %v1041
  %v1043 = vpop.f32.mrf.mxu0
  %1044 = vmatprep.mubr.f32.mxu0 0.0
  %1045 = vmatmul.mubr.f32.gmra.mxu0 %v754
  %v1046 = vpop.f32.mrf.mxu0
  %v1047 = vadd.f32 %v70, %v1046
  %v1048 = vpop.f32.mrf.mxu0
  %1049 = vmatprep.mubr.f32.mxu0 0.0
  %1050 = vmatmul.mubr.f32.gmra.mxu0 %v757
  %v1051 = vpop.f32.mrf.mxu0
  %v1052 = vadd.f32 %v70, %v1051
  %v1053 = vpop.f32.mrf.mxu0
  %1054 = vmatprep.mubr.f32.mxu0 0.0
  %1055 = vmatmul.mubr.f32.gmra.mxu0 %v760
  %v1056 = vpop.f32.mrf.mxu0
  %v1057 = vadd.f32 %v70, %v1056
  %v1058 = vpop.f32.mrf.mxu0
  %1059 = vmatprep.mubr.f32.mxu0 0.0
  %1060 = vmatmul.mubr.f32.gmra.mxu0 %v763
  %v1061 = vpop.f32.mrf.mxu0
  %v1062 = vadd.f32 %v70, %v1061
  %v1063 = vpop.f32.mrf.mxu0
  %1064 = vmatprep.mubr.f32.mxu0 0.0
  %1065 = vmatmul.mubr.f32.gmra.mxu0 %v766
  %v1066 = vpop.f32.mrf.mxu0
  %v1067 = vadd.f32 %v70, %v1066
  %v1068 = vpop.f32.mrf.mxu0
  %1069 = vmatprep.mubr.f32.mxu0 0.0
  %1070 = vmatmul.mubr.f32.gmra.mxu0 %v769
  %v1071 = vpop.f32.mrf.mxu0
  %v1072 = vadd.f32 %v70, %v1071
  %v1073 = vpop.f32.mrf.mxu0
  %1074 = vmatprep.mubr.f32.mxu0 0.0
  %1075 = vmatmul.mubr.f32.gmra.mxu0 %v772
  %v1076 = vpop.f32.mrf.mxu0
  %v1077 = vadd.f32 %v70, %v1076
  %v1078 = vpop.f32.mrf.mxu0
  %1079 = vmatprep.mubr.f32.mxu0 0.0
  %1080 = vmatmul.mubr.f32.gmra.mxu0 %v775
  %v1081 = vpop.f32.mrf.mxu0
  %v1082 = vadd.f32 %v70, %v1081
  %v1083 = vpop.f32.mrf.mxu0
  %1084 = vmatprep.mubr.f32.mxu0 0.0
  %1085 = vmatmul.mubr.f32.gmra.mxu0 %v778
  %v1086 = vpop.f32.mrf.mxu0
  %v1087 = vadd.f32 %v70, %v1086
  %v1088 = vpop.f32.mrf.mxu0
  %1089 = vdwg.mxu0
  %v1090 = vmax.f32 %v847, 0.0
  %v1091 = vmax.f32 %v852, 0.0
  %v1092 = vmax.f32 %v857, 0.0
  %v1093 = vmax.f32 %v862, 0.0
  %v1094 = vmax.f32 %v867, 0.0
  %v1095 = vmax.f32 %v872, 0.0
  %v1096 = vmax.f32 %v877, 0.0
  %v1097 = vmax.f32 %v882, 0.0
  %v1098 = vmax.f32 %v887, 0.0
  %v1099 = vmax.f32 %v892, 0.0
  %v1100 = vmax.f32 %v897, 0.0
  %v1101 = vmax.f32 %v902, 0.0
  %v1102 = vmax.f32 %v907, 0.0
  %v1103 = vmax.f32 %v912, 0.0
  %v1104 = vmax.f32 %v917, 0.0
  %v1105 = vmax.f32 %v922, 0.0
  %v1106 = vmax.f32 %v927, 0.0
  %v1107 = vmax.f32 %v932, 0.0
  %v1108 = vmax.f32 %v937, 0.0
  %v1109 = vmax.f32 %v942, 0.0
  %v1110 = vmax.f32 %v947, 0.0
  %v1111 = vmax.f32 %v952, 0.0
  %v1112 = vmax.f32 %v957, 0.0
  %v1113 = vmax.f32 %v962, 0.0
  %v1114 = vmax.f32 %v967, 0.0
  %v1115 = vmax.f32 %v972, 0.0
  %v1116 = vmax.f32 %v977, 0.0
  %v1117 = vmax.f32 %v982, 0.0
  %v1118 = vmax.f32 %v987, 0.0
  %v1119 = vmax.f32 %v992, 0.0
  %v1120 = vmax.f32 %v997, 0.0
  %v1121 = vmax.f32 %v1002, 0.0
  %v1122 = vmax.f32 %v1007, 0.0
  %v1123 = vmax.f32 %v1012, 0.0
  %v1124 = vmax.f32 %v1017, 0.0
  %v1125 = vmax.f32 %v1022, 0.0
  %v1126 = vmax.f32 %v1027, 0.0
  %v1127 = vmax.f32 %v1032, 0.0
  %v1128 = vmax.f32 %v1037, 0.0
  %v1129 = vmax.f32 %v1042, 0.0
  %v1130 = vmax.f32 %v1047, 0.0
  %v1131 = vmax.f32 %v1052, 0.0
  %v1132 = vmax.f32 %v1057, 0.0
  %v1133 = vmax.f32 %v1062, 0.0
  %v1134 = vmax.f32 %v1067, 0.0
  %v1135 = vmax.f32 %v1072, 0.0
  %v1136 = vmax.f32 %v1077, 0.0
  %v1137 = vmax.f32 %v1082, 0.0
  %v1138 = vmax.f32 %v1087, 0.0
  %s1139 = scalar_lea.vmem %s0, 784
  %v1140 = vld [vmem:[%s1139] sm:$0xff]
  %v1141 = vld [vmem:[%s1139 + $0x8] sm:$0xff]
  %v1142 = vld [vmem:[%s1139 + $0x10] sm:$0xff]
  %v1143 = vld [vmem:[%s1139 + $0x18] sm:$0xff]
  %v1144 = vld [vmem:[%s1139 + $0x20] sm:$0xff]
  %v1145 = vld [vmem:[%s1139 + $0x28] sm:$0xff]
  %v1146 = vld [vmem:[%s1139 + $0x30] sm:$0xff]
  %v1147 = vld [vmem:[%s1139 + $0x38] sm:$0xff]
  %v1148 = vld [vmem:[%s1139 + $0x40] sm:$0xff]
  %v1149 = vld [vmem:[%s1139 + $0x48] sm:$0xff]
  %v1150 = vld [vmem:[%s1139 + $0x50] sm:$0xff]
  %v1151 = vld [vmem:[%s1139 + $0x58] sm:$0xff]
  %v1152 = vld [vmem:[%s1139 + $0x60] sm:$0xff]
  %v1153 = vld [vmem:[%s1139 + $0x68] sm:$0xff]
  %v1154 = vld [vmem:[%s1139 + $0x70] sm:$0xff]
  %v1155 = vld [vmem:[%s1139 + $0x78] sm:$0xff]
  %v1156 = vld [vmem:[%s1139 + $0x80] sm:$0xff]
  %v1157 = vld [vmem:[%s1139 + $0x88] sm:$0xff]
  %v1158 = vld [vmem:[%s1139 + $0x90] sm:$0xff]
  %v1159 = vld [vmem:[%s1139 + $0x98] sm:$0xff]
  %v1160 = vld [vmem:[%s1139 + $0xa0] sm:$0xff]
  %v1161 = vld [vmem:[%s1139 + $0xa8] sm:$0xff]
  %v1162 = vld [vmem:[%s1139 + $0xb0] sm:$0xff]
  %v1163 = vld [vmem:[%s1139 + $0xb8] sm:$0xff]
  %v1164 = vld [vmem:[%s1139 + $0xc0] sm:$0xff]
  %v1165 = vld [vmem:[%s1139 + $0xc8] sm:$0xff]
  %v1166 = vld [vmem:[%s1139 + $0xd0] sm:$0xff]
  %v1167 = vld [vmem:[%s1139 + $0xd8] sm:$0xff]
  %v1168 = vld [vmem:[%s1139 + $0xe0] sm:$0xff]
  %v1169 = vld [vmem:[%s1139 + $0xe8] sm:$0xff]
  %v1170 = vld [vmem:[%s1139 + $0xf0] sm:$0xff]
  %v1171 = vld [vmem:[%s1139 + $0xf8] sm:$0xff]
  %v1172 = vld [vmem:[%s1139 + $0x100] sm:$0xff]
  %v1173 = vld [vmem:[%s1139 + $0x108] sm:$0xff]
  %v1174 = vld [vmem:[%s1139 + $0x110] sm:$0xff]
  %v1175 = vld [vmem:[%s1139 + $0x118] sm:$0xff]
  %v1176 = vld [vmem:[%s1139 + $0x120] sm:$0xff]
  %v1177 = vld [vmem:[%s1139 + $0x128] sm:$0xff]
  %v1178 = vld [vmem:[%s1139 + $0x130] sm:$0xff]
  %v1179 = vld [vmem:[%s1139 + $0x138] sm:$0xff]
  %v1180 = vld [vmem:[%s1139 + $0x140] sm:$0xff]
  %v1181 = vld [vmem:[%s1139 + $0x148] sm:$0xff]
  %v1182 = vld [vmem:[%s1139 + $0x150] sm:$0xff]
  %v1183 = vld [vmem:[%s1139 + $0x158] sm:$0xff]
  %v1184 = vld [vmem:[%s1139 + $0x160] sm:$0xff]
  %v1185 = vld [vmem:[%s1139 + $0x168] sm:$0xff]
  %v1186 = vld [vmem:[%s1139 + $0x170] sm:$0xff]
  %v1187 = vld [vmem:[%s1139 + $0x178] sm:$0xff]
  %v1188 = vld [vmem:[%s1139 + $0x180] sm:$0xff]
  %v1190 = vsel %vm72, %v1140, 0
  %v1193 = vsel %vm72, %v1141, 0
  %v1196 = vsel %vm72, %v1142, 0
  %v1199 = vsel %vm72, %v1143, 0
  %v1202 = vsel %vm72, %v1144, 0
  %v1205 = vsel %vm72, %v1145, 0
  %v1208 = vsel %vm72, %v1146, 0
  %v1211 = vsel %vm72, %v1147, 0
  %v1214 = vsel %vm72, %v1148, 0
  %v1217 = vsel %vm72, %v1149, 0
  %v1220 = vsel %vm72, %v1150, 0
  %v1223 = vsel %vm72, %v1151, 0
  %v1226 = vsel %vm72, %v1152, 0
  %v1229 = vsel %vm72, %v1153, 0
  %v1232 = vsel %vm72, %v1154, 0
  %v1235 = vsel %vm72, %v1155, 0
  %v1238 = vsel %vm72, %v1156, 0
  %v1241 = vsel %vm72, %v1157, 0
  %v1244 = vsel %vm72, %v1158, 0
  %v1247 = vsel %vm72, %v1159, 0
  %v1250 = vsel %vm72, %v1160, 0
  %v1253 = vsel %vm72, %v1161, 0
  %v1256 = vsel %vm72, %v1162, 0
  %v1259 = vsel %vm72, %v1163, 0
  %v1262 = vsel %vm72, %v1164, 0
  %v1265 = vsel %vm72, %v1165, 0
  %v1268 = vsel %vm72, %v1166, 0
  %v1271 = vsel %vm72, %v1167, 0
  %v1274 = vsel %vm72, %v1168, 0
  %v1277 = vsel %vm72, %v1169, 0
  %v1280 = vsel %vm72, %v1170, 0
  %v1283 = vsel %vm72, %v1171, 0
  %v1286 = vsel %vm72, %v1172, 0
  %v1289 = vsel %vm72, %v1173, 0
  %v1292 = vsel %vm72, %v1174, 0
  %v1295 = vsel %vm72, %v1175, 0
  %v1298 = vsel %vm72, %v1176, 0
  %v1301 = vsel %vm72, %v1177, 0
  %v1304 = vsel %vm72, %v1178, 0
  %v1307 = vsel %vm72, %v1179, 0
  %v1310 = vsel %vm72, %v1180, 0
  %v1313 = vsel %vm72, %v1181, 0
  %v1316 = vsel %vm72, %v1182, 0
  %v1319 = vsel %vm72, %v1183, 0
  %v1322 = vsel %vm72, %v1184, 0
  %v1325 = vsel %vm72, %v1185, 0
  %v1328 = vsel %vm72, %v1186, 0
  %v1331 = vsel %vm72, %v1187, 0
  %v1334 = vsel %vm72, %v1188, 0
  %1336 = vmatprep.subr.mxu0 0.0
  %1337 = vmatpush1.msra.mxu0 0.0
  %1338 = vmatprep.subr.mxu0 0.0
  %1339 = vmatpush1.msra.mxu0 0.0
  %1340 = vmatprep.subr.mxu0 0.0
  %1341 = vmatpush1.msra.mxu0 0.0
  %1342 = vmatprep.subr.mxu0 0.0
  %1343 = vmatpush1.msra.mxu0 0.0
  %1344 = vmatprep.subr.mxu0 0.0
  %1345 = vmatpush1.msra.mxu0 0.0
  %1346 = vmatprep.subr.mxu0 0.0
  %1347 = vmatpush1.msra.mxu0 0.0
  %1348 = vmatprep.subr.mxu0 0.0
  %1349 = vmatpush1.msra.mxu0 0.0
  %1350 = vmatprep.subr.mxu0 0.0
  %1351 = vmatpush1.msra.mxu0 0.0
  %1352 = vmatprep.subr.mxu0 0.0
  %1353 = vmatpush1.msra.mxu0 0.0
  %1354 = vmatprep.subr.mxu0 0.0
  %1355 = vmatpush1.msra.mxu0 0.0
  %1356 = vmatprep.subr.mxu0 0.0
  %1357 = vmatpush1.msra.mxu0 0.0
  %1358 = vmatprep.subr.mxu0 0.0
  %1359 = vmatpush1.msra.mxu0 0.0
  %1360 = vmatprep.subr.mxu0 0.0
  %1361 = vmatpush1.msra.mxu0 0.0
  %1362 = vmatprep.subr.mxu0 0.0
  %1363 = vmatpush1.msra.mxu0 0.0
  %1364 = vmatprep.subr.mxu0 0.0
  %1365 = vmatpush1.msra.mxu0 %v222
  %1366 = vmatprep.subr.mxu0 0.0
  %1367 = vmatpush1.msra.mxu0 %v14
  %1368 = vmatprep.subr.mxu0 0.0
  %1369 = vmatpush2.msra.mxu0 0.0
  %1370 = vmatprep.subr.mxu0 0.0
  %1371 = vmatpush2.msra.mxu0 0.0
  %1372 = vmatprep.subr.mxu0 0.0
  %1373 = vmatpush2.msra.mxu0 0.0
  %1374 = vmatprep.subr.mxu0 0.0
  %1375 = vmatpush2.msra.mxu0 0.0
  %1376 = vmatprep.subr.mxu0 0.0
  %1377 = vmatpush2.msra.mxu0 0.0
  %1378 = vmatprep.subr.mxu0 0.0
  %1379 = vmatpush2.msra.mxu0 0.0
  %1380 = vmatprep.subr.mxu0 0.0
  %1381 = vmatpush2.msra.mxu0 0.0
  %1382 = vmatprep.subr.mxu0 0.0
  %1383 = vmatpush2.msra.mxu0 0.0
  %1384 = vmatprep.subr.mxu0 0.0
  %1385 = vmatpush2.msra.mxu0 0.0
  %1386 = vmatprep.subr.mxu0 0.0
  %1387 = vmatpush2.msra.mxu0 0.0
  %1388 = vmatprep.subr.mxu0 0.0
  %1389 = vmatpush2.msra.mxu0 0.0
  %1390 = vmatprep.subr.mxu0 0.0
  %1391 = vmatpush2.msra.mxu0 0.0
  %1392 = vmatprep.subr.mxu0 0.0
  %1393 = vmatpush2.msra.mxu0 0.0
  %1394 = vmatprep.subr.mxu0 0.0
  %1395 = vmatpush2.msra.mxu0 0.0
  %1396 = vmatprep.subr.mxu0 0.0
  %1397 = vmatpush2.msra.mxu0 0.0
  %1398 = vmatprep.subr.mxu0 0.0
  %1399 = vmatpush2.msra.mxu0 0.0
  %1400 = vmatprep.mubr.f32.mxu0 0.0
  %1401 = vmatmul.mubr.f32.gmra.mxu0 %v1190
  %v1402 = vpop.f32.mrf.mxu0
  %v1403 = vadd.f32 %v70, %v1402
  %v1404 = vpop.f32.mrf.mxu0
  %1405 = vmatprep.mubr.f32.mxu0 0.0
  %1406 = vmatmul.mubr.f32.gmra.mxu0 %v1193
  %v1407 = vpop.f32.mrf.mxu0
  %v1408 = vadd.f32 %v70, %v1407
  %v1409 = vpop.f32.mrf.mxu0
  %1410 = vmatprep.mubr.f32.mxu0 0.0
  %1411 = vmatmul.mubr.f32.gmra.mxu0 %v1196
  %v1412 = vpop.f32.mrf.mxu0
  %v1413 = vadd.f32 %v70, %v1412
  %v1414 = vpop.f32.mrf.mxu0
  %1415 = vmatprep.mubr.f32.mxu0 0.0
  %1416 = vmatmul.mubr.f32.gmra.mxu0 %v1199
  %v1417 = vpop.f32.mrf.mxu0
  %v1418 = vadd.f32 %v70, %v1417
  %v1419 = vpop.f32.mrf.mxu0
  %1420 = vmatprep.mubr.f32.mxu0 0.0
  %1421 = vmatmul.mubr.f32.gmra.mxu0 %v1202
  %v1422 = vpop.f32.mrf.mxu0
  %v1423 = vadd.f32 %v70, %v1422
  %v1424 = vpop.f32.mrf.mxu0
  %1425 = vmatprep.mubr.f32.mxu0 0.0
  %1426 = vmatmul.mubr.f32.gmra.mxu0 %v1205
  %v1427 = vpop.f32.mrf.mxu0
  %v1428 = vadd.f32 %v70, %v1427
  %v1429 = vpop.f32.mrf.mxu0
  %1430 = vmatprep.mubr.f32.mxu0 0.0
  %1431 = vmatmul.mubr.f32.gmra.mxu0 %v1208
  %v1432 = vpop.f32.mrf.mxu0
  %v1433 = vadd.f32 %v70, %v1432
  %v1434 = vpop.f32.mrf.mxu0
  %1435 = vmatprep.mubr.f32.mxu0 0.0
  %1436 = vmatmul.mubr.f32.gmra.mxu0 %v1211
  %v1437 = vpop.f32.mrf.mxu0
  %v1438 = vadd.f32 %v70, %v1437
  %v1439 = vpop.f32.mrf.mxu0
  %1440 = vmatprep.mubr.f32.mxu0 0.0
  %1441 = vmatmul.mubr.f32.gmra.mxu0 %v1214
  %v1442 = vpop.f32.mrf.mxu0
  %v1443 = vadd.f32 %v70, %v1442
  %v1444 = vpop.f32.mrf.mxu0
  %1445 = vmatprep.mubr.f32.mxu0 0.0
  %1446 = vmatmul.mubr.f32.gmra.mxu0 %v1217
  %v1447 = vpop.f32.mrf.mxu0
  %v1448 = vadd.f32 %v70, %v1447
  %v1449 = vpop.f32.mrf.mxu0
  %1450 = vmatprep.mubr.f32.mxu0 0.0
  %1451 = vmatmul.mubr.f32.gmra.mxu0 %v1220
  %v1452 = vpop.f32.mrf.mxu0
  %v1453 = vadd.f32 %v70, %v1452
  %v1454 = vpop.f32.mrf.mxu0
  %1455 = vmatprep.mubr.f32.mxu0 0.0
  %1456 = vmatmul.mubr.f32.gmra.mxu0 %v1223
  %v1457 = vpop.f32.mrf.mxu0
  %v1458 = vadd.f32 %v70, %v1457
  %v1459 = vpop.f32.mrf.mxu0
  %1460 = vmatprep.mubr.f32.mxu0 0.0
  %1461 = vmatmul.mubr.f32.gmra.mxu0 %v1226
  %v1462 = vpop.f32.mrf.mxu0
  %v1463 = vadd.f32 %v70, %v1462
  %v1464 = vpop.f32.mrf.mxu0
  %1465 = vmatprep.mubr.f32.mxu0 0.0
  %1466 = vmatmul.mubr.f32.gmra.mxu0 %v1229
  %v1467 = vpop.f32.mrf.mxu0
  %v1468 = vadd.f32 %v70, %v1467
  %v1469 = vpop.f32.mrf.mxu0
  %1470 = vmatprep.mubr.f32.mxu0 0.0
  %1471 = vmatmul.mubr.f32.gmra.mxu0 %v1232
  %v1472 = vpop.f32.mrf.mxu0
  %v1473 = vadd.f32 %v70, %v1472
  %v1474 = vpop.f32.mrf.mxu0
  %1475 = vmatprep.mubr.f32.mxu0 0.0
  %1476 = vmatmul.mubr.f32.gmra.mxu0 %v1235
  %v1477 = vpop.f32.mrf.mxu0
  %v1478 = vadd.f32 %v70, %v1477
  %v1479 = vpop.f32.mrf.mxu0
  %1480 = vmatprep.mubr.f32.mxu0 0.0
  %1481 = vmatmul.mubr.f32.gmra.mxu0 %v1238
  %v1482 = vpop.f32.mrf.mxu0
  %v1483 = vadd.f32 %v70, %v1482
  %v1484 = vpop.f32.mrf.mxu0
  %1485 = vmatprep.mubr.f32.mxu0 0.0
  %1486 = vmatmul.mubr.f32.gmra.mxu0 %v1241
  %v1487 = vpop.f32.mrf.mxu0
  %v1488 = vadd.f32 %v70, %v1487
  %v1489 = vpop.f32.mrf.mxu0
  %1490 = vmatprep.mubr.f32.mxu0 0.0
  %1491 = vmatmul.mubr.f32.gmra.mxu0 %v1244
  %v1492 = vpop.f32.mrf.mxu0
  %v1493 = vadd.f32 %v70, %v1492
  %v1494 = vpop.f32.mrf.mxu0
  %1495 = vmatprep.mubr.f32.mxu0 0.0
  %1496 = vmatmul.mubr.f32.gmra.mxu0 %v1247
  %v1497 = vpop.f32.mrf.mxu0
  %v1498 = vadd.f32 %v70, %v1497
  %v1499 = vpop.f32.mrf.mxu0
  %1500 = vmatprep.mubr.f32.mxu0 0.0
  %1501 = vmatmul.mubr.f32.gmra.mxu0 %v1250
  %v1502 = vpop.f32.mrf.mxu0
  %v1503 = vadd.f32 %v70, %v1502
  %v1504 = vpop.f32.mrf.mxu0
  %1505 = vmatprep.mubr.f32.mxu0 0.0
  %1506 = vmatmul.mubr.f32.gmra.mxu0 %v1253
  %v1507 = vpop.f32.mrf.mxu0
  %v1508 = vadd.f32 %v70, %v1507
  %v1509 = vpop.f32.mrf.mxu0
  %1510 = vmatprep.mubr.f32.mxu0 0.0
  %1511 = vmatmul.mubr.f32.gmra.mxu0 %v1256
  %v1512 = vpop.f32.mrf.mxu0
  %v1513 = vadd.f32 %v70, %v1512
  %v1514 = vpop.f32.mrf.mxu0
  %1515 = vmatprep.mubr.f32.mxu0 0.0
  %1516 = vmatmul.mubr.f32.gmra.mxu0 %v1259
  %v1517 = vpop.f32.mrf.mxu0
  %v1518 = vadd.f32 %v70, %v1517
  %v1519 = vpop.f32.mrf.mxu0
  %1520 = vmatprep.mubr.f32.mxu0 0.0
  %1521 = vmatmul.mubr.f32.gmra.mxu0 %v1262
  %v1522 = vpop.f32.mrf.mxu0
  %v1523 = vadd.f32 %v70, %v1522
  %v1524 = vpop.f32.mrf.mxu0
  %1525 = vmatprep.mubr.f32.mxu0 0.0
  %1526 = vmatmul.mubr.f32.gmra.mxu0 %v1265
  %v1527 = vpop.f32.mrf.mxu0
  %v1528 = vadd.f32 %v70, %v1527
  %v1529 = vpop.f32.mrf.mxu0
  %1530 = vmatprep.mubr.f32.mxu0 0.0
  %1531 = vmatmul.mubr.f32.gmra.mxu0 %v1268
  %v1532 = vpop.f32.mrf.mxu0
  %v1533 = vadd.f32 %v70, %v1532
  %v1534 = vpop.f32.mrf.mxu0
  %1535 = vmatprep.mubr.f32.mxu0 0.0
  %1536 = vmatmul.mubr.f32.gmra.mxu0 %v1271
  %v1537 = vpop.f32.mrf.mxu0
  %v1538 = vadd.f32 %v70, %v1537
  %v1539 = vpop.f32.mrf.mxu0
  %1540 = vmatprep.mubr.f32.mxu0 0.0
  %1541 = vmatmul.mubr.f32.gmra.mxu0 %v1274
  %v1542 = vpop.f32.mrf.mxu0
  %v1543 = vadd.f32 %v70, %v1542
  %v1544 = vpop.f32.mrf.mxu0
  %1545 = vmatprep.mubr.f32.mxu0 0.0
  %1546 = vmatmul.mubr.f32.gmra.mxu0 %v1277
  %v1547 = vpop.f32.mrf.mxu0
  %v1548 = vadd.f32 %v70, %v1547
  %v1549 = vpop.f32.mrf.mxu0
  %1550 = vmatprep.mubr.f32.mxu0 0.0
  %1551 = vmatmul.mubr.f32.gmra.mxu0 %v1280
  %v1552 = vpop.f32.mrf.mxu0
  %v1553 = vadd.f32 %v70, %v1552
  %v1554 = vpop.f32.mrf.mxu0
  %1555 = vmatprep.mubr.f32.mxu0 0.0
  %1556 = vmatmul.mubr.f32.gmra.mxu0 %v1283
  %v1557 = vpop.f32.mrf.mxu0
  %v1558 = vadd.f32 %v70, %v1557
  %v1559 = vpop.f32.mrf.mxu0
  %1560 = vmatprep.mubr.f32.mxu0 0.0
  %1561 = vmatmul.mubr.f32.gmra.mxu0 %v1286
  %v1562 = vpop.f32.mrf.mxu0
  %v1563 = vadd.f32 %v70, %v1562
  %v1564 = vpop.f32.mrf.mxu0
  %1565 = vmatprep.mubr.f32.mxu0 0.0
  %1566 = vmatmul.mubr.f32.gmra.mxu0 %v1289
  %v1567 = vpop.f32.mrf.mxu0
  %v1568 = vadd.f32 %v70, %v1567
  %v1569 = vpop.f32.mrf.mxu0
  %1570 = vmatprep.mubr.f32.mxu0 0.0
  %1571 = vmatmul.mubr.f32.gmra.mxu0 %v1292
  %v1572 = vpop.f32.mrf.mxu0
  %v1573 = vadd.f32 %v70, %v1572
  %v1574 = vpop.f32.mrf.mxu0
  %1575 = vmatprep.mubr.f32.mxu0 0.0
  %1576 = vmatmul.mubr.f32.gmra.mxu0 %v1295
  %v1577 = vpop.f32.mrf.mxu0
  %v1578 = vadd.f32 %v70, %v1577
  %v1579 = vpop.f32.mrf.mxu0
  %1580 = vmatprep.mubr.f32.mxu0 0.0
  %1581 = vmatmul.mubr.f32.gmra.mxu0 %v1298
  %v1582 = vpop.f32.mrf.mxu0
  %v1583 = vadd.f32 %v70, %v1582
  %v1584 = vpop.f32.mrf.mxu0
  %1585 = vmatprep.mubr.f32.mxu0 0.0
  %1586 = vmatmul.mubr.f32.gmra.mxu0 %v1301
  %v1587 = vpop.f32.mrf.mxu0
  %v1588 = vadd.f32 %v70, %v1587
  %v1589 = vpop.f32.mrf.mxu0
  %1590 = vmatprep.mubr.f32.mxu0 0.0
  %1591 = vmatmul.mubr.f32.gmra.mxu0 %v1304
  %v1592 = vpop.f32.mrf.mxu0
  %v1593 = vadd.f32 %v70, %v1592
  %v1594 = vpop.f32.mrf.mxu0
  %1595 = vmatprep.mubr.f32.mxu0 0.0
  %1596 = vmatmul.mubr.f32.gmra.mxu0 %v1307
  %v1597 = vpop.f32.mrf.mxu0
  %v1598 = vadd.f32 %v70, %v1597
  %v1599 = vpop.f32.mrf.mxu0
  %1600 = vmatprep.mubr.f32.mxu0 0.0
  %1601 = vmatmul.mubr.f32.gmra.mxu0 %v1310
  %v1602 = vpop.f32.mrf.mxu0
  %v1603 = vadd.f32 %v70, %v1602
  %v1604 = vpop.f32.mrf.mxu0
  %1605 = vmatprep.mubr.f32.mxu0 0.0
  %1606 = vmatmul.mubr.f32.gmra.mxu0 %v1313
  %v1607 = vpop.f32.mrf.mxu0
  %v1608 = vadd.f32 %v70, %v1607
  %v1609 = vpop.f32.mrf.mxu0
  %1610 = vmatprep.mubr.f32.mxu0 0.0
  %1611 = vmatmul.mubr.f32.gmra.mxu0 %v1316
  %v1612 = vpop.f32.mrf.mxu0
  %v1613 = vadd.f32 %v70, %v1612
  %v1614 = vpop.f32.mrf.mxu0
  %1615 = vmatprep.mubr.f32.mxu0 0.0
  %1616 = vmatmul.mubr.f32.gmra.mxu0 %v1319
  %v1617 = vpop.f32.mrf.mxu0
  %v1618 = vadd.f32 %v70, %v1617
  %v1619 = vpop.f32.mrf.mxu0
  %1620 = vmatprep.mubr.f32.mxu0 0.0
  %1621 = vmatmul.mubr.f32.gmra.mxu0 %v1322
  %v1622 = vpop.f32.mrf.mxu0
  %v1623 = vadd.f32 %v70, %v1622
  %v1624 = vpop.f32.mrf.mxu0
  %1625 = vmatprep.mubr.f32.mxu0 0.0
  %1626 = vmatmul.mubr.f32.gmra.mxu0 %v1325
  %v1627 = vpop.f32.mrf.mxu0
  %v1628 = vadd.f32 %v70, %v1627
  %v1629 = vpop.f32.mrf.mxu0
  %1630 = vmatprep.mubr.f32.mxu0 0.0
  %1631 = vmatmul.mubr.f32.gmra.mxu0 %v1328
  %v1632 = vpop.f32.mrf.mxu0
  %v1633 = vadd.f32 %v70, %v1632
  %v1634 = vpop.f32.mrf.mxu0
  %1635 = vmatprep.mubr.f32.mxu0 0.0
  %1636 = vmatmul.mubr.f32.gmra.mxu0 %v1331
  %v1637 = vpop.f32.mrf.mxu0
  %v1638 = vadd.f32 %v70, %v1637
  %v1639 = vpop.f32.mrf.mxu0
  %1640 = vmatprep.mubr.f32.mxu0 0.0
  %1641 = vmatmul.mubr.f32.gmra.mxu0 %v1334
  %v1642 = vpop.f32.mrf.mxu0
  %v1643 = vadd.f32 %v70, %v1642
  %v1644 = vpop.f32.mrf.mxu0
  %1645 = vdwg.mxu0
  %v1646 = vmax.f32 %v1403, 0.0
  %v1647 = vmax.f32 %v1408, 0.0
  %v1648 = vmax.f32 %v1413, 0.0
  %v1649 = vmax.f32 %v1418, 0.0
  %v1650 = vmax.f32 %v1423, 0.0
  %v1651 = vmax.f32 %v1428, 0.0
  %v1652 = vmax.f32 %v1433, 0.0
  %v1653 = vmax.f32 %v1438, 0.0
  %v1654 = vmax.f32 %v1443, 0.0
  %v1655 = vmax.f32 %v1448, 0.0
  %v1656 = vmax.f32 %v1453, 0.0
  %v1657 = vmax.f32 %v1458, 0.0
  %v1658 = vmax.f32 %v1463, 0.0
  %v1659 = vmax.f32 %v1468, 0.0
  %v1660 = vmax.f32 %v1473, 0.0
  %v1661 = vmax.f32 %v1478, 0.0
  %v1662 = vmax.f32 %v1483, 0.0
  %v1663 = vmax.f32 %v1488, 0.0
  %v1664 = vmax.f32 %v1493, 0.0
  %v1665 = vmax.f32 %v1498, 0.0
  %v1666 = vmax.f32 %v1503, 0.0
  %v1667 = vmax.f32 %v1508, 0.0
  %v1668 = vmax.f32 %v1513, 0.0
  %v1669 = vmax.f32 %v1518, 0.0
  %v1670 = vmax.f32 %v1523, 0.0
  %v1671 = vmax.f32 %v1528, 0.0
  %v1672 = vmax.f32 %v1533, 0.0
  %v1673 = vmax.f32 %v1538, 0.0
  %v1674 = vmax.f32 %v1543, 0.0
  %v1675 = vmax.f32 %v1548, 0.0
  %v1676 = vmax.f32 %v1553, 0.0
  %v1677 = vmax.f32 %v1558, 0.0
  %v1678 = vmax.f32 %v1563, 0.0
  %v1679 = vmax.f32 %v1568, 0.0
  %v1680 = vmax.f32 %v1573, 0.0
  %v1681 = vmax.f32 %v1578, 0.0
  %v1682 = vmax.f32 %v1583, 0.0
  %v1683 = vmax.f32 %v1588, 0.0
  %v1684 = vmax.f32 %v1593, 0.0
  %v1685 = vmax.f32 %v1598, 0.0
  %v1686 = vmax.f32 %v1603, 0.0
  %v1687 = vmax.f32 %v1608, 0.0
  %v1688 = vmax.f32 %v1613, 0.0
  %v1689 = vmax.f32 %v1618, 0.0
  %v1690 = vmax.f32 %v1623, 0.0
  %v1691 = vmax.f32 %v1628, 0.0
  %v1692 = vmax.f32 %v1633, 0.0
  %v1693 = vmax.f32 %v1638, 0.0
  %v1694 = vmax.f32 %v1643, 0.0
  %s1695 = scalar_lea.vmem %s0, 1176
  %v1696 = vld [vmem:[%s1695] sm:$0xff]
  %v1697 = vld [vmem:[%s1695 + $0x8] sm:$0xff]
  %v1698 = vld [vmem:[%s1695 + $0x10] sm:$0xff]
  %v1699 = vld [vmem:[%s1695 + $0x18] sm:$0xff]
  %v1700 = vld [vmem:[%s1695 + $0x20] sm:$0xff]
  %v1701 = vld [vmem:[%s1695 + $0x28] sm:$0xff]
  %v1702 = vld [vmem:[%s1695 + $0x30] sm:$0xff]
  %v1703 = vld [vmem:[%s1695 + $0x38] sm:$0xff]
  %v1704 = vld [vmem:[%s1695 + $0x40] sm:$0xff]
  %v1705 = vld [vmem:[%s1695 + $0x48] sm:$0xff]
  %v1706 = vld [vmem:[%s1695 + $0x50] sm:$0xff]
  %v1707 = vld [vmem:[%s1695 + $0x58] sm:$0xff]
  %v1708 = vld [vmem:[%s1695 + $0x60] sm:$0xff]
  %v1709 = vld [vmem:[%s1695 + $0x68] sm:$0xff]
  %v1710 = vld [vmem:[%s1695 + $0x70] sm:$0xff]
  %v1711 = vld [vmem:[%s1695 + $0x78] sm:$0xff]
  %v1712 = vld [vmem:[%s1695 + $0x80] sm:$0xff]
  %v1713 = vld [vmem:[%s1695 + $0x88] sm:$0xff]
  %v1714 = vld [vmem:[%s1695 + $0x90] sm:$0xff]
  %v1715 = vld [vmem:[%s1695 + $0x98] sm:$0xff]
  %v1716 = vld [vmem:[%s1695 + $0xa0] sm:$0xff]
  %v1717 = vld [vmem:[%s1695 + $0xa8] sm:$0xff]
  %v1718 = vld [vmem:[%s1695 + $0xb0] sm:$0xff]
  %v1719 = vld [vmem:[%s1695 + $0xb8] sm:$0xff]
  %v1720 = vld [vmem:[%s1695 + $0xc0] sm:$0xff]
  %v1721 = vld [vmem:[%s1695 + $0xc8] sm:$0xff]
  %v1722 = vld [vmem:[%s1695 + $0xd0] sm:$0xff]
  %v1723 = vld [vmem:[%s1695 + $0xd8] sm:$0xff]
  %v1724 = vld [vmem:[%s1695 + $0xe0] sm:$0xff]
  %v1725 = vld [vmem:[%s1695 + $0xe8] sm:$0xff]
  %v1726 = vld [vmem:[%s1695 + $0xf0] sm:$0xff]
  %v1727 = vld [vmem:[%s1695 + $0xf8] sm:$0xff]
  %v1728 = vld [vmem:[%s1695 + $0x100] sm:$0xff]
  %v1729 = vld [vmem:[%s1695 + $0x108] sm:$0xff]
  %v1730 = vld [vmem:[%s1695 + $0x110] sm:$0xff]
  %v1731 = vld [vmem:[%s1695 + $0x118] sm:$0xff]
  %v1732 = vld [vmem:[%s1695 + $0x120] sm:$0xff]
  %v1733 = vld [vmem:[%s1695 + $0x128] sm:$0xff]
  %v1734 = vld [vmem:[%s1695 + $0x130] sm:$0xff]
  %v1735 = vld [vmem:[%s1695 + $0x138] sm:$0xff]
  %v1736 = vld [vmem:[%s1695 + $0x140] sm:$0xff]
  %v1737 = vld [vmem:[%s1695 + $0x148] sm:$0xff]
  %v1738 = vld [vmem:[%s1695 + $0x150] sm:$0xff]
  %v1739 = vld [vmem:[%s1695 + $0x158] sm:$0xff]
  %v1740 = vld [vmem:[%s1695 + $0x160] sm:$0xff]
  %v1741 = vld [vmem:[%s1695 + $0x168] sm:$0xff]
  %v1742 = vld [vmem:[%s1695 + $0x170] sm:$0xff]
  %v1743 = vld [vmem:[%s1695 + $0x178] sm:$0xff]
  %v1744 = vld [vmem:[%s1695 + $0x180] sm:$0xff]
  %v1746 = vsel %vm72, %v1696, 0
  %v1749 = vsel %vm72, %v1697, 0
  %v1752 = vsel %vm72, %v1698, 0
  %v1755 = vsel %vm72, %v1699, 0
  %v1758 = vsel %vm72, %v1700, 0
  %v1761 = vsel %vm72, %v1701, 0
  %v1764 = vsel %vm72, %v1702, 0
  %v1767 = vsel %vm72, %v1703, 0
  %v1770 = vsel %vm72, %v1704, 0
  %v1773 = vsel %vm72, %v1705, 0
  %v1776 = vsel %vm72, %v1706, 0
  %v1779 = vsel %vm72, %v1707, 0
  %v1782 = vsel %vm72, %v1708, 0
  %v1785 = vsel %vm72, %v1709, 0
  %v1788 = vsel %vm72, %v1710, 0
  %v1791 = vsel %vm72, %v1711, 0
  %v1794 = vsel %vm72, %v1712, 0
  %v1797 = vsel %vm72, %v1713, 0
  %v1800 = vsel %vm72, %v1714, 0
  %v1803 = vsel %vm72, %v1715, 0
  %v1806 = vsel %vm72, %v1716, 0
  %v1809 = vsel %vm72, %v1717, 0
  %v1812 = vsel %vm72, %v1718, 0
  %v1815 = vsel %vm72, %v1719, 0
  %v1818 = vsel %vm72, %v1720, 0
  %v1821 = vsel %vm72, %v1721, 0
  %v1824 = vsel %vm72, %v1722, 0
  %v1827 = vsel %vm72, %v1723, 0
  %v1830 = vsel %vm72, %v1724, 0
  %v1833 = vsel %vm72, %v1725, 0
  %v1836 = vsel %vm72, %v1726, 0
  %v1839 = vsel %vm72, %v1727, 0
  %v1842 = vsel %vm72, %v1728, 0
  %v1845 = vsel %vm72, %v1729, 0
  %v1848 = vsel %vm72, %v1730, 0
  %v1851 = vsel %vm72, %v1731, 0
  %v1854 = vsel %vm72, %v1732, 0
  %v1857 = vsel %vm72, %v1733, 0
  %v1860 = vsel %vm72, %v1734, 0
  %v1863 = vsel %vm72, %v1735, 0
  %v1866 = vsel %vm72, %v1736, 0
  %v1869 = vsel %vm72, %v1737, 0
  %v1872 = vsel %vm72, %v1738, 0
  %v1875 = vsel %vm72, %v1739, 0
  %v1878 = vsel %vm72, %v1740, 0
  %v1881 = vsel %vm72, %v1741, 0
  %v1884 = vsel %vm72, %v1742, 0
  %v1887 = vsel %vm72, %v1743, 0
  %v1890 = vsel %vm72, %v1744, 0
  %1892 = vmatprep.subr.mxu0 0.0
  %1893 = vmatpush1.msra.mxu0 0.0
  %1894 = vmatprep.subr.mxu0 0.0
  %1895 = vmatpush1.msra.mxu0 0.0
  %1896 = vmatprep.subr.mxu0 0.0
  %1897 = vmatpush1.msra.mxu0 0.0
  %1898 = vmatprep.subr.mxu0 0.0
  %1899 = vmatpush1.msra.mxu0 0.0
  %1900 = vmatprep.subr.mxu0 0.0
  %1901 = vmatpush1.msra.mxu0 0.0
  %1902 = vmatprep.subr.mxu0 0.0
  %1903 = vmatpush1.msra.mxu0 0.0
  %1904 = vmatprep.subr.mxu0 0.0
  %1905 = vmatpush1.msra.mxu0 0.0
  %1906 = vmatprep.subr.mxu0 0.0
  %1907 = vmatpush1.msra.mxu0 0.0
  %1908 = vmatprep.subr.mxu0 0.0
  %1909 = vmatpush1.msra.mxu0 0.0
  %1910 = vmatprep.subr.mxu0 0.0
  %1911 = vmatpush1.msra.mxu0 0.0
  %1912 = vmatprep.subr.mxu0 0.0
  %1913 = vmatpush1.msra.mxu0 0.0
  %1914 = vmatprep.subr.mxu0 0.0
  %1915 = vmatpush1.msra.mxu0 0.0
  %1916 = vmatprep.subr.mxu0 0.0
  %1917 = vmatpush1.msra.mxu0 0.0
  %1918 = vmatprep.subr.mxu0 0.0
  %1919 = vmatpush1.msra.mxu0 0.0
  %1920 = vmatprep.subr.mxu0 0.0
  %1921 = vmatpush1.msra.mxu0 %v222
  %1922 = vmatprep.subr.mxu0 0.0
  %1923 = vmatpush1.msra.mxu0 %v14
  %1924 = vmatprep.subr.mxu0 0.0
  %1925 = vmatpush2.msra.mxu0 0.0
  %1926 = vmatprep.subr.mxu0 0.0
  %1927 = vmatpush2.msra.mxu0 0.0
  %1928 = vmatprep.subr.mxu0 0.0
  %1929 = vmatpush2.msra.mxu0 0.0
  %1930 = vmatprep.subr.mxu0 0.0
  %1931 = vmatpush2.msra.mxu0 0.0
  %1932 = vmatprep.subr.mxu0 0.0
  %1933 = vmatpush2.msra.mxu0 0.0
  %1934 = vmatprep.subr.mxu0 0.0
  %1935 = vmatpush2.msra.mxu0 0.0
  %1936 = vmatprep.subr.mxu0 0.0
  %1937 = vmatpush2.msra.mxu0 0.0
  %1938 = vmatprep.subr.mxu0 0.0
  %1939 = vmatpush2.msra.mxu0 0.0
  %1940 = vmatprep.subr.mxu0 0.0
  %1941 = vmatpush2.msra.mxu0 0.0
  %1942 = vmatprep.subr.mxu0 0.0
  %1943 = vmatpush2.msra.mxu0 0.0
  %1944 = vmatprep.subr.mxu0 0.0
  %1945 = vmatpush2.msra.mxu0 0.0
  %1946 = vmatprep.subr.mxu0 0.0
  %1947 = vmatpush2.msra.mxu0 0.0
  %1948 = vmatprep.subr.mxu0 0.0
  %1949 = vmatpush2.msra.mxu0 0.0
  %1950 = vmatprep.subr.mxu0 0.0
  %1951 = vmatpush2.msra.mxu0 0.0
  %1952 = vmatprep.subr.mxu0 0.0
  %1953 = vmatpush2.msra.mxu0 0.0
  %1954 = vmatprep.subr.mxu0 0.0
  %1955 = vmatpush2.msra.mxu0 0.0
  %1956 = vmatprep.mubr.f32.mxu0 0.0
  %1957 = vmatmul.mubr.f32.gmra.mxu0 %v1746
  %v1958 = vpop.f32.mrf.mxu0
  %v1959 = vadd.f32 %v70, %v1958
  %v1960 = vpop.f32.mrf.mxu0
  %1961 = vmatprep.mubr.f32.mxu0 0.0
  %1962 = vmatmul.mubr.f32.gmra.mxu0 %v1749
  %v1963 = vpop.f32.mrf.mxu0
  %v1964 = vadd.f32 %v70, %v1963
  %v1965 = vpop.f32.mrf.mxu0
  %1966 = vmatprep.mubr.f32.mxu0 0.0
  %1967 = vmatmul.mubr.f32.gmra.mxu0 %v1752
  %v1968 = vpop.f32.mrf.mxu0
  %v1969 = vadd.f32 %v70, %v1968
  %v1970 = vpop.f32.mrf.mxu0
  %1971 = vmatprep.mubr.f32.mxu0 0.0
  %1972 = vmatmul.mubr.f32.gmra.mxu0 %v1755
  %v1973 = vpop.f32.mrf.mxu0
  %v1974 = vadd.f32 %v70, %v1973
  %v1975 = vpop.f32.mrf.mxu0
  %1976 = vmatprep.mubr.f32.mxu0 0.0
  %1977 = vmatmul.mubr.f32.gmra.mxu0 %v1758
  %v1978 = vpop.f32.mrf.mxu0
  %v1979 = vadd.f32 %v70, %v1978
  %v1980 = vpop.f32.mrf.mxu0
  %1981 = vmatprep.mubr.f32.mxu0 0.0
  %1982 = vmatmul.mubr.f32.gmra.mxu0 %v1761
  %v1983 = vpop.f32.mrf.mxu0
  %v1984 = vadd.f32 %v70, %v1983
  %v1985 = vpop.f32.mrf.mxu0
  %1986 = vmatprep.mubr.f32.mxu0 0.0
  %1987 = vmatmul.mubr.f32.gmra.mxu0 %v1764
  %v1988 = vpop.f32.mrf.mxu0
  %v1989 = vadd.f32 %v70, %v1988
  %v1990 = vpop.f32.mrf.mxu0
  %1991 = vmatprep.mubr.f32.mxu0 0.0
  %1992 = vmatmul.mubr.f32.gmra.mxu0 %v1767
  %v1993 = vpop.f32.mrf.mxu0
  %v1994 = vadd.f32 %v70, %v1993
  %v1995 = vpop.f32.mrf.mxu0
  %1996 = vmatprep.mubr.f32.mxu0 0.0
  %1997 = vmatmul.mubr.f32.gmra.mxu0 %v1770
  %v1998 = vpop.f32.mrf.mxu0
  %v1999 = vadd.f32 %v70, %v1998
  %v2000 = vpop.f32.mrf.mxu0
  %2001 = vmatprep.mubr.f32.mxu0 0.0
  %2002 = vmatmul.mubr.f32.gmra.mxu0 %v1773
  %v2003 = vpop.f32.mrf.mxu0
  %v2004 = vadd.f32 %v70, %v2003
  %v2005 = vpop.f32.mrf.mxu0
  %2006 = vmatprep.mubr.f32.mxu0 0.0
  %2007 = vmatmul.mubr.f32.gmra.mxu0 %v1776
  %v2008 = vpop.f32.mrf.mxu0
  %v2009 = vadd.f32 %v70, %v2008
  %v2010 = vpop.f32.mrf.mxu0
  %2011 = vmatprep.mubr.f32.mxu0 0.0
  %2012 = vmatmul.mubr.f32.gmra.mxu0 %v1779
  %v2013 = vpop.f32.mrf.mxu0
  %v2014 = vadd.f32 %v70, %v2013
  %v2015 = vpop.f32.mrf.mxu0
  %2016 = vmatprep.mubr.f32.mxu0 0.0
  %2017 = vmatmul.mubr.f32.gmra.mxu0 %v1782
  %v2018 = vpop.f32.mrf.mxu0
  %v2019 = vadd.f32 %v70, %v2018
  %v2020 = vpop.f32.mrf.mxu0
  %2021 = vmatprep.mubr.f32.mxu0 0.0
  %2022 = vmatmul.mubr.f32.gmra.mxu0 %v1785
  %v2023 = vpop.f32.mrf.mxu0
  %v2024 = vadd.f32 %v70, %v2023
  %v2025 = vpop.f32.mrf.mxu0
  %2026 = vmatprep.mubr.f32.mxu0 0.0
  %2027 = vmatmul.mubr.f32.gmra.mxu0 %v1788
  %v2028 = vpop.f32.mrf.mxu0
  %v2029 = vadd.f32 %v70, %v2028
  %v2030 = vpop.f32.mrf.mxu0
  %2031 = vmatprep.mubr.f32.mxu0 0.0
  %2032 = vmatmul.mubr.f32.gmra.mxu0 %v1791
  %v2033 = vpop.f32.mrf.mxu0
  %v2034 = vadd.f32 %v70, %v2033
  %v2035 = vpop.f32.mrf.mxu0
  %2036 = vmatprep.mubr.f32.mxu0 0.0
  %2037 = vmatmul.mubr.f32.gmra.mxu0 %v1794
  %v2038 = vpop.f32.mrf.mxu0
  %v2039 = vadd.f32 %v70, %v2038
  %v2040 = vpop.f32.mrf.mxu0
  %2041 = vmatprep.mubr.f32.mxu0 0.0
  %2042 = vmatmul.mubr.f32.gmra.mxu0 %v1797
  %v2043 = vpop.f32.mrf.mxu0
  %v2044 = vadd.f32 %v70, %v2043
  %v2045 = vpop.f32.mrf.mxu0
  %2046 = vmatprep.mubr.f32.mxu0 0.0
  %2047 = vmatmul.mubr.f32.gmra.mxu0 %v1800
  %v2048 = vpop.f32.mrf.mxu0
  %v2049 = vadd.f32 %v70, %v2048
  %v2050 = vpop.f32.mrf.mxu0
  %2051 = vmatprep.mubr.f32.mxu0 0.0
  %2052 = vmatmul.mubr.f32.gmra.mxu0 %v1803
  %v2053 = vpop.f32.mrf.mxu0
  %v2054 = vadd.f32 %v70, %v2053
  %v2055 = vpop.f32.mrf.mxu0
  %2056 = vmatprep.mubr.f32.mxu0 0.0
  %2057 = vmatmul.mubr.f32.gmra.mxu0 %v1806
  %v2058 = vpop.f32.mrf.mxu0
  %v2059 = vadd.f32 %v70, %v2058
  %v2060 = vpop.f32.mrf.mxu0
  %2061 = vmatprep.mubr.f32.mxu0 0.0
  %2062 = vmatmul.mubr.f32.gmra.mxu0 %v1809
  %v2063 = vpop.f32.mrf.mxu0
  %v2064 = vadd.f32 %v70, %v2063
  %v2065 = vpop.f32.mrf.mxu0
  %2066 = vmatprep.mubr.f32.mxu0 0.0
  %2067 = vmatmul.mubr.f32.gmra.mxu0 %v1812
  %v2068 = vpop.f32.mrf.mxu0
  %v2069 = vadd.f32 %v70, %v2068
  %v2070 = vpop.f32.mrf.mxu0
  %2071 = vmatprep.mubr.f32.mxu0 0.0
  %2072 = vmatmul.mubr.f32.gmra.mxu0 %v1815
  %v2073 = vpop.f32.mrf.mxu0
  %v2074 = vadd.f32 %v70, %v2073
  %v2075 = vpop.f32.mrf.mxu0
  %2076 = vmatprep.mubr.f32.mxu0 0.0
  %2077 = vmatmul.mubr.f32.gmra.mxu0 %v1818
  %v2078 = vpop.f32.mrf.mxu0
  %v2079 = vadd.f32 %v70, %v2078
  %v2080 = vpop.f32.mrf.mxu0
  %2081 = vmatprep.mubr.f32.mxu0 0.0
  %2082 = vmatmul.mubr.f32.gmra.mxu0 %v1821
  %v2083 = vpop.f32.mrf.mxu0
  %v2084 = vadd.f32 %v70, %v2083
  %v2085 = vpop.f32.mrf.mxu0
  %2086 = vmatprep.mubr.f32.mxu0 0.0
  %2087 = vmatmul.mubr.f32.gmra.mxu0 %v1824
  %v2088 = vpop.f32.mrf.mxu0
  %v2089 = vadd.f32 %v70, %v2088
  %v2090 = vpop.f32.mrf.mxu0
  %2091 = vmatprep.mubr.f32.mxu0 0.0
  %2092 = vmatmul.mubr.f32.gmra.mxu0 %v1827
  %v2093 = vpop.f32.mrf.mxu0
  %v2094 = vadd.f32 %v70, %v2093
  %v2095 = vpop.f32.mrf.mxu0
  %2096 = vmatprep.mubr.f32.mxu0 0.0
  %2097 = vmatmul.mubr.f32.gmra.mxu0 %v1830
  %v2098 = vpop.f32.mrf.mxu0
  %v2099 = vadd.f32 %v70, %v2098
  %v2100 = vpop.f32.mrf.mxu0
  %2101 = vmatprep.mubr.f32.mxu0 0.0
  %2102 = vmatmul.mubr.f32.gmra.mxu0 %v1833
  %v2103 = vpop.f32.mrf.mxu0
  %v2104 = vadd.f32 %v70, %v2103
  %v2105 = vpop.f32.mrf.mxu0
  %2106 = vmatprep.mubr.f32.mxu0 0.0
  %2107 = vmatmul.mubr.f32.gmra.mxu0 %v1836
  %v2108 = vpop.f32.mrf.mxu0
  %v2109 = vadd.f32 %v70, %v2108
  %v2110 = vpop.f32.mrf.mxu0
  %2111 = vmatprep.mubr.f32.mxu0 0.0
  %2112 = vmatmul.mubr.f32.gmra.mxu0 %v1839
  %v2113 = vpop.f32.mrf.mxu0
  %v2114 = vadd.f32 %v70, %v2113
  %v2115 = vpop.f32.mrf.mxu0
  %2116 = vmatprep.mubr.f32.mxu0 0.0
  %2117 = vmatmul.mubr.f32.gmra.mxu0 %v1842
  %v2118 = vpop.f32.mrf.mxu0
  %v2119 = vadd.f32 %v70, %v2118
  %v2120 = vpop.f32.mrf.mxu0
  %2121 = vmatprep.mubr.f32.mxu0 0.0
  %2122 = vmatmul.mubr.f32.gmra.mxu0 %v1845
  %v2123 = vpop.f32.mrf.mxu0
  %v2124 = vadd.f32 %v70, %v2123
  %v2125 = vpop.f32.mrf.mxu0
  %2126 = vmatprep.mubr.f32.mxu0 0.0
  %2127 = vmatmul.mubr.f32.gmra.mxu0 %v1848
  %v2128 = vpop.f32.mrf.mxu0
  %v2129 = vadd.f32 %v70, %v2128
  %v2130 = vpop.f32.mrf.mxu0
  %2131 = vmatprep.mubr.f32.mxu0 0.0
  %2132 = vmatmul.mubr.f32.gmra.mxu0 %v1851
  %v2133 = vpop.f32.mrf.mxu0
  %v2134 = vadd.f32 %v70, %v2133
  %v2135 = vpop.f32.mrf.mxu0
  %2136 = vmatprep.mubr.f32.mxu0 0.0
  %2137 = vmatmul.mubr.f32.gmra.mxu0 %v1854
  %v2138 = vpop.f32.mrf.mxu0
  %v2139 = vadd.f32 %v70, %v2138
  %v2140 = vpop.f32.mrf.mxu0
  %2141 = vmatprep.mubr.f32.mxu0 0.0
  %2142 = vmatmul.mubr.f32.gmra.mxu0 %v1857
  %v2143 = vpop.f32.mrf.mxu0
  %v2144 = vadd.f32 %v70, %v2143
  %v2145 = vpop.f32.mrf.mxu0
  %2146 = vmatprep.mubr.f32.mxu0 0.0
  %2147 = vmatmul.mubr.f32.gmra.mxu0 %v1860
  %v2148 = vpop.f32.mrf.mxu0
  %v2149 = vadd.f32 %v70, %v2148
  %v2150 = vpop.f32.mrf.mxu0
  %2151 = vmatprep.mubr.f32.mxu0 0.0
  %2152 = vmatmul.mubr.f32.gmra.mxu0 %v1863
  %v2153 = vpop.f32.mrf.mxu0
  %v2154 = vadd.f32 %v70, %v2153
  %v2155 = vpop.f32.mrf.mxu0
  %2156 = vmatprep.mubr.f32.mxu0 0.0
  %2157 = vmatmul.mubr.f32.gmra.mxu0 %v1866
  %v2158 = vpop.f32.mrf.mxu0
  %v2159 = vadd.f32 %v70, %v2158
  %v2160 = vpop.f32.mrf.mxu0
  %2161 = vmatprep.mubr.f32.mxu0 0.0
  %2162 = vmatmul.mubr.f32.gmra.mxu0 %v1869
  %v2163 = vpop.f32.mrf.mxu0
  %v2164 = vadd.f32 %v70, %v2163
  %v2165 = vpop.f32.mrf.mxu0
  %2166 = vmatprep.mubr.f32.mxu0 0.0
  %2167 = vmatmul.mubr.f32.gmra.mxu0 %v1872
  %v2168 = vpop.f32.mrf.mxu0
  %v2169 = vadd.f32 %v70, %v2168
  %v2170 = vpop.f32.mrf.mxu0
  %2171 = vmatprep.mubr.f32.mxu0 0.0
  %2172 = vmatmul.mubr.f32.gmra.mxu0 %v1875
  %v2173 = vpop.f32.mrf.mxu0
  %v2174 = vadd.f32 %v70, %v2173
  %v2175 = vpop.f32.mrf.mxu0
  %2176 = vmatprep.mubr.f32.mxu0 0.0
  %2177 = vmatmul.mubr.f32.gmra.mxu0 %v1878
  %v2178 = vpop.f32.mrf.mxu0
  %v2179 = vadd.f32 %v70, %v2178
  %v2180 = vpop.f32.mrf.mxu0
  %2181 = vmatprep.mubr.f32.mxu0 0.0
  %2182 = vmatmul.mubr.f32.gmra.mxu0 %v1881
  %v2183 = vpop.f32.mrf.mxu0
  %v2184 = vadd.f32 %v70, %v2183
  %v2185 = vpop.f32.mrf.mxu0
  %2186 = vmatprep.mubr.f32.mxu0 0.0
  %2187 = vmatmul.mubr.f32.gmra.mxu0 %v1884
  %v2188 = vpop.f32.mrf.mxu0
  %v2189 = vadd.f32 %v70, %v2188
  %v2190 = vpop.f32.mrf.mxu0
  %2191 = vmatprep.mubr.f32.mxu0 0.0
  %2192 = vmatmul.mubr.f32.gmra.mxu0 %v1887
  %v2193 = vpop.f32.mrf.mxu0
  %v2194 = vadd.f32 %v70, %v2193
  %v2195 = vpop.f32.mrf.mxu0
  %2196 = vmatprep.mubr.f32.mxu0 0.0
  %2197 = vmatmul.mubr.f32.gmra.mxu0 %v1890
  %v2198 = vpop.f32.mrf.mxu0
  %v2199 = vadd.f32 %v70, %v2198
  %v2200 = vpop.f32.mrf.mxu0
  %2201 = vdwg.mxu0
  %v2202 = vmax.f32 %v1959, 0.0
  %v2203 = vmax.f32 %v1964, 0.0
  %v2204 = vmax.f32 %v1969, 0.0
  %v2205 = vmax.f32 %v1974, 0.0
  %v2206 = vmax.f32 %v1979, 0.0
  %v2207 = vmax.f32 %v1984, 0.0
  %v2208 = vmax.f32 %v1989, 0.0
  %v2209 = vmax.f32 %v1994, 0.0
  %v2210 = vmax.f32 %v1999, 0.0
  %v2211 = vmax.f32 %v2004, 0.0
  %v2212 = vmax.f32 %v2009, 0.0
  %v2213 = vmax.f32 %v2014, 0.0
  %v2214 = vmax.f32 %v2019, 0.0
  %v2215 = vmax.f32 %v2024, 0.0
  %v2216 = vmax.f32 %v2029, 0.0
  %v2217 = vmax.f32 %v2034, 0.0
  %v2218 = vmax.f32 %v2039, 0.0
  %v2219 = vmax.f32 %v2044, 0.0
  %v2220 = vmax.f32 %v2049, 0.0
  %v2221 = vmax.f32 %v2054, 0.0
  %v2222 = vmax.f32 %v2059, 0.0
  %v2223 = vmax.f32 %v2064, 0.0
  %v2224 = vmax.f32 %v2069, 0.0
  %v2225 = vmax.f32 %v2074, 0.0
  %v2226 = vmax.f32 %v2079, 0.0
  %v2227 = vmax.f32 %v2084, 0.0
  %v2228 = vmax.f32 %v2089, 0.0
  %v2229 = vmax.f32 %v2094, 0.0
  %v2230 = vmax.f32 %v2099, 0.0
  %v2231 = vmax.f32 %v2104, 0.0
  %v2232 = vmax.f32 %v2109, 0.0
  %v2233 = vmax.f32 %v2114, 0.0
  %v2234 = vmax.f32 %v2119, 0.0
  %v2235 = vmax.f32 %v2124, 0.0
  %v2236 = vmax.f32 %v2129, 0.0
  %v2237 = vmax.f32 %v2134, 0.0
  %v2238 = vmax.f32 %v2139, 0.0
  %v2239 = vmax.f32 %v2144, 0.0
  %v2240 = vmax.f32 %v2149, 0.0
  %v2241 = vmax.f32 %v2154, 0.0
  %v2242 = vmax.f32 %v2159, 0.0
  %v2243 = vmax.f32 %v2164, 0.0
  %v2244 = vmax.f32 %v2169, 0.0
  %v2245 = vmax.f32 %v2174, 0.0
  %v2246 = vmax.f32 %v2179, 0.0
  %v2247 = vmax.f32 %v2184, 0.0
  %v2248 = vmax.f32 %v2189, 0.0
  %v2249 = vmax.f32 %v2194, 0.0
  %v2250 = vmax.f32 %v2199, 0.0
  %v2251 = vmax.f32 %v534, %v1090
  %v2252 = vmax.f32 %v535, %v1091
  %v2253 = vmax.f32 %v536, %v1092
  %v2254 = vmax.f32 %v537, %v1093
  %v2255 = vmax.f32 %v538, %v1094
  %v2256 = vmax.f32 %v539, %v1095
  %v2257 = vmax.f32 %v540, %v1096
  %v2258 = vmax.f32 %v541, %v1097
  %v2259 = vmax.f32 %v542, %v1098
  %v2260 = vmax.f32 %v543, %v1099
  %v2261 = vmax.f32 %v544, %v1100
  %v2262 = vmax.f32 %v545, %v1101
  %v2263 = vmax.f32 %v546, %v1102
  %v2264 = vmax.f32 %v547, %v1103
  %v2265 = vmax.f32 %v548, %v1104
  %v2266 = vmax.f32 %v549, %v1105
  %v2267 = vmax.f32 %v550, %v1106
  %v2268 = vmax.f32 %v551, %v1107
  %v2269 = vmax.f32 %v552, %v1108
  %v2270 = vmax.f32 %v553, %v1109
  %v2271 = vmax.f32 %v554, %v1110
  %v2272 = vmax.f32 %v555, %v1111
  %v2273 = vmax.f32 %v556, %v1112
  %v2274 = vmax.f32 %v557, %v1113
  %v2275 = vmax.f32 %v558, %v1114
  %v2276 = vmax.f32 %v559, %v1115
  %v2277 = vmax.f32 %v560, %v1116
  %v2278 = vmax.f32 %v561, %v1117
  %v2279 = vmax.f32 %v562, %v1118
  %v2280 = vmax.f32 %v563, %v1119
  %v2281 = vmax.f32 %v564, %v1120
  %v2282 = vmax.f32 %v565, %v1121
  %v2283 = vmax.f32 %v566, %v1122
  %v2284 = vmax.f32 %v567, %v1123
  %v2285 = vmax.f32 %v568, %v1124
  %v2286 = vmax.f32 %v569, %v1125
  %v2287 = vmax.f32 %v570, %v1126
  %v2288 = vmax.f32 %v571, %v1127
  %v2289 = vmax.f32 %v572, %v1128
  %v2290 = vmax.f32 %v573, %v1129
  %v2291 = vmax.f32 %v574, %v1130
  %v2292 = vmax.f32 %v575, %v1131
  %v2293 = vmax.f32 %v576, %v1132
  %v2294 = vmax.f32 %v577, %v1133
  %v2295 = vmax.f32 %v578, %v1134
  %v2296 = vmax.f32 %v579, %v1135
  %v2297 = vmax.f32 %v580, %v1136
  %v2298 = vmax.f32 %v581, %v1137
  %v2299 = vmax.f32 %v582, %v1138
  %v2300 = vmax.f32 %v1646, %v2202
  %v2301 = vmax.f32 %v1647, %v2203
  %v2302 = vmax.f32 %v1648, %v2204
  %v2303 = vmax.f32 %v1649, %v2205
  %v2304 = vmax.f32 %v1650, %v2206
  %v2305 = vmax.f32 %v1651, %v2207
  %v2306 = vmax.f32 %v1652, %v2208
  %v2307 = vmax.f32 %v1653, %v2209
  %v2308 = vmax.f32 %v1654, %v2210
  %v2309 = vmax.f32 %v1655, %v2211
  %v2310 = vmax.f32 %v1656, %v2212
  %v2311 = vmax.f32 %v1657, %v2213
  %v2312 = vmax.f32 %v1658, %v2214
  %v2313 = vmax.f32 %v1659, %v2215
  %v2314 = vmax.f32 %v1660, %v2216
  %v2315 = vmax.f32 %v1661, %v2217
  %v2316 = vmax.f32 %v1662, %v2218
  %v2317 = vmax.f32 %v1663, %v2219
  %v2318 = vmax.f32 %v1664, %v2220
  %v2319 = vmax.f32 %v1665, %v2221
  %v2320 = vmax.f32 %v1666, %v2222
  %v2321 = vmax.f32 %v1667, %v2223
  %v2322 = vmax.f32 %v1668, %v2224
  %v2323 = vmax.f32 %v1669, %v2225
  %v2324 = vmax.f32 %v1670, %v2226
  %v2325 = vmax.f32 %v1671, %v2227
  %v2326 = vmax.f32 %v1672, %v2228
  %v2327 = vmax.f32 %v1673, %v2229
  %v2328 = vmax.f32 %v1674, %v2230
  %v2329 = vmax.f32 %v1675, %v2231
  %v2330 = vmax.f32 %v1676, %v2232
  %v2331 = vmax.f32 %v1677, %v2233
  %v2332 = vmax.f32 %v1678, %v2234
  %v2333 = vmax.f32 %v1679, %v2235
  %v2334 = vmax.f32 %v1680, %v2236
  %v2335 = vmax.f32 %v1681, %v2237
  %v2336 = vmax.f32 %v1682, %v2238
  %v2337 = vmax.f32 %v1683, %v2239
  %v2338 = vmax.f32 %v1684, %v2240
  %v2339 = vmax.f32 %v1685, %v2241
  %v2340 = vmax.f32 %v1686, %v2242
  %v2341 = vmax.f32 %v1687, %v2243
  %v2342 = vmax.f32 %v1688, %v2244
  %v2343 = vmax.f32 %v1689, %v2245
  %v2344 = vmax.f32 %v1690, %v2246
  %v2345 = vmax.f32 %v1691, %v2247
  %v2346 = vmax.f32 %v1692, %v2248
  %v2347 = vmax.f32 %v1693, %v2249
  %v2348 = vmax.f32 %v1694, %v2250
  %v2349 = vmax.f32 %v2251, %v2300
  %v2350 = vmax.f32 %v2252, %v2301
  %v2351 = vmax.f32 %v2253, %v2302
  %v2352 = vmax.f32 %v2254, %v2303
  %v2353 = vmax.f32 %v2255, %v2304
  %v2354 = vmax.f32 %v2256, %v2305
  %v2355 = vmax.f32 %v2257, %v2306
  %v2356 = vmax.f32 %v2258, %v2307
  %v2357 = vmax.f32 %v2259, %v2308
  %v2358 = vmax.f32 %v2260, %v2309
  %v2359 = vmax.f32 %v2261, %v2310
  %v2360 = vmax.f32 %v2262, %v2311
  %v2361 = vmax.f32 %v2263, %v2312
  %v2362 = vmax.f32 %v2264, %v2313
  %v2363 = vmax.f32 %v2265, %v2314
  %v2364 = vmax.f32 %v2266, %v2315
  %v2365 = vmax.f32 %v2267, %v2316
  %v2366 = vmax.f32 %v2268, %v2317
  %v2367 = vmax.f32 %v2269, %v2318
  %v2368 = vmax.f32 %v2270, %v2319
  %v2369 = vmax.f32 %v2271, %v2320
  %v2370 = vmax.f32 %v2272, %v2321
  %v2371 = vmax.f32 %v2273, %v2322
  %v2372 = vmax.f32 %v2274, %v2323
  %v2373 = vmax.f32 %v2275, %v2324
  %v2374 = vmax.f32 %v2276, %v2325
  %v2375 = vmax.f32 %v2277, %v2326
  %v2376 = vmax.f32 %v2278, %v2327
  %v2377 = vmax.f32 %v2279, %v2328
  %v2378 = vmax.f32 %v2280, %v2329
  %v2379 = vmax.f32 %v2281, %v2330
  %v2380 = vmax.f32 %v2282, %v2331
  %v2381 = vmax.f32 %v2283, %v2332
  %v2382 = vmax.f32 %v2284, %v2333
  %v2383 = vmax.f32 %v2285, %v2334
  %v2384 = vmax.f32 %v2286, %v2335
  %v2385 = vmax.f32 %v2287, %v2336
  %v2386 = vmax.f32 %v2288, %v2337
  %v2387 = vmax.f32 %v2289, %v2338
  %v2388 = vmax.f32 %v2290, %v2339
  %v2389 = vmax.f32 %v2291, %v2340
  %v2390 = vmax.f32 %v2292, %v2341
  %v2391 = vmax.f32 %v2293, %v2342
  %v2392 = vmax.f32 %v2294, %v2343
  %v2393 = vmax.f32 %v2295, %v2344
  %v2394 = vmax.f32 %v2296, %v2345
  %v2395 = vmax.f32 %v2297, %v2346
  %v2396 = vmax.f32 %v2298, %v2347
  %v2397 = vmax.f32 %v2299, %v2348
  %vm2398 = vcmask 261120
  %2399 = vst.msk [vmem:[%s3] sm:$0xff] %vm2398, %v2349
  %2400 = vst.msk [vmem:[%s3 + $0x8] sm:$0xff] %vm2398, %v2350
  %2401 = vst.msk [vmem:[%s3 + $0x10] sm:$0xff] %vm2398, %v2351
  %2402 = vst.msk [vmem:[%s3 + $0x18] sm:$0xff] %vm2398, %v2352
  %2403 = vst.msk [vmem:[%s3 + $0x20] sm:$0xff] %vm2398, %v2353
  %2404 = vst.msk [vmem:[%s3 + $0x28] sm:$0xff] %vm2398, %v2354
  %2405 = vst.msk [vmem:[%s3 + $0x30] sm:$0xff] %vm2398, %v2355
  %2406 = vst.msk [vmem:[%s3 + $0x38] sm:$0xff] %vm2398, %v2356
  %2407 = vst.msk [vmem:[%s3 + $0x40] sm:$0xff] %vm2398, %v2357
  %2408 = vst.msk [vmem:[%s3 + $0x48] sm:$0xff] %vm2398, %v2358
  %2409 = vst.msk [vmem:[%s3 + $0x50] sm:$0xff] %vm2398, %v2359
  %2410 = vst.msk [vmem:[%s3 + $0x58] sm:$0xff] %vm2398, %v2360
  %2411 = vst.msk [vmem:[%s3 + $0x60] sm:$0xff] %vm2398, %v2361
  %2412 = vst.msk [vmem:[%s3 + $0x68] sm:$0xff] %vm2398, %v2362
  %2413 = vst.msk [vmem:[%s3 + $0x70] sm:$0xff] %vm2398, %v2363
  %2414 = vst.msk [vmem:[%s3 + $0x78] sm:$0xff] %vm2398, %v2364
  %2415 = vst.msk [vmem:[%s3 + $0x80] sm:$0xff] %vm2398, %v2365
  %2416 = vst.msk [vmem:[%s3 + $0x88] sm:$0xff] %vm2398, %v2366
  %2417 = vst.msk [vmem:[%s3 + $0x90] sm:$0xff] %vm2398, %v2367
  %2418 = vst.msk [vmem:[%s3 + $0x98] sm:$0xff] %vm2398, %v2368
  %2419 = vst.msk [vmem:[%s3 + $0xa0] sm:$0xff] %vm2398, %v2369
  %2420 = vst.msk [vmem:[%s3 + $0xa8] sm:$0xff] %vm2398, %v2370
  %2421 = vst.msk [vmem:[%s3 + $0xb0] sm:$0xff] %vm2398, %v2371
  %2422 = vst.msk [vmem:[%s3 + $0xb8] sm:$0xff] %vm2398, %v2372
  %2423 = vst.msk [vmem:[%s3 + $0xc0] sm:$0xff] %vm2398, %v2373
  %2424 = vst.msk [vmem:[%s3 + $0xc8] sm:$0xff] %vm2398, %v2374
  %2425 = vst.msk [vmem:[%s3 + $0xd0] sm:$0xff] %vm2398, %v2375
  %2426 = vst.msk [vmem:[%s3 + $0xd8] sm:$0xff] %vm2398, %v2376
  %2427 = vst.msk [vmem:[%s3 + $0xe0] sm:$0xff] %vm2398, %v2377
  %2428 = vst.msk [vmem:[%s3 + $0xe8] sm:$0xff] %vm2398, %v2378
  %2429 = vst.msk [vmem:[%s3 + $0xf0] sm:$0xff] %vm2398, %v2379
  %2430 = vst.msk [vmem:[%s3 + $0xf8] sm:$0xff] %vm2398, %v2380
  %2431 = vst.msk [vmem:[%s3 + $0x100] sm:$0xff] %vm2398, %v2381
  %2432 = vst.msk [vmem:[%s3 + $0x108] sm:$0xff] %vm2398, %v2382
  %2433 = vst.msk [vmem:[%s3 + $0x110] sm:$0xff] %vm2398, %v2383
  %2434 = vst.msk [vmem:[%s3 + $0x118] sm:$0xff] %vm2398, %v2384
  %2435 = vst.msk [vmem:[%s3 + $0x120] sm:$0xff] %vm2398, %v2385
  %2436 = vst.msk [vmem:[%s3 + $0x128] sm:$0xff] %vm2398, %v2386
  %2437 = vst.msk [vmem:[%s3 + $0x130] sm:$0xff] %vm2398, %v2387
  %2438 = vst.msk [vmem:[%s3 + $0x138] sm:$0xff] %vm2398, %v2388
  %2439 = vst.msk [vmem:[%s3 + $0x140] sm:$0xff] %vm2398, %v2389
  %2440 = vst.msk [vmem:[%s3 + $0x148] sm:$0xff] %vm2398, %v2390
  %2441 = vst.msk [vmem:[%s3 + $0x150] sm:$0xff] %vm2398, %v2391
  %2442 = vst.msk [vmem:[%s3 + $0x158] sm:$0xff] %vm2398, %v2392
  %2443 = vst.msk [vmem:[%s3 + $0x160] sm:$0xff] %vm2398, %v2393
  %2444 = vst.msk [vmem:[%s3 + $0x168] sm:$0xff] %vm2398, %v2394
  %2445 = vst.msk [vmem:[%s3 + $0x170] sm:$0xff] %vm2398, %v2395
  %2446 = vst.msk [vmem:[%s3 + $0x178] sm:$0xff] %vm2398, %v2396
  %2447 = vst.msk [vmem:[%s3 + $0x180] sm:$0xff] %vm2398, %v2397
  // Predicated region
  $region14: #{cnn_forward.2} parent=0 // pred_check
    _
  $region15: #{cnn_forward.2} parent=0 // pred_check_branch
    %2449 = sbr.rel (0) target = $region17
  $region16: #{cnn_forward.2} parent=0 // pred_region
    _
  $region17: #{cnn_forward.2} parent=0 // pred_fallthru
    _
  // Predicated region
  $region18: #{cnn_forward.2} parent=0 // pred_check
    _
  $region19: #{cnn_forward.2} parent=0 // pred_check_branch
    %2451 = sbr.rel (0) target = $region21
  $region20: #{cnn_forward.2} parent=0 // pred_region
    _
  $region21: #{cnn_forward.2} parent=0 // pred_fallthru
    _

// kernel: cnn_forward.3
$region0: #{cnn_forward.3}
  #allocation0 [shape = 'u32[]', space=smem, size = 0x4, offset = 0x4, fixed_abs, tag = 'smem constant byte address 0x4 - core index']
  #allocation1 [shape = 'u32[144,128]{1,0:T(1,128)}', space=vmem, size = 0x12000, scoped, tag = 'internal scratch']
  #allocation2 [shape = 'f32[98,64]{1,0:T(8,128)}', space=vmem, size = 0xd000, scoped, tag = 'scratch operand']
  %s0 = inlined_call_operand.vmem [shape: f32[4,98,288], index: 0, kind: input, shape index: {}]
  %s1 = inlined_call_operand.vmem [shape: f32[288,64], index: 1, kind: input, shape index: {}]
  %s2 = inlined_call_operand.vmem [shape: f32[1,64], index: 2, kind: input, shape index: {}]
  %s3 = inlined_call_operand.vmem [shape: f32[49,64,10], index: 3, kind: input, shape index: {}]
  %s4 = inlined_call_operand.vmem [shape: f32[1,10], index: 4, kind: input, shape index: {}]
  %s5 = inlined_call_operand.hbm [shape: f32[2,10], index: 5, kind: output, shape index: {}]
  %s6 = sld [smem:[#allocation0]]
  $region30: #{cnn_forward.3} parent=0
    _
  %s8 = ssub.s32 1, %s6
  %s9 = scalar_select 0, %s8, %s6
  $region1: #{cnn_forward.3} parent=0
    #allocation3 [shape = 'u8[1024]{0}', space=vmem, size = 0x400, scoped, tag = 'output window, operand 0, single buffered']
    #allocation4 [shape = 's32[1]{0}', space=sflag, size = 0x4, scoped, tag = 'scoped memory for cnn_forward.3']
    %10 = vsyncpa [#allocation4], 0
    // Predicated region
    $region2: #{cnn_forward.3} parent=1 // pred_check
      _
    $region3: #{cnn_forward.3} parent=1 // pred_check_branch
      %12 = sbr.rel (0) target = $region5
    $region4: #{cnn_forward.3} parent=1 // pred_region
      _
    $region5: #{cnn_forward.3} parent=1 // pred_fallthru
      _
    // Predicated region
    $region6: #{cnn_forward.3} parent=1 // pred_check
      _
    $region7: #{cnn_forward.3} parent=1 // pred_check_branch
      %14 = sbr.rel (0) target = $region9
    $region8: #{cnn_forward.3} parent=1 // pred_region
      _
    $region9: #{cnn_forward.3} parent=1 // pred_fallthru
      _
    // Predicated region
    $region10: #{cnn_forward.3} parent=1 // pred_check
      _
    $region11: #{cnn_forward.3} parent=1 // pred_check_branch
      %16 = sbr.rel (0) target = $region13
    $region12: #{cnn_forward.3} parent=1 // pred_region
      _
    $region13: #{cnn_forward.3} parent=1 // pred_fallthru
      _
    // Predicated region
    $region14: #{cnn_forward.3} parent=1 // pred_check
      _
    $region15: #{cnn_forward.3} parent=1 // pred_check_branch
      %18 = sbr.rel (0) target = $region17
    $region16: #{cnn_forward.3} parent=1 // pred_region
      _
    $region17: #{cnn_forward.3} parent=1 // pred_fallthru
      _
    // Predicated region
    $region18: #{cnn_forward.3} parent=1 // pred_check
      _
    $region19: #{cnn_forward.3} parent=1 // pred_check_branch
      %20 = sbr.rel (0) target = $region21
    $region20: #{cnn_forward.3} parent=1 // pred_region
      _
    $region21: #{cnn_forward.3} parent=1 // pred_fallthru
      _
    %v21 = vld [vmem:[%s1] sm:$0xff]
    %v22 = vld [vmem:[%s1 + $0x8] sm:$0xff]
    %v23 = vld [vmem:[%s1 + $0x10] sm:$0xff]
    %v24 = vld [vmem:[%s1 + $0x18] sm:$0xff]
    %v25 = vld [vmem:[%s1 + $0x20] sm:$0xff]
    %v26 = vld [vmem:[%s1 + $0x28] sm:$0xff]
    %v27 = vld [vmem:[%s1 + $0x30] sm:$0xff]
    %v28 = vld [vmem:[%s1 + $0x38] sm:$0xff]
    %v29 = vld [vmem:[%s1 + $0x40] sm:$0xff]
    %v30 = vld [vmem:[%s1 + $0x48] sm:$0xff]
    %v31 = vld [vmem:[%s1 + $0x50] sm:$0xff]
    %v32 = vld [vmem:[%s1 + $0x58] sm:$0xff]
    %v33 = vld [vmem:[%s1 + $0x60] sm:$0xff]
    %v34 = vld [vmem:[%s1 + $0x68] sm:$0xff]
    %v35 = vld [vmem:[%s1 + $0x70] sm:$0xff]
    %v36 = vld [vmem:[%s1 + $0x78] sm:$0xff]
    %v37 = vld [vmem:[%s1 + $0x80] sm:$0xff]
    %v38 = vld [vmem:[%s1 + $0x88] sm:$0xff]
    %v39 = vld [vmem:[%s1 + $0x90] sm:$0xff]
    %v40 = vld [vmem:[%s1 + $0x98] sm:$0xff]
    %v41 = vld [vmem:[%s1 + $0xa0] sm:$0xff]
    %v42 = vld [vmem:[%s1 + $0xa8] sm:$0xff]
    %v43 = vld [vmem:[%s1 + $0xb0] sm:$0xff]
    %v44 = vld [vmem:[%s1 + $0xb8] sm:$0xff]
    %v45 = vld [vmem:[%s1 + $0xc0] sm:$0xff]
    %v46 = vld [vmem:[%s1 + $0xc8] sm:$0xff]
    %v47 = vld [vmem:[%s1 + $0xd0] sm:$0xff]
    %v48 = vld [vmem:[%s1 + $0xd8] sm:$0xff]
    %v49 = vld [vmem:[%s1 + $0xe0] sm:$0xff]
    %v50 = vld [vmem:[%s1 + $0xe8] sm:$0xff]
    %v51 = vld [vmem:[%s1 + $0xf0] sm:$0xff]
    %v52 = vld [vmem:[%s1 + $0xf8] sm:$0xff]
    %v53 = vld [vmem:[%s1 + $0x100] sm:$0xff]
    %v54 = vld [vmem:[%s1 + $0x108] sm:$0xff]
    %v55 = vld [vmem:[%s1 + $0x110] sm:$0xff]
    %v56 = vld [vmem:[%s1 + $0x118] sm:$0xff]
    %v57 = vld [vmem:[%s2] sm:$0x1]
    %v58 = vld [vmem:[%s0] sm:$0xff]
    %v59 = vld [vmem:[%s0 + $0x8] sm:$0xff]
    %v60 = vld [vmem:[%s0 + $0x10] sm:$0xff]
    %v61 = vld [vmem:[%s0 + $0x18] sm:$0xff]
    %v62 = vld [vmem:[%s0 + $0x20] sm:$0xff]
    %v63 = vld [vmem:[%s0 + $0x28] sm:$0xff]
    %v64 = vld [vmem:[%s0 + $0x30] sm:$0xff]
    %v65 = vld [vmem:[%s0 + $0x38] sm:$0xff]
    %v66 = vld [vmem:[%s0 + $0x40] sm:$0xff]
    %v67 = vld [vmem:[%s0 + $0x48] sm:$0xff]
    %v68 = vld [vmem:[%s0 + $0x50] sm:$0xff]
    %v69 = vld [vmem:[%s0 + $0x58] sm:$0xff]
    %v70 = vld [vmem:[%s0 + $0x60] sm:$0xff]
    %v71 = vld [vmem:[%s0 + $0x68] sm:$0xff]
    %v72 = vld [vmem:[%s0 + $0x70] sm:$0xff]
    %v73 = vld [vmem:[%s0 + $0x78] sm:$0xff]
    %v74 = vld [vmem:[%s0 + $0x80] sm:$0xff]
    %v75 = vld [vmem:[%s0 + $0x88] sm:$0xff]
    %v76 = vld [vmem:[%s0 + $0x90] sm:$0xff]
    %v77 = vld [vmem:[%s0 + $0x98] sm:$0xff]
    %v78 = vld [vmem:[%s0 + $0xa0] sm:$0xff]
    %v79 = vld [vmem:[%s0 + $0xa8] sm:$0xff]
    %v80 = vld [vmem:[%s0 + $0xb0] sm:$0xff]
    %v81 = vld [vmem:[%s0 + $0xb8] sm:$0xff]
    %v82 = vld [vmem:[%s0 + $0xc0] sm:$0xff]
    %v83 = vld [vmem:[%s0 + $0xc8] sm:$0xff]
    %v84 = vld [vmem:[%s0 + $0xd0] sm:$0xff]
    %v85 = vld [vmem:[%s0 + $0xd8] sm:$0xff]
    %v86 = vld [vmem:[%s0 + $0xe0] sm:$0xff]
    %v87 = vld [vmem:[%s0 + $0xe8] sm:$0xff]
    %v88 = vld [vmem:[%s0 + $0xf0] sm:$0xff]
    %v89 = vld [vmem:[%s0 + $0xf8] sm:$0xff]
    %v90 = vld [vmem:[%s0 + $0x100] sm:$0xff]
    %v91 = vld [vmem:[%s0 + $0x108] sm:$0xff]
    %v92 = vld [vmem:[%s0 + $0x110] sm:$0xff]
    %v93 = vld [vmem:[%s0 + $0x118] sm:$0xff]
    %v94 = vld [vmem:[%s0 + $0x120] sm:$0x3]
    %v95 = vld [vmem:[%s0 + $0x128] sm:$0x3]
    %v96 = vld [vmem:[%s0 + $0x130] sm:$0x3]
    %v98 = vlaneseq
    %v99 = vshrl.u32 %v98, 7
    %v100 = vsub.s32 0, %v99
    %v101 = vrot.slane %v57, %v100
    %vm103 = vcmask 261120
    %v105 = vsel %vm103, %v60, 0
    %v108 = vsel %vm103, %v63, 0
    %v111 = vsel %vm103, %v66, 0
    %v114 = vsel %vm103, %v69, 0
    %v117 = vsel %vm103, %v72, 0
    %v120 = vsel %vm103, %v75, 0
    %v123 = vsel %vm103, %v78, 0
    %v126 = vsel %vm103, %v81, 0
    %v129 = vsel %vm103, %v84, 0
    %v132 = vsel %vm103, %v87, 0
    %v135 = vsel %vm103, %v90, 0
    %v138 = vsel %vm103, %v93, 0
    %v141 = vsel %vm103, %v96, 0
    %143 = vmatprep.subr.mxu0 0.0
    %144 = vmatpush1.msra.mxu0 %v36
    %145 = vmatprep.subr.mxu0 0.0
    %146 = vmatpush1.msra.mxu0 %v35
    %147 = vmatprep.subr.mxu0 0.0
    %148 = vmatpush1.msra.mxu0 %v34
    %149 = vmatprep.subr.mxu0 0.0
    %150 = vmatpush1.msra.mxu0 %v33
    %151 = vmatprep.subr.mxu0 0.0
    %152 = vmatpush1.msra.mxu0 %v32
    %153 = vmatprep.subr.mxu0 0.0
    %154 = vmatpush1.msra.mxu0 %v31
    %155 = vmatprep.subr.mxu0 0.0
    %156 = vmatpush1.msra.mxu0 %v30
    %157 = vmatprep.subr.mxu0 0.0
    %158 = vmatpush1.msra.mxu0 %v29
    %159 = vmatprep.subr.mxu0 0.0
    %160 = vmatpush1.msra.mxu0 %v28
    %161 = vmatprep.subr.mxu0 0.0
    %162 = vmatpush1.msra.mxu0 %v27
    %163 = vmatprep.subr.mxu0 0.0
    %164 = vmatpush1.msra.mxu0 %v26
    %165 = vmatprep.subr.mxu0 0.0
    %166 = vmatpush1.msra.mxu0 %v25
    %167 = vmatprep.subr.mxu0 0.0
    %168 = vmatpush1.msra.mxu0 %v24
    %169 = vmatprep.subr.mxu0 0.0
    %170 = vmatpush1.msra.mxu0 %v23
    %171 = vmatprep.subr.mxu0 0.0
    %172 = vmatpush1.msra.mxu0 %v22
    %173 = vmatprep.subr.mxu0 0.0
    %174 = vmatpush1.msra.mxu0 %v21
    %175 = vmatprep.subr.mxu0 0.0
    %176 = vmatpush2.msra.mxu0 %v52
    %177 = vmatprep.subr.mxu0 0.0
    %178 = vmatpush2.msra.mxu0 %v51
    %179 = vmatprep.subr.mxu0 0.0
    %180 = vmatpush2.msra.mxu0 %v50
    %181 = vmatprep.subr.mxu0 0.0
    %182 = vmatpush2.msra.mxu0 %v49
    %183 = vmatprep.subr.mxu0 0.0
    %184 = vmatpush2.msra.mxu0 %v48
    %185 = vmatprep.subr.mxu0 0.0
    %186 = vmatpush2.msra.mxu0 %v47
    %187 = vmatprep.subr.mxu0 0.0
    %188 = vmatpush2.msra.mxu0 %v46
    %189 = vmatprep.subr.mxu0 0.0
    %190 = vmatpush2.msra.mxu0 %v45
    %191 = vmatprep.subr.mxu0 0.0
    %192 = vmatpush2.msra.mxu0 %v44
    %193 = vmatprep.subr.mxu0 0.0
    %194 = vmatpush2.msra.mxu0 %v43
    %195 = vmatprep.subr.mxu0 0.0
    %196 = vmatpush2.msra.mxu0 %v42
    %197 = vmatprep.subr.mxu0 0.0
    %198 = vmatpush2.msra.mxu0 %v41
    %199 = vmatprep.subr.mxu0 0.0
    %200 = vmatpush2.msra.mxu0 %v40
    %201 = vmatprep.subr.mxu0 0.0
    %202 = vmatpush2.msra.mxu0 %v39
    %203 = vmatprep.subr.mxu0 0.0
    %204 = vmatpush2.msra.mxu0 %v38
    %205 = vmatprep.subr.mxu0 0.0
    %206 = vmatpush2.msra.mxu0 %v37
    %207 = vmatprep.mubr.f32.mxu0 %v59
    %208 = vmatmul.mubr.f32.gmra.mxu0 %v58
    %v209 = vpop.f32.mrf.mxu0
    %v210 = vadd.f32 %v101, %v209
    %v211 = vpop.f32.mrf.mxu0
    %212 = vmatprep.mubr.f32.mxu0 %v62
    %213 = vmatmul.mubr.f32.gmra.mxu0 %v61
    %v214 = vpop.f32.mrf.mxu0
    %v215 = vadd.f32 %v101, %v214
    %v216 = vpop.f32.mrf.mxu0
    %217 = vmatprep.mubr.f32.mxu0 %v65
    %218 = vmatmul.mubr.f32.gmra.mxu0 %v64
    %v219 = vpop.f32.mrf.mxu0
    %v220 = vadd.f32 %v101, %v219
    %v221 = vpop.f32.mrf.mxu0
    %222 = vmatprep.mubr.f32.mxu0 %v68
    %223 = vmatmul.mubr.f32.gmra.mxu0 %v67
    %v224 = vpop.f32.mrf.mxu0
    %v225 = vadd.f32 %v101, %v224
    %v226 = vpop.f32.mrf.mxu0
    %227 = vmatprep.mubr.f32.mxu0 %v71
    %228 = vmatmul.mubr.f32.gmra.mxu0 %v70
    %v229 = vpop.f32.mrf.mxu0
    %v230 = vadd.f32 %v101, %v229
    %v231 = vpop.f32.mrf.mxu0
    %232 = vmatprep.mubr.f32.mxu0 %v74
    %233 = vmatmul.mubr.f32.gmra.mxu0 %v73
    %v234 = vpop.f32.mrf.mxu0
    %v235 = vadd.f32 %v101, %v234
    %v236 = vpop.f32.mrf.mxu0
    %237 = vmatprep.mubr.f32.mxu0 %v77
    %238 = vmatmul.mubr.f32.gmra.mxu0 %v76
    %v239 = vpop.f32.mrf.mxu0
    %v240 = vadd.f32 %v101, %v239
    %v241 = vpop.f32.mrf.mxu0
    %242 = vmatprep.mubr.f32.mxu0 %v80
    %243 = vmatmul.mubr.f32.gmra.mxu0 %v79
    %v244 = vpop.f32.mrf.mxu0
    %v245 = vadd.f32 %v101, %v244
    %v246 = vpop.f32.mrf.mxu0
    %247 = vmatprep.mubr.f32.mxu0 %v83
    %248 = vmatmul.mubr.f32.gmra.mxu0 %v82
    %v249 = vpop.f32.mrf.mxu0
    %v250 = vadd.f32 %v101, %v249
    %v251 = vpop.f32.mrf.mxu0
    %252 = vmatprep.mubr.f32.mxu0 %v86
    %253 = vmatmul.mubr.f32.gmra.mxu0 %v85
    %v254 = vpop.f32.mrf.mxu0
    %v255 = vadd.f32 %v101, %v254
    %v256 = vpop.f32.mrf.mxu0
    %257 = vmatprep.mubr.f32.mxu0 %v89
    %258 = vmatmul.mubr.f32.gmra.mxu0 %v88
    %v259 = vpop.f32.mrf.mxu0
    %v260 = vadd.f32 %v101, %v259
    %v261 = vpop.f32.mrf.mxu0
    %262 = vmatprep.mubr.f32.mxu0 %v92
    %263 = vmatmul.mubr.f32.gmra.mxu0 %v91
    %v264 = vpop.f32.mrf.mxu0
    %v265 = vadd.f32 %v101, %v264
    %v266 = vpop.f32.mrf.mxu0
    %267 = vmatprep.mubr.f32.mxu0 %v95
    %268 = vmatmul.mubr.f32.gmra.mxu0 %v94
    %v269 = vpop.f32.mrf.mxu0
    %v270 = vadd.f32 %v101, %v269
    %v271 = vpop.f32.mrf.mxu0
    %272 = vdwg.mxu0
    %273 = vmatprep.subr.mxu0 0.0
    %274 = vmatpush1.msra.mxu0 0.0
    %275 = vmatprep.subr.mxu0 0.0
    %276 = vmatpush1.msra.mxu0 0.0
    %277 = vmatprep.subr.mxu0 0.0
    %278 = vmatpush1.msra.mxu0 0.0
    %279 = vmatprep.subr.mxu0 0.0
    %280 = vmatpush1.msra.mxu0 0.0
    %281 = vmatprep.subr.mxu0 0.0
    %282 = vmatpush1.msra.mxu0 0.0
    %283 = vmatprep.subr.mxu0 0.0
    %284 = vmatpush1.msra.mxu0 0.0
    %285 = vmatprep.subr.mxu0 0.0
    %286 = vmatpush1.msra.mxu0 0.0
    %287 = vmatprep.subr.mxu0 0.0
    %288 = vmatpush1.msra.mxu0 0.0
    %289 = vmatprep.subr.mxu0 0.0
    %290 = vmatpush1.msra.mxu0 0.0
    %291 = vmatprep.subr.mxu0 0.0
    %292 = vmatpush1.msra.mxu0 0.0
    %293 = vmatprep.subr.mxu0 0.0
    %294 = vmatpush1.msra.mxu0 0.0
    %295 = vmatprep.subr.mxu0 0.0
    %296 = vmatpush1.msra.mxu0 0.0
    %297 = vmatprep.subr.mxu0 0.0
    %298 = vmatpush1.msra.mxu0 %v56
    %299 = vmatprep.subr.mxu0 0.0
    %300 = vmatpush1.msra.mxu0 %v55
    %301 = vmatprep.subr.mxu0 0.0
    %302 = vmatpush1.msra.mxu0 %v54
    %303 = vmatprep.subr.mxu0 0.0
    %304 = vmatpush1.msra.mxu0 %v53
    %305 = vmatprep.subr.mxu0 0.0
    %306 = vmatpush2.msra.mxu0 0.0
    %307 = vmatprep.subr.mxu0 0.0
    %308 = vmatpush2.msra.mxu0 0.0
    %309 = vmatprep.subr.mxu0 0.0
    %310 = vmatpush2.msra.mxu0 0.0
    %311 = vmatprep.subr.mxu0 0.0
    %312 = vmatpush2.msra.mxu0 0.0
    %313 = vmatprep.subr.mxu0 0.0
    %314 = vmatpush2.msra.mxu0 0.0
    %315 = vmatprep.subr.mxu0 0.0
    %316 = vmatpush2.msra.mxu0 0.0
    %317 = vmatprep.subr.mxu0 0.0
    %318 = vmatpush2.msra.mxu0 0.0
    %319 = vmatprep.subr.mxu0 0.0
    %320 = vmatpush2.msra.mxu0 0.0
    %321 = vmatprep.subr.mxu0 0.0
    %322 = vmatpush2.msra.mxu0 0.0
    %323 = vmatprep.subr.mxu0 0.0
    %324 = vmatpush2.msra.mxu0 0.0
    %325 = vmatprep.subr.mxu0 0.0
    %326 = vmatpush2.msra.mxu0 0.0
    %327 = vmatprep.subr.mxu0 0.0
    %328 = vmatpush2.msra.mxu0 0.0
    %329 = vmatprep.subr.mxu0 0.0
    %330 = vmatpush2.msra.mxu0 0.0
    %331 = vmatprep.subr.mxu0 0.0
    %332 = vmatpush2.msra.mxu0 0.0
    %333 = vmatprep.subr.mxu0 0.0
    %334 = vmatpush2.msra.mxu0 0.0
    %335 = vmatprep.subr.mxu0 0.0
    %336 = vmatpush2.msra.mxu0 0.0
    %337 = vmatprep.mubr.f32.mxu0 0.0
    %338 = vmatmul.mubr.f32.gmra.mxu0 %v105
    %v339 = vpop.f32.mrf.mxu0
    %v340 = vadd.f32 %v210, %v339
    %v341 = vpop.f32.mrf.mxu0
    %342 = vmatprep.mubr.f32.mxu0 0.0
    %343 = vmatmul.mubr.f32.gmra.mxu0 %v108
    %v344 = vpop.f32.mrf.mxu0
    %v345 = vadd.f32 %v215, %v344
    %v346 = vpop.f32.mrf.mxu0
    %347 = vmatprep.mubr.f32.mxu0 0.0
    %348 = vmatmul.mubr.f32.gmra.mxu0 %v111
    %v349 = vpop.f32.mrf.mxu0
    %v350 = vadd.f32 %v220, %v349
    %v351 = vpop.f32.mrf.mxu0
    %352 = vmatprep.mubr.f32.mxu0 0.0
    %353 = vmatmul.mubr.f32.gmra.mxu0 %v114
    %v354 = vpop.f32.mrf.mxu0
    %v355 = vadd.f32 %v225, %v354
    %v356 = vpop.f32.mrf.mxu0
    %357 = vmatprep.mubr.f32.mxu0 0.0
    %358 = vmatmul.mubr.f32.gmra.mxu0 %v117
    %v359 = vpop.f32.mrf.mxu0
    %v360 = vadd.f32 %v230, %v359
    %v361 = vpop.f32.mrf.mxu0
    %362 = vmatprep.mubr.f32.mxu0 0.0
    %363 = vmatmul.mubr.f32.gmra.mxu0 %v120
    %v364 = vpop.f32.mrf.mxu0
    %v365 = vadd.f32 %v235, %v364
    %v366 = vpop.f32.mrf.mxu0
    %367 = vmatprep.mubr.f32.mxu0 0.0
    %368 = vmatmul.mubr.f32.gmra.mxu0 %v123
    %v369 = vpop.f32.mrf.mxu0
    %v370 = vadd.f32 %v240, %v369
    %v371 = vpop.f32.mrf.mxu0
    %372 = vmatprep.mubr.f32.mxu0 0.0
    %373 = vmatmul.mubr.f32.gmra.mxu0 %v126
    %v374 = vpop.f32.mrf.mxu0
    %v375 = vadd.f32 %v245, %v374
    %v376 = vpop.f32.mrf.mxu0
    %377 = vmatprep.mubr.f32.mxu0 0.0
    %378 = vmatmul.mubr.f32.gmra.mxu0 %v129
    %v379 = vpop.f32.mrf.mxu0
    %v380 = vadd.f32 %v250, %v379
    %v381 = vpop.f32.mrf.mxu0
    %382 = vmatprep.mubr.f32.mxu0 0.0
    %383 = vmatmul.mubr.f32.gmra.mxu0 %v132
    %v384 = vpop.f32.mrf.mxu0
    %v385 = vadd.f32 %v255, %v384
    %v386 = vpop.f32.mrf.mxu0
    %387 = vmatprep.mubr.f32.mxu0 0.0
    %388 = vmatmul.mubr.f32.gmra.mxu0 %v135
    %v389 = vpop.f32.mrf.mxu0
    %v390 = vadd.f32 %v260, %v389
    %v391 = vpop.f32.mrf.mxu0
    %392 = vmatprep.mubr.f32.mxu0 0.0
    %393 = vmatmul.mubr.f32.gmra.mxu0 %v138
    %v394 = vpop.f32.mrf.mxu0
    %v395 = vadd.f32 %v265, %v394
    %v396 = vpop.f32.mrf.mxu0
    %397 = vmatprep.mubr.f32.mxu0 0.0
    %398 = vmatmul.mubr.f32.gmra.mxu0 %v141
    %v399 = vpop.f32.mrf.mxu0
    %v400 = vadd.f32 %v270, %v399
    %v401 = vpop.f32.mrf.mxu0
    %402 = vdwg.mxu0
    %v403 = vmax.f32 %v340, 0.0
    %v404 = vmax.f32 %v345, 0.0
    %v405 = vmax.f32 %v350, 0.0
    %v406 = vmax.f32 %v355, 0.0
    %v407 = vmax.f32 %v360, 0.0
    %v408 = vmax.f32 %v365, 0.0
    %v409 = vmax.f32 %v370, 0.0
    %v410 = vmax.f32 %v375, 0.0
    %v411 = vmax.f32 %v380, 0.0
    %v412 = vmax.f32 %v385, 0.0
    %v413 = vmax.f32 %v390, 0.0
    %v414 = vmax.f32 %v395, 0.0
    %v415 = vmax.f32 %v400, 0.0
    %s416 = scalar_lea.vmem %s0, 312
    %v417 = vld [vmem:[%s416] sm:$0xff]
    %v418 = vld [vmem:[%s416 + $0x8] sm:$0xff]
    %v419 = vld [vmem:[%s416 + $0x10] sm:$0xff]
    %v420 = vld [vmem:[%s416 + $0x18] sm:$0xff]
    %v421 = vld [vmem:[%s416 + $0x20] sm:$0xff]
    %v422 = vld [vmem:[%s416 + $0x28] sm:$0xff]
    %v423 = vld [vmem:[%s416 + $0x30] sm:$0xff]
    %v424 = vld [vmem:[%s416 + $0x38] sm:$0xff]
    %v425 = vld [vmem:[%s416 + $0x40] sm:$0xff]
    %v426 = vld [vmem:[%s416 + $0x48] sm:$0xff]
    %v427 = vld [vmem:[%s416 + $0x50] sm:$0xff]
    %v428 = vld [vmem:[%s416 + $0x58] sm:$0xff]
    %v429 = vld [vmem:[%s416 + $0x60] sm:$0xff]
    %v430 = vld [vmem:[%s416 + $0x68] sm:$0xff]
    %v431 = vld [vmem:[%s416 + $0x70] sm:$0xff]
    %v432 = vld [vmem:[%s416 + $0x78] sm:$0xff]
    %v433 = vld [vmem:[%s416 + $0x80] sm:$0xff]
    %v434 = vld [vmem:[%s416 + $0x88] sm:$0xff]
    %v435 = vld [vmem:[%s416 + $0x90] sm:$0xff]
    %v436 = vld [vmem:[%s416 + $0x98] sm:$0xff]
    %v437 = vld [vmem:[%s416 + $0xa0] sm:$0xff]
    %v438 = vld [vmem:[%s416 + $0xa8] sm:$0xff]
    %v439 = vld [vmem:[%s416 + $0xb0] sm:$0xff]
    %v440 = vld [vmem:[%s416 + $0xb8] sm:$0xff]
    %v441 = vld [vmem:[%s416 + $0xc0] sm:$0xff]
    %v442 = vld [vmem:[%s416 + $0xc8] sm:$0xff]
    %v443 = vld [vmem:[%s416 + $0xd0] sm:$0xff]
    %v444 = vld [vmem:[%s416 + $0xd8] sm:$0xff]
    %v445 = vld [vmem:[%s416 + $0xe0] sm:$0xff]
    %v446 = vld [vmem:[%s416 + $0xe8] sm:$0xff]
    %v447 = vld [vmem:[%s416 + $0xf0] sm:$0xff]
    %v448 = vld [vmem:[%s416 + $0xf8] sm:$0xff]
    %v449 = vld [vmem:[%s416 + $0x100] sm:$0xff]
    %v450 = vld [vmem:[%s416 + $0x108] sm:$0xff]
    %v451 = vld [vmem:[%s416 + $0x110] sm:$0xff]
    %v452 = vld [vmem:[%s416 + $0x118] sm:$0xff]
    %v453 = vld [vmem:[%s416 + $0x120] sm:$0x3]
    %v454 = vld [vmem:[%s416 + $0x128] sm:$0x3]
    %v455 = vld [vmem:[%s416 + $0x130] sm:$0x3]
    %v457 = vsel %vm103, %v419, 0
    %v460 = vsel %vm103, %v422, 0
    %v463 = vsel %vm103, %v425, 0
    %v466 = vsel %vm103, %v428, 0
    %v469 = vsel %vm103, %v431, 0
    %v472 = vsel %vm103, %v434, 0
    %v475 = vsel %vm103, %v437, 0
    %v478 = vsel %vm103, %v440, 0
    %v481 = vsel %vm103, %v443, 0
    %v484 = vsel %vm103, %v446, 0
    %v487 = vsel %vm103, %v449, 0
    %v490 = vsel %vm103, %v452, 0
    %v493 = vsel %vm103, %v455, 0
    %495 = vmatprep.subr.mxu0 0.0
    %496 = vmatpush1.msra.mxu0 %v36
    %497 = vmatprep.subr.mxu0 0.0
    %498 = vmatpush1.msra.mxu0 %v35
    %499 = vmatprep.subr.mxu0 0.0
    %500 = vmatpush1.msra.mxu0 %v34
    %501 = vmatprep.subr.mxu0 0.0
    %502 = vmatpush1.msra.mxu0 %v33
    %503 = vmatprep.subr.mxu0 0.0
    %504 = vmatpush1.msra.mxu0 %v32
    %505 = vmatprep.subr.mxu0 0.0
    %506 = vmatpush1.msra.mxu0 %v31
    %507 = vmatprep.subr.mxu0 0.0
    %508 = vmatpush1.msra.mxu0 %v30
    %509 = vmatprep.subr.mxu0 0.0
    %510 = vmatpush1.msra.mxu0 %v29
    %511 = vmatprep.subr.mxu0 0.0
    %512 = vmatpush1.msra.mxu0 %v28
    %513 = vmatprep.subr.mxu0 0.0
    %514 = vmatpush1.msra.mxu0 %v27
    %515 = vmatprep.subr.mxu0 0.0
    %516 = vmatpush1.msra.mxu0 %v26
    %517 = vmatprep.subr.mxu0 0.0
    %518 = vmatpush1.msra.mxu0 %v25
    %519 = vmatprep.subr.mxu0 0.0
    %520 = vmatpush1.msra.mxu0 %v24
    %521 = vmatprep.subr.mxu0 0.0
    %522 = vmatpush1.msra.mxu0 %v23
    %523 = vmatprep.subr.mxu0 0.0
    %524 = vmatpush1.msra.mxu0 %v22
    %525 = vmatprep.subr.mxu0 0.0
    %526 = vmatpush1.msra.mxu0 %v21
    %527 = vmatprep.subr.mxu0 0.0
    %528 = vmatpush2.msra.mxu0 %v52
    %529 = vmatprep.subr.mxu0 0.0
    %530 = vmatpush2.msra.mxu0 %v51
    %531 = vmatprep.subr.mxu0 0.0
    %532 = vmatpush2.msra.mxu0 %v50
    %533 = vmatprep.subr.mxu0 0.0
    %534 = vmatpush2.msra.mxu0 %v49
    %535 = vmatprep.subr.mxu0 0.0
    %536 = vmatpush2.msra.mxu0 %v48
    %537 = vmatprep.subr.mxu0 0.0
    %538 = vmatpush2.msra.mxu0 %v47
    %539 = vmatprep.subr.mxu0 0.0
    %540 = vmatpush2.msra.mxu0 %v46
    %541 = vmatprep.subr.mxu0 0.0
    %542 = vmatpush2.msra.mxu0 %v45
    %543 = vmatprep.subr.mxu0 0.0
    %544 = vmatpush2.msra.mxu0 %v44
    %545 = vmatprep.subr.mxu0 0.0
    %546 = vmatpush2.msra.mxu0 %v43
    %547 = vmatprep.subr.mxu0 0.0
    %548 = vmatpush2.msra.mxu0 %v42
    %549 = vmatprep.subr.mxu0 0.0
    %550 = vmatpush2.msra.mxu0 %v41
    %551 = vmatprep.subr.mxu0 0.0
    %552 = vmatpush2.msra.mxu0 %v40
    %553 = vmatprep.subr.mxu0 0.0
    %554 = vmatpush2.msra.mxu0 %v39
    %555 = vmatprep.subr.mxu0 0.0
    %556 = vmatpush2.msra.mxu0 %v38
    %557 = vmatprep.subr.mxu0 0.0
    %558 = vmatpush2.msra.mxu0 %v37
    %559 = vmatprep.mubr.f32.mxu0 %v418
    %560 = vmatmul.mubr.f32.gmra.mxu0 %v417
    %v561 = vpop.f32.mrf.mxu0
    %v562 = vadd.f32 %v101, %v561
    %v563 = vpop.f32.mrf.mxu0
    %564 = vmatprep.mubr.f32.mxu0 %v421
    %565 = vmatmul.mubr.f32.gmra.mxu0 %v420
    %v566 = vpop.f32.mrf.mxu0
    %v567 = vadd.f32 %v101, %v566
    %v568 = vpop.f32.mrf.mxu0
    %569 = vmatprep.mubr.f32.mxu0 %v424
    %570 = vmatmul.mubr.f32.gmra.mxu0 %v423
    %v571 = vpop.f32.mrf.mxu0
    %v572 = vadd.f32 %v101, %v571
    %v573 = vpop.f32.mrf.mxu0
    %574 = vmatprep.mubr.f32.mxu0 %v427
    %575 = vmatmul.mubr.f32.gmra.mxu0 %v426
    %v576 = vpop.f32.mrf.mxu0
    %v577 = vadd.f32 %v101, %v576
    %v578 = vpop.f32.mrf.mxu0
    %579 = vmatprep.mubr.f32.mxu0 %v430
    %580 = vmatmul.mubr.f32.gmra.mxu0 %v429
    %v581 = vpop.f32.mrf.mxu0
    %v582 = vadd.f32 %v101, %v581
    %v583 = vpop.f32.mrf.mxu0
    %584 = vmatprep.mubr.f32.mxu0 %v433
    %585 = vmatmul.mubr.f32.gmra.mxu0 %v432
    %v586 = vpop.f32.mrf.mxu0
    %v587 = vadd.f32 %v101, %v586
    %v588 = vpop.f32.mrf.mxu0
    %589 = vmatprep.mubr.f32.mxu0 %v436
    %590 = vmatmul.mubr.f32.gmra.mxu0 %v435
    %v591 = vpop.f32.mrf.mxu0
    %v592 = vadd.f32 %v101, %v591
    %v593 = vpop.f32.mrf.mxu0
    %594 = vmatprep.mubr.f32.mxu0 %v439
    %595 = vmatmul.mubr.f32.gmra.mxu0 %v438
    %v596 = vpop.f32.mrf.mxu0
    %v597 = vadd.f32 %v101, %v596
    %v598 = vpop.f32.mrf.mxu0
    %599 = vmatprep.mubr.f32.mxu0 %v442
    %600 = vmatmul.mubr.f32.gmra.mxu0 %v441
    %v601 = vpop.f32.mrf.mxu0
    %v602 = vadd.f32 %v101, %v601
    %v603 = vpop.f32.mrf.mxu0
    %604 = vmatprep.mubr.f32.mxu0 %v445
    %605 = vmatmul.mubr.f32.gmra.mxu0 %v444
    %v606 = vpop.f32.mrf.mxu0
    %v607 = vadd.f32 %v101, %v606
    %v608 = vpop.f32.mrf.mxu0
    %609 = vmatprep.mubr.f32.mxu0 %v448
    %610 = vmatmul.mubr.f32.gmra.mxu0 %v447
    %v611 = vpop.f32.mrf.mxu0
    %v612 = vadd.f32 %v101, %v611
    %v613 = vpop.f32.mrf.mxu0
    %614 = vmatprep.mubr.f32.mxu0 %v451
    %615 = vmatmul.mubr.f32.gmra.mxu0 %v450
    %v616 = vpop.f32.mrf.mxu0
    %v617 = vadd.f32 %v101, %v616
    %v618 = vpop.f32.mrf.mxu0
    %619 = vmatprep.mubr.f32.mxu0 %v454
    %620 = vmatmul.mubr.f32.gmra.mxu0 %v453
    %v621 = vpop.f32.mrf.mxu0
    %v622 = vadd.f32 %v101, %v621
    %v623 = vpop.f32.mrf.mxu0
    %624 = vdwg.mxu0
    %625 = vmatprep.subr.mxu0 0.0
    %626 = vmatpush1.msra.mxu0 0.0
    %627 = vmatprep.subr.mxu0 0.0
    %628 = vmatpush1.msra.mxu0 0.0
    %629 = vmatprep.subr.mxu0 0.0
    %630 = vmatpush1.msra.mxu0 0.0
    %631 = vmatprep.subr.mxu0 0.0
    %632 = vmatpush1.msra.mxu0 0.0
    %633 = vmatprep.subr.mxu0 0.0
    %634 = vmatpush1.msra.mxu0 0.0
    %635 = vmatprep.subr.mxu0 0.0
    %636 = vmatpush1.msra.mxu0 0.0
    %637 = vmatprep.subr.mxu0 0.0
    %638 = vmatpush1.msra.mxu0 0.0
    %639 = vmatprep.subr.mxu0 0.0
    %640 = vmatpush1.msra.mxu0 0.0
    %641 = vmatprep.subr.mxu0 0.0
    %642 = vmatpush1.msra.mxu0 0.0
    %643 = vmatprep.subr.mxu0 0.0
    %644 = vmatpush1.msra.mxu0 0.0
    %645 = vmatprep.subr.mxu0 0.0
    %646 = vmatpush1.msra.mxu0 0.0
    %647 = vmatprep.subr.mxu0 0.0
    %648 = vmatpush1.msra.mxu0 0.0
    %649 = vmatprep.subr.mxu0 0.0
    %650 = vmatpush1.msra.mxu0 %v56
    %651 = vmatprep.subr.mxu0 0.0
    %652 = vmatpush1.msra.mxu0 %v55
    %653 = vmatprep.subr.mxu0 0.0
    %654 = vmatpush1.msra.mxu0 %v54
    %655 = vmatprep.subr.mxu0 0.0
    %656 = vmatpush1.msra.mxu0 %v53
    %657 = vmatprep.subr.mxu0 0.0
    %658 = vmatpush2.msra.mxu0 0.0
    %659 = vmatprep.subr.mxu0 0.0
    %660 = vmatpush2.msra.mxu0 0.0
    %661 = vmatprep.subr.mxu0 0.0
    %662 = vmatpush2.msra.mxu0 0.0
    %663 = vmatprep.subr.mxu0 0.0
    %664 = vmatpush2.msra.mxu0 0.0
    %665 = vmatprep.subr.mxu0 0.0
    %666 = vmatpush2.msra.mxu0 0.0
    %667 = vmatprep.subr.mxu0 0.0
    %668 = vmatpush2.msra.mxu0 0.0
    %669 = vmatprep.subr.mxu0 0.0
    %670 = vmatpush2.msra.mxu0 0.0
    %671 = vmatprep.subr.mxu0 0.0
    %672 = vmatpush2.msra.mxu0 0.0
    %673 = vmatprep.subr.mxu0 0.0
    %674 = vmatpush2.msra.mxu0 0.0
    %675 = vmatprep.subr.mxu0 0.0
    %676 = vmatpush2.msra.mxu0 0.0
    %677 = vmatprep.subr.mxu0 0.0
    %678 = vmatpush2.msra.mxu0 0.0
    %679 = vmatprep.subr.mxu0 0.0
    %680 = vmatpush2.msra.mxu0 0.0
    %681 = vmatprep.subr.mxu0 0.0
    %682 = vmatpush2.msra.mxu0 0.0
    %683 = vmatprep.subr.mxu0 0.0
    %684 = vmatpush2.msra.mxu0 0.0
    %685 = vmatprep.subr.mxu0 0.0
    %686 = vmatpush2.msra.mxu0 0.0
    %687 = vmatprep.subr.mxu0 0.0
    %688 = vmatpush2.msra.mxu0 0.0
    %689 = vmatprep.mubr.f32.mxu0 0.0
    %690 = vmatmul.mubr.f32.gmra.mxu0 %v457
    %v691 = vpop.f32.mrf.mxu0
    %v692 = vadd.f32 %v562, %v691
    %v693 = vpop.f32.mrf.mxu0
    %694 = vmatprep.mubr.f32.mxu0 0.0
    %695 = vmatmul.mubr.f32.gmra.mxu0 %v460
    %v696 = vpop.f32.mrf.mxu0
    %v697 = vadd.f32 %v567, %v696
    %v698 = vpop.f32.mrf.mxu0
    %699 = vmatprep.mubr.f32.mxu0 0.0
    %700 = vmatmul.mubr.f32.gmra.mxu0 %v463
    %v701 = vpop.f32.mrf.mxu0
    %v702 = vadd.f32 %v572, %v701
    %v703 = vpop.f32.mrf.mxu0
    %704 = vmatprep.mubr.f32.mxu0 0.0
    %705 = vmatmul.mubr.f32.gmra.mxu0 %v466
    %v706 = vpop.f32.mrf.mxu0
    %v707 = vadd.f32 %v577, %v706
    %v708 = vpop.f32.mrf.mxu0
    %709 = vmatprep.mubr.f32.mxu0 0.0
    %710 = vmatmul.mubr.f32.gmra.mxu0 %v469
    %v711 = vpop.f32.mrf.mxu0
    %v712 = vadd.f32 %v582, %v711
    %v713 = vpop.f32.mrf.mxu0
    %714 = vmatprep.mubr.f32.mxu0 0.0
    %715 = vmatmul.mubr.f32.gmra.mxu0 %v472
    %v716 = vpop.f32.mrf.mxu0
    %v717 = vadd.f32 %v587, %v716
    %v718 = vpop.f32.mrf.mxu0
    %719 = vmatprep.mubr.f32.mxu0 0.0
    %720 = vmatmul.mubr.f32.gmra.mxu0 %v475
    %v721 = vpop.f32.mrf.mxu0
    %v722 = vadd.f32 %v592, %v721
    %v723 = vpop.f32.mrf.mxu0
    %724 = vmatprep.mubr.f32.mxu0 0.0
    %725 = vmatmul.mubr.f32.gmra.mxu0 %v478
    %v726 = vpop.f32.mrf.mxu0
    %v727 = vadd.f32 %v597, %v726
    %v728 = vpop.f32.mrf.mxu0
    %729 = vmatprep.mubr.f32.mxu0 0.0
    %730 = vmatmul.mubr.f32.gmra.mxu0 %v481
    %v731 = vpop.f32.mrf.mxu0
    %v732 = vadd.f32 %v602, %v731
    %v733 = vpop.f32.mrf.mxu0
    %734 = vmatprep.mubr.f32.mxu0 0.0
    %735 = vmatmul.mubr.f32.gmra.mxu0 %v484
    %v736 = vpop.f32.mrf.mxu0
    %v737 = vadd.f32 %v607, %v736
    %v738 = vpop.f32.mrf.mxu0
    %739 = vmatprep.mubr.f32.mxu0 0.0
    %740 = vmatmul.mubr.f32.gmra.mxu0 %v487
    %v741 = vpop.f32.mrf.mxu0
    %v742 = vadd.f32 %v612, %v741
    %v743 = vpop.f32.mrf.mxu0
    %744 = vmatprep.mubr.f32.mxu0 0.0
    %745 = vmatmul.mubr.f32.gmra.mxu0 %v490
    %v746 = vpop.f32.mrf.mxu0
    %v747 = vadd.f32 %v617, %v746
    %v748 = vpop.f32.mrf.mxu0
    %749 = vmatprep.mubr.f32.mxu0 0.0
    %750 = vmatmul.mubr.f32.gmra.mxu0 %v493
    %v751 = vpop.f32.mrf.mxu0
    %v752 = vadd.f32 %v622, %v751
    %v753 = vpop.f32.mrf.mxu0
    %754 = vdwg.mxu0
    %v755 = vmax.f32 %v692, 0.0
    %v756 = vmax.f32 %v697, 0.0
    %v757 = vmax.f32 %v702, 0.0
    %v758 = vmax.f32 %v707, 0.0
    %v759 = vmax.f32 %v712, 0.0
    %v760 = vmax.f32 %v717, 0.0
    %v761 = vmax.f32 %v722, 0.0
    %v762 = vmax.f32 %v727, 0.0
    %v763 = vmax.f32 %v732, 0.0
    %v764 = vmax.f32 %v737, 0.0
    %v765 = vmax.f32 %v742, 0.0
    %v766 = vmax.f32 %v747, 0.0
    %v767 = vmax.f32 %v752, 0.0
    %s768 = scalar_lea.vmem %s0, 624
    %v769 = vld [vmem:[%s768] sm:$0xff]
    %v770 = vld [vmem:[%s768 + $0x8] sm:$0xff]
    %v771 = vld [vmem:[%s768 + $0x10] sm:$0xff]
    %v772 = vld [vmem:[%s768 + $0x18] sm:$0xff]
    %v773 = vld [vmem:[%s768 + $0x20] sm:$0xff]
    %v774 = vld [vmem:[%s768 + $0x28] sm:$0xff]
    %v775 = vld [vmem:[%s768 + $0x30] sm:$0xff]
    %v776 = vld [vmem:[%s768 + $0x38] sm:$0xff]
    %v777 = vld [vmem:[%s768 + $0x40] sm:$0xff]
    %v778 = vld [vmem:[%s768 + $0x48] sm:$0xff]
    %v779 = vld [vmem:[%s768 + $0x50] sm:$0xff]
    %v780 = vld [vmem:[%s768 + $0x58] sm:$0xff]
    %v781 = vld [vmem:[%s768 + $0x60] sm:$0xff]
    %v782 = vld [vmem:[%s768 + $0x68] sm:$0xff]
    %v783 = vld [vmem:[%s768 + $0x70] sm:$0xff]
    %v784 = vld [vmem:[%s768 + $0x78] sm:$0xff]
    %v785 = vld [vmem:[%s768 + $0x80] sm:$0xff]
    %v786 = vld [vmem:[%s768 + $0x88] sm:$0xff]
    %v787 = vld [vmem:[%s768 + $0x90] sm:$0xff]
    %v788 = vld [vmem:[%s768 + $0x98] sm:$0xff]
    %v789 = vld [vmem:[%s768 + $0xa0] sm:$0xff]
    %v790 = vld [vmem:[%s768 + $0xa8] sm:$0xff]
    %v791 = vld [vmem:[%s768 + $0xb0] sm:$0xff]
    %v792 = vld [vmem:[%s768 + $0xb8] sm:$0xff]
    %v793 = vld [vmem:[%s768 + $0xc0] sm:$0xff]
    %v794 = vld [vmem:[%s768 + $0xc8] sm:$0xff]
    %v795 = vld [vmem:[%s768 + $0xd0] sm:$0xff]
    %v796 = vld [vmem:[%s768 + $0xd8] sm:$0xff]
    %v797 = vld [vmem:[%s768 + $0xe0] sm:$0xff]
    %v798 = vld [vmem:[%s768 + $0xe8] sm:$0xff]
    %v799 = vld [vmem:[%s768 + $0xf0] sm:$0xff]
    %v800 = vld [vmem:[%s768 + $0xf8] sm:$0xff]
    %v801 = vld [vmem:[%s768 + $0x100] sm:$0xff]
    %v802 = vld [vmem:[%s768 + $0x108] sm:$0xff]
    %v803 = vld [vmem:[%s768 + $0x110] sm:$0xff]
    %v804 = vld [vmem:[%s768 + $0x118] sm:$0xff]
    %v805 = vld [vmem:[%s768 + $0x120] sm:$0x3]
    %v806 = vld [vmem:[%s768 + $0x128] sm:$0x3]
    %v807 = vld [vmem:[%s768 + $0x130] sm:$0x3]
    %v809 = vsel %vm103, %v771, 0
    %v812 = vsel %vm103, %v774, 0
    %v815 = vsel %vm103, %v777, 0
    %v818 = vsel %vm103, %v780, 0
    %v821 = vsel %vm103, %v783, 0
    %v824 = vsel %vm103, %v786, 0
    %v827 = vsel %vm103, %v789, 0
    %v830 = vsel %vm103, %v792, 0
    %v833 = vsel %vm103, %v795, 0
    %v836 = vsel %vm103, %v798, 0
    %v839 = vsel %vm103, %v801, 0
    %v842 = vsel %vm103, %v804, 0
    %v845 = vsel %vm103, %v807, 0
    %847 = vmatprep.subr.mxu0 0.0
    %848 = vmatpush1.msra.mxu0 %v36
    %849 = vmatprep.subr.mxu0 0.0
    %850 = vmatpush1.msra.mxu0 %v35
    %851 = vmatprep.subr.mxu0 0.0
    %852 = vmatpush1.msra.mxu0 %v34
    %853 = vmatprep.subr.mxu0 0.0
    %854 = vmatpush1.msra.mxu0 %v33
    %855 = vmatprep.subr.mxu0 0.0
    %856 = vmatpush1.msra.mxu0 %v32
    %857 = vmatprep.subr.mxu0 0.0
    %858 = vmatpush1.msra.mxu0 %v31
    %859 = vmatprep.subr.mxu0 0.0
    %860 = vmatpush1.msra.mxu0 %v30
    %861 = vmatprep.subr.mxu0 0.0
    %862 = vmatpush1.msra.mxu0 %v29
    %863 = vmatprep.subr.mxu0 0.0
    %864 = vmatpush1.msra.mxu0 %v28
    %865 = vmatprep.subr.mxu0 0.0
    %866 = vmatpush1.msra.mxu0 %v27
    %867 = vmatprep.subr.mxu0 0.0
    %868 = vmatpush1.msra.mxu0 %v26
    %869 = vmatprep.subr.mxu0 0.0
    %870 = vmatpush1.msra.mxu0 %v25
    %871 = vmatprep.subr.mxu0 0.0
    %872 = vmatpush1.msra.mxu0 %v24
    %873 = vmatprep.subr.mxu0 0.0
    %874 = vmatpush1.msra.mxu0 %v23
    %875 = vmatprep.subr.mxu0 0.0
    %876 = vmatpush1.msra.mxu0 %v22
    %877 = vmatprep.subr.mxu0 0.0
    %878 = vmatpush1.msra.mxu0 %v21
    %879 = vmatprep.subr.mxu0 0.0
    %880 = vmatpush2.msra.mxu0 %v52
    %881 = vmatprep.subr.mxu0 0.0
    %882 = vmatpush2.msra.mxu0 %v51
    %883 = vmatprep.subr.mxu0 0.0
    %884 = vmatpush2.msra.mxu0 %v50
    %885 = vmatprep.subr.mxu0 0.0
    %886 = vmatpush2.msra.mxu0 %v49
    %887 = vmatprep.subr.mxu0 0.0
    %888 = vmatpush2.msra.mxu0 %v48
    %889 = vmatprep.subr.mxu0 0.0
    %890 = vmatpush2.msra.mxu0 %v47
    %891 = vmatprep.subr.mxu0 0.0
    %892 = vmatpush2.msra.mxu0 %v46
    %893 = vmatprep.subr.mxu0 0.0
    %894 = vmatpush2.msra.mxu0 %v45
    %895 = vmatprep.subr.mxu0 0.0
    %896 = vmatpush2.msra.mxu0 %v44
    %897 = vmatprep.subr.mxu0 0.0
    %898 = vmatpush2.msra.mxu0 %v43
    %899 = vmatprep.subr.mxu0 0.0
    %900 = vmatpush2.msra.mxu0 %v42
    %901 = vmatprep.subr.mxu0 0.0
    %902 = vmatpush2.msra.mxu0 %v41
    %903 = vmatprep.subr.mxu0 0.0
    %904 = vmatpush2.msra.mxu0 %v40
    %905 = vmatprep.subr.mxu0 0.0
    %906 = vmatpush2.msra.mxu0 %v39
    %907 = vmatprep.subr.mxu0 0.0
    %908 = vmatpush2.msra.mxu0 %v38
    %909 = vmatprep.subr.mxu0 0.0
    %910 = vmatpush2.msra.mxu0 %v37
    %911 = vmatprep.mubr.f32.mxu0 %v770
    %912 = vmatmul.mubr.f32.gmra.mxu0 %v769
    %v913 = vpop.f32.mrf.mxu0
    %v914 = vadd.f32 %v101, %v913
    %v915 = vpop.f32.mrf.mxu0
    %916 = vmatprep.mubr.f32.mxu0 %v773
    %917 = vmatmul.mubr.f32.gmra.mxu0 %v772
    %v918 = vpop.f32.mrf.mxu0
    %v919 = vadd.f32 %v101, %v918
    %v920 = vpop.f32.mrf.mxu0
    %921 = vmatprep.mubr.f32.mxu0 %v776
    %922 = vmatmul.mubr.f32.gmra.mxu0 %v775
    %v923 = vpop.f32.mrf.mxu0
    %v924 = vadd.f32 %v101, %v923
    %v925 = vpop.f32.mrf.mxu0
    %926 = vmatprep.mubr.f32.mxu0 %v779
    %927 = vmatmul.mubr.f32.gmra.mxu0 %v778
    %v928 = vpop.f32.mrf.mxu0
    %v929 = vadd.f32 %v101, %v928
    %v930 = vpop.f32.mrf.mxu0
    %931 = vmatprep.mubr.f32.mxu0 %v782
    %932 = vmatmul.mubr.f32.gmra.mxu0 %v781
    %v933 = vpop.f32.mrf.mxu0
    %v934 = vadd.f32 %v101, %v933
    %v935 = vpop.f32.mrf.mxu0
    %936 = vmatprep.mubr.f32.mxu0 %v785
    %937 = vmatmul.mubr.f32.gmra.mxu0 %v784
    %v938 = vpop.f32.mrf.mxu0
    %v939 = vadd.f32 %v101, %v938
    %v940 = vpop.f32.mrf.mxu0
    %941 = vmatprep.mubr.f32.mxu0 %v788
    %942 = vmatmul.mubr.f32.gmra.mxu0 %v787
    %v943 = vpop.f32.mrf.mxu0
    %v944 = vadd.f32 %v101, %v943
    %v945 = vpop.f32.mrf.mxu0
    %946 = vmatprep.mubr.f32.mxu0 %v791
    %947 = vmatmul.mubr.f32.gmra.mxu0 %v790
    %v948 = vpop.f32.mrf.mxu0
    %v949 = vadd.f32 %v101, %v948
    %v950 = vpop.f32.mrf.mxu0
    %951 = vmatprep.mubr.f32.mxu0 %v794
    %952 = vmatmul.mubr.f32.gmra.mxu0 %v793
    %v953 = vpop.f32.mrf.mxu0
    %v954 = vadd.f32 %v101, %v953
    %v955 = vpop.f32.mrf.mxu0
    %956 = vmatprep.mubr.f32.mxu0 %v797
    %957 = vmatmul.mubr.f32.gmra.mxu0 %v796
    %v958 = vpop.f32.mrf.mxu0
    %v959 = vadd.f32 %v101, %v958
    %v960 = vpop.f32.mrf.mxu0
    %961 = vmatprep.mubr.f32.mxu0 %v800
    %962 = vmatmul.mubr.f32.gmra.mxu0 %v799
    %v963 = vpop.f32.mrf.mxu0
    %v964 = vadd.f32 %v101, %v963
    %v965 = vpop.f32.mrf.mxu0
    %966 = vmatprep.mubr.f32.mxu0 %v803
    %967 = vmatmul.mubr.f32.gmra.mxu0 %v802
    %v968 = vpop.f32.mrf.mxu0
    %v969 = vadd.f32 %v101, %v968
    %v970 = vpop.f32.mrf.mxu0
    %971 = vmatprep.mubr.f32.mxu0 %v806
    %972 = vmatmul.mubr.f32.gmra.mxu0 %v805
    %v973 = vpop.f32.mrf.mxu0
    %v974 = vadd.f32 %v101, %v973
    %v975 = vpop.f32.mrf.mxu0
    %976 = vdwg.mxu0
    %977 = vmatprep.subr.mxu0 0.0
    %978 = vmatpush1.msra.mxu0 0.0
    %979 = vmatprep.subr.mxu0 0.0
    %980 = vmatpush1.msra.mxu0 0.0
    %981 = vmatprep.subr.mxu0 0.0
    %982 = vmatpush1.msra.mxu0 0.0
    %983 = vmatprep.subr.mxu0 0.0
    %984 = vmatpush1.msra.mxu0 0.0
    %985 = vmatprep.subr.mxu0 0.0
    %986 = vmatpush1.msra.mxu0 0.0
    %987 = vmatprep.subr.mxu0 0.0
    %988 = vmatpush1.msra.mxu0 0.0
    %989 = vmatprep.subr.mxu0 0.0
    %990 = vmatpush1.msra.mxu0 0.0
    %991 = vmatprep.subr.mxu0 0.0
    %992 = vmatpush1.msra.mxu0 0.0
    %993 = vmatprep.subr.mxu0 0.0
    %994 = vmatpush1.msra.mxu0 0.0
    %995 = vmatprep.subr.mxu0 0.0
    %996 = vmatpush1.msra.mxu0 0.0
    %997 = vmatprep.subr.mxu0 0.0
    %998 = vmatpush1.msra.mxu0 0.0
    %999 = vmatprep.subr.mxu0 0.0
    %1000 = vmatpush1.msra.mxu0 0.0
    %1001 = vmatprep.subr.mxu0 0.0
    %1002 = vmatpush1.msra.mxu0 %v56
    %1003 = vmatprep.subr.mxu0 0.0
    %1004 = vmatpush1.msra.mxu0 %v55
    %1005 = vmatprep.subr.mxu0 0.0
    %1006 = vmatpush1.msra.mxu0 %v54
    %1007 = vmatprep.subr.mxu0 0.0
    %1008 = vmatpush1.msra.mxu0 %v53
    %1009 = vmatprep.subr.mxu0 0.0
    %1010 = vmatpush2.msra.mxu0 0.0
    %1011 = vmatprep.subr.mxu0 0.0
    %1012 = vmatpush2.msra.mxu0 0.0
    %1013 = vmatprep.subr.mxu0 0.0
    %1014 = vmatpush2.msra.mxu0 0.0
    %1015 = vmatprep.subr.mxu0 0.0
    %1016 = vmatpush2.msra.mxu0 0.0
    %1017 = vmatprep.subr.mxu0 0.0
    %1018 = vmatpush2.msra.mxu0 0.0
    %1019 = vmatprep.subr.mxu0 0.0
    %1020 = vmatpush2.msra.mxu0 0.0
    %1021 = vmatprep.subr.mxu0 0.0
    %1022 = vmatpush2.msra.mxu0 0.0
    %1023 = vmatprep.subr.mxu0 0.0
    %1024 = vmatpush2.msra.mxu0 0.0
    %1025 = vmatprep.subr.mxu0 0.0
    %1026 = vmatpush2.msra.mxu0 0.0
    %1027 = vmatprep.subr.mxu0 0.0
    %1028 = vmatpush2.msra.mxu0 0.0
    %1029 = vmatprep.subr.mxu0 0.0
    %1030 = vmatpush2.msra.mxu0 0.0
    %1031 = vmatprep.subr.mxu0 0.0
    %1032 = vmatpush2.msra.mxu0 0.0
    %1033 = vmatprep.subr.mxu0 0.0
    %1034 = vmatpush2.msra.mxu0 0.0
    %1035 = vmatprep.subr.mxu0 0.0
    %1036 = vmatpush2.msra.mxu0 0.0
    %1037 = vmatprep.subr.mxu0 0.0
    %1038 = vmatpush2.msra.mxu0 0.0
    %1039 = vmatprep.subr.mxu0 0.0
    %1040 = vmatpush2.msra.mxu0 0.0
    %1041 = vmatprep.mubr.f32.mxu0 0.0
    %1042 = vmatmul.mubr.f32.gmra.mxu0 %v809
    %v1043 = vpop.f32.mrf.mxu0
    %v1044 = vadd.f32 %v914, %v1043
    %v1045 = vpop.f32.mrf.mxu0
    %1046 = vmatprep.mubr.f32.mxu0 0.0
    %1047 = vmatmul.mubr.f32.gmra.mxu0 %v812
    %v1048 = vpop.f32.mrf.mxu0
    %v1049 = vadd.f32 %v919, %v1048
    %v1050 = vpop.f32.mrf.mxu0
    %1051 = vmatprep.mubr.f32.mxu0 0.0
    %1052 = vmatmul.mubr.f32.gmra.mxu0 %v815
    %v1053 = vpop.f32.mrf.mxu0
    %v1054 = vadd.f32 %v924, %v1053
    %v1055 = vpop.f32.mrf.mxu0
    %1056 = vmatprep.mubr.f32.mxu0 0.0
    %1057 = vmatmul.mubr.f32.gmra.mxu0 %v818
    %v1058 = vpop.f32.mrf.mxu0
    %v1059 = vadd.f32 %v929, %v1058
    %v1060 = vpop.f32.mrf.mxu0
    %1061 = vmatprep.mubr.f32.mxu0 0.0
    %1062 = vmatmul.mubr.f32.gmra.mxu0 %v821
    %v1063 = vpop.f32.mrf.mxu0
    %v1064 = vadd.f32 %v934, %v1063
    %v1065 = vpop.f32.mrf.mxu0
    %1066 = vmatprep.mubr.f32.mxu0 0.0
    %1067 = vmatmul.mubr.f32.gmra.mxu0 %v824
    %v1068 = vpop.f32.mrf.mxu0
    %v1069 = vadd.f32 %v939, %v1068
    %v1070 = vpop.f32.mrf.mxu0
    %1071 = vmatprep.mubr.f32.mxu0 0.0
    %1072 = vmatmul.mubr.f32.gmra.mxu0 %v827
    %v1073 = vpop.f32.mrf.mxu0
    %v1074 = vadd.f32 %v944, %v1073
    %v1075 = vpop.f32.mrf.mxu0
    %1076 = vmatprep.mubr.f32.mxu0 0.0
    %1077 = vmatmul.mubr.f32.gmra.mxu0 %v830
    %v1078 = vpop.f32.mrf.mxu0
    %v1079 = vadd.f32 %v949, %v1078
    %v1080 = vpop.f32.mrf.mxu0
    %1081 = vmatprep.mubr.f32.mxu0 0.0
    %1082 = vmatmul.mubr.f32.gmra.mxu0 %v833
    %v1083 = vpop.f32.mrf.mxu0
    %v1084 = vadd.f32 %v954, %v1083
    %v1085 = vpop.f32.mrf.mxu0
    %1086 = vmatprep.mubr.f32.mxu0 0.0
    %1087 = vmatmul.mubr.f32.gmra.mxu0 %v836
    %v1088 = vpop.f32.mrf.mxu0
    %v1089 = vadd.f32 %v959, %v1088
    %v1090 = vpop.f32.mrf.mxu0
    %1091 = vmatprep.mubr.f32.mxu0 0.0
    %1092 = vmatmul.mubr.f32.gmra.mxu0 %v839
    %v1093 = vpop.f32.mrf.mxu0
    %v1094 = vadd.f32 %v964, %v1093
    %v1095 = vpop.f32.mrf.mxu0
    %1096 = vmatprep.mubr.f32.mxu0 0.0
    %1097 = vmatmul.mubr.f32.gmra.mxu0 %v842
    %v1098 = vpop.f32.mrf.mxu0
    %v1099 = vadd.f32 %v969, %v1098
    %v1100 = vpop.f32.mrf.mxu0
    %1101 = vmatprep.mubr.f32.mxu0 0.0
    %1102 = vmatmul.mubr.f32.gmra.mxu0 %v845
    %v1103 = vpop.f32.mrf.mxu0
    %v1104 = vadd.f32 %v974, %v1103
    %v1105 = vpop.f32.mrf.mxu0
    %1106 = vdwg.mxu0
    %v1107 = vmax.f32 %v1044, 0.0
    %v1108 = vmax.f32 %v1049, 0.0
    %v1109 = vmax.f32 %v1054, 0.0
    %v1110 = vmax.f32 %v1059, 0.0
    %v1111 = vmax.f32 %v1064, 0.0
    %v1112 = vmax.f32 %v1069, 0.0
    %v1113 = vmax.f32 %v1074, 0.0
    %v1114 = vmax.f32 %v1079, 0.0
    %v1115 = vmax.f32 %v1084, 0.0
    %v1116 = vmax.f32 %v1089, 0.0
    %v1117 = vmax.f32 %v1094, 0.0
    %v1118 = vmax.f32 %v1099, 0.0
    %v1119 = vmax.f32 %v1104, 0.0
    %s1120 = scalar_lea.vmem %s0, 936
    %v1121 = vld [vmem:[%s1120] sm:$0xff]
    %v1122 = vld [vmem:[%s1120 + $0x8] sm:$0xff]
    %v1123 = vld [vmem:[%s1120 + $0x10] sm:$0xff]
    %v1124 = vld [vmem:[%s1120 + $0x18] sm:$0xff]
    %v1125 = vld [vmem:[%s1120 + $0x20] sm:$0xff]
    %v1126 = vld [vmem:[%s1120 + $0x28] sm:$0xff]
    %v1127 = vld [vmem:[%s1120 + $0x30] sm:$0xff]
    %v1128 = vld [vmem:[%s1120 + $0x38] sm:$0xff]
    %v1129 = vld [vmem:[%s1120 + $0x40] sm:$0xff]
    %v1130 = vld [vmem:[%s1120 + $0x48] sm:$0xff]
    %v1131 = vld [vmem:[%s1120 + $0x50] sm:$0xff]
    %v1132 = vld [vmem:[%s1120 + $0x58] sm:$0xff]
    %v1133 = vld [vmem:[%s1120 + $0x60] sm:$0xff]
    %v1134 = vld [vmem:[%s1120 + $0x68] sm:$0xff]
    %v1135 = vld [vmem:[%s1120 + $0x70] sm:$0xff]
    %v1136 = vld [vmem:[%s1120 + $0x78] sm:$0xff]
    %v1137 = vld [vmem:[%s1120 + $0x80] sm:$0xff]
    %v1138 = vld [vmem:[%s1120 + $0x88] sm:$0xff]
    %v1139 = vld [vmem:[%s1120 + $0x90] sm:$0xff]
    %v1140 = vld [vmem:[%s1120 + $0x98] sm:$0xff]
    %v1141 = vld [vmem:[%s1120 + $0xa0] sm:$0xff]
    %v1142 = vld [vmem:[%s1120 + $0xa8] sm:$0xff]
    %v1143 = vld [vmem:[%s1120 + $0xb0] sm:$0xff]
    %v1144 = vld [vmem:[%s1120 + $0xb8] sm:$0xff]
    %v1145 = vld [vmem:[%s1120 + $0xc0] sm:$0xff]
    %v1146 = vld [vmem:[%s1120 + $0xc8] sm:$0xff]
    %v1147 = vld [vmem:[%s1120 + $0xd0] sm:$0xff]
    %v1148 = vld [vmem:[%s1120 + $0xd8] sm:$0xff]
    %v1149 = vld [vmem:[%s1120 + $0xe0] sm:$0xff]
    %v1150 = vld [vmem:[%s1120 + $0xe8] sm:$0xff]
    %v1151 = vld [vmem:[%s1120 + $0xf0] sm:$0xff]
    %v1152 = vld [vmem:[%s1120 + $0xf8] sm:$0xff]
    %v1153 = vld [vmem:[%s1120 + $0x100] sm:$0xff]
    %v1154 = vld [vmem:[%s1120 + $0x108] sm:$0xff]
    %v1155 = vld [vmem:[%s1120 + $0x110] sm:$0xff]
    %v1156 = vld [vmem:[%s1120 + $0x118] sm:$0xff]
    %v1157 = vld [vmem:[%s1120 + $0x120] sm:$0x3]
    %v1158 = vld [vmem:[%s1120 + $0x128] sm:$0x3]
    %v1159 = vld [vmem:[%s1120 + $0x130] sm:$0x3]
    %v1161 = vsel %vm103, %v1123, 0
    %v1164 = vsel %vm103, %v1126, 0
    %v1167 = vsel %vm103, %v1129, 0
    %v1170 = vsel %vm103, %v1132, 0
    %v1173 = vsel %vm103, %v1135, 0
    %v1176 = vsel %vm103, %v1138, 0
    %v1179 = vsel %vm103, %v1141, 0
    %v1182 = vsel %vm103, %v1144, 0
    %v1185 = vsel %vm103, %v1147, 0
    %v1188 = vsel %vm103, %v1150, 0
    %v1191 = vsel %vm103, %v1153, 0
    %v1194 = vsel %vm103, %v1156, 0
    %v1197 = vsel %vm103, %v1159, 0
    %1199 = vmatprep.subr.mxu0 0.0
    %1200 = vmatpush1.msra.mxu0 %v36
    %1201 = vmatprep.subr.mxu0 0.0
    %1202 = vmatpush1.msra.mxu0 %v35
    %1203 = vmatprep.subr.mxu0 0.0
    %1204 = vmatpush1.msra.mxu0 %v34
    %1205 = vmatprep.subr.mxu0 0.0
    %1206 = vmatpush1.msra.mxu0 %v33
    %1207 = vmatprep.subr.mxu0 0.0
    %1208 = vmatpush1.msra.mxu0 %v32
    %1209 = vmatprep.subr.mxu0 0.0
    %1210 = vmatpush1.msra.mxu0 %v31
    %1211 = vmatprep.subr.mxu0 0.0
    %1212 = vmatpush1.msra.mxu0 %v30
    %1213 = vmatprep.subr.mxu0 0.0
    %1214 = vmatpush1.msra.mxu0 %v29
    %1215 = vmatprep.subr.mxu0 0.0
    %1216 = vmatpush1.msra.mxu0 %v28
    %1217 = vmatprep.subr.mxu0 0.0
    %1218 = vmatpush1.msra.mxu0 %v27
    %1219 = vmatprep.subr.mxu0 0.0
    %1220 = vmatpush1.msra.mxu0 %v26
    %1221 = vmatprep.subr.mxu0 0.0
    %1222 = vmatpush1.msra.mxu0 %v25
    %1223 = vmatprep.subr.mxu0 0.0
    %1224 = vmatpush1.msra.mxu0 %v24
    %1225 = vmatprep.subr.mxu0 0.0
    %1226 = vmatpush1.msra.mxu0 %v23
    %1227 = vmatprep.subr.mxu0 0.0
    %1228 = vmatpush1.msra.mxu0 %v22
    %1229 = vmatprep.subr.mxu0 0.0
    %1230 = vmatpush1.msra.mxu0 %v21
    %1231 = vmatprep.subr.mxu0 0.0
    %1232 = vmatpush2.msra.mxu0 %v52
    %1233 = vmatprep.subr.mxu0 0.0
    %1234 = vmatpush2.msra.mxu0 %v51
    %1235 = vmatprep.subr.mxu0 0.0
    %1236 = vmatpush2.msra.mxu0 %v50
    %1237 = vmatprep.subr.mxu0 0.0
    %1238 = vmatpush2.msra.mxu0 %v49
    %1239 = vmatprep.subr.mxu0 0.0
    %1240 = vmatpush2.msra.mxu0 %v48
    %1241 = vmatprep.subr.mxu0 0.0
    %1242 = vmatpush2.msra.mxu0 %v47
    %1243 = vmatprep.subr.mxu0 0.0
    %1244 = vmatpush2.msra.mxu0 %v46
    %1245 = vmatprep.subr.mxu0 0.0
    %1246 = vmatpush2.msra.mxu0 %v45
    %1247 = vmatprep.subr.mxu0 0.0
    %1248 = vmatpush2.msra.mxu0 %v44
    %1249 = vmatprep.subr.mxu0 0.0
    %1250 = vmatpush2.msra.mxu0 %v43
    %1251 = vmatprep.subr.mxu0 0.0
    %1252 = vmatpush2.msra.mxu0 %v42
    %1253 = vmatprep.subr.mxu0 0.0
    %1254 = vmatpush2.msra.mxu0 %v41
    %1255 = vmatprep.subr.mxu0 0.0
    %1256 = vmatpush2.msra.mxu0 %v40
    %1257 = vmatprep.subr.mxu0 0.0
    %1258 = vmatpush2.msra.mxu0 %v39
    %1259 = vmatprep.subr.mxu0 0.0
    %1260 = vmatpush2.msra.mxu0 %v38
    %1261 = vmatprep.subr.mxu0 0.0
    %1262 = vmatpush2.msra.mxu0 %v37
    %1263 = vmatprep.mubr.f32.mxu0 %v1122
    %1264 = vmatmul.mubr.f32.gmra.mxu0 %v1121
    %v1265 = vpop.f32.mrf.mxu0
    %v1266 = vadd.f32 %v101, %v1265
    %v1267 = vpop.f32.mrf.mxu0
    %1268 = vmatprep.mubr.f32.mxu0 %v1125
    %1269 = vmatmul.mubr.f32.gmra.mxu0 %v1124
    %v1270 = vpop.f32.mrf.mxu0
    %v1271 = vadd.f32 %v101, %v1270
    %v1272 = vpop.f32.mrf.mxu0
    %1273 = vmatprep.mubr.f32.mxu0 %v1128
    %1274 = vmatmul.mubr.f32.gmra.mxu0 %v1127
    %v1275 = vpop.f32.mrf.mxu0
    %v1276 = vadd.f32 %v101, %v1275
    %v1277 = vpop.f32.mrf.mxu0
    %1278 = vmatprep.mubr.f32.mxu0 %v1131
    %1279 = vmatmul.mubr.f32.gmra.mxu0 %v1130
    %v1280 = vpop.f32.mrf.mxu0
    %v1281 = vadd.f32 %v101, %v1280
    %v1282 = vpop.f32.mrf.mxu0
    %1283 = vmatprep.mubr.f32.mxu0 %v1134
    %1284 = vmatmul.mubr.f32.gmra.mxu0 %v1133
    %v1285 = vpop.f32.mrf.mxu0
    %v1286 = vadd.f32 %v101, %v1285
    %v1287 = vpop.f32.mrf.mxu0
    %1288 = vmatprep.mubr.f32.mxu0 %v1137
    %1289 = vmatmul.mubr.f32.gmra.mxu0 %v1136
    %v1290 = vpop.f32.mrf.mxu0
    %v1291 = vadd.f32 %v101, %v1290
    %v1292 = vpop.f32.mrf.mxu0
    %1293 = vmatprep.mubr.f32.mxu0 %v1140
    %1294 = vmatmul.mubr.f32.gmra.mxu0 %v1139
    %v1295 = vpop.f32.mrf.mxu0
    %v1296 = vadd.f32 %v101, %v1295
    %v1297 = vpop.f32.mrf.mxu0
    %1298 = vmatprep.mubr.f32.mxu0 %v1143
    %1299 = vmatmul.mubr.f32.gmra.mxu0 %v1142
    %v1300 = vpop.f32.mrf.mxu0
    %v1301 = vadd.f32 %v101, %v1300
    %v1302 = vpop.f32.mrf.mxu0
    %1303 = vmatprep.mubr.f32.mxu0 %v1146
    %1304 = vmatmul.mubr.f32.gmra.mxu0 %v1145
    %v1305 = vpop.f32.mrf.mxu0
    %v1306 = vadd.f32 %v101, %v1305
    %v1307 = vpop.f32.mrf.mxu0
    %1308 = vmatprep.mubr.f32.mxu0 %v1149
    %1309 = vmatmul.mubr.f32.gmra.mxu0 %v1148
    %v1310 = vpop.f32.mrf.mxu0
    %v1311 = vadd.f32 %v101, %v1310
    %v1312 = vpop.f32.mrf.mxu0
    %1313 = vmatprep.mubr.f32.mxu0 %v1152
    %1314 = vmatmul.mubr.f32.gmra.mxu0 %v1151
    %v1315 = vpop.f32.mrf.mxu0
    %v1316 = vadd.f32 %v101, %v1315
    %v1317 = vpop.f32.mrf.mxu0
    %1318 = vmatprep.mubr.f32.mxu0 %v1155
    %1319 = vmatmul.mubr.f32.gmra.mxu0 %v1154
    %v1320 = vpop.f32.mrf.mxu0
    %v1321 = vadd.f32 %v101, %v1320
    %v1322 = vpop.f32.mrf.mxu0
    %1323 = vmatprep.mubr.f32.mxu0 %v1158
    %1324 = vmatmul.mubr.f32.gmra.mxu0 %v1157
    %v1325 = vpop.f32.mrf.mxu0
    %v1326 = vadd.f32 %v101, %v1325
    %v1327 = vpop.f32.mrf.mxu0
    %1328 = vdwg.mxu0
    %1329 = vmatprep.subr.mxu0 0.0
    %1330 = vmatpush1.msra.mxu0 0.0
    %1331 = vmatprep.subr.mxu0 0.0
    %1332 = vmatpush1.msra.mxu0 0.0
    %1333 = vmatprep.subr.mxu0 0.0
    %1334 = vmatpush1.msra.mxu0 0.0
    %1335 = vmatprep.subr.mxu0 0.0
    %1336 = vmatpush1.msra.mxu0 0.0
    %1337 = vmatprep.subr.mxu0 0.0
    %1338 = vmatpush1.msra.mxu0 0.0
    %1339 = vmatprep.subr.mxu0 0.0
    %1340 = vmatpush1.msra.mxu0 0.0
    %1341 = vmatprep.subr.mxu0 0.0
    %1342 = vmatpush1.msra.mxu0 0.0
    %1343 = vmatprep.subr.mxu0 0.0
    %1344 = vmatpush1.msra.mxu0 0.0
    %1345 = vmatprep.subr.mxu0 0.0
    %1346 = vmatpush1.msra.mxu0 0.0
    %1347 = vmatprep.subr.mxu0 0.0
    %1348 = vmatpush1.msra.mxu0 0.0
    %1349 = vmatprep.subr.mxu0 0.0
    %1350 = vmatpush1.msra.mxu0 0.0
    %1351 = vmatprep.subr.mxu0 0.0
    %1352 = vmatpush1.msra.mxu0 0.0
    %1353 = vmatprep.subr.mxu0 0.0
    %1354 = vmatpush1.msra.mxu0 %v56
    %1355 = vmatprep.subr.mxu0 0.0
    %1356 = vmatpush1.msra.mxu0 %v55
    %1357 = vmatprep.subr.mxu0 0.0
    %1358 = vmatpush1.msra.mxu0 %v54
    %1359 = vmatprep.subr.mxu0 0.0
    %1360 = vmatpush1.msra.mxu0 %v53
    %1361 = vmatprep.subr.mxu0 0.0
    %1362 = vmatpush2.msra.mxu0 0.0
    %1363 = vmatprep.subr.mxu0 0.0
    %1364 = vmatpush2.msra.mxu0 0.0
    %1365 = vmatprep.subr.mxu0 0.0
    %1366 = vmatpush2.msra.mxu0 0.0
    %1367 = vmatprep.subr.mxu0 0.0
    %1368 = vmatpush2.msra.mxu0 0.0
    %1369 = vmatprep.subr.mxu0 0.0
    %1370 = vmatpush2.msra.mxu0 0.0
    %1371 = vmatprep.subr.mxu0 0.0
    %1372 = vmatpush2.msra.mxu0 0.0
    %1373 = vmatprep.subr.mxu0 0.0
    %1374 = vmatpush2.msra.mxu0 0.0
    %1375 = vmatprep.subr.mxu0 0.0
    %1376 = vmatpush2.msra.mxu0 0.0
    %1377 = vmatprep.subr.mxu0 0.0
    %1378 = vmatpush2.msra.mxu0 0.0
    %1379 = vmatprep.subr.mxu0 0.0
    %1380 = vmatpush2.msra.mxu0 0.0
    %1381 = vmatprep.subr.mxu0 0.0
    %1382 = vmatpush2.msra.mxu0 0.0
    %1383 = vmatprep.subr.mxu0 0.0
    %1384 = vmatpush2.msra.mxu0 0.0
    %1385 = vmatprep.subr.mxu0 0.0
    %1386 = vmatpush2.msra.mxu0 0.0
    %1387 = vmatprep.subr.mxu0 0.0
    %1388 = vmatpush2.msra.mxu0 0.0
    %1389 = vmatprep.subr.mxu0 0.0
    %1390 = vmatpush2.msra.mxu0 0.0
    %1391 = vmatprep.subr.mxu0 0.0
    %1392 = vmatpush2.msra.mxu0 0.0
    %1393 = vmatprep.mubr.f32.mxu0 0.0
    %1394 = vmatmul.mubr.f32.gmra.mxu0 %v1161
    %v1395 = vpop.f32.mrf.mxu0
    %v1396 = vadd.f32 %v1266, %v1395
    %v1397 = vpop.f32.mrf.mxu0
    %1398 = vmatprep.mubr.f32.mxu0 0.0
    %1399 = vmatmul.mubr.f32.gmra.mxu0 %v1164
    %v1400 = vpop.f32.mrf.mxu0
    %v1401 = vadd.f32 %v1271, %v1400
    %v1402 = vpop.f32.mrf.mxu0
    %1403 = vmatprep.mubr.f32.mxu0 0.0
    %1404 = vmatmul.mubr.f32.gmra.mxu0 %v1167
    %v1405 = vpop.f32.mrf.mxu0
    %v1406 = vadd.f32 %v1276, %v1405
    %v1407 = vpop.f32.mrf.mxu0
    %1408 = vmatprep.mubr.f32.mxu0 0.0
    %1409 = vmatmul.mubr.f32.gmra.mxu0 %v1170
    %v1410 = vpop.f32.mrf.mxu0
    %v1411 = vadd.f32 %v1281, %v1410
    %v1412 = vpop.f32.mrf.mxu0
    %1413 = vmatprep.mubr.f32.mxu0 0.0
    %1414 = vmatmul.mubr.f32.gmra.mxu0 %v1173
    %v1415 = vpop.f32.mrf.mxu0
    %v1416 = vadd.f32 %v1286, %v1415
    %v1417 = vpop.f32.mrf.mxu0
    %1418 = vmatprep.mubr.f32.mxu0 0.0
    %1419 = vmatmul.mubr.f32.gmra.mxu0 %v1176
    %v1420 = vpop.f32.mrf.mxu0
    %v1421 = vadd.f32 %v1291, %v1420
    %v1422 = vpop.f32.mrf.mxu0
    %1423 = vmatprep.mubr.f32.mxu0 0.0
    %1424 = vmatmul.mubr.f32.gmra.mxu0 %v1179
    %v1425 = vpop.f32.mrf.mxu0
    %v1426 = vadd.f32 %v1296, %v1425
    %v1427 = vpop.f32.mrf.mxu0
    %1428 = vmatprep.mubr.f32.mxu0 0.0
    %1429 = vmatmul.mubr.f32.gmra.mxu0 %v1182
    %v1430 = vpop.f32.mrf.mxu0
    %v1431 = vadd.f32 %v1301, %v1430
    %v1432 = vpop.f32.mrf.mxu0
    %1433 = vmatprep.mubr.f32.mxu0 0.0
    %1434 = vmatmul.mubr.f32.gmra.mxu0 %v1185
    %v1435 = vpop.f32.mrf.mxu0
    %v1436 = vadd.f32 %v1306, %v1435
    %v1437 = vpop.f32.mrf.mxu0
    %1438 = vmatprep.mubr.f32.mxu0 0.0
    %1439 = vmatmul.mubr.f32.gmra.mxu0 %v1188
    %v1440 = vpop.f32.mrf.mxu0
    %v1441 = vadd.f32 %v1311, %v1440
    %v1442 = vpop.f32.mrf.mxu0
    %1443 = vmatprep.mubr.f32.mxu0 0.0
    %1444 = vmatmul.mubr.f32.gmra.mxu0 %v1191
    %v1445 = vpop.f32.mrf.mxu0
    %v1446 = vadd.f32 %v1316, %v1445
    %v1447 = vpop.f32.mrf.mxu0
    %1448 = vmatprep.mubr.f32.mxu0 0.0
    %1449 = vmatmul.mubr.f32.gmra.mxu0 %v1194
    %v1450 = vpop.f32.mrf.mxu0
    %v1451 = vadd.f32 %v1321, %v1450
    %v1452 = vpop.f32.mrf.mxu0
    %1453 = vmatprep.mubr.f32.mxu0 0.0
    %1454 = vmatmul.mubr.f32.gmra.mxu0 %v1197
    %v1455 = vpop.f32.mrf.mxu0
    %v1456 = vadd.f32 %v1326, %v1455
    %v1457 = vpop.f32.mrf.mxu0
    %1458 = vdwg.mxu0
    %v1459 = vmax.f32 %v1396, 0.0
    %v1460 = vmax.f32 %v1401, 0.0
    %v1461 = vmax.f32 %v1406, 0.0
    %v1462 = vmax.f32 %v1411, 0.0
    %v1463 = vmax.f32 %v1416, 0.0
    %v1464 = vmax.f32 %v1421, 0.0
    %v1465 = vmax.f32 %v1426, 0.0
    %v1466 = vmax.f32 %v1431, 0.0
    %v1467 = vmax.f32 %v1436, 0.0
    %v1468 = vmax.f32 %v1441, 0.0
    %v1469 = vmax.f32 %v1446, 0.0
    %v1470 = vmax.f32 %v1451, 0.0
    %v1471 = vmax.f32 %v1456, 0.0
    %v1472 = vmax.f32 %v403, %v755
    %v1473 = vmax.f32 %v404, %v756
    %v1474 = vmax.f32 %v405, %v757
    %v1475 = vmax.f32 %v406, %v758
    %v1476 = vmax.f32 %v407, %v759
    %v1477 = vmax.f32 %v408, %v760
    %v1478 = vmax.f32 %v409, %v761
    %v1479 = vmax.f32 %v410, %v762
    %v1480 = vmax.f32 %v411, %v763
    %v1481 = vmax.f32 %v412, %v764
    %v1482 = vmax.f32 %v413, %v765
    %v1483 = vmax.f32 %v414, %v766
    %v1484 = vmax.f32 %v415, %v767
    %v1485 = vmax.f32 %v1107, %v1459
    %v1486 = vmax.f32 %v1108, %v1460
    %v1487 = vmax.f32 %v1109, %v1461
    %v1488 = vmax.f32 %v1110, %v1462
    %v1489 = vmax.f32 %v1111, %v1463
    %v1490 = vmax.f32 %v1112, %v1464
    %v1491 = vmax.f32 %v1113, %v1465
    %v1492 = vmax.f32 %v1114, %v1466
    %v1493 = vmax.f32 %v1115, %v1467
    %v1494 = vmax.f32 %v1116, %v1468
    %v1495 = vmax.f32 %v1117, %v1469
    %v1496 = vmax.f32 %v1118, %v1470
    %v1497 = vmax.f32 %v1119, %v1471
    %v1498 = vmax.f32 %v1472, %v1485
    %v1499 = vmax.f32 %v1473, %v1486
    %v1500 = vmax.f32 %v1474, %v1487
    %v1501 = vmax.f32 %v1475, %v1488
    %v1502 = vmax.f32 %v1476, %v1489
    %v1503 = vmax.f32 %v1477, %v1490
    %v1504 = vmax.f32 %v1478, %v1491
    %v1505 = vmax.f32 %v1479, %v1492
    %v1506 = vmax.f32 %v1480, %v1493
    %v1507 = vmax.f32 %v1481, %v1494
    %v1508 = vmax.f32 %v1482, %v1495
    %v1509 = vmax.f32 %v1483, %v1496
    %v1510 = vmax.f32 %v1484, %v1497
    %vm1511 = vcmask 523264
    %1512 = vst.msk [vmem:[#allocation2] sm:$0xff] %vm1511, %v1498
    %1513 = vst.msk [vmem:[#allocation2 + $0x8] sm:$0xff] %vm1511, %v1499
    %1514 = vst.msk [vmem:[#allocation2 + $0x10] sm:$0xff] %vm1511, %v1500
    %1515 = vst.msk [vmem:[#allocation2 + $0x18] sm:$0xff] %vm1511, %v1501
    %1516 = vst.msk [vmem:[#allocation2 + $0x20] sm:$0xff] %vm1511, %v1502
    %1517 = vst.msk [vmem:[#allocation2 + $0x28] sm:$0xff] %vm1511, %v1503
    %1518 = vst.msk [vmem:[#allocation2 + $0x30] sm:$0xff] %vm1511, %v1504
    %1519 = vst.msk [vmem:[#allocation2 + $0x38] sm:$0xff] %vm1511, %v1505
    %1520 = vst.msk [vmem:[#allocation2 + $0x40] sm:$0xff] %vm1511, %v1506
    %1521 = vst.msk [vmem:[#allocation2 + $0x48] sm:$0xff] %vm1511, %v1507
    %1522 = vst.msk [vmem:[#allocation2 + $0x50] sm:$0xff] %vm1511, %v1508
    %1523 = vst.msk [vmem:[#allocation2 + $0x58] sm:$0xff] %vm1511, %v1509
    %vm1524 = vcmask 517120
    %1525 = vst.msk [vmem:[#allocation2 + $0x60] sm:$0x3] %vm1524, %v1510
    %v1526 = vld [vmem:[#allocation2] sm:$0x3]
    %v1527 = vld [vmem:[%s3] sm:$0xff]
    %v1528 = vld [vmem:[%s3 + $0x8] sm:$0xff]
    %v1529 = vld [vmem:[%s3 + $0x10] sm:$0xff]
    %v1530 = vld [vmem:[%s3 + $0x18] sm:$0xff]
    %v1531 = vld [vmem:[%s3 + $0x20] sm:$0xff]
    %v1532 = vld [vmem:[%s3 + $0x28] sm:$0xff]
    %v1533 = vld [vmem:[%s3 + $0x30] sm:$0xff]
    %v1534 = vld [vmem:[%s3 + $0x38] sm:$0xff]
    %v1535 = vld [vmem:[#allocation2 + $0x2] sm:$0x3]
    %s1536 = scalar_lea.vmem %s3, 64
    %v1537 = vld [vmem:[%s1536] sm:$0xff]
    %v1538 = vld [vmem:[%s1536 + $0x8] sm:$0xff]
    %v1539 = vld [vmem:[%s1536 + $0x10] sm:$0xff]
    %v1540 = vld [vmem:[%s1536 + $0x18] sm:$0xff]
    %v1541 = vld [vmem:[%s1536 + $0x20] sm:$0xff]
    %v1542 = vld [vmem:[%s1536 + $0x28] sm:$0xff]
    %v1543 = vld [vmem:[%s1536 + $0x30] sm:$0xff]
    %v1544 = vld [vmem:[%s1536 + $0x38] sm:$0xff]
    %v1546 = vsel %vm1511, %v1535, 0
    %1548 = vmatprep.subr.mxu0 0.0
    %1549 = vmatpush1.msra.mxu0 0.0
    %1550 = vmatprep.subr.mxu0 0.0
    %1551 = vmatpush1.msra.mxu0 0.0
    %1552 = vmatprep.subr.mxu0 0.0
    %1553 = vmatpush1.msra.mxu0 0.0
    %1554 = vmatprep.subr.mxu0 0.0
    %1555 = vmatpush1.msra.mxu0 0.0
    %1556 = vmatprep.subr.mxu0 0.0
    %1557 = vmatpush1.msra.mxu0 0.0
    %1558 = vmatprep.subr.mxu0 0.0
    %1559 = vmatpush1.msra.mxu0 0.0
    %1560 = vmatprep.subr.mxu0 0.0
    %1561 = vmatpush1.msra.mxu0 0.0
    %1562 = vmatprep.subr.mxu0 0.0
    %1563 = vmatpush1.msra.mxu0 0.0
    %1564 = vmatprep.subr.mxu0 0.0
    %1565 = vmatpush1.msra.mxu0 %v1544
    %1566 = vmatprep.subr.mxu0 0.0
    %1567 = vmatpush1.msra.mxu0 %v1543
    %1568 = vmatprep.subr.mxu0 0.0
    %1569 = vmatpush1.msra.mxu0 %v1542
    %1570 = vmatprep.subr.mxu0 0.0
    %1571 = vmatpush1.msra.mxu0 %v1541
    %1572 = vmatprep.subr.mxu0 0.0
    %1573 = vmatpush1.msra.mxu0 %v1540
    %1574 = vmatprep.subr.mxu0 0.0
    %1575 = vmatpush1.msra.mxu0 %v1539
    %1576 = vmatprep.subr.mxu0 0.0
    %1577 = vmatpush1.msra.mxu0 %v1538
    %1578 = vmatprep.subr.mxu0 0.0
    %1579 = vmatpush1.msra.mxu0 %v1537
    %1580 = vmatprep.subr.mxu0 0.0
    %1581 = vmatpush2.msra.mxu0 0.0
    %1582 = vmatprep.subr.mxu0 0.0
    %1583 = vmatpush2.msra.mxu0 0.0
    %1584 = vmatprep.subr.mxu0 0.0
    %1585 = vmatpush2.msra.mxu0 0.0
    %1586 = vmatprep.subr.mxu0 0.0
    %1587 = vmatpush2.msra.mxu0 0.0
    %1588 = vmatprep.subr.mxu0 0.0
    %1589 = vmatpush2.msra.mxu0 0.0
    %1590 = vmatprep.subr.mxu0 0.0
    %1591 = vmatpush2.msra.mxu0 0.0
    %1592 = vmatprep.subr.mxu0 0.0
    %1593 = vmatpush2.msra.mxu0 0.0
    %1594 = vmatprep.subr.mxu0 0.0
    %1595 = vmatpush2.msra.mxu0 0.0
    %1596 = vmatprep.subr.mxu0 0.0
    %1597 = vmatpush2.msra.mxu0 0.0
    %1598 = vmatprep.subr.mxu0 0.0
    %1599 = vmatpush2.msra.mxu0 0.0
    %1600 = vmatprep.subr.mxu0 0.0
    %1601 = vmatpush2.msra.mxu0 0.0
    %1602 = vmatprep.subr.mxu0 0.0
    %1603 = vmatpush2.msra.mxu0 0.0
    %1604 = vmatprep.subr.mxu0 0.0
    %1605 = vmatpush2.msra.mxu0 0.0
    %1606 = vmatprep.subr.mxu0 0.0
    %1607 = vmatpush2.msra.mxu0 0.0
    %1608 = vmatprep.subr.mxu0 0.0
    %1609 = vmatpush2.msra.mxu0 0.0
    %1610 = vmatprep.subr.mxu0 0.0
    %1611 = vmatpush2.msra.mxu0 0.0
    %1612 = vmatprep.mubr.f32.mxu0 0.0
    %1613 = vmatmul.mubr.f32.gmra.mxu0 %v1546
    %v1614 = vpop.f32.mrf.mxu0
    %v1615 = vadd.f32 0.0, %v1614
    %v1616 = vpop.f32.mrf.mxu0
    %1617 = vdwg.mxu0
    %v1619 = vsel %vm1511, %v1526, 0
    %1621 = vmatprep.subr.mxu0 0.0
    %1622 = vmatpush1.msra.mxu0 0.0
    %1623 = vmatprep.subr.mxu0 0.0
    %1624 = vmatpush1.msra.mxu0 0.0
    %1625 = vmatprep.subr.mxu0 0.0
    %1626 = vmatpush1.msra.mxu0 0.0
    %1627 = vmatprep.subr.mxu0 0.0
    %1628 = vmatpush1.msra.mxu0 0.0
    %1629 = vmatprep.subr.mxu0 0.0
    %1630 = vmatpush1.msra.mxu0 0.0
    %1631 = vmatprep.subr.mxu0 0.0
    %1632 = vmatpush1.msra.mxu0 0.0
    %1633 = vmatprep.subr.mxu0 0.0
    %1634 = vmatpush1.msra.mxu0 0.0
    %1635 = vmatprep.subr.mxu0 0.0
    %1636 = vmatpush1.msra.mxu0 0.0
    %1637 = vmatprep.subr.mxu0 0.0
    %1638 = vmatpush1.msra.mxu0 %v1534
    %1639 = vmatprep.subr.mxu0 0.0
    %1640 = vmatpush1.msra.mxu0 %v1533
    %1641 = vmatprep.subr.mxu0 0.0
    %1642 = vmatpush1.msra.mxu0 %v1532
    %1643 = vmatprep.subr.mxu0 0.0
    %1644 = vmatpush1.msra.mxu0 %v1531
    %1645 = vmatprep.subr.mxu0 0.0
    %1646 = vmatpush1.msra.mxu0 %v1530
    %1647 = vmatprep.subr.mxu0 0.0
    %1648 = vmatpush1.msra.mxu0 %v1529
    %1649 = vmatprep.subr.mxu0 0.0
    %1650 = vmatpush1.msra.mxu0 %v1528
    %1651 = vmatprep.subr.mxu0 0.0
    %1652 = vmatpush1.msra.mxu0 %v1527
    %1653 = vmatprep.subr.mxu0 0.0
    %1654 = vmatpush2.msra.mxu0 0.0
    %1655 = vmatprep.subr.mxu0 0.0
    %1656 = vmatpush2.msra.mxu0 0.0
    %1657 = vmatprep.subr.mxu0 0.0
    %1658 = vmatpush2.msra.mxu0 0.0
    %1659 = vmatprep.subr.mxu0 0.0
    %1660 = vmatpush2.msra.mxu0 0.0
    %1661 = vmatprep.subr.mxu0 0.0
    %1662 = vmatpush2.msra.mxu0 0.0
    %1663 = vmatprep.subr.mxu0 0.0
    %1664 = vmatpush2.msra.mxu0 0.0
    %1665 = vmatprep.subr.mxu0 0.0
    %1666 = vmatpush2.msra.mxu0 0.0
    %1667 = vmatprep.subr.mxu0 0.0
    %1668 = vmatpush2.msra.mxu0 0.0
    %1669 = vmatprep.subr.mxu0 0.0
    %1670 = vmatpush2.msra.mxu0 0.0
    %1671 = vmatprep.subr.mxu0 0.0
    %1672 = vmatpush2.msra.mxu0 0.0
    %1673 = vmatprep.subr.mxu0 0.0
    %1674 = vmatpush2.msra.mxu0 0.0
    %1675 = vmatprep.subr.mxu0 0.0
    %1676 = vmatpush2.msra.mxu0 0.0
    %1677 = vmatprep.subr.mxu0 0.0
    %1678 = vmatpush2.msra.mxu0 0.0
    %1679 = vmatprep.subr.mxu0 0.0
    %1680 = vmatpush2.msra.mxu0 0.0
    %1681 = vmatprep.subr.mxu0 0.0
    %1682 = vmatpush2.msra.mxu0 0.0
    %1683 = vmatprep.subr.mxu0 0.0
    %1684 = vmatpush2.msra.mxu0 0.0
    %1685 = vmatprep.mubr.f32.mxu0 0.0
    %1686 = vmatmul.mubr.f32.gmra.mxu0 %v1619
    %v1687 = vpop.f32.mrf.mxu0
    %v1688 = vadd.f32 %v1615, %v1687
    %v1689 = vpop.f32.mrf.mxu0
    %1690 = vdwg.mxu0
    %v1691 = vld [vmem:[#allocation2 + $0x4] sm:$0x3]
    %s1692 = scalar_lea.vmem %s3, 128
    %v1693 = vld [vmem:[%s1692] sm:$0xff]
    %v1694 = vld [vmem:[%s1692 + $0x8] sm:$0xff]
    %v1695 = vld [vmem:[%s1692 + $0x10] sm:$0xff]
    %v1696 = vld [vmem:[%s1692 + $0x18] sm:$0xff]
    %v1697 = vld [vmem:[%s1692 + $0x20] sm:$0xff]
    %v1698 = vld [vmem:[%s1692 + $0x28] sm:$0xff]
    %v1699 = vld [vmem:[%s1692 + $0x30] sm:$0xff]
    %v1700 = vld [vmem:[%s1692 + $0x38] sm:$0xff]
    %v1702 = vsel %vm1511, %v1691, 0
    %1704 = vmatprep.subr.mxu0 0.0
    %1705 = vmatpush1.msra.mxu0 0.0
    %1706 = vmatprep.subr.mxu0 0.0
    %1707 = vmatpush1.msra.mxu0 0.0
    %1708 = vmatprep.subr.mxu0 0.0
    %1709 = vmatpush1.msra.mxu0 0.0
    %1710 = vmatprep.subr.mxu0 0.0
    %1711 = vmatpush1.msra.mxu0 0.0
    %1712 = vmatprep.subr.mxu0 0.0
    %1713 = vmatpush1.msra.mxu0 0.0
    %1714 = vmatprep.subr.mxu0 0.0
    %1715 = vmatpush1.msra.mxu0 0.0
    %1716 = vmatprep.subr.mxu0 0.0
    %1717 = vmatpush1.msra.mxu0 0.0
    %1718 = vmatprep.subr.mxu0 0.0
    %1719 = vmatpush1.msra.mxu0 0.0
    %1720 = vmatprep.subr.mxu0 0.0
    %1721 = vmatpush1.msra.mxu0 %v1700
    %1722 = vmatprep.subr.mxu0 0.0
    %1723 = vmatpush1.msra.mxu0 %v1699
    %1724 = vmatprep.subr.mxu0 0.0
    %1725 = vmatpush1.msra.mxu0 %v1698
    %1726 = vmatprep.subr.mxu0 0.0
    %1727 = vmatpush1.msra.mxu0 %v1697
    %1728 = vmatprep.subr.mxu0 0.0
    %1729 = vmatpush1.msra.mxu0 %v1696
    %1730 = vmatprep.subr.mxu0 0.0
    %1731 = vmatpush1.msra.mxu0 %v1695
    %1732 = vmatprep.subr.mxu0 0.0
    %1733 = vmatpush1.msra.mxu0 %v1694
    %1734 = vmatprep.subr.mxu0 0.0
    %1735 = vmatpush1.msra.mxu0 %v1693
    %1736 = vmatprep.subr.mxu0 0.0
    %1737 = vmatpush2.msra.mxu0 0.0
    %1738 = vmatprep.subr.mxu0 0.0
    %1739 = vmatpush2.msra.mxu0 0.0
    %1740 = vmatprep.subr.mxu0 0.0
    %1741 = vmatpush2.msra.mxu0 0.0
    %1742 = vmatprep.subr.mxu0 0.0
    %1743 = vmatpush2.msra.mxu0 0.0
    %1744 = vmatprep.subr.mxu0 0.0
    %1745 = vmatpush2.msra.mxu0 0.0
    %1746 = vmatprep.subr.mxu0 0.0
    %1747 = vmatpush2.msra.mxu0 0.0
    %1748 = vmatprep.subr.mxu0 0.0
    %1749 = vmatpush2.msra.mxu0 0.0
    %1750 = vmatprep.subr.mxu0 0.0
    %1751 = vmatpush2.msra.mxu0 0.0
    %1752 = vmatprep.subr.mxu0 0.0
    %1753 = vmatpush2.msra.mxu0 0.0
    %1754 = vmatprep.subr.mxu0 0.0
    %1755 = vmatpush2.msra.mxu0 0.0
    %1756 = vmatprep.subr.mxu0 0.0
    %1757 = vmatpush2.msra.mxu0 0.0
    %1758 = vmatprep.subr.mxu0 0.0
    %1759 = vmatpush2.msra.mxu0 0.0
    %1760 = vmatprep.subr.mxu0 0.0
    %1761 = vmatpush2.msra.mxu0 0.0
    %1762 = vmatprep.subr.mxu0 0.0
    %1763 = vmatpush2.msra.mxu0 0.0
    %1764 = vmatprep.subr.mxu0 0.0
    %1765 = vmatpush2.msra.mxu0 0.0
    %1766 = vmatprep.subr.mxu0 0.0
    %1767 = vmatpush2.msra.mxu0 0.0
    %1768 = vmatprep.mubr.f32.mxu0 0.0
    %1769 = vmatmul.mubr.f32.gmra.mxu0 %v1702
    %v1770 = vpop.f32.mrf.mxu0
    %v1771 = vadd.f32 0.0, %v1770
    %v1772 = vpop.f32.mrf.mxu0
    %1773 = vdwg.mxu0
    %v1774 = vadd.f32 %v1688, %v1771
    %v1775 = vld [vmem:[#allocation2 + $0x6] sm:$0x3]
    %s1776 = scalar_lea.vmem %s3, 192
    %v1777 = vld [vmem:[%s1776] sm:$0xff]
    %v1778 = vld [vmem:[%s1776 + $0x8] sm:$0xff]
    %v1779 = vld [vmem:[%s1776 + $0x10] sm:$0xff]
    %v1780 = vld [vmem:[%s1776 + $0x18] sm:$0xff]
    %v1781 = vld [vmem:[%s1776 + $0x20] sm:$0xff]
    %v1782 = vld [vmem:[%s1776 + $0x28] sm:$0xff]
    %v1783 = vld [vmem:[%s1776 + $0x30] sm:$0xff]
    %v1784 = vld [vmem:[%s1776 + $0x38] sm:$0xff]
    %v1786 = vsel %vm1511, %v1775, 0
    %1788 = vmatprep.subr.mxu0 0.0
    %1789 = vmatpush1.msra.mxu0 0.0
    %1790 = vmatprep.subr.mxu0 0.0
    %1791 = vmatpush1.msra.mxu0 0.0
    %1792 = vmatprep.subr.mxu0 0.0
    %1793 = vmatpush1.msra.mxu0 0.0
    %1794 = vmatprep.subr.mxu0 0.0
    %1795 = vmatpush1.msra.mxu0 0.0
    %1796 = vmatprep.subr.mxu0 0.0
    %1797 = vmatpush1.msra.mxu0 0.0
    %1798 = vmatprep.subr.mxu0 0.0
    %1799 = vmatpush1.msra.mxu0 0.0
    %1800 = vmatprep.subr.mxu0 0.0
    %1801 = vmatpush1.msra.mxu0 0.0
    %1802 = vmatprep.subr.mxu0 0.0
    %1803 = vmatpush1.msra.mxu0 0.0
    %1804 = vmatprep.subr.mxu0 0.0
    %1805 = vmatpush1.msra.mxu0 %v1784
    %1806 = vmatprep.subr.mxu0 0.0
    %1807 = vmatpush1.msra.mxu0 %v1783
    %1808 = vmatprep.subr.mxu0 0.0
    %1809 = vmatpush1.msra.mxu0 %v1782
    %1810 = vmatprep.subr.mxu0 0.0
    %1811 = vmatpush1.msra.mxu0 %v1781
    %1812 = vmatprep.subr.mxu0 0.0
    %1813 = vmatpush1.msra.mxu0 %v1780
    %1814 = vmatprep.subr.mxu0 0.0
    %1815 = vmatpush1.msra.mxu0 %v1779
    %1816 = vmatprep.subr.mxu0 0.0
    %1817 = vmatpush1.msra.mxu0 %v1778
    %1818 = vmatprep.subr.mxu0 0.0
    %1819 = vmatpush1.msra.mxu0 %v1777
    %1820 = vmatprep.subr.mxu0 0.0
    %1821 = vmatpush2.msra.mxu0 0.0
    %1822 = vmatprep.subr.mxu0 0.0
    %1823 = vmatpush2.msra.mxu0 0.0
    %1824 = vmatprep.subr.mxu0 0.0
    %1825 = vmatpush2.msra.mxu0 0.0
    %1826 = vmatprep.subr.mxu0 0.0
    %1827 = vmatpush2.msra.mxu0 0.0
    %1828 = vmatprep.subr.mxu0 0.0
    %1829 = vmatpush2.msra.mxu0 0.0
    %1830 = vmatprep.subr.mxu0 0.0
    %1831 = vmatpush2.msra.mxu0 0.0
    %1832 = vmatprep.subr.mxu0 0.0
    %1833 = vmatpush2.msra.mxu0 0.0
    %1834 = vmatprep.subr.mxu0 0.0
    %1835 = vmatpush2.msra.mxu0 0.0
    %1836 = vmatprep.subr.mxu0 0.0
    %1837 = vmatpush2.msra.mxu0 0.0
    %1838 = vmatprep.subr.mxu0 0.0
    %1839 = vmatpush2.msra.mxu0 0.0
    %1840 = vmatprep.subr.mxu0 0.0
    %1841 = vmatpush2.msra.mxu0 0.0
    %1842 = vmatprep.subr.mxu0 0.0
    %1843 = vmatpush2.msra.mxu0 0.0
    %1844 = vmatprep.subr.mxu0 0.0
    %1845 = vmatpush2.msra.mxu0 0.0
    %1846 = vmatprep.subr.mxu0 0.0
    %1847 = vmatpush2.msra.mxu0 0.0
    %1848 = vmatprep.subr.mxu0 0.0
    %1849 = vmatpush2.msra.mxu0 0.0
    %1850 = vmatprep.subr.mxu0 0.0
    %1851 = vmatpush2.msra.mxu0 0.0
    %1852 = vmatprep.mubr.f32.mxu0 0.0
    %1853 = vmatmul.mubr.f32.gmra.mxu0 %v1786
    %v1854 = vpop.f32.mrf.mxu0
    %v1855 = vadd.f32 0.0, %v1854
    %v1856 = vpop.f32.mrf.mxu0
    %1857 = vdwg.mxu0
    %v1858 = vadd.f32 %v1774, %v1855
    %v1859 = vld [vmem:[#allocation2 + $0x8] sm:$0x3]
    %s1860 = scalar_lea.vmem %s3, 256
    %v1861 = vld [vmem:[%s1860] sm:$0xff]
    %v1862 = vld [vmem:[%s1860 + $0x8] sm:$0xff]
    %v1863 = vld [vmem:[%s1860 + $0x10] sm:$0xff]
    %v1864 = vld [vmem:[%s1860 + $0x18] sm:$0xff]
    %v1865 = vld [vmem:[%s1860 + $0x20] sm:$0xff]
    %v1866 = vld [vmem:[%s1860 + $0x28] sm:$0xff]
    %v1867 = vld [vmem:[%s1860 + $0x30] sm:$0xff]
    %v1868 = vld [vmem:[%s1860 + $0x38] sm:$0xff]
    %v1870 = vsel %vm1511, %v1859, 0
    %1872 = vmatprep.subr.mxu0 0.0
    %1873 = vmatpush1.msra.mxu0 0.0
    %1874 = vmatprep.subr.mxu0 0.0
    %1875 = vmatpush1.msra.mxu0 0.0
    %1876 = vmatprep.subr.mxu0 0.0
    %1877 = vmatpush1.msra.mxu0 0.0
    %1878 = vmatprep.subr.mxu0 0.0
    %1879 = vmatpush1.msra.mxu0 0.0
    %1880 = vmatprep.subr.mxu0 0.0
    %1881 = vmatpush1.msra.mxu0 0.0
    %1882 = vmatprep.subr.mxu0 0.0
    %1883 = vmatpush1.msra.mxu0 0.0
    %1884 = vmatprep.subr.mxu0 0.0
    %1885 = vmatpush1.msra.mxu0 0.0
    %1886 = vmatprep.subr.mxu0 0.0
    %1887 = vmatpush1.msra.mxu0 0.0
    %1888 = vmatprep.subr.mxu0 0.0
    %1889 = vmatpush1.msra.mxu0 %v1868
    %1890 = vmatprep.subr.mxu0 0.0
    %1891 = vmatpush1.msra.mxu0 %v1867
    %1892 = vmatprep.subr.mxu0 0.0
    %1893 = vmatpush1.msra.mxu0 %v1866
    %1894 = vmatprep.subr.mxu0 0.0
    %1895 = vmatpush1.msra.mxu0 %v1865
    %1896 = vmatprep.subr.mxu0 0.0
    %1897 = vmatpush1.msra.mxu0 %v1864
    %1898 = vmatprep.subr.mxu0 0.0
    %1899 = vmatpush1.msra.mxu0 %v1863
    %1900 = vmatprep.subr.mxu0 0.0
    %1901 = vmatpush1.msra.mxu0 %v1862
    %1902 = vmatprep.subr.mxu0 0.0
    %1903 = vmatpush1.msra.mxu0 %v1861
    %1904 = vmatprep.subr.mxu0 0.0
    %1905 = vmatpush2.msra.mxu0 0.0
    %1906 = vmatprep.subr.mxu0 0.0
    %1907 = vmatpush2.msra.mxu0 0.0
    %1908 = vmatprep.subr.mxu0 0.0
    %1909 = vmatpush2.msra.mxu0 0.0
    %1910 = vmatprep.subr.mxu0 0.0
    %1911 = vmatpush2.msra.mxu0 0.0
    %1912 = vmatprep.subr.mxu0 0.0
    %1913 = vmatpush2.msra.mxu0 0.0
    %1914 = vmatprep.subr.mxu0 0.0
    %1915 = vmatpush2.msra.mxu0 0.0
    %1916 = vmatprep.subr.mxu0 0.0
    %1917 = vmatpush2.msra.mxu0 0.0
    %1918 = vmatprep.subr.mxu0 0.0
    %1919 = vmatpush2.msra.mxu0 0.0
    %1920 = vmatprep.subr.mxu0 0.0
    %1921 = vmatpush2.msra.mxu0 0.0
    %1922 = vmatprep.subr.mxu0 0.0
    %1923 = vmatpush2.msra.mxu0 0.0
    %1924 = vmatprep.subr.mxu0 0.0
    %1925 = vmatpush2.msra.mxu0 0.0
    %1926 = vmatprep.subr.mxu0 0.0
    %1927 = vmatpush2.msra.mxu0 0.0
    %1928 = vmatprep.subr.mxu0 0.0
    %1929 = vmatpush2.msra.mxu0 0.0
    %1930 = vmatprep.subr.mxu0 0.0
    %1931 = vmatpush2.msra.mxu0 0.0
    %1932 = vmatprep.subr.mxu0 0.0
    %1933 = vmatpush2.msra.mxu0 0.0
    %1934 = vmatprep.subr.mxu0 0.0
    %1935 = vmatpush2.msra.mxu0 0.0
    %1936 = vmatprep.mubr.f32.mxu0 0.0
    %1937 = vmatmul.mubr.f32.gmra.mxu0 %v1870
    %v1938 = vpop.f32.mrf.mxu0
    %v1939 = vadd.f32 0.0, %v1938
    %v1940 = vpop.f32.mrf.mxu0
    %1941 = vdwg.mxu0
    %v1942 = vadd.f32 %v1858, %v1939
    %v1943 = vld [vmem:[#allocation2 + $0xa] sm:$0x3]
    %s1944 = scalar_lea.vmem %s3, 320
    %v1945 = vld [vmem:[%s1944] sm:$0xff]
    %v1946 = vld [vmem:[%s1944 + $0x8] sm:$0xff]
    %v1947 = vld [vmem:[%s1944 + $0x10] sm:$0xff]
    %v1948 = vld [vmem:[%s1944 + $0x18] sm:$0xff]
    %v1949 = vld [vmem:[%s1944 + $0x20] sm:$0xff]
    %v1950 = vld [vmem:[%s1944 + $0x28] sm:$0xff]
    %v1951 = vld [vmem:[%s1944 + $0x30] sm:$0xff]
    %v1952 = vld [vmem:[%s1944 + $0x38] sm:$0xff]
    %v1954 = vsel %vm1511, %v1943, 0
    %1956 = vmatprep.subr.mxu0 0.0
    %1957 = vmatpush1.msra.mxu0 0.0
    %1958 = vmatprep.subr.mxu0 0.0
    %1959 = vmatpush1.msra.mxu0 0.0
    %1960 = vmatprep.subr.mxu0 0.0
    %1961 = vmatpush1.msra.mxu0 0.0
    %1962 = vmatprep.subr.mxu0 0.0
    %1963 = vmatpush1.msra.mxu0 0.0
    %1964 = vmatprep.subr.mxu0 0.0
    %1965 = vmatpush1.msra.mxu0 0.0
    %1966 = vmatprep.subr.mxu0 0.0
    %1967 = vmatpush1.msra.mxu0 0.0
    %1968 = vmatprep.subr.mxu0 0.0
    %1969 = vmatpush1.msra.mxu0 0.0
    %1970 = vmatprep.subr.mxu0 0.0
    %1971 = vmatpush1.msra.mxu0 0.0
    %1972 = vmatprep.subr.mxu0 0.0
    %1973 = vmatpush1.msra.mxu0 %v1952
    %1974 = vmatprep.subr.mxu0 0.0
    %1975 = vmatpush1.msra.mxu0 %v1951
    %1976 = vmatprep.subr.mxu0 0.0
    %1977 = vmatpush1.msra.mxu0 %v1950
    %1978 = vmatprep.subr.mxu0 0.0
    %1979 = vmatpush1.msra.mxu0 %v1949
    %1980 = vmatprep.subr.mxu0 0.0
    %1981 = vmatpush1.msra.mxu0 %v1948
    %1982 = vmatprep.subr.mxu0 0.0
    %1983 = vmatpush1.msra.mxu0 %v1947
    %1984 = vmatprep.subr.mxu0 0.0
    %1985 = vmatpush1.msra.mxu0 %v1946
    %1986 = vmatprep.subr.mxu0 0.0
    %1987 = vmatpush1.msra.mxu0 %v1945
    %1988 = vmatprep.subr.mxu0 0.0
    %1989 = vmatpush2.msra.mxu0 0.0
    %1990 = vmatprep.subr.mxu0 0.0
    %1991 = vmatpush2.msra.mxu0 0.0
    %1992 = vmatprep.subr.mxu0 0.0
    %1993 = vmatpush2.msra.mxu0 0.0
    %1994 = vmatprep.subr.mxu0 0.0
    %1995 = vmatpush2.msra.mxu0 0.0
    %1996 = vmatprep.subr.mxu0 0.0
    %1997 = vmatpush2.msra.mxu0 0.0
    %1998 = vmatprep.subr.mxu0 0.0
    %1999 = vmatpush2.msra.mxu0 0.0
    %2000 = vmatprep.subr.mxu0 0.0
    %2001 = vmatpush2.msra.mxu0 0.0
    %2002 = vmatprep.subr.mxu0 0.0
    %2003 = vmatpush2.msra.mxu0 0.0
    %2004 = vmatprep.subr.mxu0 0.0
    %2005 = vmatpush2.msra.mxu0 0.0
    %2006 = vmatprep.subr.mxu0 0.0
    %2007 = vmatpush2.msra.mxu0 0.0
    %2008 = vmatprep.subr.mxu0 0.0
    %2009 = vmatpush2.msra.mxu0 0.0
    %2010 = vmatprep.subr.mxu0 0.0
    %2011 = vmatpush2.msra.mxu0 0.0
    %2012 = vmatprep.subr.mxu0 0.0
    %2013 = vmatpush2.msra.mxu0 0.0
    %2014 = vmatprep.subr.mxu0 0.0
    %2015 = vmatpush2.msra.mxu0 0.0
    %2016 = vmatprep.subr.mxu0 0.0
    %2017 = vmatpush2.msra.mxu0 0.0
    %2018 = vmatprep.subr.mxu0 0.0
    %2019 = vmatpush2.msra.mxu0 0.0
    %2020 = vmatprep.mubr.f32.mxu0 0.0
    %2021 = vmatmul.mubr.f32.gmra.mxu0 %v1954
    %v2022 = vpop.f32.mrf.mxu0
    %v2023 = vadd.f32 0.0, %v2022
    %v2024 = vpop.f32.mrf.mxu0
    %2025 = vdwg.mxu0
    %v2026 = vadd.f32 %v1942, %v2023
    %v2027 = vld [vmem:[#allocation2 + $0xc] sm:$0x3]
    %s2028 = scalar_lea.vmem %s3, 384
    %v2029 = vld [vmem:[%s2028] sm:$0xff]
    %v2030 = vld [vmem:[%s2028 + $0x8] sm:$0xff]
    %v2031 = vld [vmem:[%s2028 + $0x10] sm:$0xff]
    %v2032 = vld [vmem:[%s2028 + $0x18] sm:$0xff]
    %v2033 = vld [vmem:[%s2028 + $0x20] sm:$0xff]
    %v2034 = vld [vmem:[%s2028 + $0x28] sm:$0xff]
    %v2035 = vld [vmem:[%s2028 + $0x30] sm:$0xff]
    %v2036 = vld [vmem:[%s2028 + $0x38] sm:$0xff]
    %v2038 = vsel %vm1511, %v2027, 0
    %2040 = vmatprep.subr.mxu0 0.0
    %2041 = vmatpush1.msra.mxu0 0.0
    %2042 = vmatprep.subr.mxu0 0.0
    %2043 = vmatpush1.msra.mxu0 0.0
    %2044 = vmatprep.subr.mxu0 0.0
    %2045 = vmatpush1.msra.mxu0 0.0
    %2046 = vmatprep.subr.mxu0 0.0
    %2047 = vmatpush1.msra.mxu0 0.0
    %2048 = vmatprep.subr.mxu0 0.0
    %2049 = vmatpush1.msra.mxu0 0.0
    %2050 = vmatprep.subr.mxu0 0.0
    %2051 = vmatpush1.msra.mxu0 0.0
    %2052 = vmatprep.subr.mxu0 0.0
    %2053 = vmatpush1.msra.mxu0 0.0
    %2054 = vmatprep.subr.mxu0 0.0
    %2055 = vmatpush1.msra.mxu0 0.0
    %2056 = vmatprep.subr.mxu0 0.0
    %2057 = vmatpush1.msra.mxu0 %v2036
    %2058 = vmatprep.subr.mxu0 0.0
    %2059 = vmatpush1.msra.mxu0 %v2035
    %2060 = vmatprep.subr.mxu0 0.0
    %2061 = vmatpush1.msra.mxu0 %v2034
    %2062 = vmatprep.subr.mxu0 0.0
    %2063 = vmatpush1.msra.mxu0 %v2033
    %2064 = vmatprep.subr.mxu0 0.0
    %2065 = vmatpush1.msra.mxu0 %v2032
    %2066 = vmatprep.subr.mxu0 0.0
    %2067 = vmatpush1.msra.mxu0 %v2031
    %2068 = vmatprep.subr.mxu0 0.0
    %2069 = vmatpush1.msra.mxu0 %v2030
    %2070 = vmatprep.subr.mxu0 0.0
    %2071 = vmatpush1.msra.mxu0 %v2029
    %2072 = vmatprep.subr.mxu0 0.0
    %2073 = vmatpush2.msra.mxu0 0.0
    %2074 = vmatprep.subr.mxu0 0.0
    %2075 = vmatpush2.msra.mxu0 0.0
    %2076 = vmatprep.subr.mxu0 0.0
    %2077 = vmatpush2.msra.mxu0 0.0
    %2078 = vmatprep.subr.mxu0 0.0
    %2079 = vmatpush2.msra.mxu0 0.0
    %2080 = vmatprep.subr.mxu0 0.0
    %2081 = vmatpush2.msra.mxu0 0.0
    %2082 = vmatprep.subr.mxu0 0.0
    %2083 = vmatpush2.msra.mxu0 0.0
    %2084 = vmatprep.subr.mxu0 0.0
    %2085 = vmatpush2.msra.mxu0 0.0
    %2086 = vmatprep.subr.mxu0 0.0
    %2087 = vmatpush2.msra.mxu0 0.0
    %2088 = vmatprep.subr.mxu0 0.0
    %2089 = vmatpush2.msra.mxu0 0.0
    %2090 = vmatprep.subr.mxu0 0.0
    %2091 = vmatpush2.msra.mxu0 0.0
    %2092 = vmatprep.subr.mxu0 0.0
    %2093 = vmatpush2.msra.mxu0 0.0
    %2094 = vmatprep.subr.mxu0 0.0
    %2095 = vmatpush2.msra.mxu0 0.0
    %2096 = vmatprep.subr.mxu0 0.0
    %2097 = vmatpush2.msra.mxu0 0.0
    %2098 = vmatprep.subr.mxu0 0.0
    %2099 = vmatpush2.msra.mxu0 0.0
    %2100 = vmatprep.subr.mxu0 0.0
    %2101 = vmatpush2.msra.mxu0 0.0
    %2102 = vmatprep.subr.mxu0 0.0
    %2103 = vmatpush2.msra.mxu0 0.0
    %2104 = vmatprep.mubr.f32.mxu0 0.0
    %2105 = vmatmul.mubr.f32.gmra.mxu0 %v2038
    %v2106 = vpop.f32.mrf.mxu0
    %v2107 = vadd.f32 0.0, %v2106
    %v2108 = vpop.f32.mrf.mxu0
    %2109 = vdwg.mxu0
    %v2110 = vadd.f32 %v2026, %v2107
    %v2111 = vld [vmem:[#allocation2 + $0xe] sm:$0x3]
    %s2112 = scalar_lea.vmem %s3, 448
    %v2113 = vld [vmem:[%s2112] sm:$0xff]
    %v2114 = vld [vmem:[%s2112 + $0x8] sm:$0xff]
    %v2115 = vld [vmem:[%s2112 + $0x10] sm:$0xff]
    %v2116 = vld [vmem:[%s2112 + $0x18] sm:$0xff]
    %v2117 = vld [vmem:[%s2112 + $0x20] sm:$0xff]
    %v2118 = vld [vmem:[%s2112 + $0x28] sm:$0xff]
    %v2119 = vld [vmem:[%s2112 + $0x30] sm:$0xff]
    %v2120 = vld [vmem:[%s2112 + $0x38] sm:$0xff]
    %v2122 = vsel %vm1511, %v2111, 0
    %2124 = vmatprep.subr.mxu0 0.0
    %2125 = vmatpush1.msra.mxu0 0.0
    %2126 = vmatprep.subr.mxu0 0.0
    %2127 = vmatpush1.msra.mxu0 0.0
    %2128 = vmatprep.subr.mxu0 0.0
    %2129 = vmatpush1.msra.mxu0 0.0
    %2130 = vmatprep.subr.mxu0 0.0
    %2131 = vmatpush1.msra.mxu0 0.0
    %2132 = vmatprep.subr.mxu0 0.0
    %2133 = vmatpush1.msra.mxu0 0.0
    %2134 = vmatprep.subr.mxu0 0.0
    %2135 = vmatpush1.msra.mxu0 0.0
    %2136 = vmatprep.subr.mxu0 0.0
    %2137 = vmatpush1.msra.mxu0 0.0
    %2138 = vmatprep.subr.mxu0 0.0
    %2139 = vmatpush1.msra.mxu0 0.0
    %2140 = vmatprep.subr.mxu0 0.0
    %2141 = vmatpush1.msra.mxu0 %v2120
    %2142 = vmatprep.subr.mxu0 0.0
    %2143 = vmatpush1.msra.mxu0 %v2119
    %2144 = vmatprep.subr.mxu0 0.0
    %2145 = vmatpush1.msra.mxu0 %v2118
    %2146 = vmatprep.subr.mxu0 0.0
    %2147 = vmatpush1.msra.mxu0 %v2117
    %2148 = vmatprep.subr.mxu0 0.0
    %2149 = vmatpush1.msra.mxu0 %v2116
    %2150 = vmatprep.subr.mxu0 0.0
    %2151 = vmatpush1.msra.mxu0 %v2115
    %2152 = vmatprep.subr.mxu0 0.0
    %2153 = vmatpush1.msra.mxu0 %v2114
    %2154 = vmatprep.subr.mxu0 0.0
    %2155 = vmatpush1.msra.mxu0 %v2113
    %2156 = vmatprep.subr.mxu0 0.0
    %2157 = vmatpush2.msra.mxu0 0.0
    %2158 = vmatprep.subr.mxu0 0.0
    %2159 = vmatpush2.msra.mxu0 0.0
    %2160 = vmatprep.subr.mxu0 0.0
    %2161 = vmatpush2.msra.mxu0 0.0
    %2162 = vmatprep.subr.mxu0 0.0
    %2163 = vmatpush2.msra.mxu0 0.0
    %2164 = vmatprep.subr.mxu0 0.0
    %2165 = vmatpush2.msra.mxu0 0.0
    %2166 = vmatprep.subr.mxu0 0.0
    %2167 = vmatpush2.msra.mxu0 0.0
    %2168 = vmatprep.subr.mxu0 0.0
    %2169 = vmatpush2.msra.mxu0 0.0
    %2170 = vmatprep.subr.mxu0 0.0
    %2171 = vmatpush2.msra.mxu0 0.0
    %2172 = vmatprep.subr.mxu0 0.0
    %2173 = vmatpush2.msra.mxu0 0.0
    %2174 = vmatprep.subr.mxu0 0.0
    %2175 = vmatpush2.msra.mxu0 0.0
    %2176 = vmatprep.subr.mxu0 0.0
    %2177 = vmatpush2.msra.mxu0 0.0
    %2178 = vmatprep.subr.mxu0 0.0
    %2179 = vmatpush2.msra.mxu0 0.0
    %2180 = vmatprep.subr.mxu0 0.0
    %2181 = vmatpush2.msra.mxu0 0.0
    %2182 = vmatprep.subr.mxu0 0.0
    %2183 = vmatpush2.msra.mxu0 0.0
    %2184 = vmatprep.subr.mxu0 0.0
    %2185 = vmatpush2.msra.mxu0 0.0
    %2186 = vmatprep.subr.mxu0 0.0
    %2187 = vmatpush2.msra.mxu0 0.0
    %2188 = vmatprep.mubr.f32.mxu0 0.0
    %2189 = vmatmul.mubr.f32.gmra.mxu0 %v2122
    %v2190 = vpop.f32.mrf.mxu0
    %v2191 = vadd.f32 0.0, %v2190
    %v2192 = vpop.f32.mrf.mxu0
    %2193 = vdwg.mxu0
    %v2194 = vadd.f32 %v2110, %v2191
    %v2195 = vld [vmem:[#allocation2 + $0x10] sm:$0x3]
    %s2196 = scalar_lea.vmem %s3, 512
    %v2197 = vld [vmem:[%s2196] sm:$0xff]
    %v2198 = vld [vmem:[%s2196 + $0x8] sm:$0xff]
    %v2199 = vld [vmem:[%s2196 + $0x10] sm:$0xff]
    %v2200 = vld [vmem:[%s2196 + $0x18] sm:$0xff]
    %v2201 = vld [vmem:[%s2196 + $0x20] sm:$0xff]
    %v2202 = vld [vmem:[%s2196 + $0x28] sm:$0xff]
    %v2203 = vld [vmem:[%s2196 + $0x30] sm:$0xff]
    %v2204 = vld [vmem:[%s2196 + $0x38] sm:$0xff]
    %v2206 = vsel %vm1511, %v2195, 0
    %2208 = vmatprep.subr.mxu0 0.0
    %2209 = vmatpush1.msra.mxu0 0.0
    %2210 = vmatprep.subr.mxu0 0.0
    %2211 = vmatpush1.msra.mxu0 0.0
    %2212 = vmatprep.subr.mxu0 0.0
    %2213 = vmatpush1.msra.mxu0 0.0
    %2214 = vmatprep.subr.mxu0 0.0
    %2215 = vmatpush1.msra.mxu0 0.0
    %2216 = vmatprep.subr.mxu0 0.0
    %2217 = vmatpush1.msra.mxu0 0.0
    %2218 = vmatprep.subr.mxu0 0.0
    %2219 = vmatpush1.msra.mxu0 0.0
    %2220 = vmatprep.subr.mxu0 0.0
    %2221 = vmatpush1.msra.mxu0 0.0
    %2222 = vmatprep.subr.mxu0 0.0
    %2223 = vmatpush1.msra.mxu0 0.0
    %2224 = vmatprep.subr.mxu0 0.0
    %2225 = vmatpush1.msra.mxu0 %v2204
    %2226 = vmatprep.subr.mxu0 0.0
    %2227 = vmatpush1.msra.mxu0 %v2203
    %2228 = vmatprep.subr.mxu0 0.0
    %2229 = vmatpush1.msra.mxu0 %v2202
    %2230 = vmatprep.subr.mxu0 0.0
    %2231 = vmatpush1.msra.mxu0 %v2201
    %2232 = vmatprep.subr.mxu0 0.0
    %2233 = vmatpush1.msra.mxu0 %v2200
    %2234 = vmatprep.subr.mxu0 0.0
    %2235 = vmatpush1.msra.mxu0 %v2199
    %2236 = vmatprep.subr.mxu0 0.0
    %2237 = vmatpush1.msra.mxu0 %v2198
    %2238 = vmatprep.subr.mxu0 0.0
    %2239 = vmatpush1.msra.mxu0 %v2197
    %2240 = vmatprep.subr.mxu0 0.0
    %2241 = vmatpush2.msra.mxu0 0.0
    %2242 = vmatprep.subr.mxu0 0.0
    %2243 = vmatpush2.msra.mxu0 0.0
    %2244 = vmatprep.subr.mxu0 0.0
    %2245 = vmatpush2.msra.mxu0 0.0
    %2246 = vmatprep.subr.mxu0 0.0
    %2247 = vmatpush2.msra.mxu0 0.0
    %2248 = vmatprep.subr.mxu0 0.0
    %2249 = vmatpush2.msra.mxu0 0.0
    %2250 = vmatprep.subr.mxu0 0.0
    %2251 = vmatpush2.msra.mxu0 0.0
    %2252 = vmatprep.subr.mxu0 0.0
    %2253 = vmatpush2.msra.mxu0 0.0
    %2254 = vmatprep.subr.mxu0 0.0
    %2255 = vmatpush2.msra.mxu0 0.0
    %2256 = vmatprep.subr.mxu0 0.0
    %2257 = vmatpush2.msra.mxu0 0.0
    %2258 = vmatprep.subr.mxu0 0.0
    %2259 = vmatpush2.msra.mxu0 0.0
    %2260 = vmatprep.subr.mxu0 0.0
    %2261 = vmatpush2.msra.mxu0 0.0
    %2262 = vmatprep.subr.mxu0 0.0
    %2263 = vmatpush2.msra.mxu0 0.0
    %2264 = vmatprep.subr.mxu0 0.0
    %2265 = vmatpush2.msra.mxu0 0.0
    %2266 = vmatprep.subr.mxu0 0.0
    %2267 = vmatpush2.msra.mxu0 0.0
    %2268 = vmatprep.subr.mxu0 0.0
    %2269 = vmatpush2.msra.mxu0 0.0
    %2270 = vmatprep.subr.mxu0 0.0
    %2271 = vmatpush2.msra.mxu0 0.0
    %2272 = vmatprep.mubr.f32.mxu0 0.0
    %2273 = vmatmul.mubr.f32.gmra.mxu0 %v2206
    %v2274 = vpop.f32.mrf.mxu0
    %v2275 = vadd.f32 0.0, %v2274
    %v2276 = vpop.f32.mrf.mxu0
    %2277 = vdwg.mxu0
    %v2278 = vadd.f32 %v2194, %v2275
    %v2279 = vld [vmem:[#allocation2 + $0x12] sm:$0x3]
    %s2280 = scalar_lea.vmem %s3, 576
    %v2281 = vld [vmem:[%s2280] sm:$0xff]
    %v2282 = vld [vmem:[%s2280 + $0x8] sm:$0xff]
    %v2283 = vld [vmem:[%s2280 + $0x10] sm:$0xff]
    %v2284 = vld [vmem:[%s2280 + $0x18] sm:$0xff]
    %v2285 = vld [vmem:[%s2280 + $0x20] sm:$0xff]
    %v2286 = vld [vmem:[%s2280 + $0x28] sm:$0xff]
    %v2287 = vld [vmem:[%s2280 + $0x30] sm:$0xff]
    %v2288 = vld [vmem:[%s2280 + $0x38] sm:$0xff]
    %v2290 = vsel %vm1511, %v2279, 0
    %2292 = vmatprep.subr.mxu0 0.0
    %2293 = vmatpush1.msra.mxu0 0.0
    %2294 = vmatprep.subr.mxu0 0.0
    %2295 = vmatpush1.msra.mxu0 0.0
    %2296 = vmatprep.subr.mxu0 0.0
    %2297 = vmatpush1.msra.mxu0 0.0
    %2298 = vmatprep.subr.mxu0 0.0
    %2299 = vmatpush1.msra.mxu0 0.0
    %2300 = vmatprep.subr.mxu0 0.0
    %2301 = vmatpush1.msra.mxu0 0.0
    %2302 = vmatprep.subr.mxu0 0.0
    %2303 = vmatpush1.msra.mxu0 0.0
    %2304 = vmatprep.subr.mxu0 0.0
    %2305 = vmatpush1.msra.mxu0 0.0
    %2306 = vmatprep.subr.mxu0 0.0
    %2307 = vmatpush1.msra.mxu0 0.0
    %2308 = vmatprep.subr.mxu0 0.0
    %2309 = vmatpush1.msra.mxu0 %v2288
    %2310 = vmatprep.subr.mxu0 0.0
    %2311 = vmatpush1.msra.mxu0 %v2287
    %2312 = vmatprep.subr.mxu0 0.0
    %2313 = vmatpush1.msra.mxu0 %v2286
    %2314 = vmatprep.subr.mxu0 0.0
    %2315 = vmatpush1.msra.mxu0 %v2285
    %2316 = vmatprep.subr.mxu0 0.0
    %2317 = vmatpush1.msra.mxu0 %v2284
    %2318 = vmatprep.subr.mxu0 0.0
    %2319 = vmatpush1.msra.mxu0 %v2283
    %2320 = vmatprep.subr.mxu0 0.0
    %2321 = vmatpush1.msra.mxu0 %v2282
    %2322 = vmatprep.subr.mxu0 0.0
    %2323 = vmatpush1.msra.mxu0 %v2281
    %2324 = vmatprep.subr.mxu0 0.0
    %2325 = vmatpush2.msra.mxu0 0.0
    %2326 = vmatprep.subr.mxu0 0.0
    %2327 = vmatpush2.msra.mxu0 0.0
    %2328 = vmatprep.subr.mxu0 0.0
    %2329 = vmatpush2.msra.mxu0 0.0
    %2330 = vmatprep.subr.mxu0 0.0
    %2331 = vmatpush2.msra.mxu0 0.0
    %2332 = vmatprep.subr.mxu0 0.0
    %2333 = vmatpush2.msra.mxu0 0.0
    %2334 = vmatprep.subr.mxu0 0.0
    %2335 = vmatpush2.msra.mxu0 0.0
    %2336 = vmatprep.subr.mxu0 0.0
    %2337 = vmatpush2.msra.mxu0 0.0
    %2338 = vmatprep.subr.mxu0 0.0
    %2339 = vmatpush2.msra.mxu0 0.0
    %2340 = vmatprep.subr.mxu0 0.0
    %2341 = vmatpush2.msra.mxu0 0.0
    %2342 = vmatprep.subr.mxu0 0.0
    %2343 = vmatpush2.msra.mxu0 0.0
    %2344 = vmatprep.subr.mxu0 0.0
    %2345 = vmatpush2.msra.mxu0 0.0
    %2346 = vmatprep.subr.mxu0 0.0
    %2347 = vmatpush2.msra.mxu0 0.0
    %2348 = vmatprep.subr.mxu0 0.0
    %2349 = vmatpush2.msra.mxu0 0.0
    %2350 = vmatprep.subr.mxu0 0.0
    %2351 = vmatpush2.msra.mxu0 0.0
    %2352 = vmatprep.subr.mxu0 0.0
    %2353 = vmatpush2.msra.mxu0 0.0
    %2354 = vmatprep.subr.mxu0 0.0
    %2355 = vmatpush2.msra.mxu0 0.0
    %2356 = vmatprep.mubr.f32.mxu0 0.0
    %2357 = vmatmul.mubr.f32.gmra.mxu0 %v2290
    %v2358 = vpop.f32.mrf.mxu0
    %v2359 = vadd.f32 0.0, %v2358
    %v2360 = vpop.f32.mrf.mxu0
    %2361 = vdwg.mxu0
    %v2362 = vadd.f32 %v2278, %v2359
    %v2363 = vld [vmem:[#allocation2 + $0x14] sm:$0x3]
    %s2364 = scalar_lea.vmem %s3, 640
    %v2365 = vld [vmem:[%s2364] sm:$0xff]
    %v2366 = vld [vmem:[%s2364 + $0x8] sm:$0xff]
    %v2367 = vld [vmem:[%s2364 + $0x10] sm:$0xff]
    %v2368 = vld [vmem:[%s2364 + $0x18] sm:$0xff]
    %v2369 = vld [vmem:[%s2364 + $0x20] sm:$0xff]
    %v2370 = vld [vmem:[%s2364 + $0x28] sm:$0xff]
    %v2371 = vld [vmem:[%s2364 + $0x30] sm:$0xff]
    %v2372 = vld [vmem:[%s2364 + $0x38] sm:$0xff]
    %v2374 = vsel %vm1511, %v2363, 0
    %2376 = vmatprep.subr.mxu0 0.0
    %2377 = vmatpush1.msra.mxu0 0.0
    %2378 = vmatprep.subr.mxu0 0.0
    %2379 = vmatpush1.msra.mxu0 0.0
    %2380 = vmatprep.subr.mxu0 0.0
    %2381 = vmatpush1.msra.mxu0 0.0
    %2382 = vmatprep.subr.mxu0 0.0
    %2383 = vmatpush1.msra.mxu0 0.0
    %2384 = vmatprep.subr.mxu0 0.0
    %2385 = vmatpush1.msra.mxu0 0.0
    %2386 = vmatprep.subr.mxu0 0.0
    %2387 = vmatpush1.msra.mxu0 0.0
    %2388 = vmatprep.subr.mxu0 0.0
    %2389 = vmatpush1.msra.mxu0 0.0
    %2390 = vmatprep.subr.mxu0 0.0
    %2391 = vmatpush1.msra.mxu0 0.0
    %2392 = vmatprep.subr.mxu0 0.0
    %2393 = vmatpush1.msra.mxu0 %v2372
    %2394 = vmatprep.subr.mxu0 0.0
    %2395 = vmatpush1.msra.mxu0 %v2371
    %2396 = vmatprep.subr.mxu0 0.0
    %2397 = vmatpush1.msra.mxu0 %v2370
    %2398 = vmatprep.subr.mxu0 0.0
    %2399 = vmatpush1.msra.mxu0 %v2369
    %2400 = vmatprep.subr.mxu0 0.0
    %2401 = vmatpush1.msra.mxu0 %v2368
    %2402 = vmatprep.subr.mxu0 0.0
    %2403 = vmatpush1.msra.mxu0 %v2367
    %2404 = vmatprep.subr.mxu0 0.0
    %2405 = vmatpush1.msra.mxu0 %v2366
    %2406 = vmatprep.subr.mxu0 0.0
    %2407 = vmatpush1.msra.mxu0 %v2365
    %2408 = vmatprep.subr.mxu0 0.0
    %2409 = vmatpush2.msra.mxu0 0.0
    %2410 = vmatprep.subr.mxu0 0.0
    %2411 = vmatpush2.msra.mxu0 0.0
    %2412 = vmatprep.subr.mxu0 0.0
    %2413 = vmatpush2.msra.mxu0 0.0
    %2414 = vmatprep.subr.mxu0 0.0
    %2415 = vmatpush2.msra.mxu0 0.0
    %2416 = vmatprep.subr.mxu0 0.0
    %2417 = vmatpush2.msra.mxu0 0.0
    %2418 = vmatprep.subr.mxu0 0.0
    %2419 = vmatpush2.msra.mxu0 0.0
    %2420 = vmatprep.subr.mxu0 0.0
    %2421 = vmatpush2.msra.mxu0 0.0
    %2422 = vmatprep.subr.mxu0 0.0
    %2423 = vmatpush2.msra.mxu0 0.0
    %2424 = vmatprep.subr.mxu0 0.0
    %2425 = vmatpush2.msra.mxu0 0.0
    %2426 = vmatprep.subr.mxu0 0.0
    %2427 = vmatpush2.msra.mxu0 0.0
    %2428 = vmatprep.subr.mxu0 0.0
    %2429 = vmatpush2.msra.mxu0 0.0
    %2430 = vmatprep.subr.mxu0 0.0
    %2431 = vmatpush2.msra.mxu0 0.0
    %2432 = vmatprep.subr.mxu0 0.0
    %2433 = vmatpush2.msra.mxu0 0.0
    %2434 = vmatprep.subr.mxu0 0.0
    %2435 = vmatpush2.msra.mxu0 0.0
    %2436 = vmatprep.subr.mxu0 0.0
    %2437 = vmatpush2.msra.mxu0 0.0
    %2438 = vmatprep.subr.mxu0 0.0
    %2439 = vmatpush2.msra.mxu0 0.0
    %2440 = vmatprep.mubr.f32.mxu0 0.0
    %2441 = vmatmul.mubr.f32.gmra.mxu0 %v2374
    %v2442 = vpop.f32.mrf.mxu0
    %v2443 = vadd.f32 0.0, %v2442
    %v2444 = vpop.f32.mrf.mxu0
    %2445 = vdwg.mxu0
    %v2446 = vadd.f32 %v2362, %v2443
    %v2447 = vld [vmem:[#allocation2 + $0x16] sm:$0x3]
    %s2448 = scalar_lea.vmem %s3, 704
    %v2449 = vld [vmem:[%s2448] sm:$0xff]
    %v2450 = vld [vmem:[%s2448 + $0x8] sm:$0xff]
    %v2451 = vld [vmem:[%s2448 + $0x10] sm:$0xff]
    %v2452 = vld [vmem:[%s2448 + $0x18] sm:$0xff]
    %v2453 = vld [vmem:[%s2448 + $0x20] sm:$0xff]
    %v2454 = vld [vmem:[%s2448 + $0x28] sm:$0xff]
    %v2455 = vld [vmem:[%s2448 + $0x30] sm:$0xff]
    %v2456 = vld [vmem:[%s2448 + $0x38] sm:$0xff]
    %v2458 = vsel %vm1511, %v2447, 0
    %2460 = vmatprep.subr.mxu0 0.0
    %2461 = vmatpush1.msra.mxu0 0.0
    %2462 = vmatprep.subr.mxu0 0.0
    %2463 = vmatpush1.msra.mxu0 0.0
    %2464 = vmatprep.subr.mxu0 0.0
    %2465 = vmatpush1.msra.mxu0 0.0
    %2466 = vmatprep.subr.mxu0 0.0
    %2467 = vmatpush1.msra.mxu0 0.0
    %2468 = vmatprep.subr.mxu0 0.0
    %2469 = vmatpush1.msra.mxu0 0.0
    %2470 = vmatprep.subr.mxu0 0.0
    %2471 = vmatpush1.msra.mxu0 0.0
    %2472 = vmatprep.subr.mxu0 0.0
    %2473 = vmatpush1.msra.mxu0 0.0
    %2474 = vmatprep.subr.mxu0 0.0
    %2475 = vmatpush1.msra.mxu0 0.0
    %2476 = vmatprep.subr.mxu0 0.0
    %2477 = vmatpush1.msra.mxu0 %v2456
    %2478 = vmatprep.subr.mxu0 0.0
    %2479 = vmatpush1.msra.mxu0 %v2455
    %2480 = vmatprep.subr.mxu0 0.0
    %2481 = vmatpush1.msra.mxu0 %v2454
    %2482 = vmatprep.subr.mxu0 0.0
    %2483 = vmatpush1.msra.mxu0 %v2453
    %2484 = vmatprep.subr.mxu0 0.0
    %2485 = vmatpush1.msra.mxu0 %v2452
    %2486 = vmatprep.subr.mxu0 0.0
    %2487 = vmatpush1.msra.mxu0 %v2451
    %2488 = vmatprep.subr.mxu0 0.0
    %2489 = vmatpush1.msra.mxu0 %v2450
    %2490 = vmatprep.subr.mxu0 0.0
    %2491 = vmatpush1.msra.mxu0 %v2449
    %2492 = vmatprep.subr.mxu0 0.0
    %2493 = vmatpush2.msra.mxu0 0.0
    %2494 = vmatprep.subr.mxu0 0.0
    %2495 = vmatpush2.msra.mxu0 0.0
    %2496 = vmatprep.subr.mxu0 0.0
    %2497 = vmatpush2.msra.mxu0 0.0
    %2498 = vmatprep.subr.mxu0 0.0
    %2499 = vmatpush2.msra.mxu0 0.0
    %2500 = vmatprep.subr.mxu0 0.0
    %2501 = vmatpush2.msra.mxu0 0.0
    %2502 = vmatprep.subr.mxu0 0.0
    %2503 = vmatpush2.msra.mxu0 0.0
    %2504 = vmatprep.subr.mxu0 0.0
    %2505 = vmatpush2.msra.mxu0 0.0
    %2506 = vmatprep.subr.mxu0 0.0
    %2507 = vmatpush2.msra.mxu0 0.0
    %2508 = vmatprep.subr.mxu0 0.0
    %2509 = vmatpush2.msra.mxu0 0.0
    %2510 = vmatprep.subr.mxu0 0.0
    %2511 = vmatpush2.msra.mxu0 0.0
    %2512 = vmatprep.subr.mxu0 0.0
    %2513 = vmatpush2.msra.mxu0 0.0
    %2514 = vmatprep.subr.mxu0 0.0
    %2515 = vmatpush2.msra.mxu0 0.0
    %2516 = vmatprep.subr.mxu0 0.0
    %2517 = vmatpush2.msra.mxu0 0.0
    %2518 = vmatprep.subr.mxu0 0.0
    %2519 = vmatpush2.msra.mxu0 0.0
    %2520 = vmatprep.subr.mxu0 0.0
    %2521 = vmatpush2.msra.mxu0 0.0
    %2522 = vmatprep.subr.mxu0 0.0
    %2523 = vmatpush2.msra.mxu0 0.0
    %2524 = vmatprep.mubr.f32.mxu0 0.0
    %2525 = vmatmul.mubr.f32.gmra.mxu0 %v2458
    %v2526 = vpop.f32.mrf.mxu0
    %v2527 = vadd.f32 0.0, %v2526
    %v2528 = vpop.f32.mrf.mxu0
    %2529 = vdwg.mxu0
    %v2530 = vadd.f32 %v2446, %v2527
    %v2531 = vld [vmem:[#allocation2 + $0x18] sm:$0x3]
    %s2532 = scalar_lea.vmem %s3, 768
    %v2533 = vld [vmem:[%s2532] sm:$0xff]
    %v2534 = vld [vmem:[%s2532 + $0x8] sm:$0xff]
    %v2535 = vld [vmem:[%s2532 + $0x10] sm:$0xff]
    %v2536 = vld [vmem:[%s2532 + $0x18] sm:$0xff]
    %v2537 = vld [vmem:[%s2532 + $0x20] sm:$0xff]
    %v2538 = vld [vmem:[%s2532 + $0x28] sm:$0xff]
    %v2539 = vld [vmem:[%s2532 + $0x30] sm:$0xff]
    %v2540 = vld [vmem:[%s2532 + $0x38] sm:$0xff]
    %v2542 = vsel %vm1511, %v2531, 0
    %2544 = vmatprep.subr.mxu0 0.0
    %2545 = vmatpush1.msra.mxu0 0.0
    %2546 = vmatprep.subr.mxu0 0.0
    %2547 = vmatpush1.msra.mxu0 0.0
    %2548 = vmatprep.subr.mxu0 0.0
    %2549 = vmatpush1.msra.mxu0 0.0
    %2550 = vmatprep.subr.mxu0 0.0
    %2551 = vmatpush1.msra.mxu0 0.0
    %2552 = vmatprep.subr.mxu0 0.0
    %2553 = vmatpush1.msra.mxu0 0.0
    %2554 = vmatprep.subr.mxu0 0.0
    %2555 = vmatpush1.msra.mxu0 0.0
    %2556 = vmatprep.subr.mxu0 0.0
    %2557 = vmatpush1.msra.mxu0 0.0
    %2558 = vmatprep.subr.mxu0 0.0
    %2559 = vmatpush1.msra.mxu0 0.0
    %2560 = vmatprep.subr.mxu0 0.0
    %2561 = vmatpush1.msra.mxu0 %v2540
    %2562 = vmatprep.subr.mxu0 0.0
    %2563 = vmatpush1.msra.mxu0 %v2539
    %2564 = vmatprep.subr.mxu0 0.0
    %2565 = vmatpush1.msra.mxu0 %v2538
    %2566 = vmatprep.subr.mxu0 0.0
    %2567 = vmatpush1.msra.mxu0 %v2537
    %2568 = vmatprep.subr.mxu0 0.0
    %2569 = vmatpush1.msra.mxu0 %v2536
    %2570 = vmatprep.subr.mxu0 0.0
    %2571 = vmatpush1.msra.mxu0 %v2535
    %2572 = vmatprep.subr.mxu0 0.0
    %2573 = vmatpush1.msra.mxu0 %v2534
    %2574 = vmatprep.subr.mxu0 0.0
    %2575 = vmatpush1.msra.mxu0 %v2533
    %2576 = vmatprep.subr.mxu0 0.0
    %2577 = vmatpush2.msra.mxu0 0.0
    %2578 = vmatprep.subr.mxu0 0.0
    %2579 = vmatpush2.msra.mxu0 0.0
    %2580 = vmatprep.subr.mxu0 0.0
    %2581 = vmatpush2.msra.mxu0 0.0
    %2582 = vmatprep.subr.mxu0 0.0
    %2583 = vmatpush2.msra.mxu0 0.0
    %2584 = vmatprep.subr.mxu0 0.0
    %2585 = vmatpush2.msra.mxu0 0.0
    %2586 = vmatprep.subr.mxu0 0.0
    %2587 = vmatpush2.msra.mxu0 0.0
    %2588 = vmatprep.subr.mxu0 0.0
    %2589 = vmatpush2.msra.mxu0 0.0
    %2590 = vmatprep.subr.mxu0 0.0
    %2591 = vmatpush2.msra.mxu0 0.0
    %2592 = vmatprep.subr.mxu0 0.0
    %2593 = vmatpush2.msra.mxu0 0.0
    %2594 = vmatprep.subr.mxu0 0.0
    %2595 = vmatpush2.msra.mxu0 0.0
    %2596 = vmatprep.subr.mxu0 0.0
    %2597 = vmatpush2.msra.mxu0 0.0
    %2598 = vmatprep.subr.mxu0 0.0
    %2599 = vmatpush2.msra.mxu0 0.0
    %2600 = vmatprep.subr.mxu0 0.0
    %2601 = vmatpush2.msra.mxu0 0.0
    %2602 = vmatprep.subr.mxu0 0.0
    %2603 = vmatpush2.msra.mxu0 0.0
    %2604 = vmatprep.subr.mxu0 0.0
    %2605 = vmatpush2.msra.mxu0 0.0
    %2606 = vmatprep.subr.mxu0 0.0
    %2607 = vmatpush2.msra.mxu0 0.0
    %2608 = vmatprep.mubr.f32.mxu0 0.0
    %2609 = vmatmul.mubr.f32.gmra.mxu0 %v2542
    %v2610 = vpop.f32.mrf.mxu0
    %v2611 = vadd.f32 0.0, %v2610
    %v2612 = vpop.f32.mrf.mxu0
    %2613 = vdwg.mxu0
    %v2614 = vadd.f32 %v2530, %v2611
    %v2615 = vld [vmem:[#allocation2 + $0x1a] sm:$0x3]
    %s2616 = scalar_lea.vmem %s3, 832
    %v2617 = vld [vmem:[%s2616] sm:$0xff]
    %v2618 = vld [vmem:[%s2616 + $0x8] sm:$0xff]
    %v2619 = vld [vmem:[%s2616 + $0x10] sm:$0xff]
    %v2620 = vld [vmem:[%s2616 + $0x18] sm:$0xff]
    %v2621 = vld [vmem:[%s2616 + $0x20] sm:$0xff]
    %v2622 = vld [vmem:[%s2616 + $0x28] sm:$0xff]
    %v2623 = vld [vmem:[%s2616 + $0x30] sm:$0xff]
    %v2624 = vld [vmem:[%s2616 + $0x38] sm:$0xff]
    %v2626 = vsel %vm1511, %v2615, 0
    %2628 = vmatprep.subr.mxu0 0.0
    %2629 = vmatpush1.msra.mxu0 0.0
    %2630 = vmatprep.subr.mxu0 0.0
    %2631 = vmatpush1.msra.mxu0 0.0
    %2632 = vmatprep.subr.mxu0 0.0
    %2633 = vmatpush1.msra.mxu0 0.0
    %2634 = vmatprep.subr.mxu0 0.0
    %2635 = vmatpush1.msra.mxu0 0.0
    %2636 = vmatprep.subr.mxu0 0.0
    %2637 = vmatpush1.msra.mxu0 0.0
    %2638 = vmatprep.subr.mxu0 0.0
    %2639 = vmatpush1.msra.mxu0 0.0
    %2640 = vmatprep.subr.mxu0 0.0
    %2641 = vmatpush1.msra.mxu0 0.0
    %2642 = vmatprep.subr.mxu0 0.0
    %2643 = vmatpush1.msra.mxu0 0.0
    %2644 = vmatprep.subr.mxu0 0.0
    %2645 = vmatpush1.msra.mxu0 %v2624
    %2646 = vmatprep.subr.mxu0 0.0
    %2647 = vmatpush1.msra.mxu0 %v2623
    %2648 = vmatprep.subr.mxu0 0.0
    %2649 = vmatpush1.msra.mxu0 %v2622
    %2650 = vmatprep.subr.mxu0 0.0
    %2651 = vmatpush1.msra.mxu0 %v2621
    %2652 = vmatprep.subr.mxu0 0.0
    %2653 = vmatpush1.msra.mxu0 %v2620
    %2654 = vmatprep.subr.mxu0 0.0
    %2655 = vmatpush1.msra.mxu0 %v2619
    %2656 = vmatprep.subr.mxu0 0.0
    %2657 = vmatpush1.msra.mxu0 %v2618
    %2658 = vmatprep.subr.mxu0 0.0
    %2659 = vmatpush1.msra.mxu0 %v2617
    %2660 = vmatprep.subr.mxu0 0.0
    %2661 = vmatpush2.msra.mxu0 0.0
    %2662 = vmatprep.subr.mxu0 0.0
    %2663 = vmatpush2.msra.mxu0 0.0
    %2664 = vmatprep.subr.mxu0 0.0
    %2665 = vmatpush2.msra.mxu0 0.0
    %2666 = vmatprep.subr.mxu0 0.0
    %2667 = vmatpush2.msra.mxu0 0.0
    %2668 = vmatprep.subr.mxu0 0.0
    %2669 = vmatpush2.msra.mxu0 0.0
    %2670 = vmatprep.subr.mxu0 0.0
    %2671 = vmatpush2.msra.mxu0 0.0
    %2672 = vmatprep.subr.mxu0 0.0
    %2673 = vmatpush2.msra.mxu0 0.0
    %2674 = vmatprep.subr.mxu0 0.0
    %2675 = vmatpush2.msra.mxu0 0.0
    %2676 = vmatprep.subr.mxu0 0.0
    %2677 = vmatpush2.msra.mxu0 0.0
    %2678 = vmatprep.subr.mxu0 0.0
    %2679 = vmatpush2.msra.mxu0 0.0
    %2680 = vmatprep.subr.mxu0 0.0
    %2681 = vmatpush2.msra.mxu0 0.0
    %2682 = vmatprep.subr.mxu0 0.0
    %2683 = vmatpush2.msra.mxu0 0.0
    %2684 = vmatprep.subr.mxu0 0.0
    %2685 = vmatpush2.msra.mxu0 0.0
    %2686 = vmatprep.subr.mxu0 0.0
    %2687 = vmatpush2.msra.mxu0 0.0
    %2688 = vmatprep.subr.mxu0 0.0
    %2689 = vmatpush2.msra.mxu0 0.0
    %2690 = vmatprep.subr.mxu0 0.0
    %2691 = vmatpush2.msra.mxu0 0.0
    %2692 = vmatprep.mubr.f32.mxu0 0.0
    %2693 = vmatmul.mubr.f32.gmra.mxu0 %v2626
    %v2694 = vpop.f32.mrf.mxu0
    %v2695 = vadd.f32 0.0, %v2694
    %v2696 = vpop.f32.mrf.mxu0
    %2697 = vdwg.mxu0
    %v2698 = vadd.f32 %v2614, %v2695
    %v2699 = vld [vmem:[#allocation2 + $0x1c] sm:$0x3]
    %s2700 = scalar_lea.vmem %s3, 896
    %v2701 = vld [vmem:[%s2700] sm:$0xff]
    %v2702 = vld [vmem:[%s2700 + $0x8] sm:$0xff]
    %v2703 = vld [vmem:[%s2700 + $0x10] sm:$0xff]
    %v2704 = vld [vmem:[%s2700 + $0x18] sm:$0xff]
    %v2705 = vld [vmem:[%s2700 + $0x20] sm:$0xff]
    %v2706 = vld [vmem:[%s2700 + $0x28] sm:$0xff]
    %v2707 = vld [vmem:[%s2700 + $0x30] sm:$0xff]
    %v2708 = vld [vmem:[%s2700 + $0x38] sm:$0xff]
    %v2710 = vsel %vm1511, %v2699, 0
    %2712 = vmatprep.subr.mxu0 0.0
    %2713 = vmatpush1.msra.mxu0 0.0
    %2714 = vmatprep.subr.mxu0 0.0
    %2715 = vmatpush1.msra.mxu0 0.0
    %2716 = vmatprep.subr.mxu0 0.0
    %2717 = vmatpush1.msra.mxu0 0.0
    %2718 = vmatprep.subr.mxu0 0.0
    %2719 = vmatpush1.msra.mxu0 0.0
    %2720 = vmatprep.subr.mxu0 0.0
    %2721 = vmatpush1.msra.mxu0 0.0
    %2722 = vmatprep.subr.mxu0 0.0
    %2723 = vmatpush1.msra.mxu0 0.0
    %2724 = vmatprep.subr.mxu0 0.0
    %2725 = vmatpush1.msra.mxu0 0.0
    %2726 = vmatprep.subr.mxu0 0.0
    %2727 = vmatpush1.msra.mxu0 0.0
    %2728 = vmatprep.subr.mxu0 0.0
    %2729 = vmatpush1.msra.mxu0 %v2708
    %2730 = vmatprep.subr.mxu0 0.0
    %2731 = vmatpush1.msra.mxu0 %v2707
    %2732 = vmatprep.subr.mxu0 0.0
    %2733 = vmatpush1.msra.mxu0 %v2706
    %2734 = vmatprep.subr.mxu0 0.0
    %2735 = vmatpush1.msra.mxu0 %v2705
    %2736 = vmatprep.subr.mxu0 0.0
    %2737 = vmatpush1.msra.mxu0 %v2704
    %2738 = vmatprep.subr.mxu0 0.0
    %2739 = vmatpush1.msra.mxu0 %v2703
    %2740 = vmatprep.subr.mxu0 0.0
    %2741 = vmatpush1.msra.mxu0 %v2702
    %2742 = vmatprep.subr.mxu0 0.0
    %2743 = vmatpush1.msra.mxu0 %v2701
    %2744 = vmatprep.subr.mxu0 0.0
    %2745 = vmatpush2.msra.mxu0 0.0
    %2746 = vmatprep.subr.mxu0 0.0
    %2747 = vmatpush2.msra.mxu0 0.0
    %2748 = vmatprep.subr.mxu0 0.0
    %2749 = vmatpush2.msra.mxu0 0.0
    %2750 = vmatprep.subr.mxu0 0.0
    %2751 = vmatpush2.msra.mxu0 0.0
    %2752 = vmatprep.subr.mxu0 0.0
    %2753 = vmatpush2.msra.mxu0 0.0
    %2754 = vmatprep.subr.mxu0 0.0
    %2755 = vmatpush2.msra.mxu0 0.0
    %2756 = vmatprep.subr.mxu0 0.0
    %2757 = vmatpush2.msra.mxu0 0.0
    %2758 = vmatprep.subr.mxu0 0.0
    %2759 = vmatpush2.msra.mxu0 0.0
    %2760 = vmatprep.subr.mxu0 0.0
    %2761 = vmatpush2.msra.mxu0 0.0
    %2762 = vmatprep.subr.mxu0 0.0
    %2763 = vmatpush2.msra.mxu0 0.0
    %2764 = vmatprep.subr.mxu0 0.0
    %2765 = vmatpush2.msra.mxu0 0.0
    %2766 = vmatprep.subr.mxu0 0.0
    %2767 = vmatpush2.msra.mxu0 0.0
    %2768 = vmatprep.subr.mxu0 0.0
    %2769 = vmatpush2.msra.mxu0 0.0
    %2770 = vmatprep.subr.mxu0 0.0
    %2771 = vmatpush2.msra.mxu0 0.0
    %2772 = vmatprep.subr.mxu0 0.0
    %2773 = vmatpush2.msra.mxu0 0.0
    %2774 = vmatprep.subr.mxu0 0.0
    %2775 = vmatpush2.msra.mxu0 0.0
    %2776 = vmatprep.mubr.f32.mxu0 0.0
    %2777 = vmatmul.mubr.f32.gmra.mxu0 %v2710
    %v2778 = vpop.f32.mrf.mxu0
    %v2779 = vadd.f32 0.0, %v2778
    %v2780 = vpop.f32.mrf.mxu0
    %2781 = vdwg.mxu0
    %v2782 = vadd.f32 %v2698, %v2779
    %v2783 = vld [vmem:[#allocation2 + $0x1e] sm:$0x3]
    %s2784 = scalar_lea.vmem %s3, 960
    %v2785 = vld [vmem:[%s2784] sm:$0xff]
    %v2786 = vld [vmem:[%s2784 + $0x8] sm:$0xff]
    %v2787 = vld [vmem:[%s2784 + $0x10] sm:$0xff]
    %v2788 = vld [vmem:[%s2784 + $0x18] sm:$0xff]
    %v2789 = vld [vmem:[%s2784 + $0x20] sm:$0xff]
    %v2790 = vld [vmem:[%s2784 + $0x28] sm:$0xff]
    %v2791 = vld [vmem:[%s2784 + $0x30] sm:$0xff]
    %v2792 = vld [vmem:[%s2784 + $0x38] sm:$0xff]
    %v2794 = vsel %vm1511, %v2783, 0
    %2796 = vmatprep.subr.mxu0 0.0
    %2797 = vmatpush1.msra.mxu0 0.0
    %2798 = vmatprep.subr.mxu0 0.0
    %2799 = vmatpush1.msra.mxu0 0.0
    %2800 = vmatprep.subr.mxu0 0.0
    %2801 = vmatpush1.msra.mxu0 0.0
    %2802 = vmatprep.subr.mxu0 0.0
    %2803 = vmatpush1.msra.mxu0 0.0
    %2804 = vmatprep.subr.mxu0 0.0
    %2805 = vmatpush1.msra.mxu0 0.0
    %2806 = vmatprep.subr.mxu0 0.0
    %2807 = vmatpush1.msra.mxu0 0.0
    %2808 = vmatprep.subr.mxu0 0.0
    %2809 = vmatpush1.msra.mxu0 0.0
    %2810 = vmatprep.subr.mxu0 0.0
    %2811 = vmatpush1.msra.mxu0 0.0
    %2812 = vmatprep.subr.mxu0 0.0
    %2813 = vmatpush1.msra.mxu0 %v2792
    %2814 = vmatprep.subr.mxu0 0.0
    %2815 = vmatpush1.msra.mxu0 %v2791
    %2816 = vmatprep.subr.mxu0 0.0
    %2817 = vmatpush1.msra.mxu0 %v2790
    %2818 = vmatprep.subr.mxu0 0.0
    %2819 = vmatpush1.msra.mxu0 %v2789
    %2820 = vmatprep.subr.mxu0 0.0
    %2821 = vmatpush1.msra.mxu0 %v2788
    %2822 = vmatprep.subr.mxu0 0.0
    %2823 = vmatpush1.msra.mxu0 %v2787
    %2824 = vmatprep.subr.mxu0 0.0
    %2825 = vmatpush1.msra.mxu0 %v2786
    %2826 = vmatprep.subr.mxu0 0.0
    %2827 = vmatpush1.msra.mxu0 %v2785
    %2828 = vmatprep.subr.mxu0 0.0
    %2829 = vmatpush2.msra.mxu0 0.0
    %2830 = vmatprep.subr.mxu0 0.0
    %2831 = vmatpush2.msra.mxu0 0.0
    %2832 = vmatprep.subr.mxu0 0.0
    %2833 = vmatpush2.msra.mxu0 0.0
    %2834 = vmatprep.subr.mxu0 0.0
    %2835 = vmatpush2.msra.mxu0 0.0
    %2836 = vmatprep.subr.mxu0 0.0
    %2837 = vmatpush2.msra.mxu0 0.0
    %2838 = vmatprep.subr.mxu0 0.0
    %2839 = vmatpush2.msra.mxu0 0.0
    %2840 = vmatprep.subr.mxu0 0.0
    %2841 = vmatpush2.msra.mxu0 0.0
    %2842 = vmatprep.subr.mxu0 0.0
    %2843 = vmatpush2.msra.mxu0 0.0
    %2844 = vmatprep.subr.mxu0 0.0
    %2845 = vmatpush2.msra.mxu0 0.0
    %2846 = vmatprep.subr.mxu0 0.0
    %2847 = vmatpush2.msra.mxu0 0.0
    %2848 = vmatprep.subr.mxu0 0.0
    %2849 = vmatpush2.msra.mxu0 0.0
    %2850 = vmatprep.subr.mxu0 0.0
    %2851 = vmatpush2.msra.mxu0 0.0
    %2852 = vmatprep.subr.mxu0 0.0
    %2853 = vmatpush2.msra.mxu0 0.0
    %2854 = vmatprep.subr.mxu0 0.0
    %2855 = vmatpush2.msra.mxu0 0.0
    %2856 = vmatprep.subr.mxu0 0.0
    %2857 = vmatpush2.msra.mxu0 0.0
    %2858 = vmatprep.subr.mxu0 0.0
    %2859 = vmatpush2.msra.mxu0 0.0
    %2860 = vmatprep.mubr.f32.mxu0 0.0
    %2861 = vmatmul.mubr.f32.gmra.mxu0 %v2794
    %v2862 = vpop.f32.mrf.mxu0
    %v2863 = vadd.f32 0.0, %v2862
    %v2864 = vpop.f32.mrf.mxu0
    %2865 = vdwg.mxu0
    %v2866 = vadd.f32 %v2782, %v2863
    %v2867 = vld [vmem:[#allocation2 + $0x20] sm:$0x3]
    %s2868 = scalar_lea.vmem %s3, 1024
    %v2869 = vld [vmem:[%s2868] sm:$0xff]
    %v2870 = vld [vmem:[%s2868 + $0x8] sm:$0xff]
    %v2871 = vld [vmem:[%s2868 + $0x10] sm:$0xff]
    %v2872 = vld [vmem:[%s2868 + $0x18] sm:$0xff]
    %v2873 = vld [vmem:[%s2868 + $0x20] sm:$0xff]
    %v2874 = vld [vmem:[%s2868 + $0x28] sm:$0xff]
    %v2875 = vld [vmem:[%s2868 + $0x30] sm:$0xff]
    %v2876 = vld [vmem:[%s2868 + $0x38] sm:$0xff]
    %v2878 = vsel %vm1511, %v2867, 0
    %2880 = vmatprep.subr.mxu0 0.0
    %2881 = vmatpush1.msra.mxu0 0.0
    %2882 = vmatprep.subr.mxu0 0.0
    %2883 = vmatpush1.msra.mxu0 0.0
    %2884 = vmatprep.subr.mxu0 0.0
    %2885 = vmatpush1.msra.mxu0 0.0
    %2886 = vmatprep.subr.mxu0 0.0
    %2887 = vmatpush1.msra.mxu0 0.0
    %2888 = vmatprep.subr.mxu0 0.0
    %2889 = vmatpush1.msra.mxu0 0.0
    %2890 = vmatprep.subr.mxu0 0.0
    %2891 = vmatpush1.msra.mxu0 0.0
    %2892 = vmatprep.subr.mxu0 0.0
    %2893 = vmatpush1.msra.mxu0 0.0
    %2894 = vmatprep.subr.mxu0 0.0
    %2895 = vmatpush1.msra.mxu0 0.0
    %2896 = vmatprep.subr.mxu0 0.0
    %2897 = vmatpush1.msra.mxu0 %v2876
    %2898 = vmatprep.subr.mxu0 0.0
    %2899 = vmatpush1.msra.mxu0 %v2875
    %2900 = vmatprep.subr.mxu0 0.0
    %2901 = vmatpush1.msra.mxu0 %v2874
    %2902 = vmatprep.subr.mxu0 0.0
    %2903 = vmatpush1.msra.mxu0 %v2873
    %2904 = vmatprep.subr.mxu0 0.0
    %2905 = vmatpush1.msra.mxu0 %v2872
    %2906 = vmatprep.subr.mxu0 0.0
    %2907 = vmatpush1.msra.mxu0 %v2871
    %2908 = vmatprep.subr.mxu0 0.0
    %2909 = vmatpush1.msra.mxu0 %v2870
    %2910 = vmatprep.subr.mxu0 0.0
    %2911 = vmatpush1.msra.mxu0 %v2869
    %2912 = vmatprep.subr.mxu0 0.0
    %2913 = vmatpush2.msra.mxu0 0.0
    %2914 = vmatprep.subr.mxu0 0.0
    %2915 = vmatpush2.msra.mxu0 0.0
    %2916 = vmatprep.subr.mxu0 0.0
    %2917 = vmatpush2.msra.mxu0 0.0
    %2918 = vmatprep.subr.mxu0 0.0
    %2919 = vmatpush2.msra.mxu0 0.0
    %2920 = vmatprep.subr.mxu0 0.0
    %2921 = vmatpush2.msra.mxu0 0.0
    %2922 = vmatprep.subr.mxu0 0.0
    %2923 = vmatpush2.msra.mxu0 0.0
    %2924 = vmatprep.subr.mxu0 0.0
    %2925 = vmatpush2.msra.mxu0 0.0
    %2926 = vmatprep.subr.mxu0 0.0
    %2927 = vmatpush2.msra.mxu0 0.0
    %2928 = vmatprep.subr.mxu0 0.0
    %2929 = vmatpush2.msra.mxu0 0.0
    %2930 = vmatprep.subr.mxu0 0.0
    %2931 = vmatpush2.msra.mxu0 0.0
    %2932 = vmatprep.subr.mxu0 0.0
    %2933 = vmatpush2.msra.mxu0 0.0
    %2934 = vmatprep.subr.mxu0 0.0
    %2935 = vmatpush2.msra.mxu0 0.0
    %2936 = vmatprep.subr.mxu0 0.0
    %2937 = vmatpush2.msra.mxu0 0.0
    %2938 = vmatprep.subr.mxu0 0.0
    %2939 = vmatpush2.msra.mxu0 0.0
    %2940 = vmatprep.subr.mxu0 0.0
    %2941 = vmatpush2.msra.mxu0 0.0
    %2942 = vmatprep.subr.mxu0 0.0
    %2943 = vmatpush2.msra.mxu0 0.0
    %2944 = vmatprep.mubr.f32.mxu0 0.0
    %2945 = vmatmul.mubr.f32.gmra.mxu0 %v2878
    %v2946 = vpop.f32.mrf.mxu0
    %v2947 = vadd.f32 0.0, %v2946
    %v2948 = vpop.f32.mrf.mxu0
    %2949 = vdwg.mxu0
    %v2950 = vadd.f32 %v2866, %v2947
    %v2951 = vld [vmem:[#allocation2 + $0x22] sm:$0x3]
    %s2952 = scalar_lea.vmem %s3, 1088
    %v2953 = vld [vmem:[%s2952] sm:$0xff]
    %v2954 = vld [vmem:[%s2952 + $0x8] sm:$0xff]
    %v2955 = vld [vmem:[%s2952 + $0x10] sm:$0xff]
    %v2956 = vld [vmem:[%s2952 + $0x18] sm:$0xff]
    %v2957 = vld [vmem:[%s2952 + $0x20] sm:$0xff]
    %v2958 = vld [vmem:[%s2952 + $0x28] sm:$0xff]
    %v2959 = vld [vmem:[%s2952 + $0x30] sm:$0xff]
    %v2960 = vld [vmem:[%s2952 + $0x38] sm:$0xff]
    %v2962 = vsel %vm1511, %v2951, 0
    %2964 = vmatprep.subr.mxu0 0.0
    %2965 = vmatpush1.msra.mxu0 0.0
    %2966 = vmatprep.subr.mxu0 0.0
    %2967 = vmatpush1.msra.mxu0 0.0
    %2968 = vmatprep.subr.mxu0 0.0
    %2969 = vmatpush1.msra.mxu0 0.0
    %2970 = vmatprep.subr.mxu0 0.0
    %2971 = vmatpush1.msra.mxu0 0.0
    %2972 = vmatprep.subr.mxu0 0.0
    %2973 = vmatpush1.msra.mxu0 0.0
    %2974 = vmatprep.subr.mxu0 0.0
    %2975 = vmatpush1.msra.mxu0 0.0
    %2976 = vmatprep.subr.mxu0 0.0
    %2977 = vmatpush1.msra.mxu0 0.0
    %2978 = vmatprep.subr.mxu0 0.0
    %2979 = vmatpush1.msra.mxu0 0.0
    %2980 = vmatprep.subr.mxu0 0.0
    %2981 = vmatpush1.msra.mxu0 %v2960
    %2982 = vmatprep.subr.mxu0 0.0
    %2983 = vmatpush1.msra.mxu0 %v2959
    %2984 = vmatprep.subr.mxu0 0.0
    %2985 = vmatpush1.msra.mxu0 %v2958
    %2986 = vmatprep.subr.mxu0 0.0
    %2987 = vmatpush1.msra.mxu0 %v2957
    %2988 = vmatprep.subr.mxu0 0.0
    %2989 = vmatpush1.msra.mxu0 %v2956
    %2990 = vmatprep.subr.mxu0 0.0
    %2991 = vmatpush1.msra.mxu0 %v2955
    %2992 = vmatprep.subr.mxu0 0.0
    %2993 = vmatpush1.msra.mxu0 %v2954
    %2994 = vmatprep.subr.mxu0 0.0
    %2995 = vmatpush1.msra.mxu0 %v2953
    %2996 = vmatprep.subr.mxu0 0.0
    %2997 = vmatpush2.msra.mxu0 0.0
    %2998 = vmatprep.subr.mxu0 0.0
    %2999 = vmatpush2.msra.mxu0 0.0
    %3000 = vmatprep.subr.mxu0 0.0
    %3001 = vmatpush2.msra.mxu0 0.0
    %3002 = vmatprep.subr.mxu0 0.0
    %3003 = vmatpush2.msra.mxu0 0.0
    %3004 = vmatprep.subr.mxu0 0.0
    %3005 = vmatpush2.msra.mxu0 0.0
    %3006 = vmatprep.subr.mxu0 0.0
    %3007 = vmatpush2.msra.mxu0 0.0
    %3008 = vmatprep.subr.mxu0 0.0
    %3009 = vmatpush2.msra.mxu0 0.0
    %3010 = vmatprep.subr.mxu0 0.0
    %3011 = vmatpush2.msra.mxu0 0.0
    %3012 = vmatprep.subr.mxu0 0.0
    %3013 = vmatpush2.msra.mxu0 0.0
    %3014 = vmatprep.subr.mxu0 0.0
    %3015 = vmatpush2.msra.mxu0 0.0
    %3016 = vmatprep.subr.mxu0 0.0
    %3017 = vmatpush2.msra.mxu0 0.0
    %3018 = vmatprep.subr.mxu0 0.0
    %3019 = vmatpush2.msra.mxu0 0.0
    %3020 = vmatprep.subr.mxu0 0.0
    %3021 = vmatpush2.msra.mxu0 0.0
    %3022 = vmatprep.subr.mxu0 0.0
    %3023 = vmatpush2.msra.mxu0 0.0
    %3024 = vmatprep.subr.mxu0 0.0
    %3025 = vmatpush2.msra.mxu0 0.0
    %3026 = vmatprep.subr.mxu0 0.0
    %3027 = vmatpush2.msra.mxu0 0.0
    %3028 = vmatprep.mubr.f32.mxu0 0.0
    %3029 = vmatmul.mubr.f32.gmra.mxu0 %v2962
    %v3030 = vpop.f32.mrf.mxu0
    %v3031 = vadd.f32 0.0, %v3030
    %v3032 = vpop.f32.mrf.mxu0
    %3033 = vdwg.mxu0
    %v3034 = vadd.f32 %v2950, %v3031
    %v3035 = vld [vmem:[#allocation2 + $0x24] sm:$0x3]
    %s3036 = scalar_lea.vmem %s3, 1152
    %v3037 = vld [vmem:[%s3036] sm:$0xff]
    %v3038 = vld [vmem:[%s3036 + $0x8] sm:$0xff]
    %v3039 = vld [vmem:[%s3036 + $0x10] sm:$0xff]
    %v3040 = vld [vmem:[%s3036 + $0x18] sm:$0xff]
    %v3041 = vld [vmem:[%s3036 + $0x20] sm:$0xff]
    %v3042 = vld [vmem:[%s3036 + $0x28] sm:$0xff]
    %v3043 = vld [vmem:[%s3036 + $0x30] sm:$0xff]
    %v3044 = vld [vmem:[%s3036 + $0x38] sm:$0xff]
    %v3046 = vsel %vm1511, %v3035, 0
    %3048 = vmatprep.subr.mxu0 0.0
    %3049 = vmatpush1.msra.mxu0 0.0
    %3050 = vmatprep.subr.mxu0 0.0
    %3051 = vmatpush1.msra.mxu0 0.0
    %3052 = vmatprep.subr.mxu0 0.0
    %3053 = vmatpush1.msra.mxu0 0.0
    %3054 = vmatprep.subr.mxu0 0.0
    %3055 = vmatpush1.msra.mxu0 0.0
    %3056 = vmatprep.subr.mxu0 0.0
    %3057 = vmatpush1.msra.mxu0 0.0
    %3058 = vmatprep.subr.mxu0 0.0
    %3059 = vmatpush1.msra.mxu0 0.0
    %3060 = vmatprep.subr.mxu0 0.0
    %3061 = vmatpush1.msra.mxu0 0.0
    %3062 = vmatprep.subr.mxu0 0.0
    %3063 = vmatpush1.msra.mxu0 0.0
    %3064 = vmatprep.subr.mxu0 0.0
    %3065 = vmatpush1.msra.mxu0 %v3044
    %3066 = vmatprep.subr.mxu0 0.0
    %3067 = vmatpush1.msra.mxu0 %v3043
    %3068 = vmatprep.subr.mxu0 0.0
    %3069 = vmatpush1.msra.mxu0 %v3042
    %3070 = vmatprep.subr.mxu0 0.0
    %3071 = vmatpush1.msra.mxu0 %v3041
    %3072 = vmatprep.subr.mxu0 0.0
    %3073 = vmatpush1.msra.mxu0 %v3040
    %3074 = vmatprep.subr.mxu0 0.0
    %3075 = vmatpush1.msra.mxu0 %v3039
    %3076 = vmatprep.subr.mxu0 0.0
    %3077 = vmatpush1.msra.mxu0 %v3038
    %3078 = vmatprep.subr.mxu0 0.0
    %3079 = vmatpush1.msra.mxu0 %v3037
    %3080 = vmatprep.subr.mxu0 0.0
    %3081 = vmatpush2.msra.mxu0 0.0
    %3082 = vmatprep.subr.mxu0 0.0
    %3083 = vmatpush2.msra.mxu0 0.0
    %3084 = vmatprep.subr.mxu0 0.0
    %3085 = vmatpush2.msra.mxu0 0.0
    %3086 = vmatprep.subr.mxu0 0.0
    %3087 = vmatpush2.msra.mxu0 0.0
    %3088 = vmatprep.subr.mxu0 0.0
    %3089 = vmatpush2.msra.mxu0 0.0
    %3090 = vmatprep.subr.mxu0 0.0
    %3091 = vmatpush2.msra.mxu0 0.0
    %3092 = vmatprep.subr.mxu0 0.0
    %3093 = vmatpush2.msra.mxu0 0.0
    %3094 = vmatprep.subr.mxu0 0.0
    %3095 = vmatpush2.msra.mxu0 0.0
    %3096 = vmatprep.subr.mxu0 0.0
    %3097 = vmatpush2.msra.mxu0 0.0
    %3098 = vmatprep.subr.mxu0 0.0
    %3099 = vmatpush2.msra.mxu0 0.0
    %3100 = vmatprep.subr.mxu0 0.0
    %3101 = vmatpush2.msra.mxu0 0.0
    %3102 = vmatprep.subr.mxu0 0.0
    %3103 = vmatpush2.msra.mxu0 0.0
    %3104 = vmatprep.subr.mxu0 0.0
    %3105 = vmatpush2.msra.mxu0 0.0
    %3106 = vmatprep.subr.mxu0 0.0
    %3107 = vmatpush2.msra.mxu0 0.0
    %3108 = vmatprep.subr.mxu0 0.0
    %3109 = vmatpush2.msra.mxu0 0.0
    %3110 = vmatprep.subr.mxu0 0.0
    %3111 = vmatpush2.msra.mxu0 0.0
    %3112 = vmatprep.mubr.f32.mxu0 0.0
    %3113 = vmatmul.mubr.f32.gmra.mxu0 %v3046
    %v3114 = vpop.f32.mrf.mxu0
    %v3115 = vadd.f32 0.0, %v3114
    %v3116 = vpop.f32.mrf.mxu0
    %3117 = vdwg.mxu0
    %v3118 = vadd.f32 %v3034, %v3115
    %v3119 = vld [vmem:[#allocation2 + $0x26] sm:$0x3]
    %s3120 = scalar_lea.vmem %s3, 1216
    %v3121 = vld [vmem:[%s3120] sm:$0xff]
    %v3122 = vld [vmem:[%s3120 + $0x8] sm:$0xff]
    %v3123 = vld [vmem:[%s3120 + $0x10] sm:$0xff]
    %v3124 = vld [vmem:[%s3120 + $0x18] sm:$0xff]
    %v3125 = vld [vmem:[%s3120 + $0x20] sm:$0xff]
    %v3126 = vld [vmem:[%s3120 + $0x28] sm:$0xff]
    %v3127 = vld [vmem:[%s3120 + $0x30] sm:$0xff]
    %v3128 = vld [vmem:[%s3120 + $0x38] sm:$0xff]
    %v3130 = vsel %vm1511, %v3119, 0
    %3132 = vmatprep.subr.mxu0 0.0
    %3133 = vmatpush1.msra.mxu0 0.0
    %3134 = vmatprep.subr.mxu0 0.0
    %3135 = vmatpush1.msra.mxu0 0.0
    %3136 = vmatprep.subr.mxu0 0.0
    %3137 = vmatpush1.msra.mxu0 0.0
    %3138 = vmatprep.subr.mxu0 0.0
    %3139 = vmatpush1.msra.mxu0 0.0
    %3140 = vmatprep.subr.mxu0 0.0
    %3141 = vmatpush1.msra.mxu0 0.0
    %3142 = vmatprep.subr.mxu0 0.0
    %3143 = vmatpush1.msra.mxu0 0.0
    %3144 = vmatprep.subr.mxu0 0.0
    %3145 = vmatpush1.msra.mxu0 0.0
    %3146 = vmatprep.subr.mxu0 0.0
    %3147 = vmatpush1.msra.mxu0 0.0
    %3148 = vmatprep.subr.mxu0 0.0
    %3149 = vmatpush1.msra.mxu0 %v3128
    %3150 = vmatprep.subr.mxu0 0.0
    %3151 = vmatpush1.msra.mxu0 %v3127
    %3152 = vmatprep.subr.mxu0 0.0
    %3153 = vmatpush1.msra.mxu0 %v3126
    %3154 = vmatprep.subr.mxu0 0.0
    %3155 = vmatpush1.msra.mxu0 %v3125
    %3156 = vmatprep.subr.mxu0 0.0
    %3157 = vmatpush1.msra.mxu0 %v3124
    %3158 = vmatprep.subr.mxu0 0.0
    %3159 = vmatpush1.msra.mxu0 %v3123
    %3160 = vmatprep.subr.mxu0 0.0
    %3161 = vmatpush1.msra.mxu0 %v3122
    %3162 = vmatprep.subr.mxu0 0.0
    %3163 = vmatpush1.msra.mxu0 %v3121
    %3164 = vmatprep.subr.mxu0 0.0
    %3165 = vmatpush2.msra.mxu0 0.0
    %3166 = vmatprep.subr.mxu0 0.0
    %3167 = vmatpush2.msra.mxu0 0.0
    %3168 = vmatprep.subr.mxu0 0.0
    %3169 = vmatpush2.msra.mxu0 0.0
    %3170 = vmatprep.subr.mxu0 0.0
    %3171 = vmatpush2.msra.mxu0 0.0
    %3172 = vmatprep.subr.mxu0 0.0
    %3173 = vmatpush2.msra.mxu0 0.0
    %3174 = vmatprep.subr.mxu0 0.0
    %3175 = vmatpush2.msra.mxu0 0.0
    %3176 = vmatprep.subr.mxu0 0.0
    %3177 = vmatpush2.msra.mxu0 0.0
    %3178 = vmatprep.subr.mxu0 0.0
    %3179 = vmatpush2.msra.mxu0 0.0
    %3180 = vmatprep.subr.mxu0 0.0
    %3181 = vmatpush2.msra.mxu0 0.0
    %3182 = vmatprep.subr.mxu0 0.0
    %3183 = vmatpush2.msra.mxu0 0.0
    %3184 = vmatprep.subr.mxu0 0.0
    %3185 = vmatpush2.msra.mxu0 0.0
    %3186 = vmatprep.subr.mxu0 0.0
    %3187 = vmatpush2.msra.mxu0 0.0
    %3188 = vmatprep.subr.mxu0 0.0
    %3189 = vmatpush2.msra.mxu0 0.0
    %3190 = vmatprep.subr.mxu0 0.0
    %3191 = vmatpush2.msra.mxu0 0.0
    %3192 = vmatprep.subr.mxu0 0.0
    %3193 = vmatpush2.msra.mxu0 0.0
    %3194 = vmatprep.subr.mxu0 0.0
    %3195 = vmatpush2.msra.mxu0 0.0
    %3196 = vmatprep.mubr.f32.mxu0 0.0
    %3197 = vmatmul.mubr.f32.gmra.mxu0 %v3130
    %v3198 = vpop.f32.mrf.mxu0
    %v3199 = vadd.f32 0.0, %v3198
    %v3200 = vpop.f32.mrf.mxu0
    %3201 = vdwg.mxu0
    %v3202 = vadd.f32 %v3118, %v3199
    %v3203 = vld [vmem:[#allocation2 + $0x28] sm:$0x3]
    %s3204 = scalar_lea.vmem %s3, 1280
    %v3205 = vld [vmem:[%s3204] sm:$0xff]
    %v3206 = vld [vmem:[%s3204 + $0x8] sm:$0xff]
    %v3207 = vld [vmem:[%s3204 + $0x10] sm:$0xff]
    %v3208 = vld [vmem:[%s3204 + $0x18] sm:$0xff]
    %v3209 = vld [vmem:[%s3204 + $0x20] sm:$0xff]
    %v3210 = vld [vmem:[%s3204 + $0x28] sm:$0xff]
    %v3211 = vld [vmem:[%s3204 + $0x30] sm:$0xff]
    %v3212 = vld [vmem:[%s3204 + $0x38] sm:$0xff]
    %v3214 = vsel %vm1511, %v3203, 0
    %3216 = vmatprep.subr.mxu0 0.0
    %3217 = vmatpush1.msra.mxu0 0.0
    %3218 = vmatprep.subr.mxu0 0.0
    %3219 = vmatpush1.msra.mxu0 0.0
    %3220 = vmatprep.subr.mxu0 0.0
    %3221 = vmatpush1.msra.mxu0 0.0
    %3222 = vmatprep.subr.mxu0 0.0
    %3223 = vmatpush1.msra.mxu0 0.0
    %3224 = vmatprep.subr.mxu0 0.0
    %3225 = vmatpush1.msra.mxu0 0.0
    %3226 = vmatprep.subr.mxu0 0.0
    %3227 = vmatpush1.msra.mxu0 0.0
    %3228 = vmatprep.subr.mxu0 0.0
    %3229 = vmatpush1.msra.mxu0 0.0
    %3230 = vmatprep.subr.mxu0 0.0
    %3231 = vmatpush1.msra.mxu0 0.0
    %3232 = vmatprep.subr.mxu0 0.0
    %3233 = vmatpush1.msra.mxu0 %v3212
    %3234 = vmatprep.subr.mxu0 0.0
    %3235 = vmatpush1.msra.mxu0 %v3211
    %3236 = vmatprep.subr.mxu0 0.0
    %3237 = vmatpush1.msra.mxu0 %v3210
    %3238 = vmatprep.subr.mxu0 0.0
    %3239 = vmatpush1.msra.mxu0 %v3209
    %3240 = vmatprep.subr.mxu0 0.0
    %3241 = vmatpush1.msra.mxu0 %v3208
    %3242 = vmatprep.subr.mxu0 0.0
    %3243 = vmatpush1.msra.mxu0 %v3207
    %3244 = vmatprep.subr.mxu0 0.0
    %3245 = vmatpush1.msra.mxu0 %v3206
    %3246 = vmatprep.subr.mxu0 0.0
    %3247 = vmatpush1.msra.mxu0 %v3205
    %3248 = vmatprep.subr.mxu0 0.0
    %3249 = vmatpush2.msra.mxu0 0.0
    %3250 = vmatprep.subr.mxu0 0.0
    %3251 = vmatpush2.msra.mxu0 0.0
    %3252 = vmatprep.subr.mxu0 0.0
    %3253 = vmatpush2.msra.mxu0 0.0
    %3254 = vmatprep.subr.mxu0 0.0
    %3255 = vmatpush2.msra.mxu0 0.0
    %3256 = vmatprep.subr.mxu0 0.0
    %3257 = vmatpush2.msra.mxu0 0.0
    %3258 = vmatprep.subr.mxu0 0.0
    %3259 = vmatpush2.msra.mxu0 0.0
    %3260 = vmatprep.subr.mxu0 0.0
    %3261 = vmatpush2.msra.mxu0 0.0
    %3262 = vmatprep.subr.mxu0 0.0
    %3263 = vmatpush2.msra.mxu0 0.0
    %3264 = vmatprep.subr.mxu0 0.0
    %3265 = vmatpush2.msra.mxu0 0.0
    %3266 = vmatprep.subr.mxu0 0.0
    %3267 = vmatpush2.msra.mxu0 0.0
    %3268 = vmatprep.subr.mxu0 0.0
    %3269 = vmatpush2.msra.mxu0 0.0
    %3270 = vmatprep.subr.mxu0 0.0
    %3271 = vmatpush2.msra.mxu0 0.0
    %3272 = vmatprep.subr.mxu0 0.0
    %3273 = vmatpush2.msra.mxu0 0.0
    %3274 = vmatprep.subr.mxu0 0.0
    %3275 = vmatpush2.msra.mxu0 0.0
    %3276 = vmatprep.subr.mxu0 0.0
    %3277 = vmatpush2.msra.mxu0 0.0
    %3278 = vmatprep.subr.mxu0 0.0
    %3279 = vmatpush2.msra.mxu0 0.0
    %3280 = vmatprep.mubr.f32.mxu0 0.0
    %3281 = vmatmul.mubr.f32.gmra.mxu0 %v3214
    %v3282 = vpop.f32.mrf.mxu0
    %v3283 = vadd.f32 0.0, %v3282
    %v3284 = vpop.f32.mrf.mxu0
    %3285 = vdwg.mxu0
    %v3286 = vadd.f32 %v3202, %v3283
    %v3287 = vld [vmem:[#allocation2 + $0x2a] sm:$0x3]
    %s3288 = scalar_lea.vmem %s3, 1344
    %v3289 = vld [vmem:[%s3288] sm:$0xff]
    %v3290 = vld [vmem:[%s3288 + $0x8] sm:$0xff]
    %v3291 = vld [vmem:[%s3288 + $0x10] sm:$0xff]
    %v3292 = vld [vmem:[%s3288 + $0x18] sm:$0xff]
    %v3293 = vld [vmem:[%s3288 + $0x20] sm:$0xff]
    %v3294 = vld [vmem:[%s3288 + $0x28] sm:$0xff]
    %v3295 = vld [vmem:[%s3288 + $0x30] sm:$0xff]
    %v3296 = vld [vmem:[%s3288 + $0x38] sm:$0xff]
    %v3298 = vsel %vm1511, %v3287, 0
    %3300 = vmatprep.subr.mxu0 0.0
    %3301 = vmatpush1.msra.mxu0 0.0
    %3302 = vmatprep.subr.mxu0 0.0
    %3303 = vmatpush1.msra.mxu0 0.0
    %3304 = vmatprep.subr.mxu0 0.0
    %3305 = vmatpush1.msra.mxu0 0.0
    %3306 = vmatprep.subr.mxu0 0.0
    %3307 = vmatpush1.msra.mxu0 0.0
    %3308 = vmatprep.subr.mxu0 0.0
    %3309 = vmatpush1.msra.mxu0 0.0
    %3310 = vmatprep.subr.mxu0 0.0
    %3311 = vmatpush1.msra.mxu0 0.0
    %3312 = vmatprep.subr.mxu0 0.0
    %3313 = vmatpush1.msra.mxu0 0.0
    %3314 = vmatprep.subr.mxu0 0.0
    %3315 = vmatpush1.msra.mxu0 0.0
    %3316 = vmatprep.subr.mxu0 0.0
    %3317 = vmatpush1.msra.mxu0 %v3296
    %3318 = vmatprep.subr.mxu0 0.0
    %3319 = vmatpush1.msra.mxu0 %v3295
    %3320 = vmatprep.subr.mxu0 0.0
    %3321 = vmatpush1.msra.mxu0 %v3294
    %3322 = vmatprep.subr.mxu0 0.0
    %3323 = vmatpush1.msra.mxu0 %v3293
    %3324 = vmatprep.subr.mxu0 0.0
    %3325 = vmatpush1.msra.mxu0 %v3292
    %3326 = vmatprep.subr.mxu0 0.0
    %3327 = vmatpush1.msra.mxu0 %v3291
    %3328 = vmatprep.subr.mxu0 0.0
    %3329 = vmatpush1.msra.mxu0 %v3290
    %3330 = vmatprep.subr.mxu0 0.0
    %3331 = vmatpush1.msra.mxu0 %v3289
    %3332 = vmatprep.subr.mxu0 0.0
    %3333 = vmatpush2.msra.mxu0 0.0
    %3334 = vmatprep.subr.mxu0 0.0
    %3335 = vmatpush2.msra.mxu0 0.0
    %3336 = vmatprep.subr.mxu0 0.0
    %3337 = vmatpush2.msra.mxu0 0.0
    %3338 = vmatprep.subr.mxu0 0.0
    %3339 = vmatpush2.msra.mxu0 0.0
    %3340 = vmatprep.subr.mxu0 0.0
    %3341 = vmatpush2.msra.mxu0 0.0
    %3342 = vmatprep.subr.mxu0 0.0
    %3343 = vmatpush2.msra.mxu0 0.0
    %3344 = vmatprep.subr.mxu0 0.0
    %3345 = vmatpush2.msra.mxu0 0.0
    %3346 = vmatprep.subr.mxu0 0.0
    %3347 = vmatpush2.msra.mxu0 0.0
    %3348 = vmatprep.subr.mxu0 0.0
    %3349 = vmatpush2.msra.mxu0 0.0
    %3350 = vmatprep.subr.mxu0 0.0
    %3351 = vmatpush2.msra.mxu0 0.0
    %3352 = vmatprep.subr.mxu0 0.0
    %3353 = vmatpush2.msra.mxu0 0.0
    %3354 = vmatprep.subr.mxu0 0.0
    %3355 = vmatpush2.msra.mxu0 0.0
    %3356 = vmatprep.subr.mxu0 0.0
    %3357 = vmatpush2.msra.mxu0 0.0
    %3358 = vmatprep.subr.mxu0 0.0
    %3359 = vmatpush2.msra.mxu0 0.0
    %3360 = vmatprep.subr.mxu0 0.0
    %3361 = vmatpush2.msra.mxu0 0.0
    %3362 = vmatprep.subr.mxu0 0.0
    %3363 = vmatpush2.msra.mxu0 0.0
    %3364 = vmatprep.mubr.f32.mxu0 0.0
    %3365 = vmatmul.mubr.f32.gmra.mxu0 %v3298
    %v3366 = vpop.f32.mrf.mxu0
    %v3367 = vadd.f32 0.0, %v3366
    %v3368 = vpop.f32.mrf.mxu0
    %3369 = vdwg.mxu0
    %v3370 = vadd.f32 %v3286, %v3367
    %v3371 = vld [vmem:[#allocation2 + $0x2c] sm:$0x3]
    %s3372 = scalar_lea.vmem %s3, 1408
    %v3373 = vld [vmem:[%s3372] sm:$0xff]
    %v3374 = vld [vmem:[%s3372 + $0x8] sm:$0xff]
    %v3375 = vld [vmem:[%s3372 + $0x10] sm:$0xff]
    %v3376 = vld [vmem:[%s3372 + $0x18] sm:$0xff]
    %v3377 = vld [vmem:[%s3372 + $0x20] sm:$0xff]
    %v3378 = vld [vmem:[%s3372 + $0x28] sm:$0xff]
    %v3379 = vld [vmem:[%s3372 + $0x30] sm:$0xff]
    %v3380 = vld [vmem:[%s3372 + $0x38] sm:$0xff]
    %v3382 = vsel %vm1511, %v3371, 0
    %3384 = vmatprep.subr.mxu0 0.0
    %3385 = vmatpush1.msra.mxu0 0.0
    %3386 = vmatprep.subr.mxu0 0.0
    %3387 = vmatpush1.msra.mxu0 0.0
    %3388 = vmatprep.subr.mxu0 0.0
    %3389 = vmatpush1.msra.mxu0 0.0
    %3390 = vmatprep.subr.mxu0 0.0
    %3391 = vmatpush1.msra.mxu0 0.0
    %3392 = vmatprep.subr.mxu0 0.0
    %3393 = vmatpush1.msra.mxu0 0.0
    %3394 = vmatprep.subr.mxu0 0.0
    %3395 = vmatpush1.msra.mxu0 0.0
    %3396 = vmatprep.subr.mxu0 0.0
    %3397 = vmatpush1.msra.mxu0 0.0
    %3398 = vmatprep.subr.mxu0 0.0
    %3399 = vmatpush1.msra.mxu0 0.0
    %3400 = vmatprep.subr.mxu0 0.0
    %3401 = vmatpush1.msra.mxu0 %v3380
    %3402 = vmatprep.subr.mxu0 0.0
    %3403 = vmatpush1.msra.mxu0 %v3379
    %3404 = vmatprep.subr.mxu0 0.0
    %3405 = vmatpush1.msra.mxu0 %v3378
    %3406 = vmatprep.subr.mxu0 0.0
    %3407 = vmatpush1.msra.mxu0 %v3377
    %3408 = vmatprep.subr.mxu0 0.0
    %3409 = vmatpush1.msra.mxu0 %v3376
    %3410 = vmatprep.subr.mxu0 0.0
    %3411 = vmatpush1.msra.mxu0 %v3375
    %3412 = vmatprep.subr.mxu0 0.0
    %3413 = vmatpush1.msra.mxu0 %v3374
    %3414 = vmatprep.subr.mxu0 0.0
    %3415 = vmatpush1.msra.mxu0 %v3373
    %3416 = vmatprep.subr.mxu0 0.0
    %3417 = vmatpush2.msra.mxu0 0.0
    %3418 = vmatprep.subr.mxu0 0.0
    %3419 = vmatpush2.msra.mxu0 0.0
    %3420 = vmatprep.subr.mxu0 0.0
    %3421 = vmatpush2.msra.mxu0 0.0
    %3422 = vmatprep.subr.mxu0 0.0
    %3423 = vmatpush2.msra.mxu0 0.0
    %3424 = vmatprep.subr.mxu0 0.0
    %3425 = vmatpush2.msra.mxu0 0.0
    %3426 = vmatprep.subr.mxu0 0.0
    %3427 = vmatpush2.msra.mxu0 0.0
    %3428 = vmatprep.subr.mxu0 0.0
    %3429 = vmatpush2.msra.mxu0 0.0
    %3430 = vmatprep.subr.mxu0 0.0
    %3431 = vmatpush2.msra.mxu0 0.0
    %3432 = vmatprep.subr.mxu0 0.0
    %3433 = vmatpush2.msra.mxu0 0.0
    %3434 = vmatprep.subr.mxu0 0.0
    %3435 = vmatpush2.msra.mxu0 0.0
    %3436 = vmatprep.subr.mxu0 0.0
    %3437 = vmatpush2.msra.mxu0 0.0
    %3438 = vmatprep.subr.mxu0 0.0
    %3439 = vmatpush2.msra.mxu0 0.0
    %3440 = vmatprep.subr.mxu0 0.0
    %3441 = vmatpush2.msra.mxu0 0.0
    %3442 = vmatprep.subr.mxu0 0.0
    %3443 = vmatpush2.msra.mxu0 0.0
    %3444 = vmatprep.subr.mxu0 0.0
    %3445 = vmatpush2.msra.mxu0 0.0
    %3446 = vmatprep.subr.mxu0 0.0
    %3447 = vmatpush2.msra.mxu0 0.0
    %3448 = vmatprep.mubr.f32.mxu0 0.0
    %3449 = vmatmul.mubr.f32.gmra.mxu0 %v3382
    %v3450 = vpop.f32.mrf.mxu0
    %v3451 = vadd.f32 0.0, %v3450
    %v3452 = vpop.f32.mrf.mxu0
    %3453 = vdwg.mxu0
    %v3454 = vadd.f32 %v3370, %v3451
    %v3455 = vld [vmem:[#allocation2 + $0x2e] sm:$0x3]
    %s3456 = scalar_lea.vmem %s3, 1472
    %v3457 = vld [vmem:[%s3456] sm:$0xff]
    %v3458 = vld [vmem:[%s3456 + $0x8] sm:$0xff]
    %v3459 = vld [vmem:[%s3456 + $0x10] sm:$0xff]
    %v3460 = vld [vmem:[%s3456 + $0x18] sm:$0xff]
    %v3461 = vld [vmem:[%s3456 + $0x20] sm:$0xff]
    %v3462 = vld [vmem:[%s3456 + $0x28] sm:$0xff]
    %v3463 = vld [vmem:[%s3456 + $0x30] sm:$0xff]
    %v3464 = vld [vmem:[%s3456 + $0x38] sm:$0xff]
    %v3466 = vsel %vm1511, %v3455, 0
    %3468 = vmatprep.subr.mxu0 0.0
    %3469 = vmatpush1.msra.mxu0 0.0
    %3470 = vmatprep.subr.mxu0 0.0
    %3471 = vmatpush1.msra.mxu0 0.0
    %3472 = vmatprep.subr.mxu0 0.0
    %3473 = vmatpush1.msra.mxu0 0.0
    %3474 = vmatprep.subr.mxu0 0.0
    %3475 = vmatpush1.msra.mxu0 0.0
    %3476 = vmatprep.subr.mxu0 0.0
    %3477 = vmatpush1.msra.mxu0 0.0
    %3478 = vmatprep.subr.mxu0 0.0
    %3479 = vmatpush1.msra.mxu0 0.0
    %3480 = vmatprep.subr.mxu0 0.0
    %3481 = vmatpush1.msra.mxu0 0.0
    %3482 = vmatprep.subr.mxu0 0.0
    %3483 = vmatpush1.msra.mxu0 0.0
    %3484 = vmatprep.subr.mxu0 0.0
    %3485 = vmatpush1.msra.mxu0 %v3464
    %3486 = vmatprep.subr.mxu0 0.0
    %3487 = vmatpush1.msra.mxu0 %v3463
    %3488 = vmatprep.subr.mxu0 0.0
    %3489 = vmatpush1.msra.mxu0 %v3462
    %3490 = vmatprep.subr.mxu0 0.0
    %3491 = vmatpush1.msra.mxu0 %v3461
    %3492 = vmatprep.subr.mxu0 0.0
    %3493 = vmatpush1.msra.mxu0 %v3460
    %3494 = vmatprep.subr.mxu0 0.0
    %3495 = vmatpush1.msra.mxu0 %v3459
    %3496 = vmatprep.subr.mxu0 0.0
    %3497 = vmatpush1.msra.mxu0 %v3458
    %3498 = vmatprep.subr.mxu0 0.0
    %3499 = vmatpush1.msra.mxu0 %v3457
    %3500 = vmatprep.subr.mxu0 0.0
    %3501 = vmatpush2.msra.mxu0 0.0
    %3502 = vmatprep.subr.mxu0 0.0
    %3503 = vmatpush2.msra.mxu0 0.0
    %3504 = vmatprep.subr.mxu0 0.0
    %3505 = vmatpush2.msra.mxu0 0.0
    %3506 = vmatprep.subr.mxu0 0.0
    %3507 = vmatpush2.msra.mxu0 0.0
    %3508 = vmatprep.subr.mxu0 0.0
    %3509 = vmatpush2.msra.mxu0 0.0
    %3510 = vmatprep.subr.mxu0 0.0
    %3511 = vmatpush2.msra.mxu0 0.0
    %3512 = vmatprep.subr.mxu0 0.0
    %3513 = vmatpush2.msra.mxu0 0.0
    %3514 = vmatprep.subr.mxu0 0.0
    %3515 = vmatpush2.msra.mxu0 0.0
    %3516 = vmatprep.subr.mxu0 0.0
    %3517 = vmatpush2.msra.mxu0 0.0
    %3518 = vmatprep.subr.mxu0 0.0
    %3519 = vmatpush2.msra.mxu0 0.0
    %3520 = vmatprep.subr.mxu0 0.0
    %3521 = vmatpush2.msra.mxu0 0.0
    %3522 = vmatprep.subr.mxu0 0.0
    %3523 = vmatpush2.msra.mxu0 0.0
    %3524 = vmatprep.subr.mxu0 0.0
    %3525 = vmatpush2.msra.mxu0 0.0
    %3526 = vmatprep.subr.mxu0 0.0
    %3527 = vmatpush2.msra.mxu0 0.0
    %3528 = vmatprep.subr.mxu0 0.0
    %3529 = vmatpush2.msra.mxu0 0.0
    %3530 = vmatprep.subr.mxu0 0.0
    %3531 = vmatpush2.msra.mxu0 0.0
    %3532 = vmatprep.mubr.f32.mxu0 0.0
    %3533 = vmatmul.mubr.f32.gmra.mxu0 %v3466
    %v3534 = vpop.f32.mrf.mxu0
    %v3535 = vadd.f32 0.0, %v3534
    %v3536 = vpop.f32.mrf.mxu0
    %3537 = vdwg.mxu0
    %v3538 = vadd.f32 %v3454, %v3535
    %v3539 = vld [vmem:[#allocation2 + $0x30] sm:$0x3]
    %s3540 = scalar_lea.vmem %s3, 1536
    %v3541 = vld [vmem:[%s3540] sm:$0xff]
    %v3542 = vld [vmem:[%s3540 + $0x8] sm:$0xff]
    %v3543 = vld [vmem:[%s3540 + $0x10] sm:$0xff]
    %v3544 = vld [vmem:[%s3540 + $0x18] sm:$0xff]
    %v3545 = vld [vmem:[%s3540 + $0x20] sm:$0xff]
    %v3546 = vld [vmem:[%s3540 + $0x28] sm:$0xff]
    %v3547 = vld [vmem:[%s3540 + $0x30] sm:$0xff]
    %v3548 = vld [vmem:[%s3540 + $0x38] sm:$0xff]
    %v3550 = vsel %vm1511, %v3539, 0
    %3552 = vmatprep.subr.mxu0 0.0
    %3553 = vmatpush1.msra.mxu0 0.0
    %3554 = vmatprep.subr.mxu0 0.0
    %3555 = vmatpush1.msra.mxu0 0.0
    %3556 = vmatprep.subr.mxu0 0.0
    %3557 = vmatpush1.msra.mxu0 0.0
    %3558 = vmatprep.subr.mxu0 0.0
    %3559 = vmatpush1.msra.mxu0 0.0
    %3560 = vmatprep.subr.mxu0 0.0
    %3561 = vmatpush1.msra.mxu0 0.0
    %3562 = vmatprep.subr.mxu0 0.0
    %3563 = vmatpush1.msra.mxu0 0.0
    %3564 = vmatprep.subr.mxu0 0.0
    %3565 = vmatpush1.msra.mxu0 0.0
    %3566 = vmatprep.subr.mxu0 0.0
    %3567 = vmatpush1.msra.mxu0 0.0
    %3568 = vmatprep.subr.mxu0 0.0
    %3569 = vmatpush1.msra.mxu0 %v3548
    %3570 = vmatprep.subr.mxu0 0.0
    %3571 = vmatpush1.msra.mxu0 %v3547
    %3572 = vmatprep.subr.mxu0 0.0
    %3573 = vmatpush1.msra.mxu0 %v3546
    %3574 = vmatprep.subr.mxu0 0.0
    %3575 = vmatpush1.msra.mxu0 %v3545
    %3576 = vmatprep.subr.mxu0 0.0
    %3577 = vmatpush1.msra.mxu0 %v3544
    %3578 = vmatprep.subr.mxu0 0.0
    %3579 = vmatpush1.msra.mxu0 %v3543
    %3580 = vmatprep.subr.mxu0 0.0
    %3581 = vmatpush1.msra.mxu0 %v3542
    %3582 = vmatprep.subr.mxu0 0.0
    %3583 = vmatpush1.msra.mxu0 %v3541
    %3584 = vmatprep.subr.mxu0 0.0
    %3585 = vmatpush2.msra.mxu0 0.0
    %3586 = vmatprep.subr.mxu0 0.0
    %3587 = vmatpush2.msra.mxu0 0.0
    %3588 = vmatprep.subr.mxu0 0.0
    %3589 = vmatpush2.msra.mxu0 0.0
    %3590 = vmatprep.subr.mxu0 0.0
    %3591 = vmatpush2.msra.mxu0 0.0
    %3592 = vmatprep.subr.mxu0 0.0
    %3593 = vmatpush2.msra.mxu0 0.0
    %3594 = vmatprep.subr.mxu0 0.0
    %3595 = vmatpush2.msra.mxu0 0.0
    %3596 = vmatprep.subr.mxu0 0.0
    %3597 = vmatpush2.msra.mxu0 0.0
    %3598 = vmatprep.subr.mxu0 0.0
    %3599 = vmatpush2.msra.mxu0 0.0
    %3600 = vmatprep.subr.mxu0 0.0
    %3601 = vmatpush2.msra.mxu0 0.0
    %3602 = vmatprep.subr.mxu0 0.0
    %3603 = vmatpush2.msra.mxu0 0.0
    %3604 = vmatprep.subr.mxu0 0.0
    %3605 = vmatpush2.msra.mxu0 0.0
    %3606 = vmatprep.subr.mxu0 0.0
    %3607 = vmatpush2.msra.mxu0 0.0
    %3608 = vmatprep.subr.mxu0 0.0
    %3609 = vmatpush2.msra.mxu0 0.0
    %3610 = vmatprep.subr.mxu0 0.0
    %3611 = vmatpush2.msra.mxu0 0.0
    %3612 = vmatprep.subr.mxu0 0.0
    %3613 = vmatpush2.msra.mxu0 0.0
    %3614 = vmatprep.subr.mxu0 0.0
    %3615 = vmatpush2.msra.mxu0 0.0
    %3616 = vmatprep.mubr.f32.mxu0 0.0
    %3617 = vmatmul.mubr.f32.gmra.mxu0 %v3550
    %v3618 = vpop.f32.mrf.mxu0
    %v3619 = vadd.f32 0.0, %v3618
    %v3620 = vpop.f32.mrf.mxu0
    %3621 = vdwg.mxu0
    %v3622 = vadd.f32 %v3538, %v3619
    %v3623 = vld [vmem:[#allocation2 + $0x32] sm:$0x3]
    %s3624 = scalar_lea.vmem %s3, 1600
    %v3625 = vld [vmem:[%s3624] sm:$0xff]
    %v3626 = vld [vmem:[%s3624 + $0x8] sm:$0xff]
    %v3627 = vld [vmem:[%s3624 + $0x10] sm:$0xff]
    %v3628 = vld [vmem:[%s3624 + $0x18] sm:$0xff]
    %v3629 = vld [vmem:[%s3624 + $0x20] sm:$0xff]
    %v3630 = vld [vmem:[%s3624 + $0x28] sm:$0xff]
    %v3631 = vld [vmem:[%s3624 + $0x30] sm:$0xff]
    %v3632 = vld [vmem:[%s3624 + $0x38] sm:$0xff]
    %v3634 = vsel %vm1511, %v3623, 0
    %3636 = vmatprep.subr.mxu0 0.0
    %3637 = vmatpush1.msra.mxu0 0.0
    %3638 = vmatprep.subr.mxu0 0.0
    %3639 = vmatpush1.msra.mxu0 0.0
    %3640 = vmatprep.subr.mxu0 0.0
    %3641 = vmatpush1.msra.mxu0 0.0
    %3642 = vmatprep.subr.mxu0 0.0
    %3643 = vmatpush1.msra.mxu0 0.0
    %3644 = vmatprep.subr.mxu0 0.0
    %3645 = vmatpush1.msra.mxu0 0.0
    %3646 = vmatprep.subr.mxu0 0.0
    %3647 = vmatpush1.msra.mxu0 0.0
    %3648 = vmatprep.subr.mxu0 0.0
    %3649 = vmatpush1.msra.mxu0 0.0
    %3650 = vmatprep.subr.mxu0 0.0
    %3651 = vmatpush1.msra.mxu0 0.0
    %3652 = vmatprep.subr.mxu0 0.0
    %3653 = vmatpush1.msra.mxu0 %v3632
    %3654 = vmatprep.subr.mxu0 0.0
    %3655 = vmatpush1.msra.mxu0 %v3631
    %3656 = vmatprep.subr.mxu0 0.0
    %3657 = vmatpush1.msra.mxu0 %v3630
    %3658 = vmatprep.subr.mxu0 0.0
    %3659 = vmatpush1.msra.mxu0 %v3629
    %3660 = vmatprep.subr.mxu0 0.0
    %3661 = vmatpush1.msra.mxu0 %v3628
    %3662 = vmatprep.subr.mxu0 0.0
    %3663 = vmatpush1.msra.mxu0 %v3627
    %3664 = vmatprep.subr.mxu0 0.0
    %3665 = vmatpush1.msra.mxu0 %v3626
    %3666 = vmatprep.subr.mxu0 0.0
    %3667 = vmatpush1.msra.mxu0 %v3625
    %3668 = vmatprep.subr.mxu0 0.0
    %3669 = vmatpush2.msra.mxu0 0.0
    %3670 = vmatprep.subr.mxu0 0.0
    %3671 = vmatpush2.msra.mxu0 0.0
    %3672 = vmatprep.subr.mxu0 0.0
    %3673 = vmatpush2.msra.mxu0 0.0
    %3674 = vmatprep.subr.mxu0 0.0
    %3675 = vmatpush2.msra.mxu0 0.0
    %3676 = vmatprep.subr.mxu0 0.0
    %3677 = vmatpush2.msra.mxu0 0.0
    %3678 = vmatprep.subr.mxu0 0.0
    %3679 = vmatpush2.msra.mxu0 0.0
    %3680 = vmatprep.subr.mxu0 0.0
    %3681 = vmatpush2.msra.mxu0 0.0
    %3682 = vmatprep.subr.mxu0 0.0
    %3683 = vmatpush2.msra.mxu0 0.0
    %3684 = vmatprep.subr.mxu0 0.0
    %3685 = vmatpush2.msra.mxu0 0.0
    %3686 = vmatprep.subr.mxu0 0.0
    %3687 = vmatpush2.msra.mxu0 0.0
    %3688 = vmatprep.subr.mxu0 0.0
    %3689 = vmatpush2.msra.mxu0 0.0
    %3690 = vmatprep.subr.mxu0 0.0
    %3691 = vmatpush2.msra.mxu0 0.0
    %3692 = vmatprep.subr.mxu0 0.0
    %3693 = vmatpush2.msra.mxu0 0.0
    %3694 = vmatprep.subr.mxu0 0.0
    %3695 = vmatpush2.msra.mxu0 0.0
    %3696 = vmatprep.subr.mxu0 0.0
    %3697 = vmatpush2.msra.mxu0 0.0
    %3698 = vmatprep.subr.mxu0 0.0
    %3699 = vmatpush2.msra.mxu0 0.0
    %3700 = vmatprep.mubr.f32.mxu0 0.0
    %3701 = vmatmul.mubr.f32.gmra.mxu0 %v3634
    %v3702 = vpop.f32.mrf.mxu0
    %v3703 = vadd.f32 0.0, %v3702
    %v3704 = vpop.f32.mrf.mxu0
    %3705 = vdwg.mxu0
    %v3706 = vadd.f32 %v3622, %v3703
    %v3707 = vld [vmem:[#allocation2 + $0x34] sm:$0x3]
    %s3708 = scalar_lea.vmem %s3, 1664
    %v3709 = vld [vmem:[%s3708] sm:$0xff]
    %v3710 = vld [vmem:[%s3708 + $0x8] sm:$0xff]
    %v3711 = vld [vmem:[%s3708 + $0x10] sm:$0xff]
    %v3712 = vld [vmem:[%s3708 + $0x18] sm:$0xff]
    %v3713 = vld [vmem:[%s3708 + $0x20] sm:$0xff]
    %v3714 = vld [vmem:[%s3708 + $0x28] sm:$0xff]
    %v3715 = vld [vmem:[%s3708 + $0x30] sm:$0xff]
    %v3716 = vld [vmem:[%s3708 + $0x38] sm:$0xff]
    %v3718 = vsel %vm1511, %v3707, 0
    %3720 = vmatprep.subr.mxu0 0.0
    %3721 = vmatpush1.msra.mxu0 0.0
    %3722 = vmatprep.subr.mxu0 0.0
    %3723 = vmatpush1.msra.mxu0 0.0
    %3724 = vmatprep.subr.mxu0 0.0
    %3725 = vmatpush1.msra.mxu0 0.0
    %3726 = vmatprep.subr.mxu0 0.0
    %3727 = vmatpush1.msra.mxu0 0.0
    %3728 = vmatprep.subr.mxu0 0.0
    %3729 = vmatpush1.msra.mxu0 0.0
    %3730 = vmatprep.subr.mxu0 0.0
    %3731 = vmatpush1.msra.mxu0 0.0
    %3732 = vmatprep.subr.mxu0 0.0
    %3733 = vmatpush1.msra.mxu0 0.0
    %3734 = vmatprep.subr.mxu0 0.0
    %3735 = vmatpush1.msra.mxu0 0.0
    %3736 = vmatprep.subr.mxu0 0.0
    %3737 = vmatpush1.msra.mxu0 %v3716
    %3738 = vmatprep.subr.mxu0 0.0
    %3739 = vmatpush1.msra.mxu0 %v3715
    %3740 = vmatprep.subr.mxu0 0.0
    %3741 = vmatpush1.msra.mxu0 %v3714
    %3742 = vmatprep.subr.mxu0 0.0
    %3743 = vmatpush1.msra.mxu0 %v3713
    %3744 = vmatprep.subr.mxu0 0.0
    %3745 = vmatpush1.msra.mxu0 %v3712
    %3746 = vmatprep.subr.mxu0 0.0
    %3747 = vmatpush1.msra.mxu0 %v3711
    %3748 = vmatprep.subr.mxu0 0.0
    %3749 = vmatpush1.msra.mxu0 %v3710
    %3750 = vmatprep.subr.mxu0 0.0
    %3751 = vmatpush1.msra.mxu0 %v3709
    %3752 = vmatprep.subr.mxu0 0.0
    %3753 = vmatpush2.msra.mxu0 0.0
    %3754 = vmatprep.subr.mxu0 0.0
    %3755 = vmatpush2.msra.mxu0 0.0
    %3756 = vmatprep.subr.mxu0 0.0
    %3757 = vmatpush2.msra.mxu0 0.0
    %3758 = vmatprep.subr.mxu0 0.0
    %3759 = vmatpush2.msra.mxu0 0.0
    %3760 = vmatprep.subr.mxu0 0.0
    %3761 = vmatpush2.msra.mxu0 0.0
    %3762 = vmatprep.subr.mxu0 0.0
    %3763 = vmatpush2.msra.mxu0 0.0
    %3764 = vmatprep.subr.mxu0 0.0
    %3765 = vmatpush2.msra.mxu0 0.0
    %3766 = vmatprep.subr.mxu0 0.0
    %3767 = vmatpush2.msra.mxu0 0.0
    %3768 = vmatprep.subr.mxu0 0.0
    %3769 = vmatpush2.msra.mxu0 0.0
    %3770 = vmatprep.subr.mxu0 0.0
    %3771 = vmatpush2.msra.mxu0 0.0
    %3772 = vmatprep.subr.mxu0 0.0
    %3773 = vmatpush2.msra.mxu0 0.0
    %3774 = vmatprep.subr.mxu0 0.0
    %3775 = vmatpush2.msra.mxu0 0.0
    %3776 = vmatprep.subr.mxu0 0.0
    %3777 = vmatpush2.msra.mxu0 0.0
    %3778 = vmatprep.subr.mxu0 0.0
    %3779 = vmatpush2.msra.mxu0 0.0
    %3780 = vmatprep.subr.mxu0 0.0
    %3781 = vmatpush2.msra.mxu0 0.0
    %3782 = vmatprep.subr.mxu0 0.0
    %3783 = vmatpush2.msra.mxu0 0.0
    %3784 = vmatprep.mubr.f32.mxu0 0.0
    %3785 = vmatmul.mubr.f32.gmra.mxu0 %v3718
    %v3786 = vpop.f32.mrf.mxu0
    %v3787 = vadd.f32 0.0, %v3786
    %v3788 = vpop.f32.mrf.mxu0
    %3789 = vdwg.mxu0
    %v3790 = vadd.f32 %v3706, %v3787
    %v3791 = vld [vmem:[#allocation2 + $0x36] sm:$0x3]
    %s3792 = scalar_lea.vmem %s3, 1728
    %v3793 = vld [vmem:[%s3792] sm:$0xff]
    %v3794 = vld [vmem:[%s3792 + $0x8] sm:$0xff]
    %v3795 = vld [vmem:[%s3792 + $0x10] sm:$0xff]
    %v3796 = vld [vmem:[%s3792 + $0x18] sm:$0xff]
    %v3797 = vld [vmem:[%s3792 + $0x20] sm:$0xff]
    %v3798 = vld [vmem:[%s3792 + $0x28] sm:$0xff]
    %v3799 = vld [vmem:[%s3792 + $0x30] sm:$0xff]
    %v3800 = vld [vmem:[%s3792 + $0x38] sm:$0xff]
    %v3802 = vsel %vm1511, %v3791, 0
    %3804 = vmatprep.subr.mxu0 0.0
    %3805 = vmatpush1.msra.mxu0 0.0
    %3806 = vmatprep.subr.mxu0 0.0
    %3807 = vmatpush1.msra.mxu0 0.0
    %3808 = vmatprep.subr.mxu0 0.0
    %3809 = vmatpush1.msra.mxu0 0.0
    %3810 = vmatprep.subr.mxu0 0.0
    %3811 = vmatpush1.msra.mxu0 0.0
    %3812 = vmatprep.subr.mxu0 0.0
    %3813 = vmatpush1.msra.mxu0 0.0
    %3814 = vmatprep.subr.mxu0 0.0
    %3815 = vmatpush1.msra.mxu0 0.0
    %3816 = vmatprep.subr.mxu0 0.0
    %3817 = vmatpush1.msra.mxu0 0.0
    %3818 = vmatprep.subr.mxu0 0.0
    %3819 = vmatpush1.msra.mxu0 0.0
    %3820 = vmatprep.subr.mxu0 0.0
    %3821 = vmatpush1.msra.mxu0 %v3800
    %3822 = vmatprep.subr.mxu0 0.0
    %3823 = vmatpush1.msra.mxu0 %v3799
    %3824 = vmatprep.subr.mxu0 0.0
    %3825 = vmatpush1.msra.mxu0 %v3798
    %3826 = vmatprep.subr.mxu0 0.0
    %3827 = vmatpush1.msra.mxu0 %v3797
    %3828 = vmatprep.subr.mxu0 0.0
    %3829 = vmatpush1.msra.mxu0 %v3796
    %3830 = vmatprep.subr.mxu0 0.0
    %3831 = vmatpush1.msra.mxu0 %v3795
    %3832 = vmatprep.subr.mxu0 0.0
    %3833 = vmatpush1.msra.mxu0 %v3794
    %3834 = vmatprep.subr.mxu0 0.0
    %3835 = vmatpush1.msra.mxu0 %v3793
    %3836 = vmatprep.subr.mxu0 0.0
    %3837 = vmatpush2.msra.mxu0 0.0
    %3838 = vmatprep.subr.mxu0 0.0
    %3839 = vmatpush2.msra.mxu0 0.0
    %3840 = vmatprep.subr.mxu0 0.0
    %3841 = vmatpush2.msra.mxu0 0.0
    %3842 = vmatprep.subr.mxu0 0.0
    %3843 = vmatpush2.msra.mxu0 0.0
    %3844 = vmatprep.subr.mxu0 0.0
    %3845 = vmatpush2.msra.mxu0 0.0
    %3846 = vmatprep.subr.mxu0 0.0
    %3847 = vmatpush2.msra.mxu0 0.0
    %3848 = vmatprep.subr.mxu0 0.0
    %3849 = vmatpush2.msra.mxu0 0.0
    %3850 = vmatprep.subr.mxu0 0.0
    %3851 = vmatpush2.msra.mxu0 0.0
    %3852 = vmatprep.subr.mxu0 0.0
    %3853 = vmatpush2.msra.mxu0 0.0
    %3854 = vmatprep.subr.mxu0 0.0
    %3855 = vmatpush2.msra.mxu0 0.0
    %3856 = vmatprep.subr.mxu0 0.0
    %3857 = vmatpush2.msra.mxu0 0.0
    %3858 = vmatprep.subr.mxu0 0.0
    %3859 = vmatpush2.msra.mxu0 0.0
    %3860 = vmatprep.subr.mxu0 0.0
    %3861 = vmatpush2.msra.mxu0 0.0
    %3862 = vmatprep.subr.mxu0 0.0
    %3863 = vmatpush2.msra.mxu0 0.0
    %3864 = vmatprep.subr.mxu0 0.0
    %3865 = vmatpush2.msra.mxu0 0.0
    %3866 = vmatprep.subr.mxu0 0.0
    %3867 = vmatpush2.msra.mxu0 0.0
    %3868 = vmatprep.mubr.f32.mxu0 0.0
    %3869 = vmatmul.mubr.f32.gmra.mxu0 %v3802
    %v3870 = vpop.f32.mrf.mxu0
    %v3871 = vadd.f32 0.0, %v3870
    %v3872 = vpop.f32.mrf.mxu0
    %3873 = vdwg.mxu0
    %v3874 = vadd.f32 %v3790, %v3871
    %v3875 = vld [vmem:[#allocation2 + $0x38] sm:$0x3]
    %s3876 = scalar_lea.vmem %s3, 1792
    %v3877 = vld [vmem:[%s3876] sm:$0xff]
    %v3878 = vld [vmem:[%s3876 + $0x8] sm:$0xff]
    %v3879 = vld [vmem:[%s3876 + $0x10] sm:$0xff]
    %v3880 = vld [vmem:[%s3876 + $0x18] sm:$0xff]
    %v3881 = vld [vmem:[%s3876 + $0x20] sm:$0xff]
    %v3882 = vld [vmem:[%s3876 + $0x28] sm:$0xff]
    %v3883 = vld [vmem:[%s3876 + $0x30] sm:$0xff]
    %v3884 = vld [vmem:[%s3876 + $0x38] sm:$0xff]
    %v3886 = vsel %vm1511, %v3875, 0
    %3888 = vmatprep.subr.mxu0 0.0
    %3889 = vmatpush1.msra.mxu0 0.0
    %3890 = vmatprep.subr.mxu0 0.0
    %3891 = vmatpush1.msra.mxu0 0.0
    %3892 = vmatprep.subr.mxu0 0.0
    %3893 = vmatpush1.msra.mxu0 0.0
    %3894 = vmatprep.subr.mxu0 0.0
    %3895 = vmatpush1.msra.mxu0 0.0
    %3896 = vmatprep.subr.mxu0 0.0
    %3897 = vmatpush1.msra.mxu0 0.0
    %3898 = vmatprep.subr.mxu0 0.0
    %3899 = vmatpush1.msra.mxu0 0.0
    %3900 = vmatprep.subr.mxu0 0.0
    %3901 = vmatpush1.msra.mxu0 0.0
    %3902 = vmatprep.subr.mxu0 0.0
    %3903 = vmatpush1.msra.mxu0 0.0
    %3904 = vmatprep.subr.mxu0 0.0
    %3905 = vmatpush1.msra.mxu0 %v3884
    %3906 = vmatprep.subr.mxu0 0.0
    %3907 = vmatpush1.msra.mxu0 %v3883
    %3908 = vmatprep.subr.mxu0 0.0
    %3909 = vmatpush1.msra.mxu0 %v3882
    %3910 = vmatprep.subr.mxu0 0.0
    %3911 = vmatpush1.msra.mxu0 %v3881
    %3912 = vmatprep.subr.mxu0 0.0
    %3913 = vmatpush1.msra.mxu0 %v3880
    %3914 = vmatprep.subr.mxu0 0.0
    %3915 = vmatpush1.msra.mxu0 %v3879
    %3916 = vmatprep.subr.mxu0 0.0
    %3917 = vmatpush1.msra.mxu0 %v3878
    %3918 = vmatprep.subr.mxu0 0.0
    %3919 = vmatpush1.msra.mxu0 %v3877
    %3920 = vmatprep.subr.mxu0 0.0
    %3921 = vmatpush2.msra.mxu0 0.0
    %3922 = vmatprep.subr.mxu0 0.0
    %3923 = vmatpush2.msra.mxu0 0.0
    %3924 = vmatprep.subr.mxu0 0.0
    %3925 = vmatpush2.msra.mxu0 0.0
    %3926 = vmatprep.subr.mxu0 0.0
    %3927 = vmatpush2.msra.mxu0 0.0
    %3928 = vmatprep.subr.mxu0 0.0
    %3929 = vmatpush2.msra.mxu0 0.0
    %3930 = vmatprep.subr.mxu0 0.0
    %3931 = vmatpush2.msra.mxu0 0.0
    %3932 = vmatprep.subr.mxu0 0.0
    %3933 = vmatpush2.msra.mxu0 0.0
    %3934 = vmatprep.subr.mxu0 0.0
    %3935 = vmatpush2.msra.mxu0 0.0
    %3936 = vmatprep.subr.mxu0 0.0
    %3937 = vmatpush2.msra.mxu0 0.0
    %3938 = vmatprep.subr.mxu0 0.0
    %3939 = vmatpush2.msra.mxu0 0.0
    %3940 = vmatprep.subr.mxu0 0.0
    %3941 = vmatpush2.msra.mxu0 0.0
    %3942 = vmatprep.subr.mxu0 0.0
    %3943 = vmatpush2.msra.mxu0 0.0
    %3944 = vmatprep.subr.mxu0 0.0
    %3945 = vmatpush2.msra.mxu0 0.0
    %3946 = vmatprep.subr.mxu0 0.0
    %3947 = vmatpush2.msra.mxu0 0.0
    %3948 = vmatprep.subr.mxu0 0.0
    %3949 = vmatpush2.msra.mxu0 0.0
    %3950 = vmatprep.subr.mxu0 0.0
    %3951 = vmatpush2.msra.mxu0 0.0
    %3952 = vmatprep.mubr.f32.mxu0 0.0
    %3953 = vmatmul.mubr.f32.gmra.mxu0 %v3886
    %v3954 = vpop.f32.mrf.mxu0
    %v3955 = vadd.f32 0.0, %v3954
    %v3956 = vpop.f32.mrf.mxu0
    %3957 = vdwg.mxu0
    %v3958 = vadd.f32 %v3874, %v3955
    %v3959 = vld [vmem:[#allocation2 + $0x3a] sm:$0x3]
    %s3960 = scalar_lea.vmem %s3, 1856
    %v3961 = vld [vmem:[%s3960] sm:$0xff]
    %v3962 = vld [vmem:[%s3960 + $0x8] sm:$0xff]
    %v3963 = vld [vmem:[%s3960 + $0x10] sm:$0xff]
    %v3964 = vld [vmem:[%s3960 + $0x18] sm:$0xff]
    %v3965 = vld [vmem:[%s3960 + $0x20] sm:$0xff]
    %v3966 = vld [vmem:[%s3960 + $0x28] sm:$0xff]
    %v3967 = vld [vmem:[%s3960 + $0x30] sm:$0xff]
    %v3968 = vld [vmem:[%s3960 + $0x38] sm:$0xff]
    %v3970 = vsel %vm1511, %v3959, 0
    %3972 = vmatprep.subr.mxu0 0.0
    %3973 = vmatpush1.msra.mxu0 0.0
    %3974 = vmatprep.subr.mxu0 0.0
    %3975 = vmatpush1.msra.mxu0 0.0
    %3976 = vmatprep.subr.mxu0 0.0
    %3977 = vmatpush1.msra.mxu0 0.0
    %3978 = vmatprep.subr.mxu0 0.0
    %3979 = vmatpush1.msra.mxu0 0.0
    %3980 = vmatprep.subr.mxu0 0.0
    %3981 = vmatpush1.msra.mxu0 0.0
    %3982 = vmatprep.subr.mxu0 0.0
    %3983 = vmatpush1.msra.mxu0 0.0
    %3984 = vmatprep.subr.mxu0 0.0
    %3985 = vmatpush1.msra.mxu0 0.0
    %3986 = vmatprep.subr.mxu0 0.0
    %3987 = vmatpush1.msra.mxu0 0.0
    %3988 = vmatprep.subr.mxu0 0.0
    %3989 = vmatpush1.msra.mxu0 %v3968
    %3990 = vmatprep.subr.mxu0 0.0
    %3991 = vmatpush1.msra.mxu0 %v3967
    %3992 = vmatprep.subr.mxu0 0.0
    %3993 = vmatpush1.msra.mxu0 %v3966
    %3994 = vmatprep.subr.mxu0 0.0
    %3995 = vmatpush1.msra.mxu0 %v3965
    %3996 = vmatprep.subr.mxu0 0.0
    %3997 = vmatpush1.msra.mxu0 %v3964
    %3998 = vmatprep.subr.mxu0 0.0
    %3999 = vmatpush1.msra.mxu0 %v3963
    %4000 = vmatprep.subr.mxu0 0.0
    %4001 = vmatpush1.msra.mxu0 %v3962
    %4002 = vmatprep.subr.mxu0 0.0
    %4003 = vmatpush1.msra.mxu0 %v3961
    %4004 = vmatprep.subr.mxu0 0.0
    %4005 = vmatpush2.msra.mxu0 0.0
    %4006 = vmatprep.subr.mxu0 0.0
    %4007 = vmatpush2.msra.mxu0 0.0
    %4008 = vmatprep.subr.mxu0 0.0
    %4009 = vmatpush2.msra.mxu0 0.0
    %4010 = vmatprep.subr.mxu0 0.0
    %4011 = vmatpush2.msra.mxu0 0.0
    %4012 = vmatprep.subr.mxu0 0.0
    %4013 = vmatpush2.msra.mxu0 0.0
    %4014 = vmatprep.subr.mxu0 0.0
    %4015 = vmatpush2.msra.mxu0 0.0
    %4016 = vmatprep.subr.mxu0 0.0
    %4017 = vmatpush2.msra.mxu0 0.0
    %4018 = vmatprep.subr.mxu0 0.0
    %4019 = vmatpush2.msra.mxu0 0.0
    %4020 = vmatprep.subr.mxu0 0.0
    %4021 = vmatpush2.msra.mxu0 0.0
    %4022 = vmatprep.subr.mxu0 0.0
    %4023 = vmatpush2.msra.mxu0 0.0
    %4024 = vmatprep.subr.mxu0 0.0
    %4025 = vmatpush2.msra.mxu0 0.0
    %4026 = vmatprep.subr.mxu0 0.0
    %4027 = vmatpush2.msra.mxu0 0.0
    %4028 = vmatprep.subr.mxu0 0.0
    %4029 = vmatpush2.msra.mxu0 0.0
    %4030 = vmatprep.subr.mxu0 0.0
    %4031 = vmatpush2.msra.mxu0 0.0
    %4032 = vmatprep.subr.mxu0 0.0
    %4033 = vmatpush2.msra.mxu0 0.0
    %4034 = vmatprep.subr.mxu0 0.0
    %4035 = vmatpush2.msra.mxu0 0.0
    %4036 = vmatprep.mubr.f32.mxu0 0.0
    %4037 = vmatmul.mubr.f32.gmra.mxu0 %v3970
    %v4038 = vpop.f32.mrf.mxu0
    %v4039 = vadd.f32 0.0, %v4038
    %v4040 = vpop.f32.mrf.mxu0
    %4041 = vdwg.mxu0
    %v4042 = vadd.f32 %v3958, %v4039
    %v4043 = vld [vmem:[#allocation2 + $0x3c] sm:$0x3]
    %s4044 = scalar_lea.vmem %s3, 1920
    %v4045 = vld [vmem:[%s4044] sm:$0xff]
    %v4046 = vld [vmem:[%s4044 + $0x8] sm:$0xff]
    %v4047 = vld [vmem:[%s4044 + $0x10] sm:$0xff]
    %v4048 = vld [vmem:[%s4044 + $0x18] sm:$0xff]
    %v4049 = vld [vmem:[%s4044 + $0x20] sm:$0xff]
    %v4050 = vld [vmem:[%s4044 + $0x28] sm:$0xff]
    %v4051 = vld [vmem:[%s4044 + $0x30] sm:$0xff]
    %v4052 = vld [vmem:[%s4044 + $0x38] sm:$0xff]
    %v4054 = vsel %vm1511, %v4043, 0
    %4056 = vmatprep.subr.mxu0 0.0
    %4057 = vmatpush1.msra.mxu0 0.0
    %4058 = vmatprep.subr.mxu0 0.0
    %4059 = vmatpush1.msra.mxu0 0.0
    %4060 = vmatprep.subr.mxu0 0.0
    %4061 = vmatpush1.msra.mxu0 0.0
    %4062 = vmatprep.subr.mxu0 0.0
    %4063 = vmatpush1.msra.mxu0 0.0
    %4064 = vmatprep.subr.mxu0 0.0
    %4065 = vmatpush1.msra.mxu0 0.0
    %4066 = vmatprep.subr.mxu0 0.0
    %4067 = vmatpush1.msra.mxu0 0.0
    %4068 = vmatprep.subr.mxu0 0.0
    %4069 = vmatpush1.msra.mxu0 0.0
    %4070 = vmatprep.subr.mxu0 0.0
    %4071 = vmatpush1.msra.mxu0 0.0
    %4072 = vmatprep.subr.mxu0 0.0
    %4073 = vmatpush1.msra.mxu0 %v4052
    %4074 = vmatprep.subr.mxu0 0.0
    %4075 = vmatpush1.msra.mxu0 %v4051
    %4076 = vmatprep.subr.mxu0 0.0
    %4077 = vmatpush1.msra.mxu0 %v4050
    %4078 = vmatprep.subr.mxu0 0.0
    %4079 = vmatpush1.msra.mxu0 %v4049
    %4080 = vmatprep.subr.mxu0 0.0
    %4081 = vmatpush1.msra.mxu0 %v4048
    %4082 = vmatprep.subr.mxu0 0.0
    %4083 = vmatpush1.msra.mxu0 %v4047
    %4084 = vmatprep.subr.mxu0 0.0
    %4085 = vmatpush1.msra.mxu0 %v4046
    %4086 = vmatprep.subr.mxu0 0.0
    %4087 = vmatpush1.msra.mxu0 %v4045
    %4088 = vmatprep.subr.mxu0 0.0
    %4089 = vmatpush2.msra.mxu0 0.0
    %4090 = vmatprep.subr.mxu0 0.0
    %4091 = vmatpush2.msra.mxu0 0.0
    %4092 = vmatprep.subr.mxu0 0.0
    %4093 = vmatpush2.msra.mxu0 0.0
    %4094 = vmatprep.subr.mxu0 0.0
    %4095 = vmatpush2.msra.mxu0 0.0
    %4096 = vmatprep.subr.mxu0 0.0
    %4097 = vmatpush2.msra.mxu0 0.0
    %4098 = vmatprep.subr.mxu0 0.0
    %4099 = vmatpush2.msra.mxu0 0.0
    %4100 = vmatprep.subr.mxu0 0.0
    %4101 = vmatpush2.msra.mxu0 0.0
    %4102 = vmatprep.subr.mxu0 0.0
    %4103 = vmatpush2.msra.mxu0 0.0
    %4104 = vmatprep.subr.mxu0 0.0
    %4105 = vmatpush2.msra.mxu0 0.0
    %4106 = vmatprep.subr.mxu0 0.0
    %4107 = vmatpush2.msra.mxu0 0.0
    %4108 = vmatprep.subr.mxu0 0.0
    %4109 = vmatpush2.msra.mxu0 0.0
    %4110 = vmatprep.subr.mxu0 0.0
    %4111 = vmatpush2.msra.mxu0 0.0
    %4112 = vmatprep.subr.mxu0 0.0
    %4113 = vmatpush2.msra.mxu0 0.0
    %4114 = vmatprep.subr.mxu0 0.0
    %4115 = vmatpush2.msra.mxu0 0.0
    %4116 = vmatprep.subr.mxu0 0.0
    %4117 = vmatpush2.msra.mxu0 0.0
    %4118 = vmatprep.subr.mxu0 0.0
    %4119 = vmatpush2.msra.mxu0 0.0
    %4120 = vmatprep.mubr.f32.mxu0 0.0
    %4121 = vmatmul.mubr.f32.gmra.mxu0 %v4054
    %v4122 = vpop.f32.mrf.mxu0
    %v4123 = vadd.f32 0.0, %v4122
    %v4124 = vpop.f32.mrf.mxu0
    %4125 = vdwg.mxu0
    %v4126 = vadd.f32 %v4042, %v4123
    %v4127 = vld [vmem:[#allocation2 + $0x3e] sm:$0x3]
    %s4128 = scalar_lea.vmem %s3, 1984
    %v4129 = vld [vmem:[%s4128] sm:$0xff]
    %v4130 = vld [vmem:[%s4128 + $0x8] sm:$0xff]
    %v4131 = vld [vmem:[%s4128 + $0x10] sm:$0xff]
    %v4132 = vld [vmem:[%s4128 + $0x18] sm:$0xff]
    %v4133 = vld [vmem:[%s4128 + $0x20] sm:$0xff]
    %v4134 = vld [vmem:[%s4128 + $0x28] sm:$0xff]
    %v4135 = vld [vmem:[%s4128 + $0x30] sm:$0xff]
    %v4136 = vld [vmem:[%s4128 + $0x38] sm:$0xff]
    %v4138 = vsel %vm1511, %v4127, 0
    %4140 = vmatprep.subr.mxu0 0.0
    %4141 = vmatpush1.msra.mxu0 0.0
    %4142 = vmatprep.subr.mxu0 0.0
    %4143 = vmatpush1.msra.mxu0 0.0
    %4144 = vmatprep.subr.mxu0 0.0
    %4145 = vmatpush1.msra.mxu0 0.0
    %4146 = vmatprep.subr.mxu0 0.0
    %4147 = vmatpush1.msra.mxu0 0.0
    %4148 = vmatprep.subr.mxu0 0.0
    %4149 = vmatpush1.msra.mxu0 0.0
    %4150 = vmatprep.subr.mxu0 0.0
    %4151 = vmatpush1.msra.mxu0 0.0
    %4152 = vmatprep.subr.mxu0 0.0
    %4153 = vmatpush1.msra.mxu0 0.0
    %4154 = vmatprep.subr.mxu0 0.0
    %4155 = vmatpush1.msra.mxu0 0.0
    %4156 = vmatprep.subr.mxu0 0.0
    %4157 = vmatpush1.msra.mxu0 %v4136
    %4158 = vmatprep.subr.mxu0 0.0
    %4159 = vmatpush1.msra.mxu0 %v4135
    %4160 = vmatprep.subr.mxu0 0.0
    %4161 = vmatpush1.msra.mxu0 %v4134
    %4162 = vmatprep.subr.mxu0 0.0
    %4163 = vmatpush1.msra.mxu0 %v4133
    %4164 = vmatprep.subr.mxu0 0.0
    %4165 = vmatpush1.msra.mxu0 %v4132
    %4166 = vmatprep.subr.mxu0 0.0
    %4167 = vmatpush1.msra.mxu0 %v4131
    %4168 = vmatprep.subr.mxu0 0.0
    %4169 = vmatpush1.msra.mxu0 %v4130
    %4170 = vmatprep.subr.mxu0 0.0
    %4171 = vmatpush1.msra.mxu0 %v4129
    %4172 = vmatprep.subr.mxu0 0.0
    %4173 = vmatpush2.msra.mxu0 0.0
    %4174 = vmatprep.subr.mxu0 0.0
    %4175 = vmatpush2.msra.mxu0 0.0
    %4176 = vmatprep.subr.mxu0 0.0
    %4177 = vmatpush2.msra.mxu0 0.0
    %4178 = vmatprep.subr.mxu0 0.0
    %4179 = vmatpush2.msra.mxu0 0.0
    %4180 = vmatprep.subr.mxu0 0.0
    %4181 = vmatpush2.msra.mxu0 0.0
    %4182 = vmatprep.subr.mxu0 0.0
    %4183 = vmatpush2.msra.mxu0 0.0
    %4184 = vmatprep.subr.mxu0 0.0
    %4185 = vmatpush2.msra.mxu0 0.0
    %4186 = vmatprep.subr.mxu0 0.0
    %4187 = vmatpush2.msra.mxu0 0.0
    %4188 = vmatprep.subr.mxu0 0.0
    %4189 = vmatpush2.msra.mxu0 0.0
    %4190 = vmatprep.subr.mxu0 0.0
    %4191 = vmatpush2.msra.mxu0 0.0
    %4192 = vmatprep.subr.mxu0 0.0
    %4193 = vmatpush2.msra.mxu0 0.0
    %4194 = vmatprep.subr.mxu0 0.0
    %4195 = vmatpush2.msra.mxu0 0.0
    %4196 = vmatprep.subr.mxu0 0.0
    %4197 = vmatpush2.msra.mxu0 0.0
    %4198 = vmatprep.subr.mxu0 0.0
    %4199 = vmatpush2.msra.mxu0 0.0
    %4200 = vmatprep.subr.mxu0 0.0
    %4201 = vmatpush2.msra.mxu0 0.0
    %4202 = vmatprep.subr.mxu0 0.0
    %4203 = vmatpush2.msra.mxu0 0.0
    %4204 = vmatprep.mubr.f32.mxu0 0.0
    %4205 = vmatmul.mubr.f32.gmra.mxu0 %v4138
    %v4206 = vpop.f32.mrf.mxu0
    %v4207 = vadd.f32 0.0, %v4206
    %v4208 = vpop.f32.mrf.mxu0
    %4209 = vdwg.mxu0
    %v4210 = vadd.f32 %v4126, %v4207
    %v4211 = vld [vmem:[#allocation2 + $0x40] sm:$0x3]
    %s4212 = scalar_lea.vmem %s3, 2048
    %v4213 = vld [vmem:[%s4212] sm:$0xff]
    %v4214 = vld [vmem:[%s4212 + $0x8] sm:$0xff]
    %v4215 = vld [vmem:[%s4212 + $0x10] sm:$0xff]
    %v4216 = vld [vmem:[%s4212 + $0x18] sm:$0xff]
    %v4217 = vld [vmem:[%s4212 + $0x20] sm:$0xff]
    %v4218 = vld [vmem:[%s4212 + $0x28] sm:$0xff]
    %v4219 = vld [vmem:[%s4212 + $0x30] sm:$0xff]
    %v4220 = vld [vmem:[%s4212 + $0x38] sm:$0xff]
    %v4222 = vsel %vm1511, %v4211, 0
    %4224 = vmatprep.subr.mxu0 0.0
    %4225 = vmatpush1.msra.mxu0 0.0
    %4226 = vmatprep.subr.mxu0 0.0
    %4227 = vmatpush1.msra.mxu0 0.0
    %4228 = vmatprep.subr.mxu0 0.0
    %4229 = vmatpush1.msra.mxu0 0.0
    %4230 = vmatprep.subr.mxu0 0.0
    %4231 = vmatpush1.msra.mxu0 0.0
    %4232 = vmatprep.subr.mxu0 0.0
    %4233 = vmatpush1.msra.mxu0 0.0
    %4234 = vmatprep.subr.mxu0 0.0
    %4235 = vmatpush1.msra.mxu0 0.0
    %4236 = vmatprep.subr.mxu0 0.0
    %4237 = vmatpush1.msra.mxu0 0.0
    %4238 = vmatprep.subr.mxu0 0.0
    %4239 = vmatpush1.msra.mxu0 0.0
    %4240 = vmatprep.subr.mxu0 0.0
    %4241 = vmatpush1.msra.mxu0 %v4220
    %4242 = vmatprep.subr.mxu0 0.0
    %4243 = vmatpush1.msra.mxu0 %v4219
    %4244 = vmatprep.subr.mxu0 0.0
    %4245 = vmatpush1.msra.mxu0 %v4218
    %4246 = vmatprep.subr.mxu0 0.0
    %4247 = vmatpush1.msra.mxu0 %v4217
    %4248 = vmatprep.subr.mxu0 0.0
    %4249 = vmatpush1.msra.mxu0 %v4216
    %4250 = vmatprep.subr.mxu0 0.0
    %4251 = vmatpush1.msra.mxu0 %v4215
    %4252 = vmatprep.subr.mxu0 0.0
    %4253 = vmatpush1.msra.mxu0 %v4214
    %4254 = vmatprep.subr.mxu0 0.0
    %4255 = vmatpush1.msra.mxu0 %v4213
    %4256 = vmatprep.subr.mxu0 0.0
    %4257 = vmatpush2.msra.mxu0 0.0
    %4258 = vmatprep.subr.mxu0 0.0
    %4259 = vmatpush2.msra.mxu0 0.0
    %4260 = vmatprep.subr.mxu0 0.0
    %4261 = vmatpush2.msra.mxu0 0.0
    %4262 = vmatprep.subr.mxu0 0.0
    %4263 = vmatpush2.msra.mxu0 0.0
    %4264 = vmatprep.subr.mxu0 0.0
    %4265 = vmatpush2.msra.mxu0 0.0
    %4266 = vmatprep.subr.mxu0 0.0
    %4267 = vmatpush2.msra.mxu0 0.0
    %4268 = vmatprep.subr.mxu0 0.0
    %4269 = vmatpush2.msra.mxu0 0.0
    %4270 = vmatprep.subr.mxu0 0.0
    %4271 = vmatpush2.msra.mxu0 0.0
    %4272 = vmatprep.subr.mxu0 0.0
    %4273 = vmatpush2.msra.mxu0 0.0
    %4274 = vmatprep.subr.mxu0 0.0
    %4275 = vmatpush2.msra.mxu0 0.0
    %4276 = vmatprep.subr.mxu0 0.0
    %4277 = vmatpush2.msra.mxu0 0.0
    %4278 = vmatprep.subr.mxu0 0.0
    %4279 = vmatpush2.msra.mxu0 0.0
    %4280 = vmatprep.subr.mxu0 0.0
    %4281 = vmatpush2.msra.mxu0 0.0
    %4282 = vmatprep.subr.mxu0 0.0
    %4283 = vmatpush2.msra.mxu0 0.0
    %4284 = vmatprep.subr.mxu0 0.0
    %4285 = vmatpush2.msra.mxu0 0.0
    %4286 = vmatprep.subr.mxu0 0.0
    %4287 = vmatpush2.msra.mxu0 0.0
    %4288 = vmatprep.mubr.f32.mxu0 0.0
    %4289 = vmatmul.mubr.f32.gmra.mxu0 %v4222
    %v4290 = vpop.f32.mrf.mxu0
    %v4291 = vadd.f32 0.0, %v4290
    %v4292 = vpop.f32.mrf.mxu0
    %4293 = vdwg.mxu0
    %v4294 = vadd.f32 %v4210, %v4291
    %v4295 = vld [vmem:[#allocation2 + $0x42] sm:$0x3]
    %s4296 = scalar_lea.vmem %s3, 2112
    %v4297 = vld [vmem:[%s4296] sm:$0xff]
    %v4298 = vld [vmem:[%s4296 + $0x8] sm:$0xff]
    %v4299 = vld [vmem:[%s4296 + $0x10] sm:$0xff]
    %v4300 = vld [vmem:[%s4296 + $0x18] sm:$0xff]
    %v4301 = vld [vmem:[%s4296 + $0x20] sm:$0xff]
    %v4302 = vld [vmem:[%s4296 + $0x28] sm:$0xff]
    %v4303 = vld [vmem:[%s4296 + $0x30] sm:$0xff]
    %v4304 = vld [vmem:[%s4296 + $0x38] sm:$0xff]
    %v4306 = vsel %vm1511, %v4295, 0
    %4308 = vmatprep.subr.mxu0 0.0
    %4309 = vmatpush1.msra.mxu0 0.0
    %4310 = vmatprep.subr.mxu0 0.0
    %4311 = vmatpush1.msra.mxu0 0.0
    %4312 = vmatprep.subr.mxu0 0.0
    %4313 = vmatpush1.msra.mxu0 0.0
    %4314 = vmatprep.subr.mxu0 0.0
    %4315 = vmatpush1.msra.mxu0 0.0
    %4316 = vmatprep.subr.mxu0 0.0
    %4317 = vmatpush1.msra.mxu0 0.0
    %4318 = vmatprep.subr.mxu0 0.0
    %4319 = vmatpush1.msra.mxu0 0.0
    %4320 = vmatprep.subr.mxu0 0.0
    %4321 = vmatpush1.msra.mxu0 0.0
    %4322 = vmatprep.subr.mxu0 0.0
    %4323 = vmatpush1.msra.mxu0 0.0
    %4324 = vmatprep.subr.mxu0 0.0
    %4325 = vmatpush1.msra.mxu0 %v4304
    %4326 = vmatprep.subr.mxu0 0.0
    %4327 = vmatpush1.msra.mxu0 %v4303
    %4328 = vmatprep.subr.mxu0 0.0
    %4329 = vmatpush1.msra.mxu0 %v4302
    %4330 = vmatprep.subr.mxu0 0.0
    %4331 = vmatpush1.msra.mxu0 %v4301
    %4332 = vmatprep.subr.mxu0 0.0
    %4333 = vmatpush1.msra.mxu0 %v4300
    %4334 = vmatprep.subr.mxu0 0.0
    %4335 = vmatpush1.msra.mxu0 %v4299
    %4336 = vmatprep.subr.mxu0 0.0
    %4337 = vmatpush1.msra.mxu0 %v4298
    %4338 = vmatprep.subr.mxu0 0.0
    %4339 = vmatpush1.msra.mxu0 %v4297
    %4340 = vmatprep.subr.mxu0 0.0
    %4341 = vmatpush2.msra.mxu0 0.0
    %4342 = vmatprep.subr.mxu0 0.0
    %4343 = vmatpush2.msra.mxu0 0.0
    %4344 = vmatprep.subr.mxu0 0.0
    %4345 = vmatpush2.msra.mxu0 0.0
    %4346 = vmatprep.subr.mxu0 0.0
    %4347 = vmatpush2.msra.mxu0 0.0
    %4348 = vmatprep.subr.mxu0 0.0
    %4349 = vmatpush2.msra.mxu0 0.0
    %4350 = vmatprep.subr.mxu0 0.0
    %4351 = vmatpush2.msra.mxu0 0.0
    %4352 = vmatprep.subr.mxu0 0.0
    %4353 = vmatpush2.msra.mxu0 0.0
    %4354 = vmatprep.subr.mxu0 0.0
    %4355 = vmatpush2.msra.mxu0 0.0
    %4356 = vmatprep.subr.mxu0 0.0
    %4357 = vmatpush2.msra.mxu0 0.0
    %4358 = vmatprep.subr.mxu0 0.0
    %4359 = vmatpush2.msra.mxu0 0.0
    %4360 = vmatprep.subr.mxu0 0.0
    %4361 = vmatpush2.msra.mxu0 0.0
    %4362 = vmatprep.subr.mxu0 0.0
    %4363 = vmatpush2.msra.mxu0 0.0
    %4364 = vmatprep.subr.mxu0 0.0
    %4365 = vmatpush2.msra.mxu0 0.0
    %4366 = vmatprep.subr.mxu0 0.0
    %4367 = vmatpush2.msra.mxu0 0.0
    %4368 = vmatprep.subr.mxu0 0.0
    %4369 = vmatpush2.msra.mxu0 0.0
    %4370 = vmatprep.subr.mxu0 0.0
    %4371 = vmatpush2.msra.mxu0 0.0
    %4372 = vmatprep.mubr.f32.mxu0 0.0
    %4373 = vmatmul.mubr.f32.gmra.mxu0 %v4306
    %v4374 = vpop.f32.mrf.mxu0
    %v4375 = vadd.f32 0.0, %v4374
    %v4376 = vpop.f32.mrf.mxu0
    %4377 = vdwg.mxu0
    %v4378 = vadd.f32 %v4294, %v4375
    %v4379 = vld [vmem:[#allocation2 + $0x44] sm:$0x3]
    %s4380 = scalar_lea.vmem %s3, 2176
    %v4381 = vld [vmem:[%s4380] sm:$0xff]
    %v4382 = vld [vmem:[%s4380 + $0x8] sm:$0xff]
    %v4383 = vld [vmem:[%s4380 + $0x10] sm:$0xff]
    %v4384 = vld [vmem:[%s4380 + $0x18] sm:$0xff]
    %v4385 = vld [vmem:[%s4380 + $0x20] sm:$0xff]
    %v4386 = vld [vmem:[%s4380 + $0x28] sm:$0xff]
    %v4387 = vld [vmem:[%s4380 + $0x30] sm:$0xff]
    %v4388 = vld [vmem:[%s4380 + $0x38] sm:$0xff]
    %v4390 = vsel %vm1511, %v4379, 0
    %4392 = vmatprep.subr.mxu0 0.0
    %4393 = vmatpush1.msra.mxu0 0.0
    %4394 = vmatprep.subr.mxu0 0.0
    %4395 = vmatpush1.msra.mxu0 0.0
    %4396 = vmatprep.subr.mxu0 0.0
    %4397 = vmatpush1.msra.mxu0 0.0
    %4398 = vmatprep.subr.mxu0 0.0
    %4399 = vmatpush1.msra.mxu0 0.0
    %4400 = vmatprep.subr.mxu0 0.0
    %4401 = vmatpush1.msra.mxu0 0.0
    %4402 = vmatprep.subr.mxu0 0.0
    %4403 = vmatpush1.msra.mxu0 0.0
    %4404 = vmatprep.subr.mxu0 0.0
    %4405 = vmatpush1.msra.mxu0 0.0
    %4406 = vmatprep.subr.mxu0 0.0
    %4407 = vmatpush1.msra.mxu0 0.0
    %4408 = vmatprep.subr.mxu0 0.0
    %4409 = vmatpush1.msra.mxu0 %v4388
    %4410 = vmatprep.subr.mxu0 0.0
    %4411 = vmatpush1.msra.mxu0 %v4387
    %4412 = vmatprep.subr.mxu0 0.0
    %4413 = vmatpush1.msra.mxu0 %v4386
    %4414 = vmatprep.subr.mxu0 0.0
    %4415 = vmatpush1.msra.mxu0 %v4385
    %4416 = vmatprep.subr.mxu0 0.0
    %4417 = vmatpush1.msra.mxu0 %v4384
    %4418 = vmatprep.subr.mxu0 0.0
    %4419 = vmatpush1.msra.mxu0 %v4383
    %4420 = vmatprep.subr.mxu0 0.0
    %4421 = vmatpush1.msra.mxu0 %v4382
    %4422 = vmatprep.subr.mxu0 0.0
    %4423 = vmatpush1.msra.mxu0 %v4381
    %4424 = vmatprep.subr.mxu0 0.0
    %4425 = vmatpush2.msra.mxu0 0.0
    %4426 = vmatprep.subr.mxu0 0.0
    %4427 = vmatpush2.msra.mxu0 0.0
    %4428 = vmatprep.subr.mxu0 0.0
    %4429 = vmatpush2.msra.mxu0 0.0
    %4430 = vmatprep.subr.mxu0 0.0
    %4431 = vmatpush2.msra.mxu0 0.0
    %4432 = vmatprep.subr.mxu0 0.0
    %4433 = vmatpush2.msra.mxu0 0.0
    %4434 = vmatprep.subr.mxu0 0.0
    %4435 = vmatpush2.msra.mxu0 0.0
    %4436 = vmatprep.subr.mxu0 0.0
    %4437 = vmatpush2.msra.mxu0 0.0
    %4438 = vmatprep.subr.mxu0 0.0
    %4439 = vmatpush2.msra.mxu0 0.0
    %4440 = vmatprep.subr.mxu0 0.0
    %4441 = vmatpush2.msra.mxu0 0.0
    %4442 = vmatprep.subr.mxu0 0.0
    %4443 = vmatpush2.msra.mxu0 0.0
    %4444 = vmatprep.subr.mxu0 0.0
    %4445 = vmatpush2.msra.mxu0 0.0
    %4446 = vmatprep.subr.mxu0 0.0
    %4447 = vmatpush2.msra.mxu0 0.0
    %4448 = vmatprep.subr.mxu0 0.0
    %4449 = vmatpush2.msra.mxu0 0.0
    %4450 = vmatprep.subr.mxu0 0.0
    %4451 = vmatpush2.msra.mxu0 0.0
    %4452 = vmatprep.subr.mxu0 0.0
    %4453 = vmatpush2.msra.mxu0 0.0
    %4454 = vmatprep.subr.mxu0 0.0
    %4455 = vmatpush2.msra.mxu0 0.0
    %4456 = vmatprep.mubr.f32.mxu0 0.0
    %4457 = vmatmul.mubr.f32.gmra.mxu0 %v4390
    %v4458 = vpop.f32.mrf.mxu0
    %v4459 = vadd.f32 0.0, %v4458
    %v4460 = vpop.f32.mrf.mxu0
    %4461 = vdwg.mxu0
    %v4462 = vadd.f32 %v4378, %v4459
    %v4463 = vld [vmem:[#allocation2 + $0x46] sm:$0x3]
    %s4464 = scalar_lea.vmem %s3, 2240
    %v4465 = vld [vmem:[%s4464] sm:$0xff]
    %v4466 = vld [vmem:[%s4464 + $0x8] sm:$0xff]
    %v4467 = vld [vmem:[%s4464 + $0x10] sm:$0xff]
    %v4468 = vld [vmem:[%s4464 + $0x18] sm:$0xff]
    %v4469 = vld [vmem:[%s4464 + $0x20] sm:$0xff]
    %v4470 = vld [vmem:[%s4464 + $0x28] sm:$0xff]
    %v4471 = vld [vmem:[%s4464 + $0x30] sm:$0xff]
    %v4472 = vld [vmem:[%s4464 + $0x38] sm:$0xff]
    %v4474 = vsel %vm1511, %v4463, 0
    %4476 = vmatprep.subr.mxu0 0.0
    %4477 = vmatpush1.msra.mxu0 0.0
    %4478 = vmatprep.subr.mxu0 0.0
    %4479 = vmatpush1.msra.mxu0 0.0
    %4480 = vmatprep.subr.mxu0 0.0
    %4481 = vmatpush1.msra.mxu0 0.0
    %4482 = vmatprep.subr.mxu0 0.0
    %4483 = vmatpush1.msra.mxu0 0.0
    %4484 = vmatprep.subr.mxu0 0.0
    %4485 = vmatpush1.msra.mxu0 0.0
    %4486 = vmatprep.subr.mxu0 0.0
    %4487 = vmatpush1.msra.mxu0 0.0
    %4488 = vmatprep.subr.mxu0 0.0
    %4489 = vmatpush1.msra.mxu0 0.0
    %4490 = vmatprep.subr.mxu0 0.0
    %4491 = vmatpush1.msra.mxu0 0.0
    %4492 = vmatprep.subr.mxu0 0.0
    %4493 = vmatpush1.msra.mxu0 %v4472
    %4494 = vmatprep.subr.mxu0 0.0
    %4495 = vmatpush1.msra.mxu0 %v4471
    %4496 = vmatprep.subr.mxu0 0.0
    %4497 = vmatpush1.msra.mxu0 %v4470
    %4498 = vmatprep.subr.mxu0 0.0
    %4499 = vmatpush1.msra.mxu0 %v4469
    %4500 = vmatprep.subr.mxu0 0.0
    %4501 = vmatpush1.msra.mxu0 %v4468
    %4502 = vmatprep.subr.mxu0 0.0
    %4503 = vmatpush1.msra.mxu0 %v4467
    %4504 = vmatprep.subr.mxu0 0.0
    %4505 = vmatpush1.msra.mxu0 %v4466
    %4506 = vmatprep.subr.mxu0 0.0
    %4507 = vmatpush1.msra.mxu0 %v4465
    %4508 = vmatprep.subr.mxu0 0.0
    %4509 = vmatpush2.msra.mxu0 0.0
    %4510 = vmatprep.subr.mxu0 0.0
    %4511 = vmatpush2.msra.mxu0 0.0
    %4512 = vmatprep.subr.mxu0 0.0
    %4513 = vmatpush2.msra.mxu0 0.0
    %4514 = vmatprep.subr.mxu0 0.0
    %4515 = vmatpush2.msra.mxu0 0.0
    %4516 = vmatprep.subr.mxu0 0.0
    %4517 = vmatpush2.msra.mxu0 0.0
    %4518 = vmatprep.subr.mxu0 0.0
    %4519 = vmatpush2.msra.mxu0 0.0
    %4520 = vmatprep.subr.mxu0 0.0
    %4521 = vmatpush2.msra.mxu0 0.0
    %4522 = vmatprep.subr.mxu0 0.0
    %4523 = vmatpush2.msra.mxu0 0.0
    %4524 = vmatprep.subr.mxu0 0.0
    %4525 = vmatpush2.msra.mxu0 0.0
    %4526 = vmatprep.subr.mxu0 0.0
    %4527 = vmatpush2.msra.mxu0 0.0
    %4528 = vmatprep.subr.mxu0 0.0
    %4529 = vmatpush2.msra.mxu0 0.0
    %4530 = vmatprep.subr.mxu0 0.0
    %4531 = vmatpush2.msra.mxu0 0.0
    %4532 = vmatprep.subr.mxu0 0.0
    %4533 = vmatpush2.msra.mxu0 0.0
    %4534 = vmatprep.subr.mxu0 0.0
    %4535 = vmatpush2.msra.mxu0 0.0
    %4536 = vmatprep.subr.mxu0 0.0
    %4537 = vmatpush2.msra.mxu0 0.0
    %4538 = vmatprep.subr.mxu0 0.0
    %4539 = vmatpush2.msra.mxu0 0.0
    %4540 = vmatprep.mubr.f32.mxu0 0.0
    %4541 = vmatmul.mubr.f32.gmra.mxu0 %v4474
    %v4542 = vpop.f32.mrf.mxu0
    %v4543 = vadd.f32 0.0, %v4542
    %v4544 = vpop.f32.mrf.mxu0
    %4545 = vdwg.mxu0
    %v4546 = vadd.f32 %v4462, %v4543
    %v4547 = vld [vmem:[#allocation2 + $0x48] sm:$0x3]
    %s4548 = scalar_lea.vmem %s3, 2304
    %v4549 = vld [vmem:[%s4548] sm:$0xff]
    %v4550 = vld [vmem:[%s4548 + $0x8] sm:$0xff]
    %v4551 = vld [vmem:[%s4548 + $0x10] sm:$0xff]
    %v4552 = vld [vmem:[%s4548 + $0x18] sm:$0xff]
    %v4553 = vld [vmem:[%s4548 + $0x20] sm:$0xff]
    %v4554 = vld [vmem:[%s4548 + $0x28] sm:$0xff]
    %v4555 = vld [vmem:[%s4548 + $0x30] sm:$0xff]
    %v4556 = vld [vmem:[%s4548 + $0x38] sm:$0xff]
    %v4558 = vsel %vm1511, %v4547, 0
    %4560 = vmatprep.subr.mxu0 0.0
    %4561 = vmatpush1.msra.mxu0 0.0
    %4562 = vmatprep.subr.mxu0 0.0
    %4563 = vmatpush1.msra.mxu0 0.0
    %4564 = vmatprep.subr.mxu0 0.0
    %4565 = vmatpush1.msra.mxu0 0.0
    %4566 = vmatprep.subr.mxu0 0.0
    %4567 = vmatpush1.msra.mxu0 0.0
    %4568 = vmatprep.subr.mxu0 0.0
    %4569 = vmatpush1.msra.mxu0 0.0
    %4570 = vmatprep.subr.mxu0 0.0
    %4571 = vmatpush1.msra.mxu0 0.0
    %4572 = vmatprep.subr.mxu0 0.0
    %4573 = vmatpush1.msra.mxu0 0.0
    %4574 = vmatprep.subr.mxu0 0.0
    %4575 = vmatpush1.msra.mxu0 0.0
    %4576 = vmatprep.subr.mxu0 0.0
    %4577 = vmatpush1.msra.mxu0 %v4556
    %4578 = vmatprep.subr.mxu0 0.0
    %4579 = vmatpush1.msra.mxu0 %v4555
    %4580 = vmatprep.subr.mxu0 0.0
    %4581 = vmatpush1.msra.mxu0 %v4554
    %4582 = vmatprep.subr.mxu0 0.0
    %4583 = vmatpush1.msra.mxu0 %v4553
    %4584 = vmatprep.subr.mxu0 0.0
    %4585 = vmatpush1.msra.mxu0 %v4552
    %4586 = vmatprep.subr.mxu0 0.0
    %4587 = vmatpush1.msra.mxu0 %v4551
    %4588 = vmatprep.subr.mxu0 0.0
    %4589 = vmatpush1.msra.mxu0 %v4550
    %4590 = vmatprep.subr.mxu0 0.0
    %4591 = vmatpush1.msra.mxu0 %v4549
    %4592 = vmatprep.subr.mxu0 0.0
    %4593 = vmatpush2.msra.mxu0 0.0
    %4594 = vmatprep.subr.mxu0 0.0
    %4595 = vmatpush2.msra.mxu0 0.0
    %4596 = vmatprep.subr.mxu0 0.0
    %4597 = vmatpush2.msra.mxu0 0.0
    %4598 = vmatprep.subr.mxu0 0.0
    %4599 = vmatpush2.msra.mxu0 0.0
    %4600 = vmatprep.subr.mxu0 0.0
    %4601 = vmatpush2.msra.mxu0 0.0
    %4602 = vmatprep.subr.mxu0 0.0
    %4603 = vmatpush2.msra.mxu0 0.0
    %4604 = vmatprep.subr.mxu0 0.0
    %4605 = vmatpush2.msra.mxu0 0.0
    %4606 = vmatprep.subr.mxu0 0.0
    %4607 = vmatpush2.msra.mxu0 0.0
    %4608 = vmatprep.subr.mxu0 0.0
    %4609 = vmatpush2.msra.mxu0 0.0
    %4610 = vmatprep.subr.mxu0 0.0
    %4611 = vmatpush2.msra.mxu0 0.0
    %4612 = vmatprep.subr.mxu0 0.0
    %4613 = vmatpush2.msra.mxu0 0.0
    %4614 = vmatprep.subr.mxu0 0.0
    %4615 = vmatpush2.msra.mxu0 0.0
    %4616 = vmatprep.subr.mxu0 0.0
    %4617 = vmatpush2.msra.mxu0 0.0
    %4618 = vmatprep.subr.mxu0 0.0
    %4619 = vmatpush2.msra.mxu0 0.0
    %4620 = vmatprep.subr.mxu0 0.0
    %4621 = vmatpush2.msra.mxu0 0.0
    %4622 = vmatprep.subr.mxu0 0.0
    %4623 = vmatpush2.msra.mxu0 0.0
    %4624 = vmatprep.mubr.f32.mxu0 0.0
    %4625 = vmatmul.mubr.f32.gmra.mxu0 %v4558
    %v4626 = vpop.f32.mrf.mxu0
    %v4627 = vadd.f32 0.0, %v4626
    %v4628 = vpop.f32.mrf.mxu0
    %4629 = vdwg.mxu0
    %v4630 = vadd.f32 %v4546, %v4627
    %v4631 = vld [vmem:[#allocation2 + $0x4a] sm:$0x3]
    %s4632 = scalar_lea.vmem %s3, 2368
    %v4633 = vld [vmem:[%s4632] sm:$0xff]
    %v4634 = vld [vmem:[%s4632 + $0x8] sm:$0xff]
    %v4635 = vld [vmem:[%s4632 + $0x10] sm:$0xff]
    %v4636 = vld [vmem:[%s4632 + $0x18] sm:$0xff]
    %v4637 = vld [vmem:[%s4632 + $0x20] sm:$0xff]
    %v4638 = vld [vmem:[%s4632 + $0x28] sm:$0xff]
    %v4639 = vld [vmem:[%s4632 + $0x30] sm:$0xff]
    %v4640 = vld [vmem:[%s4632 + $0x38] sm:$0xff]
    %v4642 = vsel %vm1511, %v4631, 0
    %4644 = vmatprep.subr.mxu0 0.0
    %4645 = vmatpush1.msra.mxu0 0.0
    %4646 = vmatprep.subr.mxu0 0.0
    %4647 = vmatpush1.msra.mxu0 0.0
    %4648 = vmatprep.subr.mxu0 0.0
    %4649 = vmatpush1.msra.mxu0 0.0
    %4650 = vmatprep.subr.mxu0 0.0
    %4651 = vmatpush1.msra.mxu0 0.0
    %4652 = vmatprep.subr.mxu0 0.0
    %4653 = vmatpush1.msra.mxu0 0.0
    %4654 = vmatprep.subr.mxu0 0.0
    %4655 = vmatpush1.msra.mxu0 0.0
    %4656 = vmatprep.subr.mxu0 0.0
    %4657 = vmatpush1.msra.mxu0 0.0
    %4658 = vmatprep.subr.mxu0 0.0
    %4659 = vmatpush1.msra.mxu0 0.0
    %4660 = vmatprep.subr.mxu0 0.0
    %4661 = vmatpush1.msra.mxu0 %v4640
    %4662 = vmatprep.subr.mxu0 0.0
    %4663 = vmatpush1.msra.mxu0 %v4639
    %4664 = vmatprep.subr.mxu0 0.0
    %4665 = vmatpush1.msra.mxu0 %v4638
    %4666 = vmatprep.subr.mxu0 0.0
    %4667 = vmatpush1.msra.mxu0 %v4637
    %4668 = vmatprep.subr.mxu0 0.0
    %4669 = vmatpush1.msra.mxu0 %v4636
    %4670 = vmatprep.subr.mxu0 0.0
    %4671 = vmatpush1.msra.mxu0 %v4635
    %4672 = vmatprep.subr.mxu0 0.0
    %4673 = vmatpush1.msra.mxu0 %v4634
    %4674 = vmatprep.subr.mxu0 0.0
    %4675 = vmatpush1.msra.mxu0 %v4633
    %4676 = vmatprep.subr.mxu0 0.0
    %4677 = vmatpush2.msra.mxu0 0.0
    %4678 = vmatprep.subr.mxu0 0.0
    %4679 = vmatpush2.msra.mxu0 0.0
    %4680 = vmatprep.subr.mxu0 0.0
    %4681 = vmatpush2.msra.mxu0 0.0
    %4682 = vmatprep.subr.mxu0 0.0
    %4683 = vmatpush2.msra.mxu0 0.0
    %4684 = vmatprep.subr.mxu0 0.0
    %4685 = vmatpush2.msra.mxu0 0.0
    %4686 = vmatprep.subr.mxu0 0.0
    %4687 = vmatpush2.msra.mxu0 0.0
    %4688 = vmatprep.subr.mxu0 0.0
    %4689 = vmatpush2.msra.mxu0 0.0
    %4690 = vmatprep.subr.mxu0 0.0
    %4691 = vmatpush2.msra.mxu0 0.0
    %4692 = vmatprep.subr.mxu0 0.0
    %4693 = vmatpush2.msra.mxu0 0.0
    %4694 = vmatprep.subr.mxu0 0.0
    %4695 = vmatpush2.msra.mxu0 0.0
    %4696 = vmatprep.subr.mxu0 0.0
    %4697 = vmatpush2.msra.mxu0 0.0
    %4698 = vmatprep.subr.mxu0 0.0
    %4699 = vmatpush2.msra.mxu0 0.0
    %4700 = vmatprep.subr.mxu0 0.0
    %4701 = vmatpush2.msra.mxu0 0.0
    %4702 = vmatprep.subr.mxu0 0.0
    %4703 = vmatpush2.msra.mxu0 0.0
    %4704 = vmatprep.subr.mxu0 0.0
    %4705 = vmatpush2.msra.mxu0 0.0
    %4706 = vmatprep.subr.mxu0 0.0
    %4707 = vmatpush2.msra.mxu0 0.0
    %4708 = vmatprep.mubr.f32.mxu0 0.0
    %4709 = vmatmul.mubr.f32.gmra.mxu0 %v4642
    %v4710 = vpop.f32.mrf.mxu0
    %v4711 = vadd.f32 0.0, %v4710
    %v4712 = vpop.f32.mrf.mxu0
    %4713 = vdwg.mxu0
    %v4714 = vadd.f32 %v4630, %v4711
    %v4715 = vld [vmem:[#allocation2 + $0x4c] sm:$0x3]
    %s4716 = scalar_lea.vmem %s3, 2432
    %v4717 = vld [vmem:[%s4716] sm:$0xff]
    %v4718 = vld [vmem:[%s4716 + $0x8] sm:$0xff]
    %v4719 = vld [vmem:[%s4716 + $0x10] sm:$0xff]
    %v4720 = vld [vmem:[%s4716 + $0x18] sm:$0xff]
    %v4721 = vld [vmem:[%s4716 + $0x20] sm:$0xff]
    %v4722 = vld [vmem:[%s4716 + $0x28] sm:$0xff]
    %v4723 = vld [vmem:[%s4716 + $0x30] sm:$0xff]
    %v4724 = vld [vmem:[%s4716 + $0x38] sm:$0xff]
    %v4726 = vsel %vm1511, %v4715, 0
    %4728 = vmatprep.subr.mxu0 0.0
    %4729 = vmatpush1.msra.mxu0 0.0
    %4730 = vmatprep.subr.mxu0 0.0
    %4731 = vmatpush1.msra.mxu0 0.0
    %4732 = vmatprep.subr.mxu0 0.0
    %4733 = vmatpush1.msra.mxu0 0.0
    %4734 = vmatprep.subr.mxu0 0.0
    %4735 = vmatpush1.msra.mxu0 0.0
    %4736 = vmatprep.subr.mxu0 0.0
    %4737 = vmatpush1.msra.mxu0 0.0
    %4738 = vmatprep.subr.mxu0 0.0
    %4739 = vmatpush1.msra.mxu0 0.0
    %4740 = vmatprep.subr.mxu0 0.0
    %4741 = vmatpush1.msra.mxu0 0.0
    %4742 = vmatprep.subr.mxu0 0.0
    %4743 = vmatpush1.msra.mxu0 0.0
    %4744 = vmatprep.subr.mxu0 0.0
    %4745 = vmatpush1.msra.mxu0 %v4724
    %4746 = vmatprep.subr.mxu0 0.0
    %4747 = vmatpush1.msra.mxu0 %v4723
    %4748 = vmatprep.subr.mxu0 0.0
    %4749 = vmatpush1.msra.mxu0 %v4722
    %4750 = vmatprep.subr.mxu0 0.0
    %4751 = vmatpush1.msra.mxu0 %v4721
    %4752 = vmatprep.subr.mxu0 0.0
    %4753 = vmatpush1.msra.mxu0 %v4720
    %4754 = vmatprep.subr.mxu0 0.0
    %4755 = vmatpush1.msra.mxu0 %v4719
    %4756 = vmatprep.subr.mxu0 0.0
    %4757 = vmatpush1.msra.mxu0 %v4718
    %4758 = vmatprep.subr.mxu0 0.0
    %4759 = vmatpush1.msra.mxu0 %v4717
    %4760 = vmatprep.subr.mxu0 0.0
    %4761 = vmatpush2.msra.mxu0 0.0
    %4762 = vmatprep.subr.mxu0 0.0
    %4763 = vmatpush2.msra.mxu0 0.0
    %4764 = vmatprep.subr.mxu0 0.0
    %4765 = vmatpush2.msra.mxu0 0.0
    %4766 = vmatprep.subr.mxu0 0.0
    %4767 = vmatpush2.msra.mxu0 0.0
    %4768 = vmatprep.subr.mxu0 0.0
    %4769 = vmatpush2.msra.mxu0 0.0
    %4770 = vmatprep.subr.mxu0 0.0
    %4771 = vmatpush2.msra.mxu0 0.0
    %4772 = vmatprep.subr.mxu0 0.0
    %4773 = vmatpush2.msra.mxu0 0.0
    %4774 = vmatprep.subr.mxu0 0.0
    %4775 = vmatpush2.msra.mxu0 0.0
    %4776 = vmatprep.subr.mxu0 0.0
    %4777 = vmatpush2.msra.mxu0 0.0
    %4778 = vmatprep.subr.mxu0 0.0
    %4779 = vmatpush2.msra.mxu0 0.0
    %4780 = vmatprep.subr.mxu0 0.0
    %4781 = vmatpush2.msra.mxu0 0.0
    %4782 = vmatprep.subr.mxu0 0.0
    %4783 = vmatpush2.msra.mxu0 0.0
    %4784 = vmatprep.subr.mxu0 0.0
    %4785 = vmatpush2.msra.mxu0 0.0
    %4786 = vmatprep.subr.mxu0 0.0
    %4787 = vmatpush2.msra.mxu0 0.0
    %4788 = vmatprep.subr.mxu0 0.0
    %4789 = vmatpush2.msra.mxu0 0.0
    %4790 = vmatprep.subr.mxu0 0.0
    %4791 = vmatpush2.msra.mxu0 0.0
    %4792 = vmatprep.mubr.f32.mxu0 0.0
    %4793 = vmatmul.mubr.f32.gmra.mxu0 %v4726
    %v4794 = vpop.f32.mrf.mxu0
    %v4795 = vadd.f32 0.0, %v4794
    %v4796 = vpop.f32.mrf.mxu0
    %4797 = vdwg.mxu0
    %v4798 = vadd.f32 %v4714, %v4795
    %v4799 = vld [vmem:[#allocation2 + $0x4e] sm:$0x3]
    %s4800 = scalar_lea.vmem %s3, 2496
    %v4801 = vld [vmem:[%s4800] sm:$0xff]
    %v4802 = vld [vmem:[%s4800 + $0x8] sm:$0xff]
    %v4803 = vld [vmem:[%s4800 + $0x10] sm:$0xff]
    %v4804 = vld [vmem:[%s4800 + $0x18] sm:$0xff]
    %v4805 = vld [vmem:[%s4800 + $0x20] sm:$0xff]
    %v4806 = vld [vmem:[%s4800 + $0x28] sm:$0xff]
    %v4807 = vld [vmem:[%s4800 + $0x30] sm:$0xff]
    %v4808 = vld [vmem:[%s4800 + $0x38] sm:$0xff]
    %v4810 = vsel %vm1511, %v4799, 0
    %4812 = vmatprep.subr.mxu0 0.0
    %4813 = vmatpush1.msra.mxu0 0.0
    %4814 = vmatprep.subr.mxu0 0.0
    %4815 = vmatpush1.msra.mxu0 0.0
    %4816 = vmatprep.subr.mxu0 0.0
    %4817 = vmatpush1.msra.mxu0 0.0
    %4818 = vmatprep.subr.mxu0 0.0
    %4819 = vmatpush1.msra.mxu0 0.0
    %4820 = vmatprep.subr.mxu0 0.0
    %4821 = vmatpush1.msra.mxu0 0.0
    %4822 = vmatprep.subr.mxu0 0.0
    %4823 = vmatpush1.msra.mxu0 0.0
    %4824 = vmatprep.subr.mxu0 0.0
    %4825 = vmatpush1.msra.mxu0 0.0
    %4826 = vmatprep.subr.mxu0 0.0
    %4827 = vmatpush1.msra.mxu0 0.0
    %4828 = vmatprep.subr.mxu0 0.0
    %4829 = vmatpush1.msra.mxu0 %v4808
    %4830 = vmatprep.subr.mxu0 0.0
    %4831 = vmatpush1.msra.mxu0 %v4807
    %4832 = vmatprep.subr.mxu0 0.0
    %4833 = vmatpush1.msra.mxu0 %v4806
    %4834 = vmatprep.subr.mxu0 0.0
    %4835 = vmatpush1.msra.mxu0 %v4805
    %4836 = vmatprep.subr.mxu0 0.0
    %4837 = vmatpush1.msra.mxu0 %v4804
    %4838 = vmatprep.subr.mxu0 0.0
    %4839 = vmatpush1.msra.mxu0 %v4803
    %4840 = vmatprep.subr.mxu0 0.0
    %4841 = vmatpush1.msra.mxu0 %v4802
    %4842 = vmatprep.subr.mxu0 0.0
    %4843 = vmatpush1.msra.mxu0 %v4801
    %4844 = vmatprep.subr.mxu0 0.0
    %4845 = vmatpush2.msra.mxu0 0.0
    %4846 = vmatprep.subr.mxu0 0.0
    %4847 = vmatpush2.msra.mxu0 0.0
    %4848 = vmatprep.subr.mxu0 0.0
    %4849 = vmatpush2.msra.mxu0 0.0
    %4850 = vmatprep.subr.mxu0 0.0
    %4851 = vmatpush2.msra.mxu0 0.0
    %4852 = vmatprep.subr.mxu0 0.0
    %4853 = vmatpush2.msra.mxu0 0.0
    %4854 = vmatprep.subr.mxu0 0.0
    %4855 = vmatpush2.msra.mxu0 0.0
    %4856 = vmatprep.subr.mxu0 0.0
    %4857 = vmatpush2.msra.mxu0 0.0
    %4858 = vmatprep.subr.mxu0 0.0
    %4859 = vmatpush2.msra.mxu0 0.0
    %4860 = vmatprep.subr.mxu0 0.0
    %4861 = vmatpush2.msra.mxu0 0.0
    %4862 = vmatprep.subr.mxu0 0.0
    %4863 = vmatpush2.msra.mxu0 0.0
    %4864 = vmatprep.subr.mxu0 0.0
    %4865 = vmatpush2.msra.mxu0 0.0
    %4866 = vmatprep.subr.mxu0 0.0
    %4867 = vmatpush2.msra.mxu0 0.0
    %4868 = vmatprep.subr.mxu0 0.0
    %4869 = vmatpush2.msra.mxu0 0.0
    %4870 = vmatprep.subr.mxu0 0.0
    %4871 = vmatpush2.msra.mxu0 0.0
    %4872 = vmatprep.subr.mxu0 0.0
    %4873 = vmatpush2.msra.mxu0 0.0
    %4874 = vmatprep.subr.mxu0 0.0
    %4875 = vmatpush2.msra.mxu0 0.0
    %4876 = vmatprep.mubr.f32.mxu0 0.0
    %4877 = vmatmul.mubr.f32.gmra.mxu0 %v4810
    %v4878 = vpop.f32.mrf.mxu0
    %v4879 = vadd.f32 0.0, %v4878
    %v4880 = vpop.f32.mrf.mxu0
    %4881 = vdwg.mxu0
    %v4882 = vadd.f32 %v4798, %v4879
    %v4883 = vld [vmem:[#allocation2 + $0x50] sm:$0x3]
    %s4884 = scalar_lea.vmem %s3, 2560
    %v4885 = vld [vmem:[%s4884] sm:$0xff]
    %v4886 = vld [vmem:[%s4884 + $0x8] sm:$0xff]
    %v4887 = vld [vmem:[%s4884 + $0x10] sm:$0xff]
    %v4888 = vld [vmem:[%s4884 + $0x18] sm:$0xff]
    %v4889 = vld [vmem:[%s4884 + $0x20] sm:$0xff]
    %v4890 = vld [vmem:[%s4884 + $0x28] sm:$0xff]
    %v4891 = vld [vmem:[%s4884 + $0x30] sm:$0xff]
    %v4892 = vld [vmem:[%s4884 + $0x38] sm:$0xff]
    %v4894 = vsel %vm1511, %v4883, 0
    %4896 = vmatprep.subr.mxu0 0.0
    %4897 = vmatpush1.msra.mxu0 0.0
    %4898 = vmatprep.subr.mxu0 0.0
    %4899 = vmatpush1.msra.mxu0 0.0
    %4900 = vmatprep.subr.mxu0 0.0
    %4901 = vmatpush1.msra.mxu0 0.0
    %4902 = vmatprep.subr.mxu0 0.0
    %4903 = vmatpush1.msra.mxu0 0.0
    %4904 = vmatprep.subr.mxu0 0.0
    %4905 = vmatpush1.msra.mxu0 0.0
    %4906 = vmatprep.subr.mxu0 0.0
    %4907 = vmatpush1.msra.mxu0 0.0
    %4908 = vmatprep.subr.mxu0 0.0
    %4909 = vmatpush1.msra.mxu0 0.0
    %4910 = vmatprep.subr.mxu0 0.0
    %4911 = vmatpush1.msra.mxu0 0.0
    %4912 = vmatprep.subr.mxu0 0.0
    %4913 = vmatpush1.msra.mxu0 %v4892
    %4914 = vmatprep.subr.mxu0 0.0
    %4915 = vmatpush1.msra.mxu0 %v4891
    %4916 = vmatprep.subr.mxu0 0.0
    %4917 = vmatpush1.msra.mxu0 %v4890
    %4918 = vmatprep.subr.mxu0 0.0
    %4919 = vmatpush1.msra.mxu0 %v4889
    %4920 = vmatprep.subr.mxu0 0.0
    %4921 = vmatpush1.msra.mxu0 %v4888
    %4922 = vmatprep.subr.mxu0 0.0
    %4923 = vmatpush1.msra.mxu0 %v4887
    %4924 = vmatprep.subr.mxu0 0.0
    %4925 = vmatpush1.msra.mxu0 %v4886
    %4926 = vmatprep.subr.mxu0 0.0
    %4927 = vmatpush1.msra.mxu0 %v4885
    %4928 = vmatprep.subr.mxu0 0.0
    %4929 = vmatpush2.msra.mxu0 0.0
    %4930 = vmatprep.subr.mxu0 0.0
    %4931 = vmatpush2.msra.mxu0 0.0
    %4932 = vmatprep.subr.mxu0 0.0
    %4933 = vmatpush2.msra.mxu0 0.0
    %4934 = vmatprep.subr.mxu0 0.0
    %4935 = vmatpush2.msra.mxu0 0.0
    %4936 = vmatprep.subr.mxu0 0.0
    %4937 = vmatpush2.msra.mxu0 0.0
    %4938 = vmatprep.subr.mxu0 0.0
    %4939 = vmatpush2.msra.mxu0 0.0
    %4940 = vmatprep.subr.mxu0 0.0
    %4941 = vmatpush2.msra.mxu0 0.0
    %4942 = vmatprep.subr.mxu0 0.0
    %4943 = vmatpush2.msra.mxu0 0.0
    %4944 = vmatprep.subr.mxu0 0.0
    %4945 = vmatpush2.msra.mxu0 0.0
    %4946 = vmatprep.subr.mxu0 0.0
    %4947 = vmatpush2.msra.mxu0 0.0
    %4948 = vmatprep.subr.mxu0 0.0
    %4949 = vmatpush2.msra.mxu0 0.0
    %4950 = vmatprep.subr.mxu0 0.0
    %4951 = vmatpush2.msra.mxu0 0.0
    %4952 = vmatprep.subr.mxu0 0.0
    %4953 = vmatpush2.msra.mxu0 0.0
    %4954 = vmatprep.subr.mxu0 0.0
    %4955 = vmatpush2.msra.mxu0 0.0
    %4956 = vmatprep.subr.mxu0 0.0
    %4957 = vmatpush2.msra.mxu0 0.0
    %4958 = vmatprep.subr.mxu0 0.0
    %4959 = vmatpush2.msra.mxu0 0.0
    %4960 = vmatprep.mubr.f32.mxu0 0.0
    %4961 = vmatmul.mubr.f32.gmra.mxu0 %v4894
    %v4962 = vpop.f32.mrf.mxu0
    %v4963 = vadd.f32 0.0, %v4962
    %v4964 = vpop.f32.mrf.mxu0
    %4965 = vdwg.mxu0
    %v4966 = vadd.f32 %v4882, %v4963
    %v4967 = vld [vmem:[#allocation2 + $0x52] sm:$0x3]
    %s4968 = scalar_lea.vmem %s3, 2624
    %v4969 = vld [vmem:[%s4968] sm:$0xff]
    %v4970 = vld [vmem:[%s4968 + $0x8] sm:$0xff]
    %v4971 = vld [vmem:[%s4968 + $0x10] sm:$0xff]
    %v4972 = vld [vmem:[%s4968 + $0x18] sm:$0xff]
    %v4973 = vld [vmem:[%s4968 + $0x20] sm:$0xff]
    %v4974 = vld [vmem:[%s4968 + $0x28] sm:$0xff]
    %v4975 = vld [vmem:[%s4968 + $0x30] sm:$0xff]
    %v4976 = vld [vmem:[%s4968 + $0x38] sm:$0xff]
    %v4978 = vsel %vm1511, %v4967, 0
    %4980 = vmatprep.subr.mxu0 0.0
    %4981 = vmatpush1.msra.mxu0 0.0
    %4982 = vmatprep.subr.mxu0 0.0
    %4983 = vmatpush1.msra.mxu0 0.0
    %4984 = vmatprep.subr.mxu0 0.0
    %4985 = vmatpush1.msra.mxu0 0.0
    %4986 = vmatprep.subr.mxu0 0.0
    %4987 = vmatpush1.msra.mxu0 0.0
    %4988 = vmatprep.subr.mxu0 0.0
    %4989 = vmatpush1.msra.mxu0 0.0
    %4990 = vmatprep.subr.mxu0 0.0
    %4991 = vmatpush1.msra.mxu0 0.0
    %4992 = vmatprep.subr.mxu0 0.0
    %4993 = vmatpush1.msra.mxu0 0.0
    %4994 = vmatprep.subr.mxu0 0.0
    %4995 = vmatpush1.msra.mxu0 0.0
    %4996 = vmatprep.subr.mxu0 0.0
    %4997 = vmatpush1.msra.mxu0 %v4976
    %4998 = vmatprep.subr.mxu0 0.0
    %4999 = vmatpush1.msra.mxu0 %v4975
    %5000 = vmatprep.subr.mxu0 0.0
    %5001 = vmatpush1.msra.mxu0 %v4974
    %5002 = vmatprep.subr.mxu0 0.0
    %5003 = vmatpush1.msra.mxu0 %v4973
    %5004 = vmatprep.subr.mxu0 0.0
    %5005 = vmatpush1.msra.mxu0 %v4972
    %5006 = vmatprep.subr.mxu0 0.0
    %5007 = vmatpush1.msra.mxu0 %v4971
    %5008 = vmatprep.subr.mxu0 0.0
    %5009 = vmatpush1.msra.mxu0 %v4970
    %5010 = vmatprep.subr.mxu0 0.0
    %5011 = vmatpush1.msra.mxu0 %v4969
    %5012 = vmatprep.subr.mxu0 0.0
    %5013 = vmatpush2.msra.mxu0 0.0
    %5014 = vmatprep.subr.mxu0 0.0
    %5015 = vmatpush2.msra.mxu0 0.0
    %5016 = vmatprep.subr.mxu0 0.0
    %5017 = vmatpush2.msra.mxu0 0.0
    %5018 = vmatprep.subr.mxu0 0.0
    %5019 = vmatpush2.msra.mxu0 0.0
    %5020 = vmatprep.subr.mxu0 0.0
    %5021 = vmatpush2.msra.mxu0 0.0
    %5022 = vmatprep.subr.mxu0 0.0
    %5023 = vmatpush2.msra.mxu0 0.0
    %5024 = vmatprep.subr.mxu0 0.0
    %5025 = vmatpush2.msra.mxu0 0.0
    %5026 = vmatprep.subr.mxu0 0.0
    %5027 = vmatpush2.msra.mxu0 0.0
    %5028 = vmatprep.subr.mxu0 0.0
    %5029 = vmatpush2.msra.mxu0 0.0
    %5030 = vmatprep.subr.mxu0 0.0
    %5031 = vmatpush2.msra.mxu0 0.0
    %5032 = vmatprep.subr.mxu0 0.0
    %5033 = vmatpush2.msra.mxu0 0.0
    %5034 = vmatprep.subr.mxu0 0.0
    %5035 = vmatpush2.msra.mxu0 0.0
    %5036 = vmatprep.subr.mxu0 0.0
    %5037 = vmatpush2.msra.mxu0 0.0
    %5038 = vmatprep.subr.mxu0 0.0
    %5039 = vmatpush2.msra.mxu0 0.0
    %5040 = vmatprep.subr.mxu0 0.0
    %5041 = vmatpush2.msra.mxu0 0.0
    %5042 = vmatprep.subr.mxu0 0.0
    %5043 = vmatpush2.msra.mxu0 0.0
    %5044 = vmatprep.mubr.f32.mxu0 0.0
    %5045 = vmatmul.mubr.f32.gmra.mxu0 %v4978
    %v5046 = vpop.f32.mrf.mxu0
    %v5047 = vadd.f32 0.0, %v5046
    %v5048 = vpop.f32.mrf.mxu0
    %5049 = vdwg.mxu0
    %v5050 = vadd.f32 %v4966, %v5047
    %v5051 = vld [vmem:[#allocation2 + $0x54] sm:$0x3]
    %s5052 = scalar_lea.vmem %s3, 2688
    %v5053 = vld [vmem:[%s5052] sm:$0xff]
    %v5054 = vld [vmem:[%s5052 + $0x8] sm:$0xff]
    %v5055 = vld [vmem:[%s5052 + $0x10] sm:$0xff]
    %v5056 = vld [vmem:[%s5052 + $0x18] sm:$0xff]
    %v5057 = vld [vmem:[%s5052 + $0x20] sm:$0xff]
    %v5058 = vld [vmem:[%s5052 + $0x28] sm:$0xff]
    %v5059 = vld [vmem:[%s5052 + $0x30] sm:$0xff]
    %v5060 = vld [vmem:[%s5052 + $0x38] sm:$0xff]
    %v5062 = vsel %vm1511, %v5051, 0
    %5064 = vmatprep.subr.mxu0 0.0
    %5065 = vmatpush1.msra.mxu0 0.0
    %5066 = vmatprep.subr.mxu0 0.0
    %5067 = vmatpush1.msra.mxu0 0.0
    %5068 = vmatprep.subr.mxu0 0.0
    %5069 = vmatpush1.msra.mxu0 0.0
    %5070 = vmatprep.subr.mxu0 0.0
    %5071 = vmatpush1.msra.mxu0 0.0
    %5072 = vmatprep.subr.mxu0 0.0
    %5073 = vmatpush1.msra.mxu0 0.0
    %5074 = vmatprep.subr.mxu0 0.0
    %5075 = vmatpush1.msra.mxu0 0.0
    %5076 = vmatprep.subr.mxu0 0.0
    %5077 = vmatpush1.msra.mxu0 0.0
    %5078 = vmatprep.subr.mxu0 0.0
    %5079 = vmatpush1.msra.mxu0 0.0
    %5080 = vmatprep.subr.mxu0 0.0
    %5081 = vmatpush1.msra.mxu0 %v5060
    %5082 = vmatprep.subr.mxu0 0.0
    %5083 = vmatpush1.msra.mxu0 %v5059
    %5084 = vmatprep.subr.mxu0 0.0
    %5085 = vmatpush1.msra.mxu0 %v5058
    %5086 = vmatprep.subr.mxu0 0.0
    %5087 = vmatpush1.msra.mxu0 %v5057
    %5088 = vmatprep.subr.mxu0 0.0
    %5089 = vmatpush1.msra.mxu0 %v5056
    %5090 = vmatprep.subr.mxu0 0.0
    %5091 = vmatpush1.msra.mxu0 %v5055
    %5092 = vmatprep.subr.mxu0 0.0
    %5093 = vmatpush1.msra.mxu0 %v5054
    %5094 = vmatprep.subr.mxu0 0.0
    %5095 = vmatpush1.msra.mxu0 %v5053
    %5096 = vmatprep.subr.mxu0 0.0
    %5097 = vmatpush2.msra.mxu0 0.0
    %5098 = vmatprep.subr.mxu0 0.0
    %5099 = vmatpush2.msra.mxu0 0.0
    %5100 = vmatprep.subr.mxu0 0.0
    %5101 = vmatpush2.msra.mxu0 0.0
    %5102 = vmatprep.subr.mxu0 0.0
    %5103 = vmatpush2.msra.mxu0 0.0
    %5104 = vmatprep.subr.mxu0 0.0
    %5105 = vmatpush2.msra.mxu0 0.0
    %5106 = vmatprep.subr.mxu0 0.0
    %5107 = vmatpush2.msra.mxu0 0.0
    %5108 = vmatprep.subr.mxu0 0.0
    %5109 = vmatpush2.msra.mxu0 0.0
    %5110 = vmatprep.subr.mxu0 0.0
    %5111 = vmatpush2.msra.mxu0 0.0
    %5112 = vmatprep.subr.mxu0 0.0
    %5113 = vmatpush2.msra.mxu0 0.0
    %5114 = vmatprep.subr.mxu0 0.0
    %5115 = vmatpush2.msra.mxu0 0.0
    %5116 = vmatprep.subr.mxu0 0.0
    %5117 = vmatpush2.msra.mxu0 0.0
    %5118 = vmatprep.subr.mxu0 0.0
    %5119 = vmatpush2.msra.mxu0 0.0
    %5120 = vmatprep.subr.mxu0 0.0
    %5121 = vmatpush2.msra.mxu0 0.0
    %5122 = vmatprep.subr.mxu0 0.0
    %5123 = vmatpush2.msra.mxu0 0.0
    %5124 = vmatprep.subr.mxu0 0.0
    %5125 = vmatpush2.msra.mxu0 0.0
    %5126 = vmatprep.subr.mxu0 0.0
    %5127 = vmatpush2.msra.mxu0 0.0
    %5128 = vmatprep.mubr.f32.mxu0 0.0
    %5129 = vmatmul.mubr.f32.gmra.mxu0 %v5062
    %v5130 = vpop.f32.mrf.mxu0
    %v5131 = vadd.f32 0.0, %v5130
    %v5132 = vpop.f32.mrf.mxu0
    %5133 = vdwg.mxu0
    %v5134 = vadd.f32 %v5050, %v5131
    %v5135 = vld [vmem:[#allocation2 + $0x56] sm:$0x3]
    %s5136 = scalar_lea.vmem %s3, 2752
    %v5137 = vld [vmem:[%s5136] sm:$0xff]
    %v5138 = vld [vmem:[%s5136 + $0x8] sm:$0xff]
    %v5139 = vld [vmem:[%s5136 + $0x10] sm:$0xff]
    %v5140 = vld [vmem:[%s5136 + $0x18] sm:$0xff]
    %v5141 = vld [vmem:[%s5136 + $0x20] sm:$0xff]
    %v5142 = vld [vmem:[%s5136 + $0x28] sm:$0xff]
    %v5143 = vld [vmem:[%s5136 + $0x30] sm:$0xff]
    %v5144 = vld [vmem:[%s5136 + $0x38] sm:$0xff]
    %v5146 = vsel %vm1511, %v5135, 0
    %5148 = vmatprep.subr.mxu0 0.0
    %5149 = vmatpush1.msra.mxu0 0.0
    %5150 = vmatprep.subr.mxu0 0.0
    %5151 = vmatpush1.msra.mxu0 0.0
    %5152 = vmatprep.subr.mxu0 0.0
    %5153 = vmatpush1.msra.mxu0 0.0
    %5154 = vmatprep.subr.mxu0 0.0
    %5155 = vmatpush1.msra.mxu0 0.0
    %5156 = vmatprep.subr.mxu0 0.0
    %5157 = vmatpush1.msra.mxu0 0.0
    %5158 = vmatprep.subr.mxu0 0.0
    %5159 = vmatpush1.msra.mxu0 0.0
    %5160 = vmatprep.subr.mxu0 0.0
    %5161 = vmatpush1.msra.mxu0 0.0
    %5162 = vmatprep.subr.mxu0 0.0
    %5163 = vmatpush1.msra.mxu0 0.0
    %5164 = vmatprep.subr.mxu0 0.0
    %5165 = vmatpush1.msra.mxu0 %v5144
    %5166 = vmatprep.subr.mxu0 0.0
    %5167 = vmatpush1.msra.mxu0 %v5143
    %5168 = vmatprep.subr.mxu0 0.0
    %5169 = vmatpush1.msra.mxu0 %v5142
    %5170 = vmatprep.subr.mxu0 0.0
    %5171 = vmatpush1.msra.mxu0 %v5141
    %5172 = vmatprep.subr.mxu0 0.0
    %5173 = vmatpush1.msra.mxu0 %v5140
    %5174 = vmatprep.subr.mxu0 0.0
    %5175 = vmatpush1.msra.mxu0 %v5139
    %5176 = vmatprep.subr.mxu0 0.0
    %5177 = vmatpush1.msra.mxu0 %v5138
    %5178 = vmatprep.subr.mxu0 0.0
    %5179 = vmatpush1.msra.mxu0 %v5137
    %5180 = vmatprep.subr.mxu0 0.0
    %5181 = vmatpush2.msra.mxu0 0.0
    %5182 = vmatprep.subr.mxu0 0.0
    %5183 = vmatpush2.msra.mxu0 0.0
    %5184 = vmatprep.subr.mxu0 0.0
    %5185 = vmatpush2.msra.mxu0 0.0
    %5186 = vmatprep.subr.mxu0 0.0
    %5187 = vmatpush2.msra.mxu0 0.0
    %5188 = vmatprep.subr.mxu0 0.0
    %5189 = vmatpush2.msra.mxu0 0.0
    %5190 = vmatprep.subr.mxu0 0.0
    %5191 = vmatpush2.msra.mxu0 0.0
    %5192 = vmatprep.subr.mxu0 0.0
    %5193 = vmatpush2.msra.mxu0 0.0
    %5194 = vmatprep.subr.mxu0 0.0
    %5195 = vmatpush2.msra.mxu0 0.0
    %5196 = vmatprep.subr.mxu0 0.0
    %5197 = vmatpush2.msra.mxu0 0.0
    %5198 = vmatprep.subr.mxu0 0.0
    %5199 = vmatpush2.msra.mxu0 0.0
    %5200 = vmatprep.subr.mxu0 0.0
    %5201 = vmatpush2.msra.mxu0 0.0
    %5202 = vmatprep.subr.mxu0 0.0
    %5203 = vmatpush2.msra.mxu0 0.0
    %5204 = vmatprep.subr.mxu0 0.0
    %5205 = vmatpush2.msra.mxu0 0.0
    %5206 = vmatprep.subr.mxu0 0.0
    %5207 = vmatpush2.msra.mxu0 0.0
    %5208 = vmatprep.subr.mxu0 0.0
    %5209 = vmatpush2.msra.mxu0 0.0
    %5210 = vmatprep.subr.mxu0 0.0
    %5211 = vmatpush2.msra.mxu0 0.0
    %5212 = vmatprep.mubr.f32.mxu0 0.0
    %5213 = vmatmul.mubr.f32.gmra.mxu0 %v5146
    %v5214 = vpop.f32.mrf.mxu0
    %v5215 = vadd.f32 0.0, %v5214
    %v5216 = vpop.f32.mrf.mxu0
    %5217 = vdwg.mxu0
    %v5218 = vadd.f32 %v5134, %v5215
    %v5219 = vld [vmem:[#allocation2 + $0x58] sm:$0x3]
    %s5220 = scalar_lea.vmem %s3, 2816
    %v5221 = vld [vmem:[%s5220] sm:$0xff]
    %v5222 = vld [vmem:[%s5220 + $0x8] sm:$0xff]
    %v5223 = vld [vmem:[%s5220 + $0x10] sm:$0xff]
    %v5224 = vld [vmem:[%s5220 + $0x18] sm:$0xff]
    %v5225 = vld [vmem:[%s5220 + $0x20] sm:$0xff]
    %v5226 = vld [vmem:[%s5220 + $0x28] sm:$0xff]
    %v5227 = vld [vmem:[%s5220 + $0x30] sm:$0xff]
    %v5228 = vld [vmem:[%s5220 + $0x38] sm:$0xff]
    %v5230 = vsel %vm1511, %v5219, 0
    %5232 = vmatprep.subr.mxu0 0.0
    %5233 = vmatpush1.msra.mxu0 0.0
    %5234 = vmatprep.subr.mxu0 0.0
    %5235 = vmatpush1.msra.mxu0 0.0
    %5236 = vmatprep.subr.mxu0 0.0
    %5237 = vmatpush1.msra.mxu0 0.0
    %5238 = vmatprep.subr.mxu0 0.0
    %5239 = vmatpush1.msra.mxu0 0.0
    %5240 = vmatprep.subr.mxu0 0.0
    %5241 = vmatpush1.msra.mxu0 0.0
    %5242 = vmatprep.subr.mxu0 0.0
    %5243 = vmatpush1.msra.mxu0 0.0
    %5244 = vmatprep.subr.mxu0 0.0
    %5245 = vmatpush1.msra.mxu0 0.0
    %5246 = vmatprep.subr.mxu0 0.0
    %5247 = vmatpush1.msra.mxu0 0.0
    %5248 = vmatprep.subr.mxu0 0.0
    %5249 = vmatpush1.msra.mxu0 %v5228
    %5250 = vmatprep.subr.mxu0 0.0
    %5251 = vmatpush1.msra.mxu0 %v5227
    %5252 = vmatprep.subr.mxu0 0.0
    %5253 = vmatpush1.msra.mxu0 %v5226
    %5254 = vmatprep.subr.mxu0 0.0
    %5255 = vmatpush1.msra.mxu0 %v5225
    %5256 = vmatprep.subr.mxu0 0.0
    %5257 = vmatpush1.msra.mxu0 %v5224
    %5258 = vmatprep.subr.mxu0 0.0
    %5259 = vmatpush1.msra.mxu0 %v5223
    %5260 = vmatprep.subr.mxu0 0.0
    %5261 = vmatpush1.msra.mxu0 %v5222
    %5262 = vmatprep.subr.mxu0 0.0
    %5263 = vmatpush1.msra.mxu0 %v5221
    %5264 = vmatprep.subr.mxu0 0.0
    %5265 = vmatpush2.msra.mxu0 0.0
    %5266 = vmatprep.subr.mxu0 0.0
    %5267 = vmatpush2.msra.mxu0 0.0
    %5268 = vmatprep.subr.mxu0 0.0
    %5269 = vmatpush2.msra.mxu0 0.0
    %5270 = vmatprep.subr.mxu0 0.0
    %5271 = vmatpush2.msra.mxu0 0.0
    %5272 = vmatprep.subr.mxu0 0.0
    %5273 = vmatpush2.msra.mxu0 0.0
    %5274 = vmatprep.subr.mxu0 0.0
    %5275 = vmatpush2.msra.mxu0 0.0
    %5276 = vmatprep.subr.mxu0 0.0
    %5277 = vmatpush2.msra.mxu0 0.0
    %5278 = vmatprep.subr.mxu0 0.0
    %5279 = vmatpush2.msra.mxu0 0.0
    %5280 = vmatprep.subr.mxu0 0.0
    %5281 = vmatpush2.msra.mxu0 0.0
    %5282 = vmatprep.subr.mxu0 0.0
    %5283 = vmatpush2.msra.mxu0 0.0
    %5284 = vmatprep.subr.mxu0 0.0
    %5285 = vmatpush2.msra.mxu0 0.0
    %5286 = vmatprep.subr.mxu0 0.0
    %5287 = vmatpush2.msra.mxu0 0.0
    %5288 = vmatprep.subr.mxu0 0.0
    %5289 = vmatpush2.msra.mxu0 0.0
    %5290 = vmatprep.subr.mxu0 0.0
    %5291 = vmatpush2.msra.mxu0 0.0
    %5292 = vmatprep.subr.mxu0 0.0
    %5293 = vmatpush2.msra.mxu0 0.0
    %5294 = vmatprep.subr.mxu0 0.0
    %5295 = vmatpush2.msra.mxu0 0.0
    %5296 = vmatprep.mubr.f32.mxu0 0.0
    %5297 = vmatmul.mubr.f32.gmra.mxu0 %v5230
    %v5298 = vpop.f32.mrf.mxu0
    %v5299 = vadd.f32 0.0, %v5298
    %v5300 = vpop.f32.mrf.mxu0
    %5301 = vdwg.mxu0
    %v5302 = vadd.f32 %v5218, %v5299
    %v5303 = vld [vmem:[#allocation2 + $0x5a] sm:$0x3]
    %s5304 = scalar_lea.vmem %s3, 2880
    %v5305 = vld [vmem:[%s5304] sm:$0xff]
    %v5306 = vld [vmem:[%s5304 + $0x8] sm:$0xff]
    %v5307 = vld [vmem:[%s5304 + $0x10] sm:$0xff]
    %v5308 = vld [vmem:[%s5304 + $0x18] sm:$0xff]
    %v5309 = vld [vmem:[%s5304 + $0x20] sm:$0xff]
    %v5310 = vld [vmem:[%s5304 + $0x28] sm:$0xff]
    %v5311 = vld [vmem:[%s5304 + $0x30] sm:$0xff]
    %v5312 = vld [vmem:[%s5304 + $0x38] sm:$0xff]
    %v5314 = vsel %vm1511, %v5303, 0
    %5316 = vmatprep.subr.mxu0 0.0
    %5317 = vmatpush1.msra.mxu0 0.0
    %5318 = vmatprep.subr.mxu0 0.0
    %5319 = vmatpush1.msra.mxu0 0.0
    %5320 = vmatprep.subr.mxu0 0.0
    %5321 = vmatpush1.msra.mxu0 0.0
    %5322 = vmatprep.subr.mxu0 0.0
    %5323 = vmatpush1.msra.mxu0 0.0
    %5324 = vmatprep.subr.mxu0 0.0
    %5325 = vmatpush1.msra.mxu0 0.0
    %5326 = vmatprep.subr.mxu0 0.0
    %5327 = vmatpush1.msra.mxu0 0.0
    %5328 = vmatprep.subr.mxu0 0.0
    %5329 = vmatpush1.msra.mxu0 0.0
    %5330 = vmatprep.subr.mxu0 0.0
    %5331 = vmatpush1.msra.mxu0 0.0
    %5332 = vmatprep.subr.mxu0 0.0
    %5333 = vmatpush1.msra.mxu0 %v5312
    %5334 = vmatprep.subr.mxu0 0.0
    %5335 = vmatpush1.msra.mxu0 %v5311
    %5336 = vmatprep.subr.mxu0 0.0
    %5337 = vmatpush1.msra.mxu0 %v5310
    %5338 = vmatprep.subr.mxu0 0.0
    %5339 = vmatpush1.msra.mxu0 %v5309
    %5340 = vmatprep.subr.mxu0 0.0
    %5341 = vmatpush1.msra.mxu0 %v5308
    %5342 = vmatprep.subr.mxu0 0.0
    %5343 = vmatpush1.msra.mxu0 %v5307
    %5344 = vmatprep.subr.mxu0 0.0
    %5345 = vmatpush1.msra.mxu0 %v5306
    %5346 = vmatprep.subr.mxu0 0.0
    %5347 = vmatpush1.msra.mxu0 %v5305
    %5348 = vmatprep.subr.mxu0 0.0
    %5349 = vmatpush2.msra.mxu0 0.0
    %5350 = vmatprep.subr.mxu0 0.0
    %5351 = vmatpush2.msra.mxu0 0.0
    %5352 = vmatprep.subr.mxu0 0.0
    %5353 = vmatpush2.msra.mxu0 0.0
    %5354 = vmatprep.subr.mxu0 0.0
    %5355 = vmatpush2.msra.mxu0 0.0
    %5356 = vmatprep.subr.mxu0 0.0
    %5357 = vmatpush2.msra.mxu0 0.0
    %5358 = vmatprep.subr.mxu0 0.0
    %5359 = vmatpush2.msra.mxu0 0.0
    %5360 = vmatprep.subr.mxu0 0.0
    %5361 = vmatpush2.msra.mxu0 0.0
    %5362 = vmatprep.subr.mxu0 0.0
    %5363 = vmatpush2.msra.mxu0 0.0
    %5364 = vmatprep.subr.mxu0 0.0
    %5365 = vmatpush2.msra.mxu0 0.0
    %5366 = vmatprep.subr.mxu0 0.0
    %5367 = vmatpush2.msra.mxu0 0.0
    %5368 = vmatprep.subr.mxu0 0.0
    %5369 = vmatpush2.msra.mxu0 0.0
    %5370 = vmatprep.subr.mxu0 0.0
    %5371 = vmatpush2.msra.mxu0 0.0
    %5372 = vmatprep.subr.mxu0 0.0
    %5373 = vmatpush2.msra.mxu0 0.0
    %5374 = vmatprep.subr.mxu0 0.0
    %5375 = vmatpush2.msra.mxu0 0.0
    %5376 = vmatprep.subr.mxu0 0.0
    %5377 = vmatpush2.msra.mxu0 0.0
    %5378 = vmatprep.subr.mxu0 0.0
    %5379 = vmatpush2.msra.mxu0 0.0
    %5380 = vmatprep.mubr.f32.mxu0 0.0
    %5381 = vmatmul.mubr.f32.gmra.mxu0 %v5314
    %v5382 = vpop.f32.mrf.mxu0
    %v5383 = vadd.f32 0.0, %v5382
    %v5384 = vpop.f32.mrf.mxu0
    %5385 = vdwg.mxu0
    %v5386 = vadd.f32 %v5302, %v5383
    %v5387 = vld [vmem:[#allocation2 + $0x5c] sm:$0x3]
    %s5388 = scalar_lea.vmem %s3, 2944
    %v5389 = vld [vmem:[%s5388] sm:$0xff]
    %v5390 = vld [vmem:[%s5388 + $0x8] sm:$0xff]
    %v5391 = vld [vmem:[%s5388 + $0x10] sm:$0xff]
    %v5392 = vld [vmem:[%s5388 + $0x18] sm:$0xff]
    %v5393 = vld [vmem:[%s5388 + $0x20] sm:$0xff]
    %v5394 = vld [vmem:[%s5388 + $0x28] sm:$0xff]
    %v5395 = vld [vmem:[%s5388 + $0x30] sm:$0xff]
    %v5396 = vld [vmem:[%s5388 + $0x38] sm:$0xff]
    %v5398 = vsel %vm1511, %v5387, 0
    %5400 = vmatprep.subr.mxu0 0.0
    %5401 = vmatpush1.msra.mxu0 0.0
    %5402 = vmatprep.subr.mxu0 0.0
    %5403 = vmatpush1.msra.mxu0 0.0
    %5404 = vmatprep.subr.mxu0 0.0
    %5405 = vmatpush1.msra.mxu0 0.0
    %5406 = vmatprep.subr.mxu0 0.0
    %5407 = vmatpush1.msra.mxu0 0.0
    %5408 = vmatprep.subr.mxu0 0.0
    %5409 = vmatpush1.msra.mxu0 0.0
    %5410 = vmatprep.subr.mxu0 0.0
    %5411 = vmatpush1.msra.mxu0 0.0
    %5412 = vmatprep.subr.mxu0 0.0
    %5413 = vmatpush1.msra.mxu0 0.0
    %5414 = vmatprep.subr.mxu0 0.0
    %5415 = vmatpush1.msra.mxu0 0.0
    %5416 = vmatprep.subr.mxu0 0.0
    %5417 = vmatpush1.msra.mxu0 %v5396
    %5418 = vmatprep.subr.mxu0 0.0
    %5419 = vmatpush1.msra.mxu0 %v5395
    %5420 = vmatprep.subr.mxu0 0.0
    %5421 = vmatpush1.msra.mxu0 %v5394
    %5422 = vmatprep.subr.mxu0 0.0
    %5423 = vmatpush1.msra.mxu0 %v5393
    %5424 = vmatprep.subr.mxu0 0.0
    %5425 = vmatpush1.msra.mxu0 %v5392
    %5426 = vmatprep.subr.mxu0 0.0
    %5427 = vmatpush1.msra.mxu0 %v5391
    %5428 = vmatprep.subr.mxu0 0.0
    %5429 = vmatpush1.msra.mxu0 %v5390
    %5430 = vmatprep.subr.mxu0 0.0
    %5431 = vmatpush1.msra.mxu0 %v5389
    %5432 = vmatprep.subr.mxu0 0.0
    %5433 = vmatpush2.msra.mxu0 0.0
    %5434 = vmatprep.subr.mxu0 0.0
    %5435 = vmatpush2.msra.mxu0 0.0
    %5436 = vmatprep.subr.mxu0 0.0
    %5437 = vmatpush2.msra.mxu0 0.0
    %5438 = vmatprep.subr.mxu0 0.0
    %5439 = vmatpush2.msra.mxu0 0.0
    %5440 = vmatprep.subr.mxu0 0.0
    %5441 = vmatpush2.msra.mxu0 0.0
    %5442 = vmatprep.subr.mxu0 0.0
    %5443 = vmatpush2.msra.mxu0 0.0
    %5444 = vmatprep.subr.mxu0 0.0
    %5445 = vmatpush2.msra.mxu0 0.0
    %5446 = vmatprep.subr.mxu0 0.0
    %5447 = vmatpush2.msra.mxu0 0.0
    %5448 = vmatprep.subr.mxu0 0.0
    %5449 = vmatpush2.msra.mxu0 0.0
    %5450 = vmatprep.subr.mxu0 0.0
    %5451 = vmatpush2.msra.mxu0 0.0
    %5452 = vmatprep.subr.mxu0 0.0
    %5453 = vmatpush2.msra.mxu0 0.0
    %5454 = vmatprep.subr.mxu0 0.0
    %5455 = vmatpush2.msra.mxu0 0.0
    %5456 = vmatprep.subr.mxu0 0.0
    %5457 = vmatpush2.msra.mxu0 0.0
    %5458 = vmatprep.subr.mxu0 0.0
    %5459 = vmatpush2.msra.mxu0 0.0
    %5460 = vmatprep.subr.mxu0 0.0
    %5461 = vmatpush2.msra.mxu0 0.0
    %5462 = vmatprep.subr.mxu0 0.0
    %5463 = vmatpush2.msra.mxu0 0.0
    %5464 = vmatprep.mubr.f32.mxu0 0.0
    %5465 = vmatmul.mubr.f32.gmra.mxu0 %v5398
    %v5466 = vpop.f32.mrf.mxu0
    %v5467 = vadd.f32 0.0, %v5466
    %v5468 = vpop.f32.mrf.mxu0
    %5469 = vdwg.mxu0
    %v5470 = vadd.f32 %v5386, %v5467
    %v5471 = vld [vmem:[#allocation2 + $0x5e] sm:$0x3]
    %s5472 = scalar_lea.vmem %s3, 3008
    %v5473 = vld [vmem:[%s5472] sm:$0xff]
    %v5474 = vld [vmem:[%s5472 + $0x8] sm:$0xff]
    %v5475 = vld [vmem:[%s5472 + $0x10] sm:$0xff]
    %v5476 = vld [vmem:[%s5472 + $0x18] sm:$0xff]
    %v5477 = vld [vmem:[%s5472 + $0x20] sm:$0xff]
    %v5478 = vld [vmem:[%s5472 + $0x28] sm:$0xff]
    %v5479 = vld [vmem:[%s5472 + $0x30] sm:$0xff]
    %v5480 = vld [vmem:[%s5472 + $0x38] sm:$0xff]
    %v5482 = vsel %vm1511, %v5471, 0
    %5484 = vmatprep.subr.mxu0 0.0
    %5485 = vmatpush1.msra.mxu0 0.0
    %5486 = vmatprep.subr.mxu0 0.0
    %5487 = vmatpush1.msra.mxu0 0.0
    %5488 = vmatprep.subr.mxu0 0.0
    %5489 = vmatpush1.msra.mxu0 0.0
    %5490 = vmatprep.subr.mxu0 0.0
    %5491 = vmatpush1.msra.mxu0 0.0
    %5492 = vmatprep.subr.mxu0 0.0
    %5493 = vmatpush1.msra.mxu0 0.0
    %5494 = vmatprep.subr.mxu0 0.0
    %5495 = vmatpush1.msra.mxu0 0.0
    %5496 = vmatprep.subr.mxu0 0.0
    %5497 = vmatpush1.msra.mxu0 0.0
    %5498 = vmatprep.subr.mxu0 0.0
    %5499 = vmatpush1.msra.mxu0 0.0
    %5500 = vmatprep.subr.mxu0 0.0
    %5501 = vmatpush1.msra.mxu0 %v5480
    %5502 = vmatprep.subr.mxu0 0.0
    %5503 = vmatpush1.msra.mxu0 %v5479
    %5504 = vmatprep.subr.mxu0 0.0
    %5505 = vmatpush1.msra.mxu0 %v5478
    %5506 = vmatprep.subr.mxu0 0.0
    %5507 = vmatpush1.msra.mxu0 %v5477
    %5508 = vmatprep.subr.mxu0 0.0
    %5509 = vmatpush1.msra.mxu0 %v5476
    %5510 = vmatprep.subr.mxu0 0.0
    %5511 = vmatpush1.msra.mxu0 %v5475
    %5512 = vmatprep.subr.mxu0 0.0
    %5513 = vmatpush1.msra.mxu0 %v5474
    %5514 = vmatprep.subr.mxu0 0.0
    %5515 = vmatpush1.msra.mxu0 %v5473
    %5516 = vmatprep.subr.mxu0 0.0
    %5517 = vmatpush2.msra.mxu0 0.0
    %5518 = vmatprep.subr.mxu0 0.0
    %5519 = vmatpush2.msra.mxu0 0.0
    %5520 = vmatprep.subr.mxu0 0.0
    %5521 = vmatpush2.msra.mxu0 0.0
    %5522 = vmatprep.subr.mxu0 0.0
    %5523 = vmatpush2.msra.mxu0 0.0
    %5524 = vmatprep.subr.mxu0 0.0
    %5525 = vmatpush2.msra.mxu0 0.0
    %5526 = vmatprep.subr.mxu0 0.0
    %5527 = vmatpush2.msra.mxu0 0.0
    %5528 = vmatprep.subr.mxu0 0.0
    %5529 = vmatpush2.msra.mxu0 0.0
    %5530 = vmatprep.subr.mxu0 0.0
    %5531 = vmatpush2.msra.mxu0 0.0
    %5532 = vmatprep.subr.mxu0 0.0
    %5533 = vmatpush2.msra.mxu0 0.0
    %5534 = vmatprep.subr.mxu0 0.0
    %5535 = vmatpush2.msra.mxu0 0.0
    %5536 = vmatprep.subr.mxu0 0.0
    %5537 = vmatpush2.msra.mxu0 0.0
    %5538 = vmatprep.subr.mxu0 0.0
    %5539 = vmatpush2.msra.mxu0 0.0
    %5540 = vmatprep.subr.mxu0 0.0
    %5541 = vmatpush2.msra.mxu0 0.0
    %5542 = vmatprep.subr.mxu0 0.0
    %5543 = vmatpush2.msra.mxu0 0.0
    %5544 = vmatprep.subr.mxu0 0.0
    %5545 = vmatpush2.msra.mxu0 0.0
    %5546 = vmatprep.subr.mxu0 0.0
    %5547 = vmatpush2.msra.mxu0 0.0
    %5548 = vmatprep.mubr.f32.mxu0 0.0
    %5549 = vmatmul.mubr.f32.gmra.mxu0 %v5482
    %v5550 = vpop.f32.mrf.mxu0
    %v5551 = vadd.f32 0.0, %v5550
    %v5552 = vpop.f32.mrf.mxu0
    %5553 = vdwg.mxu0
    %v5554 = vadd.f32 %v5470, %v5551
    %v5555 = vld [vmem:[#allocation2 + $0x60] sm:$0x3]
    %s5556 = scalar_lea.vmem %s3, 3072
    %v5557 = vld [vmem:[%s5556] sm:$0xff]
    %v5558 = vld [vmem:[%s5556 + $0x8] sm:$0xff]
    %v5559 = vld [vmem:[%s5556 + $0x10] sm:$0xff]
    %v5560 = vld [vmem:[%s5556 + $0x18] sm:$0xff]
    %v5561 = vld [vmem:[%s5556 + $0x20] sm:$0xff]
    %v5562 = vld [vmem:[%s5556 + $0x28] sm:$0xff]
    %v5563 = vld [vmem:[%s5556 + $0x30] sm:$0xff]
    %v5564 = vld [vmem:[%s5556 + $0x38] sm:$0xff]
    %v5566 = vsel %vm1511, %v5555, 0
    %5568 = vmatprep.subr.mxu0 0.0
    %5569 = vmatpush1.msra.mxu0 0.0
    %5570 = vmatprep.subr.mxu0 0.0
    %5571 = vmatpush1.msra.mxu0 0.0
    %5572 = vmatprep.subr.mxu0 0.0
    %5573 = vmatpush1.msra.mxu0 0.0
    %5574 = vmatprep.subr.mxu0 0.0
    %5575 = vmatpush1.msra.mxu0 0.0
    %5576 = vmatprep.subr.mxu0 0.0
    %5577 = vmatpush1.msra.mxu0 0.0
    %5578 = vmatprep.subr.mxu0 0.0
    %5579 = vmatpush1.msra.mxu0 0.0
    %5580 = vmatprep.subr.mxu0 0.0
    %5581 = vmatpush1.msra.mxu0 0.0
    %5582 = vmatprep.subr.mxu0 0.0
    %5583 = vmatpush1.msra.mxu0 0.0
    %5584 = vmatprep.subr.mxu0 0.0
    %5585 = vmatpush1.msra.mxu0 %v5564
    %5586 = vmatprep.subr.mxu0 0.0
    %5587 = vmatpush1.msra.mxu0 %v5563
    %5588 = vmatprep.subr.mxu0 0.0
    %5589 = vmatpush1.msra.mxu0 %v5562
    %5590 = vmatprep.subr.mxu0 0.0
    %5591 = vmatpush1.msra.mxu0 %v5561
    %5592 = vmatprep.subr.mxu0 0.0
    %5593 = vmatpush1.msra.mxu0 %v5560
    %5594 = vmatprep.subr.mxu0 0.0
    %5595 = vmatpush1.msra.mxu0 %v5559
    %5596 = vmatprep.subr.mxu0 0.0
    %5597 = vmatpush1.msra.mxu0 %v5558
    %5598 = vmatprep.subr.mxu0 0.0
    %5599 = vmatpush1.msra.mxu0 %v5557
    %5600 = vmatprep.subr.mxu0 0.0
    %5601 = vmatpush2.msra.mxu0 0.0
    %5602 = vmatprep.subr.mxu0 0.0
    %5603 = vmatpush2.msra.mxu0 0.0
    %5604 = vmatprep.subr.mxu0 0.0
    %5605 = vmatpush2.msra.mxu0 0.0
    %5606 = vmatprep.subr.mxu0 0.0
    %5607 = vmatpush2.msra.mxu0 0.0
    %5608 = vmatprep.subr.mxu0 0.0
    %5609 = vmatpush2.msra.mxu0 0.0
    %5610 = vmatprep.subr.mxu0 0.0
    %5611 = vmatpush2.msra.mxu0 0.0
    %5612 = vmatprep.subr.mxu0 0.0
    %5613 = vmatpush2.msra.mxu0 0.0
    %5614 = vmatprep.subr.mxu0 0.0
    %5615 = vmatpush2.msra.mxu0 0.0
    %5616 = vmatprep.subr.mxu0 0.0
    %5617 = vmatpush2.msra.mxu0 0.0
    %5618 = vmatprep.subr.mxu0 0.0
    %5619 = vmatpush2.msra.mxu0 0.0
    %5620 = vmatprep.subr.mxu0 0.0
    %5621 = vmatpush2.msra.mxu0 0.0
    %5622 = vmatprep.subr.mxu0 0.0
    %5623 = vmatpush2.msra.mxu0 0.0
    %5624 = vmatprep.subr.mxu0 0.0
    %5625 = vmatpush2.msra.mxu0 0.0
    %5626 = vmatprep.subr.mxu0 0.0
    %5627 = vmatpush2.msra.mxu0 0.0
    %5628 = vmatprep.subr.mxu0 0.0
    %5629 = vmatpush2.msra.mxu0 0.0
    %5630 = vmatprep.subr.mxu0 0.0
    %5631 = vmatpush2.msra.mxu0 0.0
    %5632 = vmatprep.mubr.f32.mxu0 0.0
    %5633 = vmatmul.mubr.f32.gmra.mxu0 %v5566
    %v5634 = vpop.f32.mrf.mxu0
    %v5635 = vadd.f32 0.0, %v5634
    %v5636 = vpop.f32.mrf.mxu0
    %5637 = vdwg.mxu0
    %v5638 = vadd.f32 %v5554, %v5635
    %v5639 = vld [vmem:[%s4] sm:$0x1]
    %v5641 = vlaneseq
    %v5642 = vshrl.u32 %v5641, 7
    %v5643 = vsub.s32 0, %v5642
    %v5644 = vrot.slane %v5639, %v5643
    %v5646 = vadd.f32 %v5638, %v5644
    %vm5647 = vcmask 74752
    %5648 = vst.msk [vmem:[#allocation3] sm:$0x3] %vm5647, %v5646
    // Predicated region
    $region22: #{cnn_forward.3} parent=1 // pred_check
      _
    $region23: #{cnn_forward.3} parent=1 // pred_check_branch
      %5650 = sbr.rel (0) target = $region25
    $region24: #{cnn_forward.3} parent=1 // pred_region
      %s5652 = ssub.s32 32, 32
      %5653 = vsyncadd [#allocation4], %s5652
      %s5655 = sshll.u32 [#allocation3], 4
      %s5656 = int_to_ptr.vmem [resolvable:$true] %s5655
      %5658 = dma.vmem_to_hbm [thread:$0]  %s5656, 32, %s5, [#allocation4]
    $region25: #{cnn_forward.3} parent=1 // pred_fallthru
      _
    // Predicated region
    $region26: #{cnn_forward.3} parent=1 // pred_check
      _
    $region27: #{cnn_forward.3} parent=1 // pred_check_branch
      %5660 = sbr.rel (0) target = $region29
    $region28: #{cnn_forward.3} parent=1 // pred_region
      %5661 = dma.done [#allocation4], 32
    $region29: #{cnn_forward.3} parent=1 // pred_fallthru
      _
    %5662 = vsyncpa [#allocation4], 1

</llo_original>
